<compile_context>
chip_gen: v7x
topology: tpu7x:2x2x1
jax: 0.10.0
libtpu: 0.0.40
codegen_flags: <defaults>
</compile_context>

<pallas_src>
import functools

import jax
import jax.numpy as jnp
from jax.experimental import pallas as pl
from jax.experimental.pallas import tpu as pltpu


# ----------------------------- configuration ---------------------------------
CFG = dict(
    d_model=128,           # BERT hidden size
    output_dim=8,
    nhead=2,               # nn.TransformerEncoderLayer heads
    num_layers=2,          # nn.TransformerEncoder layers
    dim_feedforward=2048,  # PyTorch TransformerEncoderLayer default
    bert_layers=2,         # L-2
    bert_heads=2,          # A-2
    bert_intermediate=512, # 4 * 128
    vocab=100,
    max_pos=32,
    bert_ln_eps=1e-12,
    layer_norm_eps=1e-5,
    batch=2,
    seq=8,
)

PAD_OUT = 128   # lane-dense output slab width for the final fc (== d_model)

# Row layout of the consolidated (32, 128) f32 parameter-row array (vecD):
ROW_EMB_LN_W = 0
ROW_EMB_LN_B = 1
ROW_BERT_BASE = 2          # + 6*l : [attn_out_b, ln1_w, ln1_b, ffn_out_b, ln2_w, ln2_b]
ROW_NORM_W = 14
ROW_NORM_B = 15
ROW_ENC_BASE = 16          # + 6*l : same ordering as the BERT block
ROW_FC_B = 28
VECD_ROWS = 32


# ------------------------------ fused kernel ----------------------------------
def _layer_norm(z, w, b, eps):
    mu = jnp.mean(z, axis=-1, keepdims=True)
    zc = z - mu
    var = jnp.mean(zc * zc, axis=-1, keepdims=True)
    return zc * jax.lax.rsqrt(var + eps) * w + b


def _fused_forward_kernel(
    emb_ref, mask_ref,
    wqkv_ref, wo_ref, bw1_ref, bw2_ref, ew1_hbm, ew2_hbm, fcw_ref,
    vecd_ref, vec3d_ref, veci_ref,
    out_ref,
    ew1_buf, ew2_buf, dma_sem,
    *, B, S, D, nhead_bert, nhead_enc, n_bert, n_enc, ib,
    bert_eps, enc_eps,
):
    """Entire GlobalModel forward (post embedding lookup) in one kernel."""
    bf16 = jnp.bfloat16

    # -- prefetch the big encoder FFN weights (HBM -> VMEM) behind BERT compute --
    cp_w1 = pltpu.make_async_copy(ew1_hbm, ew1_buf, dma_sem.at[0])
    cp_w2 = pltpu.make_async_copy(ew2_hbm, ew2_buf, dma_sem.at[1])
    cp_w1.start()
    cp_w2.start()

    mask = mask_ref[...]                       # (B, S, S) additive bias (0 / -1e9), f32

    def row(idx):                              # (1, D) f32 parameter row (sublane slice)
        return vecd_ref[idx:idx + 1, :]

    def mha(x2d, nhead, wqkv, bqkv, wo, bo):
        # Fused QKV projection: one (B*S, D) @ (D, 3D) bf16 MXU matmul, f32 accum.
        dh = D // nhead
        scale = 1.0 / float(dh) ** 0.5
        qkv = jnp.dot(x2d.astype(bf16), wqkv,
                      preferred_element_type=jnp.float32) + bqkv     # (B*S, 3D) f32
        ctx_heads = []
        for h in range(nhead):                 # static loop (nhead == 2)
            q = qkv[:, 0 * D + h * dh:0 * D + (h + 1) * dh].reshape(B, S, dh)
            k = qkv[:, 1 * D + h * dh:1 * D + (h + 1) * dh].reshape(B, S, dh)
            v = qkv[:, 2 * D + h * dh:2 * D + (h + 1) * dh].reshape(B, S, dh)
            s = jnp.einsum('bqd,bkd->bqk', q.astype(bf16), k.astype(bf16),
                           preferred_element_type=jnp.float32) * scale + mask
            s = s - jnp.max(s, axis=-1, keepdims=True)
            e = jnp.exp(s)
            p = e * pl.reciprocal(jnp.sum(e, axis=-1, keepdims=True), approx=True)
            ctx = jnp.einsum('bqk,bkd->bqd', p.astype(bf16), v.astype(bf16),
                             preferred_element_type=jnp.float32)      # (B, S, dh) f32
            ctx_heads.append(ctx.reshape(B * S, dh))
        # lane-concat the head halves -> ONE K=128 output projection
        ctx2d = ctx_heads[0] if nhead == 1 else jnp.concatenate(ctx_heads, axis=-1)
        return jnp.dot(ctx2d.astype(bf16), wo,
                       preferred_element_type=jnp.float32) + bo

    # ---- BERT embedding LayerNorm (embeddings summed outside the kernel) ----
    x = _layer_norm(emb_ref[...], row(ROW_EMB_LN_W), row(ROW_EMB_LN_B), bert_eps)
    emb_out = x                                       # == inp[2][0]

    # ---- BERT encoder: post-LN, GELU FFN ----
    for l in range(n_bert):
        base = ROW_BERT_BASE + 6 * l
        a = mha(x, nhead_bert, wqkv_ref[l], vec3d_ref[l:l + 1, :],
                wo_ref[l], row(base + 0))
        x = _layer_norm(x + a, row(base + 1), row(base + 2), bert_eps)
        h = jnp.dot(x.astype(bf16), bw1_ref[l],
                    preferred_element_type=jnp.float32) + veci_ref[l:l + 1, :ib]
        # TODO(synk): HF BERT uses exact (erf) GELU; tanh approximation kept for Mosaic portability.
        h = jax.nn.gelu(h, approximate=True)
        f = jnp.dot(h.astype(bf16), bw2_ref[l],
                    preferred_element_type=jnp.float32) + row(base + 3)
        x = _layer_norm(x + f, row(base + 4), row(base + 5), bert_eps)
    # x == inp[0] (last hidden state)

    # ---- add_norm = self.norm(inp[0] + inp[2][0]) ----
    x = _layer_norm(x + emb_out, row(ROW_NORM_W), row(ROW_NORM_B), enc_eps)

    # encoder FFN weights must have landed by now (DMA overlapped all of BERT)
    cp_w1.wait()
    cp_w2.wait()

    # ---- nn.TransformerEncoder: post-LN, ReLU FFN, key_padding_mask ----
    for l in range(n_enc):
        base = ROW_ENC_BASE + 6 * l
        a = mha(x, nhead_enc, wqkv_ref[n_bert + l],
                vec3d_ref[n_bert + l:n_bert + l + 1, :],
                wo_ref[n_bert + l], row(base + 0))
        x = _layer_norm(x + a, row(base + 1), row(base + 2), enc_eps)
        ff = jnp.dot(x.astype(bf16), ew1_buf[l],
                     preferred_element_type=jnp.float32) \
             + veci_ref[n_bert + l:n_bert + l + 1, :]
        ff = jnp.maximum(ff, 0.0)
        ff = jnp.dot(ff.astype(bf16), ew2_buf[l],
                     preferred_element_type=jnp.float32) + row(base + 3)
        x = _layer_norm(x + ff, row(base + 4), row(base + 5), enc_eps)

    # hidden.transpose(0,1)[0,:,:] == sequence position 0 of (B, S, D)
    cls = x.reshape(B, S, D)[:, 0:1, :].reshape(B, D)            # (B, D)
    # lane-dense (B, 128) output slab; true logits are cols [:output_dim]
    out_ref[...] = jnp.dot(cls.astype(bf16), fcw_ref[...],
                           preferred_element_type=jnp.float32) + row(ROW_FC_B)


# ------------------------------ parameter init ---------------------------------
def init_params(key):
    D = CFG["d_model"]
    IB = CFG["bert_intermediate"]
    IE = CFG["dim_feedforward"]
    LB = CFG["bert_layers"]
    LE = CFG["num_layers"]
    OUT = CFG["output_dim"]
    keys = iter(jax.random.split(key, 64))

    def nrm(shape):
        return jax.random.normal(next(keys), shape, jnp.float32) * 0.02

    ones = lambda n: jnp.ones((n,), jnp.float32)
    zeros = lambda n: jnp.zeros((n,), jnp.float32)

    params = {}
    # embedding tables (gathered in plain JAX outside the kernel)
    params["word_emb"] = nrm((CFG["vocab"], D))
    params["pos_emb"] = nrm((CFG["max_pos"], D))
    params["type_emb"] = nrm((2, D))

    # ---- bf16 matmul weights (BERT layers first, then encoder layers) ----
    params["wqkv"] = nrm((LB + LE, D, 3 * D)).astype(jnp.bfloat16)
    params["wo"] = nrm((LB + LE, D, D)).astype(jnp.bfloat16)
    params["b_w1"] = nrm((LB, D, IB)).astype(jnp.bfloat16)
    params["b_w2"] = nrm((LB, IB, D)).astype(jnp.bfloat16)
    params["e_w1"] = nrm((LE, D, IE)).astype(jnp.bfloat16)
    params["e_w2"] = nrm((LE, IE, D)).astype(jnp.bfloat16)
    fc_w = nrm((D, OUT))
    params["fc_w"] = (jnp.zeros((D, PAD_OUT), jnp.float32)
                      .at[:, :OUT].set(fc_w).astype(jnp.bfloat16))

    # ---- consolidated f32 parameter rows ----
    rows = [ones(D), zeros(D)]                       # embedding LN w, b
    for _ in range(LB):                              # per BERT layer
        rows += [nrm((D,)), ones(D), zeros(D), nrm((D,)), ones(D), zeros(D)]
    rows += [ones(D), zeros(D)]                      # self.norm w, b
    for _ in range(LE):                              # per encoder layer
        rows += [nrm((D,)), ones(D), zeros(D), nrm((D,)), ones(D), zeros(D)]
    rows.append(jnp.zeros((D,), jnp.float32).at[:OUT].set(nrm((OUT,))))  # fc bias (padded)
    while len(rows) < VECD_ROWS:
        rows.append(zeros(D))
    params["vecD"] = jnp.stack(rows)                 # (32, 128)

    params["vec3D"] = nrm((LB + LE, 3 * D))          # stacked QKV biases, (4, 384)

    veci = jnp.zeros((LB + LE, IE), jnp.float32)     # stacked FFN-in biases, (4, 2048)
    for l in range(LB):
        veci = veci.at[l, :IB].set(nrm((IB,)))
    for l in range(LE):
        veci = veci.at[LB + l, :].set(nrm((IE,)))
    params["vecI"] = veci
    return params


# ------------------------------ forward pass ------------------------------------
def global_model_forward(token_ids, attention_mask, params):
    B, S = token_ids.shape
    D = CFG["d_model"]
    LB, LE = CFG["bert_layers"], CFG["num_layers"]
    IE = CFG["dim_feedforward"]

    # additive attention bias: 0 for real tokens, -1e9 for padding
    # (covers both HF BERT's extended mask and ~attention_mask key_padding_mask)
    mask_bias = (1.0 - attention_mask.astype(jnp.float32)) * -1e9
    mask_bias = jnp.broadcast_to(mask_bias[:, None, :], (B, S, S))

    # BERT embedding gathers: plain-JAX glue; everything after runs in one kernel
    emb = (params["word_emb"][token_ids]
           + params["pos_emb"][None, :S, :]
           + params["type_emb"][0][None, None, :]).reshape(B * S, D)

    kernel = functools.partial(
        _fused_forward_kernel,
        B=B, S=S, D=D,
        nhead_bert=CFG["bert_heads"], nhead_enc=CFG["nhead"],
        n_bert=LB, n_enc=LE, ib=CFG["bert_intermediate"],
        bert_eps=CFG["bert_ln_eps"], enc_eps=CFG["layer_norm_eps"],
    )

    def vmem_spec():
        return pl.BlockSpec(memory_space=pltpu.MemorySpace.VMEM)

    out_pad = pl.pallas_call(
        kernel,
        out_shape=jax.ShapeDtypeStruct((B, PAD_OUT), jnp.float32),
        in_specs=[
            vmem_spec(), vmem_spec(),                 # emb, mask
            vmem_spec(), vmem_spec(),                 # wqkv, wo
            vmem_spec(), vmem_spec(),                 # BERT FFN w1, w2
            pl.BlockSpec(memory_space=pl.ANY),        # encoder FFN w1 (manual prefetch)
            pl.BlockSpec(memory_space=pl.ANY),        # encoder FFN w2 (manual prefetch)
            vmem_spec(),                              # fc_w (padded)
            vmem_spec(), vmem_spec(), vmem_spec(),    # vecD, vec3D, vecI
        ],
        out_specs=vmem_spec(),
        scratch_shapes=[
            pltpu.VMEM((LE, D, IE), jnp.bfloat16),    # encoder FFN w1 landing buffer
            pltpu.VMEM((LE, IE, D), jnp.bfloat16),    # encoder FFN w2 landing buffer
            pltpu.SemaphoreType.DMA((2,)),
        ],
        cost_estimate=pl.CostEstimate(
            flops=30_000_000, transcendentals=20_000, bytes_accessed=3_600_000),
    )(
        emb, mask_bias,
        params["wqkv"], params["wo"], params["b_w1"], params["b_w2"],
        params["e_w1"], params["e_w2"], params["fc_w"],
        params["vecD"], params["vec3D"], params["vecI"],
    )
    return out_pad[:, :CFG["output_dim"]]


# ----------------------------------- main ----------------------------------------
if __name__ == "__main__":
    key = jax.random.PRNGKey(0)
    kp, kt = jax.random.split(key)
    params = init_params(kp)

    B, S = CFG["batch"], CFG["seq"]
    token_ids = jax.random.randint(kt, (B, S), 0, CFG["vocab"], dtype=jnp.int32)
    attention_mask = jnp.array([[1, 1, 1, 1, 1, 1, 1, 1],
                                [1, 1, 1, 1, 1, 0, 0, 0]], dtype=jnp.int32)

    fwd = jax.jit(global_model_forward)
    out = jax.block_until_ready(fwd(token_ids, attention_mask, params))
    assert out.shape == (B, CFG["output_dim"])
    assert bool(jnp.all(jnp.isfinite(out)))
    print("KERNEL_OK")
</pallas_src>

<mosaic_0001>
module attributes {stable_mosaic.version = 11 : i64} {
  func.func @_fused_forward_kernel(%arg0: memref<16x128xf32, #tpu.memory_space<vmem>>, %arg1: memref<2x8x8xf32, #tpu.memory_space<vmem>>, %arg2: memref<4x128x384xbf16, #tpu.memory_space<vmem>>, %arg3: memref<4x128x128xbf16, #tpu.memory_space<vmem>>, %arg4: memref<2x128x512xbf16, #tpu.memory_space<vmem>>, %arg5: memref<2x512x128xbf16, #tpu.memory_space<vmem>>, %arg6: memref<2x128x2048xbf16, #tpu.memory_space<any>>, %arg7: memref<2x2048x128xbf16, #tpu.memory_space<any>>, %arg8: memref<128x128xbf16, #tpu.memory_space<vmem>>, %arg9: memref<32x128xf32, #tpu.memory_space<vmem>>, %arg10: memref<4x384xf32, #tpu.memory_space<vmem>>, %arg11: memref<4x2048xf32, #tpu.memory_space<vmem>>, %arg12: memref<2x128xf32, #tpu.memory_space<vmem>>, %arg13: memref<2x128x2048xbf16, #tpu.memory_space<vmem>>, %arg14: memref<2x2048x128xbf16, #tpu.memory_space<vmem>>, %arg15: memref<2x!tpu.dma_semaphore, #tpu.memory_space<semaphore_mem>>) attributes {dimension_semantics = [], scalar_prefetch = 0 : i64, scratch_operands = 3 : i64, tpu.core_type = #tpu.core_type<tc>} {
    %c0_i32 = arith.constant 0 : i32
    %0 = tpu.memref_slice %arg15[%c0_i32] : memref<2x!tpu.dma_semaphore, #tpu.memory_space<semaphore_mem>> -> memref<1x!tpu.dma_semaphore, #tpu.memory_space<semaphore_mem>>
    %1 = tpu.memref_squeeze %0 : memref<1x!tpu.dma_semaphore, #tpu.memory_space<semaphore_mem>> -> memref<!tpu.dma_semaphore, #tpu.memory_space<semaphore_mem>>
    tpu.enqueue_dma source(%arg6 : memref<2x128x2048xbf16, #tpu.memory_space<any>>) target(%arg13 : memref<2x128x2048xbf16, #tpu.memory_space<vmem>>) target_semaphore(%1 : memref<!tpu.dma_semaphore, #tpu.memory_space<semaphore_mem>>)
    %c1_i32 = arith.constant 1 : i32
    %2 = tpu.memref_slice %arg15[%c1_i32] : memref<2x!tpu.dma_semaphore, #tpu.memory_space<semaphore_mem>> -> memref<1x!tpu.dma_semaphore, #tpu.memory_space<semaphore_mem>>
    %3 = tpu.memref_squeeze %2 : memref<1x!tpu.dma_semaphore, #tpu.memory_space<semaphore_mem>> -> memref<!tpu.dma_semaphore, #tpu.memory_space<semaphore_mem>>
    tpu.enqueue_dma source(%arg7 : memref<2x2048x128xbf16, #tpu.memory_space<any>>) target(%arg14 : memref<2x2048x128xbf16, #tpu.memory_space<vmem>>) target_semaphore(%3 : memref<!tpu.dma_semaphore, #tpu.memory_space<semaphore_mem>>)
    %c0 = arith.constant 0 : index
    %c0_0 = arith.constant 0 : index
    %c0_1 = arith.constant 0 : index
    %4 = vector.load %arg1[%c0, %c0_0, %c0_1] : memref<2x8x8xf32, #tpu.memory_space<vmem>>, vector<2x8x8xf32>
    %c0_2 = arith.constant 0 : index
    %c0_3 = arith.constant 0 : index
    %5 = vector.load %arg0[%c0_2, %c0_3] : memref<16x128xf32, #tpu.memory_space<vmem>>, vector<16x128xf32>
    %c0_4 = arith.constant 0 : index
    %c0_5 = arith.constant 0 : index
    %6 = vector.load %arg9[%c0_4, %c0_5] : memref<32x128xf32, #tpu.memory_space<vmem>>, vector<1x128xf32>
    %c1 = arith.constant 1 : index
    %c0_6 = arith.constant 0 : index
    %7 = vector.load %arg9[%c1, %c0_6] : memref<32x128xf32, #tpu.memory_space<vmem>>, vector<1x128xf32>
    %cst = arith.constant dense<0.000000e+00> : vector<16xf32>
    %8 = vector.multi_reduction <add>, %5, %cst [1] : vector<16x128xf32> to vector<16xf32>
    %9 = vector.shape_cast %8 : vector<16xf32> to vector<16x1xf32>
    %cst_7 = arith.constant 1.280000e+02 : f32
    %10 = vector.broadcast %cst_7 : f32 to vector<16x1xf32>
    %11 = arith.divf %9, %10 : vector<16x1xf32>
    %12 = vector.broadcast %11 : vector<16x1xf32> to vector<16x128xf32>
    %13 = arith.subf %5, %12 : vector<16x128xf32>
    %14 = arith.mulf %13, %13 : vector<16x128xf32>
    %cst_8 = arith.constant dense<0.000000e+00> : vector<16xf32>
    %15 = vector.multi_reduction <add>, %14, %cst_8 [1] : vector<16x128xf32> to vector<16xf32>
    %16 = vector.shape_cast %15 : vector<16xf32> to vector<16x1xf32>
    %cst_9 = arith.constant 1.280000e+02 : f32
    %17 = vector.broadcast %cst_9 : f32 to vector<16x1xf32>
    %18 = arith.divf %16, %17 : vector<16x1xf32>
    %cst_10 = arith.constant 9.99999996E-13 : f32
    %19 = vector.broadcast %cst_10 : f32 to vector<16x1xf32>
    %20 = arith.addf %18, %19 : vector<16x1xf32>
    %21 = math.rsqrt %20 : vector<16x1xf32>
    %22 = vector.broadcast %21 : vector<16x1xf32> to vector<16x128xf32>
    %23 = arith.mulf %13, %22 : vector<16x128xf32>
    %24 = vector.broadcast %6 : vector<1x128xf32> to vector<16x128xf32>
    %25 = arith.mulf %23, %24 : vector<16x128xf32>
    %26 = vector.broadcast %7 : vector<1x128xf32> to vector<16x128xf32>
    %27 = arith.addf %25, %26 : vector<16x128xf32>
    %c0_11 = arith.constant 0 : index
    %c0_12 = arith.constant 0 : index
    %c0_13 = arith.constant 0 : index
    %28 = vector.load %arg2[%c0_11, %c0_12, %c0_13] : memref<4x128x384xbf16, #tpu.memory_space<vmem>>, vector<1x128x384xbf16>
    %29 = vector.shape_cast %28 : vector<1x128x384xbf16> to vector<128x384xbf16>
    %c0_14 = arith.constant 0 : index
    %c0_15 = arith.constant 0 : index
    %30 = vector.load %arg10[%c0_14, %c0_15] : memref<4x384xf32, #tpu.memory_space<vmem>>, vector<1x384xf32>
    %c0_16 = arith.constant 0 : index
    %c0_17 = arith.constant 0 : index
    %c0_18 = arith.constant 0 : index
    %31 = vector.load %arg3[%c0_16, %c0_17, %c0_18] : memref<4x128x128xbf16, #tpu.memory_space<vmem>>, vector<1x128x128xbf16>
    %32 = vector.shape_cast %31 : vector<1x128x128xbf16> to vector<128x128xbf16>
    %c2 = arith.constant 2 : index
    %c0_19 = arith.constant 0 : index
    %33 = vector.load %arg9[%c2, %c0_19] : memref<32x128xf32, #tpu.memory_space<vmem>>, vector<1x128xf32>
    %34 = arith.truncf %27 : vector<16x128xf32> to vector<16x128xbf16>
    %cst_20 = arith.constant dense<0.000000e+00> : vector<16x384xf32>
    %35 = tpu.matmul %34, %29, %cst_20 {dimension_numbers = #tpu.dot_dimension_numbers<[1], [0], [0], [1], [0, 0, 1, 1], [], []>} : vector<16x128xbf16>, vector<128x384xbf16>, vector<16x384xf32> -> vector<16x384xf32>
    %36 = vector.broadcast %30 : vector<1x384xf32> to vector<16x384xf32>
    %37 = arith.addf %35, %36 : vector<16x384xf32>
    %38 = vector.extract_strided_slice %37 {offsets = [0, 0], sizes = [16, 64], strides = [1, 1]} : vector<16x384xf32> to vector<16x64xf32>
    %39 = vector.shape_cast %38 : vector<16x64xf32> to vector<2x8x64xf32>
    %40 = vector.extract_strided_slice %37 {offsets = [0, 128], sizes = [16, 64], strides = [1, 1]} : vector<16x384xf32> to vector<16x64xf32>
    %41 = vector.shape_cast %40 : vector<16x64xf32> to vector<2x8x64xf32>
    %42 = vector.extract_strided_slice %37 {offsets = [0, 256], sizes = [16, 64], strides = [1, 1]} : vector<16x384xf32> to vector<16x64xf32>
    %43 = vector.shape_cast %42 : vector<16x64xf32> to vector<2x8x64xf32>
    %44 = arith.truncf %39 : vector<2x8x64xf32> to vector<2x8x64xbf16>
    %45 = arith.truncf %41 : vector<2x8x64xf32> to vector<2x8x64xbf16>
    "tpu.trace_start"() <{level = 10 : i32, message = "bqd,bkd->bqk"}> : () -> ()
    %cst_21 = arith.constant dense<0.000000e+00> : vector<2x8x8xf32>
    %46 = tpu.matmul %44, %45, %cst_21 {dimension_numbers = #tpu.dot_dimension_numbers<[2], [2], [1], [1], [0, 0, 0, 1, 1, 1], [0], [0]>} : vector<2x8x64xbf16>, vector<2x8x64xbf16>, vector<2x8x8xf32> -> vector<2x8x8xf32>
    "tpu.trace_stop"() : () -> ()
    %cst_22 = arith.constant 1.250000e-01 : f32
    %47 = vector.broadcast %cst_22 : f32 to vector<2x8x8xf32>
    %48 = arith.mulf %46, %47 : vector<2x8x8xf32>
    %49 = arith.addf %48, %4 : vector<2x8x8xf32>
    %cst_23 = arith.constant dense<0xFF800000> : vector<2x8xf32>
    %50 = vector.multi_reduction <maximumf>, %49, %cst_23 [2] : vector<2x8x8xf32> to vector<2x8xf32>
    %51 = vector.shape_cast %50 : vector<2x8xf32> to vector<2x8x1xf32>
    %52 = vector.broadcast %51 : vector<2x8x1xf32> to vector<2x8x8xf32>
    %53 = arith.subf %49, %52 : vector<2x8x8xf32>
    %54 = math.exp %53 : vector<2x8x8xf32>
    %cst_24 = arith.constant dense<0.000000e+00> : vector<2x8xf32>
    %55 = vector.multi_reduction <add>, %54, %cst_24 [2] : vector<2x8x8xf32> to vector<2x8xf32>
    %56 = vector.shape_cast %55 : vector<2x8xf32> to vector<2x8x1xf32>
    %57 = tpu.reciprocal %56 {approx = true} : vector<2x8x1xf32> -> vector<2x8x1xf32>
    %58 = vector.broadcast %57 : vector<2x8x1xf32> to vector<2x8x8xf32>
    %59 = arith.mulf %54, %58 : vector<2x8x8xf32>
    %60 = arith.truncf %59 : vector<2x8x8xf32> to vector<2x8x8xbf16>
    %61 = arith.truncf %43 : vector<2x8x64xf32> to vector<2x8x64xbf16>
    "tpu.trace_start"() <{level = 10 : i32, message = "bqk,bkd->bqd"}> : () -> ()
    %cst_25 = arith.constant dense<0.000000e+00> : vector<2x8x64xf32>
    %62 = tpu.matmul %60, %61, %cst_25 {dimension_numbers = #tpu.dot_dimension_numbers<[2], [1], [1], [2], [0, 0, 0, 1, 1, 2], [0], [0]>} : vector<2x8x8xbf16>, vector<2x8x64xbf16>, vector<2x8x64xf32> -> vector<2x8x64xf32>
    "tpu.trace_stop"() : () -> ()
    %63 = vector.shape_cast %62 : vector<2x8x64xf32> to vector<16x64xf32>
    %64 = vector.extract_strided_slice %37 {offsets = [0, 64], sizes = [16, 64], strides = [1, 1]} : vector<16x384xf32> to vector<16x64xf32>
    %65 = vector.shape_cast %64 : vector<16x64xf32> to vector<2x8x64xf32>
    %66 = vector.extract_strided_slice %37 {offsets = [0, 192], sizes = [16, 64], strides = [1, 1]} : vector<16x384xf32> to vector<16x64xf32>
    %67 = vector.shape_cast %66 : vector<16x64xf32> to vector<2x8x64xf32>
    %68 = vector.extract_strided_slice %37 {offsets = [0, 320], sizes = [16, 64], strides = [1, 1]} : vector<16x384xf32> to vector<16x64xf32>
    %69 = vector.shape_cast %68 : vector<16x64xf32> to vector<2x8x64xf32>
    %70 = arith.truncf %65 : vector<2x8x64xf32> to vector<2x8x64xbf16>
    %71 = arith.truncf %67 : vector<2x8x64xf32> to vector<2x8x64xbf16>
    "tpu.trace_start"() <{level = 10 : i32, message = "bqd,bkd->bqk"}> : () -> ()
    %cst_26 = arith.constant dense<0.000000e+00> : vector<2x8x8xf32>
    %72 = tpu.matmul %70, %71, %cst_26 {dimension_numbers = #tpu.dot_dimension_numbers<[2], [2], [1], [1], [0, 0, 0, 1, 1, 1], [0], [0]>} : vector<2x8x64xbf16>, vector<2x8x64xbf16>, vector<2x8x8xf32> -> vector<2x8x8xf32>
    "tpu.trace_stop"() : () -> ()
    %cst_27 = arith.constant 1.250000e-01 : f32
    %73 = vector.broadcast %cst_27 : f32 to vector<2x8x8xf32>
    %74 = arith.mulf %72, %73 : vector<2x8x8xf32>
    %75 = arith.addf %74, %4 : vector<2x8x8xf32>
    %cst_28 = arith.constant dense<0xFF800000> : vector<2x8xf32>
    %76 = vector.multi_reduction <maximumf>, %75, %cst_28 [2] : vector<2x8x8xf32> to vector<2x8xf32>
    %77 = vector.shape_cast %76 : vector<2x8xf32> to vector<2x8x1xf32>
    %78 = vector.broadcast %77 : vector<2x8x1xf32> to vector<2x8x8xf32>
    %79 = arith.subf %75, %78 : vector<2x8x8xf32>
    %80 = math.exp %79 : vector<2x8x8xf32>
    %cst_29 = arith.constant dense<0.000000e+00> : vector<2x8xf32>
    %81 = vector.multi_reduction <add>, %80, %cst_29 [2] : vector<2x8x8xf32> to vector<2x8xf32>
    %82 = vector.shape_cast %81 : vector<2x8xf32> to vector<2x8x1xf32>
    %83 = tpu.reciprocal %82 {approx = true} : vector<2x8x1xf32> -> vector<2x8x1xf32>
    %84 = vector.broadcast %83 : vector<2x8x1xf32> to vector<2x8x8xf32>
    %85 = arith.mulf %80, %84 : vector<2x8x8xf32>
    %86 = arith.truncf %85 : vector<2x8x8xf32> to vector<2x8x8xbf16>
    %87 = arith.truncf %69 : vector<2x8x64xf32> to vector<2x8x64xbf16>
    "tpu.trace_start"() <{level = 10 : i32, message = "bqk,bkd->bqd"}> : () -> ()
    %cst_30 = arith.constant dense<0.000000e+00> : vector<2x8x64xf32>
    %88 = tpu.matmul %86, %87, %cst_30 {dimension_numbers = #tpu.dot_dimension_numbers<[2], [1], [1], [2], [0, 0, 0, 1, 1, 2], [0], [0]>} : vector<2x8x8xbf16>, vector<2x8x64xbf16>, vector<2x8x64xf32> -> vector<2x8x64xf32>
    "tpu.trace_stop"() : () -> ()
    %89 = vector.shape_cast %88 : vector<2x8x64xf32> to vector<16x64xf32>
    %90 = tpu.concatenate %63, %89 in 1 : vector<16x64xf32>, vector<16x64xf32> -> vector<16x128xf32>
    %91 = arith.truncf %90 : vector<16x128xf32> to vector<16x128xbf16>
    %cst_31 = arith.constant dense<0.000000e+00> : vector<16x128xf32>
    %92 = tpu.matmul %91, %32, %cst_31 {dimension_numbers = #tpu.dot_dimension_numbers<[1], [0], [0], [1], [0, 0, 1, 1], [], []>} : vector<16x128xbf16>, vector<128x128xbf16>, vector<16x128xf32> -> vector<16x128xf32>
    %93 = vector.broadcast %33 : vector<1x128xf32> to vector<16x128xf32>
    %94 = arith.addf %92, %93 : vector<16x128xf32>
    %95 = arith.addf %27, %94 : vector<16x128xf32>
    %c3 = arith.constant 3 : index
    %c0_32 = arith.constant 0 : index
    %96 = vector.load %arg9[%c3, %c0_32] : memref<32x128xf32, #tpu.memory_space<vmem>>, vector<1x128xf32>
    %c4 = arith.constant 4 : index
    %c0_33 = arith.constant 0 : index
    %97 = vector.load %arg9[%c4, %c0_33] : memref<32x128xf32, #tpu.memory_space<vmem>>, vector<1x128xf32>
    %cst_34 = arith.constant dense<0.000000e+00> : vector<16xf32>
    %98 = vector.multi_reduction <add>, %95, %cst_34 [1] : vector<16x128xf32> to vector<16xf32>
    %99 = vector.shape_cast %98 : vector<16xf32> to vector<16x1xf32>
    %cst_35 = arith.constant 1.280000e+02 : f32
    %100 = vector.broadcast %cst_35 : f32 to vector<16x1xf32>
    %101 = arith.divf %99, %100 : vector<16x1xf32>
    %102 = vector.broadcast %101 : vector<16x1xf32> to vector<16x128xf32>
    %103 = arith.subf %95, %102 : vector<16x128xf32>
    %104 = arith.mulf %103, %103 : vector<16x128xf32>
    %cst_36 = arith.constant dense<0.000000e+00> : vector<16xf32>
    %105 = vector.multi_reduction <add>, %104, %cst_36 [1] : vector<16x128xf32> to vector<16xf32>
    %106 = vector.shape_cast %105 : vector<16xf32> to vector<16x1xf32>
    %cst_37 = arith.constant 1.280000e+02 : f32
    %107 = vector.broadcast %cst_37 : f32 to vector<16x1xf32>
    %108 = arith.divf %106, %107 : vector<16x1xf32>
    %cst_38 = arith.constant 9.99999996E-13 : f32
    %109 = vector.broadcast %cst_38 : f32 to vector<16x1xf32>
    %110 = arith.addf %108, %109 : vector<16x1xf32>
    %111 = math.rsqrt %110 : vector<16x1xf32>
    %112 = vector.broadcast %111 : vector<16x1xf32> to vector<16x128xf32>
    %113 = arith.mulf %103, %112 : vector<16x128xf32>
    %114 = vector.broadcast %96 : vector<1x128xf32> to vector<16x128xf32>
    %115 = arith.mulf %113, %114 : vector<16x128xf32>
    %116 = vector.broadcast %97 : vector<1x128xf32> to vector<16x128xf32>
    %117 = arith.addf %115, %116 : vector<16x128xf32>
    %118 = arith.truncf %117 : vector<16x128xf32> to vector<16x128xbf16>
    %c0_39 = arith.constant 0 : index
    %c0_40 = arith.constant 0 : index
    %c0_41 = arith.constant 0 : index
    %119 = vector.load %arg4[%c0_39, %c0_40, %c0_41] : memref<2x128x512xbf16, #tpu.memory_space<vmem>>, vector<1x128x512xbf16>
    %120 = vector.shape_cast %119 : vector<1x128x512xbf16> to vector<128x512xbf16>
    %cst_42 = arith.constant dense<0.000000e+00> : vector<16x512xf32>
    %121 = tpu.matmul %118, %120, %cst_42 {dimension_numbers = #tpu.dot_dimension_numbers<[1], [0], [0], [1], [0, 0, 1, 1], [], []>} : vector<16x128xbf16>, vector<128x512xbf16>, vector<16x512xf32> -> vector<16x512xf32>
    %c0_43 = arith.constant 0 : index
    %c0_44 = arith.constant 0 : index
    %122 = vector.load %arg11[%c0_43, %c0_44] : memref<4x2048xf32, #tpu.memory_space<vmem>>, vector<1x512xf32>
    %123 = vector.broadcast %122 : vector<1x512xf32> to vector<16x512xf32>
    %124 = arith.addf %121, %123 : vector<16x512xf32>
    %125 = arith.mulf %124, %124 : vector<16x512xf32>
    %126 = arith.mulf %124, %125 : vector<16x512xf32>
    %cst_45 = arith.constant 4.471500e-02 : f32
    %127 = vector.broadcast %cst_45 : f32 to vector<16x512xf32>
    %128 = arith.mulf %127, %126 : vector<16x512xf32>
    %129 = arith.addf %124, %128 : vector<16x512xf32>
    %cst_46 = arith.constant 0.797884583 : f32
    %130 = vector.broadcast %cst_46 : f32 to vector<16x512xf32>
    %131 = arith.mulf %130, %129 : vector<16x512xf32>
    %132 = math.tanh %131 : vector<16x512xf32>
    %cst_47 = arith.constant 1.000000e+00 : f32
    %133 = vector.broadcast %cst_47 : f32 to vector<16x512xf32>
    %134 = arith.addf %133, %132 : vector<16x512xf32>
    %cst_48 = arith.constant 5.000000e-01 : f32
    %135 = vector.broadcast %cst_48 : f32 to vector<16x512xf32>
    %136 = arith.mulf %135, %134 : vector<16x512xf32>
    %137 = arith.mulf %124, %136 : vector<16x512xf32>
    %138 = arith.truncf %137 : vector<16x512xf32> to vector<16x512xbf16>
    %c0_49 = arith.constant 0 : index
    %c0_50 = arith.constant 0 : index
    %c0_51 = arith.constant 0 : index
    %139 = vector.load %arg5[%c0_49, %c0_50, %c0_51] : memref<2x512x128xbf16, #tpu.memory_space<vmem>>, vector<1x512x128xbf16>
    %140 = vector.shape_cast %139 : vector<1x512x128xbf16> to vector<512x128xbf16>
    %cst_52 = arith.constant dense<0.000000e+00> : vector<16x128xf32>
    %141 = tpu.matmul %138, %140, %cst_52 {dimension_numbers = #tpu.dot_dimension_numbers<[1], [0], [0], [1], [0, 0, 1, 1], [], []>} : vector<16x512xbf16>, vector<512x128xbf16>, vector<16x128xf32> -> vector<16x128xf32>
    %c5 = arith.constant 5 : index
    %c0_53 = arith.constant 0 : index
    %142 = vector.load %arg9[%c5, %c0_53] : memref<32x128xf32, #tpu.memory_space<vmem>>, vector<1x128xf32>
    %143 = vector.broadcast %142 : vector<1x128xf32> to vector<16x128xf32>
    %144 = arith.addf %141, %143 : vector<16x128xf32>
    %145 = arith.addf %117, %144 : vector<16x128xf32>
    %c6 = arith.constant 6 : index
    %c0_54 = arith.constant 0 : index
    %146 = vector.load %arg9[%c6, %c0_54] : memref<32x128xf32, #tpu.memory_space<vmem>>, vector<1x128xf32>
    %c7 = arith.constant 7 : index
    %c0_55 = arith.constant 0 : index
    %147 = vector.load %arg9[%c7, %c0_55] : memref<32x128xf32, #tpu.memory_space<vmem>>, vector<1x128xf32>
    %cst_56 = arith.constant dense<0.000000e+00> : vector<16xf32>
    %148 = vector.multi_reduction <add>, %145, %cst_56 [1] : vector<16x128xf32> to vector<16xf32>
    %149 = vector.shape_cast %148 : vector<16xf32> to vector<16x1xf32>
    %cst_57 = arith.constant 1.280000e+02 : f32
    %150 = vector.broadcast %cst_57 : f32 to vector<16x1xf32>
    %151 = arith.divf %149, %150 : vector<16x1xf32>
    %152 = vector.broadcast %151 : vector<16x1xf32> to vector<16x128xf32>
    %153 = arith.subf %145, %152 : vector<16x128xf32>
    %154 = arith.mulf %153, %153 : vector<16x128xf32>
    %cst_58 = arith.constant dense<0.000000e+00> : vector<16xf32>
    %155 = vector.multi_reduction <add>, %154, %cst_58 [1] : vector<16x128xf32> to vector<16xf32>
    %156 = vector.shape_cast %155 : vector<16xf32> to vector<16x1xf32>
    %cst_59 = arith.constant 1.280000e+02 : f32
    %157 = vector.broadcast %cst_59 : f32 to vector<16x1xf32>
    %158 = arith.divf %156, %157 : vector<16x1xf32>
    %cst_60 = arith.constant 9.99999996E-13 : f32
    %159 = vector.broadcast %cst_60 : f32 to vector<16x1xf32>
    %160 = arith.addf %158, %159 : vector<16x1xf32>
    %161 = math.rsqrt %160 : vector<16x1xf32>
    %162 = vector.broadcast %161 : vector<16x1xf32> to vector<16x128xf32>
    %163 = arith.mulf %153, %162 : vector<16x128xf32>
    %164 = vector.broadcast %146 : vector<1x128xf32> to vector<16x128xf32>
    %165 = arith.mulf %163, %164 : vector<16x128xf32>
    %166 = vector.broadcast %147 : vector<1x128xf32> to vector<16x128xf32>
    %167 = arith.addf %165, %166 : vector<16x128xf32>
    %c1_61 = arith.constant 1 : index
    %c0_62 = arith.constant 0 : index
    %c0_63 = arith.constant 0 : index
    %168 = vector.load %arg2[%c1_61, %c0_62, %c0_63] : memref<4x128x384xbf16, #tpu.memory_space<vmem>>, vector<1x128x384xbf16>
    %169 = vector.shape_cast %168 : vector<1x128x384xbf16> to vector<128x384xbf16>
    %c1_64 = arith.constant 1 : index
    %c0_65 = arith.constant 0 : index
    %170 = vector.load %arg10[%c1_64, %c0_65] : memref<4x384xf32, #tpu.memory_space<vmem>>, vector<1x384xf32>
    %c1_66 = arith.constant 1 : index
    %c0_67 = arith.constant 0 : index
    %c0_68 = arith.constant 0 : index
    %171 = vector.load %arg3[%c1_66, %c0_67, %c0_68] : memref<4x128x128xbf16, #tpu.memory_space<vmem>>, vector<1x128x128xbf16>
    %172 = vector.shape_cast %171 : vector<1x128x128xbf16> to vector<128x128xbf16>
    %c8 = arith.constant 8 : index
    %c0_69 = arith.constant 0 : index
    %173 = vector.load %arg9[%c8, %c0_69] : memref<32x128xf32, #tpu.memory_space<vmem>>, vector<1x128xf32>
    %174 = arith.truncf %167 : vector<16x128xf32> to vector<16x128xbf16>
    %cst_70 = arith.constant dense<0.000000e+00> : vector<16x384xf32>
    %175 = tpu.matmul %174, %169, %cst_70 {dimension_numbers = #tpu.dot_dimension_numbers<[1], [0], [0], [1], [0, 0, 1, 1], [], []>} : vector<16x128xbf16>, vector<128x384xbf16>, vector<16x384xf32> -> vector<16x384xf32>
    %176 = vector.broadcast %170 : vector<1x384xf32> to vector<16x384xf32>
    %177 = arith.addf %175, %176 : vector<16x384xf32>
    %178 = vector.extract_strided_slice %177 {offsets = [0, 0], sizes = [16, 64], strides = [1, 1]} : vector<16x384xf32> to vector<16x64xf32>
    %179 = vector.shape_cast %178 : vector<16x64xf32> to vector<2x8x64xf32>
    %180 = vector.extract_strided_slice %177 {offsets = [0, 128], sizes = [16, 64], strides = [1, 1]} : vector<16x384xf32> to vector<16x64xf32>
    %181 = vector.shape_cast %180 : vector<16x64xf32> to vector<2x8x64xf32>
    %182 = vector.extract_strided_slice %177 {offsets = [0, 256], sizes = [16, 64], strides = [1, 1]} : vector<16x384xf32> to vector<16x64xf32>
    %183 = vector.shape_cast %182 : vector<16x64xf32> to vector<2x8x64xf32>
    %184 = arith.truncf %179 : vector<2x8x64xf32> to vector<2x8x64xbf16>
    %185 = arith.truncf %181 : vector<2x8x64xf32> to vector<2x8x64xbf16>
    "tpu.trace_start"() <{level = 10 : i32, message = "bqd,bkd->bqk"}> : () -> ()
    %cst_71 = arith.constant dense<0.000000e+00> : vector<2x8x8xf32>
    %186 = tpu.matmul %184, %185, %cst_71 {dimension_numbers = #tpu.dot_dimension_numbers<[2], [2], [1], [1], [0, 0, 0, 1, 1, 1], [0], [0]>} : vector<2x8x64xbf16>, vector<2x8x64xbf16>, vector<2x8x8xf32> -> vector<2x8x8xf32>
    "tpu.trace_stop"() : () -> ()
    %cst_72 = arith.constant 1.250000e-01 : f32
    %187 = vector.broadcast %cst_72 : f32 to vector<2x8x8xf32>
    %188 = arith.mulf %186, %187 : vector<2x8x8xf32>
    %189 = arith.addf %188, %4 : vector<2x8x8xf32>
    %cst_73 = arith.constant dense<0xFF800000> : vector<2x8xf32>
    %190 = vector.multi_reduction <maximumf>, %189, %cst_73 [2] : vector<2x8x8xf32> to vector<2x8xf32>
    %191 = vector.shape_cast %190 : vector<2x8xf32> to vector<2x8x1xf32>
    %192 = vector.broadcast %191 : vector<2x8x1xf32> to vector<2x8x8xf32>
    %193 = arith.subf %189, %192 : vector<2x8x8xf32>
    %194 = math.exp %193 : vector<2x8x8xf32>
    %cst_74 = arith.constant dense<0.000000e+00> : vector<2x8xf32>
    %195 = vector.multi_reduction <add>, %194, %cst_74 [2] : vector<2x8x8xf32> to vector<2x8xf32>
    %196 = vector.shape_cast %195 : vector<2x8xf32> to vector<2x8x1xf32>
    %197 = tpu.reciprocal %196 {approx = true} : vector<2x8x1xf32> -> vector<2x8x1xf32>
    %198 = vector.broadcast %197 : vector<2x8x1xf32> to vector<2x8x8xf32>
    %199 = arith.mulf %194, %198 : vector<2x8x8xf32>
    %200 = arith.truncf %199 : vector<2x8x8xf32> to vector<2x8x8xbf16>
    %201 = arith.truncf %183 : vector<2x8x64xf32> to vector<2x8x64xbf16>
    "tpu.trace_start"() <{level = 10 : i32, message = "bqk,bkd->bqd"}> : () -> ()
    %cst_75 = arith.constant dense<0.000000e+00> : vector<2x8x64xf32>
    %202 = tpu.matmul %200, %201, %cst_75 {dimension_numbers = #tpu.dot_dimension_numbers<[2], [1], [1], [2], [0, 0, 0, 1, 1, 2], [0], [0]>} : vector<2x8x8xbf16>, vector<2x8x64xbf16>, vector<2x8x64xf32> -> vector<2x8x64xf32>
    "tpu.trace_stop"() : () -> ()
    %203 = vector.shape_cast %202 : vector<2x8x64xf32> to vector<16x64xf32>
    %204 = vector.extract_strided_slice %177 {offsets = [0, 64], sizes = [16, 64], strides = [1, 1]} : vector<16x384xf32> to vector<16x64xf32>
    %205 = vector.shape_cast %204 : vector<16x64xf32> to vector<2x8x64xf32>
    %206 = vector.extract_strided_slice %177 {offsets = [0, 192], sizes = [16, 64], strides = [1, 1]} : vector<16x384xf32> to vector<16x64xf32>
    %207 = vector.shape_cast %206 : vector<16x64xf32> to vector<2x8x64xf32>
    %208 = vector.extract_strided_slice %177 {offsets = [0, 320], sizes = [16, 64], strides = [1, 1]} : vector<16x384xf32> to vector<16x64xf32>
    %209 = vector.shape_cast %208 : vector<16x64xf32> to vector<2x8x64xf32>
    %210 = arith.truncf %205 : vector<2x8x64xf32> to vector<2x8x64xbf16>
    %211 = arith.truncf %207 : vector<2x8x64xf32> to vector<2x8x64xbf16>
    "tpu.trace_start"() <{level = 10 : i32, message = "bqd,bkd->bqk"}> : () -> ()
    %cst_76 = arith.constant dense<0.000000e+00> : vector<2x8x8xf32>
    %212 = tpu.matmul %210, %211, %cst_76 {dimension_numbers = #tpu.dot_dimension_numbers<[2], [2], [1], [1], [0, 0, 0, 1, 1, 1], [0], [0]>} : vector<2x8x64xbf16>, vector<2x8x64xbf16>, vector<2x8x8xf32> -> vector<2x8x8xf32>
    "tpu.trace_stop"() : () -> ()
    %cst_77 = arith.constant 1.250000e-01 : f32
    %213 = vector.broadcast %cst_77 : f32 to vector<2x8x8xf32>
    %214 = arith.mulf %212, %213 : vector<2x8x8xf32>
    %215 = arith.addf %214, %4 : vector<2x8x8xf32>
    %cst_78 = arith.constant dense<0xFF800000> : vector<2x8xf32>
    %216 = vector.multi_reduction <maximumf>, %215, %cst_78 [2] : vector<2x8x8xf32> to vector<2x8xf32>
    %217 = vector.shape_cast %216 : vector<2x8xf32> to vector<2x8x1xf32>
    %218 = vector.broadcast %217 : vector<2x8x1xf32> to vector<2x8x8xf32>
    %219 = arith.subf %215, %218 : vector<2x8x8xf32>
    %220 = math.exp %219 : vector<2x8x8xf32>
    %cst_79 = arith.constant dense<0.000000e+00> : vector<2x8xf32>
    %221 = vector.multi_reduction <add>, %220, %cst_79 [2] : vector<2x8x8xf32> to vector<2x8xf32>
    %222 = vector.shape_cast %221 : vector<2x8xf32> to vector<2x8x1xf32>
    %223 = tpu.reciprocal %222 {approx = true} : vector<2x8x1xf32> -> vector<2x8x1xf32>
    %224 = vector.broadcast %223 : vector<2x8x1xf32> to vector<2x8x8xf32>
    %225 = arith.mulf %220, %224 : vector<2x8x8xf32>
    %226 = arith.truncf %225 : vector<2x8x8xf32> to vector<2x8x8xbf16>
    %227 = arith.truncf %209 : vector<2x8x64xf32> to vector<2x8x64xbf16>
    "tpu.trace_start"() <{level = 10 : i32, message = "bqk,bkd->bqd"}> : () -> ()
    %cst_80 = arith.constant dense<0.000000e+00> : vector<2x8x64xf32>
    %228 = tpu.matmul %226, %227, %cst_80 {dimension_numbers = #tpu.dot_dimension_numbers<[2], [1], [1], [2], [0, 0, 0, 1, 1, 2], [0], [0]>} : vector<2x8x8xbf16>, vector<2x8x64xbf16>, vector<2x8x64xf32> -> vector<2x8x64xf32>
    "tpu.trace_stop"() : () -> ()
    %229 = vector.shape_cast %228 : vector<2x8x64xf32> to vector<16x64xf32>
    %230 = tpu.concatenate %203, %229 in 1 : vector<16x64xf32>, vector<16x64xf32> -> vector<16x128xf32>
    %231 = arith.truncf %230 : vector<16x128xf32> to vector<16x128xbf16>
    %cst_81 = arith.constant dense<0.000000e+00> : vector<16x128xf32>
    %232 = tpu.matmul %231, %172, %cst_81 {dimension_numbers = #tpu.dot_dimension_numbers<[1], [0], [0], [1], [0, 0, 1, 1], [], []>} : vector<16x128xbf16>, vector<128x128xbf16>, vector<16x128xf32> -> vector<16x128xf32>
    %233 = vector.broadcast %173 : vector<1x128xf32> to vector<16x128xf32>
    %234 = arith.addf %232, %233 : vector<16x128xf32>
    %235 = arith.addf %167, %234 : vector<16x128xf32>
    %c9 = arith.constant 9 : index
    %c0_82 = arith.constant 0 : index
    %236 = vector.load %arg9[%c9, %c0_82] : memref<32x128xf32, #tpu.memory_space<vmem>>, vector<1x128xf32>
    %c10 = arith.constant 10 : index
    %c0_83 = arith.constant 0 : index
    %237 = vector.load %arg9[%c10, %c0_83] : memref<32x128xf32, #tpu.memory_space<vmem>>, vector<1x128xf32>
    %cst_84 = arith.constant dense<0.000000e+00> : vector<16xf32>
    %238 = vector.multi_reduction <add>, %235, %cst_84 [1] : vector<16x128xf32> to vector<16xf32>
    %239 = vector.shape_cast %238 : vector<16xf32> to vector<16x1xf32>
    %cst_85 = arith.constant 1.280000e+02 : f32
    %240 = vector.broadcast %cst_85 : f32 to vector<16x1xf32>
    %241 = arith.divf %239, %240 : vector<16x1xf32>
    %242 = vector.broadcast %241 : vector<16x1xf32> to vector<16x128xf32>
    %243 = arith.subf %235, %242 : vector<16x128xf32>
    %244 = arith.mulf %243, %243 : vector<16x128xf32>
    %cst_86 = arith.constant dense<0.000000e+00> : vector<16xf32>
    %245 = vector.multi_reduction <add>, %244, %cst_86 [1] : vector<16x128xf32> to vector<16xf32>
    %246 = vector.shape_cast %245 : vector<16xf32> to vector<16x1xf32>
    %cst_87 = arith.constant 1.280000e+02 : f32
    %247 = vector.broadcast %cst_87 : f32 to vector<16x1xf32>
    %248 = arith.divf %246, %247 : vector<16x1xf32>
    %cst_88 = arith.constant 9.99999996E-13 : f32
    %249 = vector.broadcast %cst_88 : f32 to vector<16x1xf32>
    %250 = arith.addf %248, %249 : vector<16x1xf32>
    %251 = math.rsqrt %250 : vector<16x1xf32>
    %252 = vector.broadcast %251 : vector<16x1xf32> to vector<16x128xf32>
    %253 = arith.mulf %243, %252 : vector<16x128xf32>
    %254 = vector.broadcast %236 : vector<1x128xf32> to vector<16x128xf32>
    %255 = arith.mulf %253, %254 : vector<16x128xf32>
    %256 = vector.broadcast %237 : vector<1x128xf32> to vector<16x128xf32>
    %257 = arith.addf %255, %256 : vector<16x128xf32>
    %258 = arith.truncf %257 : vector<16x128xf32> to vector<16x128xbf16>
    %c1_89 = arith.constant 1 : index
    %c0_90 = arith.constant 0 : index
    %c0_91 = arith.constant 0 : index
    %259 = vector.load %arg4[%c1_89, %c0_90, %c0_91] : memref<2x128x512xbf16, #tpu.memory_space<vmem>>, vector<1x128x512xbf16>
    %260 = vector.shape_cast %259 : vector<1x128x512xbf16> to vector<128x512xbf16>
    %cst_92 = arith.constant dense<0.000000e+00> : vector<16x512xf32>
    %261 = tpu.matmul %258, %260, %cst_92 {dimension_numbers = #tpu.dot_dimension_numbers<[1], [0], [0], [1], [0, 0, 1, 1], [], []>} : vector<16x128xbf16>, vector<128x512xbf16>, vector<16x512xf32> -> vector<16x512xf32>
    %c1_93 = arith.constant 1 : index
    %c0_94 = arith.constant 0 : index
    %262 = vector.load %arg11[%c1_93, %c0_94] : memref<4x2048xf32, #tpu.memory_space<vmem>>, vector<1x512xf32>
    %263 = vector.broadcast %262 : vector<1x512xf32> to vector<16x512xf32>
    %264 = arith.addf %261, %263 : vector<16x512xf32>
    %265 = arith.mulf %264, %264 : vector<16x512xf32>
    %266 = arith.mulf %264, %265 : vector<16x512xf32>
    %cst_95 = arith.constant 4.471500e-02 : f32
    %267 = vector.broadcast %cst_95 : f32 to vector<16x512xf32>
    %268 = arith.mulf %267, %266 : vector<16x512xf32>
    %269 = arith.addf %264, %268 : vector<16x512xf32>
    %cst_96 = arith.constant 0.797884583 : f32
    %270 = vector.broadcast %cst_96 : f32 to vector<16x512xf32>
    %271 = arith.mulf %270, %269 : vector<16x512xf32>
    %272 = math.tanh %271 : vector<16x512xf32>
    %cst_97 = arith.constant 1.000000e+00 : f32
    %273 = vector.broadcast %cst_97 : f32 to vector<16x512xf32>
    %274 = arith.addf %273, %272 : vector<16x512xf32>
    %cst_98 = arith.constant 5.000000e-01 : f32
    %275 = vector.broadcast %cst_98 : f32 to vector<16x512xf32>
    %276 = arith.mulf %275, %274 : vector<16x512xf32>
    %277 = arith.mulf %264, %276 : vector<16x512xf32>
    %278 = arith.truncf %277 : vector<16x512xf32> to vector<16x512xbf16>
    %c1_99 = arith.constant 1 : index
    %c0_100 = arith.constant 0 : index
    %c0_101 = arith.constant 0 : index
    %279 = vector.load %arg5[%c1_99, %c0_100, %c0_101] : memref<2x512x128xbf16, #tpu.memory_space<vmem>>, vector<1x512x128xbf16>
    %280 = vector.shape_cast %279 : vector<1x512x128xbf16> to vector<512x128xbf16>
    %cst_102 = arith.constant dense<0.000000e+00> : vector<16x128xf32>
    %281 = tpu.matmul %278, %280, %cst_102 {dimension_numbers = #tpu.dot_dimension_numbers<[1], [0], [0], [1], [0, 0, 1, 1], [], []>} : vector<16x512xbf16>, vector<512x128xbf16>, vector<16x128xf32> -> vector<16x128xf32>
    %c11 = arith.constant 11 : index
    %c0_103 = arith.constant 0 : index
    %282 = vector.load %arg9[%c11, %c0_103] : memref<32x128xf32, #tpu.memory_space<vmem>>, vector<1x128xf32>
    %283 = vector.broadcast %282 : vector<1x128xf32> to vector<16x128xf32>
    %284 = arith.addf %281, %283 : vector<16x128xf32>
    %285 = arith.addf %257, %284 : vector<16x128xf32>
    %c12 = arith.constant 12 : index
    %c0_104 = arith.constant 0 : index
    %286 = vector.load %arg9[%c12, %c0_104] : memref<32x128xf32, #tpu.memory_space<vmem>>, vector<1x128xf32>
    %c13 = arith.constant 13 : index
    %c0_105 = arith.constant 0 : index
    %287 = vector.load %arg9[%c13, %c0_105] : memref<32x128xf32, #tpu.memory_space<vmem>>, vector<1x128xf32>
    %cst_106 = arith.constant dense<0.000000e+00> : vector<16xf32>
    %288 = vector.multi_reduction <add>, %285, %cst_106 [1] : vector<16x128xf32> to vector<16xf32>
    %289 = vector.shape_cast %288 : vector<16xf32> to vector<16x1xf32>
    %cst_107 = arith.constant 1.280000e+02 : f32
    %290 = vector.broadcast %cst_107 : f32 to vector<16x1xf32>
    %291 = arith.divf %289, %290 : vector<16x1xf32>
    %292 = vector.broadcast %291 : vector<16x1xf32> to vector<16x128xf32>
    %293 = arith.subf %285, %292 : vector<16x128xf32>
    %294 = arith.mulf %293, %293 : vector<16x128xf32>
    %cst_108 = arith.constant dense<0.000000e+00> : vector<16xf32>
    %295 = vector.multi_reduction <add>, %294, %cst_108 [1] : vector<16x128xf32> to vector<16xf32>
    %296 = vector.shape_cast %295 : vector<16xf32> to vector<16x1xf32>
    %cst_109 = arith.constant 1.280000e+02 : f32
    %297 = vector.broadcast %cst_109 : f32 to vector<16x1xf32>
    %298 = arith.divf %296, %297 : vector<16x1xf32>
    %cst_110 = arith.constant 9.99999996E-13 : f32
    %299 = vector.broadcast %cst_110 : f32 to vector<16x1xf32>
    %300 = arith.addf %298, %299 : vector<16x1xf32>
    %301 = math.rsqrt %300 : vector<16x1xf32>
    %302 = vector.broadcast %301 : vector<16x1xf32> to vector<16x128xf32>
    %303 = arith.mulf %293, %302 : vector<16x128xf32>
    %304 = vector.broadcast %286 : vector<1x128xf32> to vector<16x128xf32>
    %305 = arith.mulf %303, %304 : vector<16x128xf32>
    %306 = vector.broadcast %287 : vector<1x128xf32> to vector<16x128xf32>
    %307 = arith.addf %305, %306 : vector<16x128xf32>
    %308 = arith.addf %307, %27 : vector<16x128xf32>
    %c14 = arith.constant 14 : index
    %c0_111 = arith.constant 0 : index
    %309 = vector.load %arg9[%c14, %c0_111] : memref<32x128xf32, #tpu.memory_space<vmem>>, vector<1x128xf32>
    %c15 = arith.constant 15 : index
    %c0_112 = arith.constant 0 : index
    %310 = vector.load %arg9[%c15, %c0_112] : memref<32x128xf32, #tpu.memory_space<vmem>>, vector<1x128xf32>
    %cst_113 = arith.constant dense<0.000000e+00> : vector<16xf32>
    %311 = vector.multi_reduction <add>, %308, %cst_113 [1] : vector<16x128xf32> to vector<16xf32>
    %312 = vector.shape_cast %311 : vector<16xf32> to vector<16x1xf32>
    %cst_114 = arith.constant 1.280000e+02 : f32
    %313 = vector.broadcast %cst_114 : f32 to vector<16x1xf32>
    %314 = arith.divf %312, %313 : vector<16x1xf32>
    %315 = vector.broadcast %314 : vector<16x1xf32> to vector<16x128xf32>
    %316 = arith.subf %308, %315 : vector<16x128xf32>
    %317 = arith.mulf %316, %316 : vector<16x128xf32>
    %cst_115 = arith.constant dense<0.000000e+00> : vector<16xf32>
    %318 = vector.multi_reduction <add>, %317, %cst_115 [1] : vector<16x128xf32> to vector<16xf32>
    %319 = vector.shape_cast %318 : vector<16xf32> to vector<16x1xf32>
    %cst_116 = arith.constant 1.280000e+02 : f32
    %320 = vector.broadcast %cst_116 : f32 to vector<16x1xf32>
    %321 = arith.divf %319, %320 : vector<16x1xf32>
    %cst_117 = arith.constant 9.99999974E-6 : f32
    %322 = vector.broadcast %cst_117 : f32 to vector<16x1xf32>
    %323 = arith.addf %321, %322 : vector<16x1xf32>
    %324 = math.rsqrt %323 : vector<16x1xf32>
    %325 = vector.broadcast %324 : vector<16x1xf32> to vector<16x128xf32>
    %326 = arith.mulf %316, %325 : vector<16x128xf32>
    %327 = vector.broadcast %309 : vector<1x128xf32> to vector<16x128xf32>
    %328 = arith.mulf %326, %327 : vector<16x128xf32>
    %329 = vector.broadcast %310 : vector<1x128xf32> to vector<16x128xf32>
    %330 = arith.addf %328, %329 : vector<16x128xf32>
    %c0_i32_118 = arith.constant 0 : i32
    %331 = tpu.memref_slice %arg15[%c0_i32_118] : memref<2x!tpu.dma_semaphore, #tpu.memory_space<semaphore_mem>> -> memref<1x!tpu.dma_semaphore, #tpu.memory_space<semaphore_mem>>
    %332 = tpu.memref_squeeze %331 : memref<1x!tpu.dma_semaphore, #tpu.memory_space<semaphore_mem>> -> memref<!tpu.dma_semaphore, #tpu.memory_space<semaphore_mem>>
    tpu.wait_dma2 semaphore(%332 : memref<!tpu.dma_semaphore, #tpu.memory_space<semaphore_mem>>) src(%arg6 : memref<2x128x2048xbf16, #tpu.memory_space<any>>) dst(%arg13 : memref<2x128x2048xbf16, #tpu.memory_space<vmem>>)
    %c1_i32_119 = arith.constant 1 : i32
    %333 = tpu.memref_slice %arg15[%c1_i32_119] : memref<2x!tpu.dma_semaphore, #tpu.memory_space<semaphore_mem>> -> memref<1x!tpu.dma_semaphore, #tpu.memory_space<semaphore_mem>>
    %334 = tpu.memref_squeeze %333 : memref<1x!tpu.dma_semaphore, #tpu.memory_space<semaphore_mem>> -> memref<!tpu.dma_semaphore, #tpu.memory_space<semaphore_mem>>
    tpu.wait_dma2 semaphore(%334 : memref<!tpu.dma_semaphore, #tpu.memory_space<semaphore_mem>>) src(%arg7 : memref<2x2048x128xbf16, #tpu.memory_space<any>>) dst(%arg14 : memref<2x2048x128xbf16, #tpu.memory_space<vmem>>)
    %c2_120 = arith.constant 2 : index
    %c0_121 = arith.constant 0 : index
    %c0_122 = arith.constant 0 : index
    %335 = vector.load %arg2[%c2_120, %c0_121, %c0_122] : memref<4x128x384xbf16, #tpu.memory_space<vmem>>, vector<1x128x384xbf16>
    %336 = vector.shape_cast %335 : vector<1x128x384xbf16> to vector<128x384xbf16>
    %c2_123 = arith.constant 2 : index
    %c0_124 = arith.constant 0 : index
    %337 = vector.load %arg10[%c2_123, %c0_124] : memref<4x384xf32, #tpu.memory_space<vmem>>, vector<1x384xf32>
    %c2_125 = arith.constant 2 : index
    %c0_126 = arith.constant 0 : index
    %c0_127 = arith.constant 0 : index
    %338 = vector.load %arg3[%c2_125, %c0_126, %c0_127] : memref<4x128x128xbf16, #tpu.memory_space<vmem>>, vector<1x128x128xbf16>
    %339 = vector.shape_cast %338 : vector<1x128x128xbf16> to vector<128x128xbf16>
    %c16 = arith.constant 16 : index
    %c0_128 = arith.constant 0 : index
    %340 = vector.load %arg9[%c16, %c0_128] : memref<32x128xf32, #tpu.memory_space<vmem>>, vector<1x128xf32>
    %341 = arith.truncf %330 : vector<16x128xf32> to vector<16x128xbf16>
    %cst_129 = arith.constant dense<0.000000e+00> : vector<16x384xf32>
    %342 = tpu.matmul %341, %336, %cst_129 {dimension_numbers = #tpu.dot_dimension_numbers<[1], [0], [0], [1], [0, 0, 1, 1], [], []>} : vector<16x128xbf16>, vector<128x384xbf16>, vector<16x384xf32> -> vector<16x384xf32>
    %343 = vector.broadcast %337 : vector<1x384xf32> to vector<16x384xf32>
    %344 = arith.addf %342, %343 : vector<16x384xf32>
    %345 = vector.extract_strided_slice %344 {offsets = [0, 0], sizes = [16, 64], strides = [1, 1]} : vector<16x384xf32> to vector<16x64xf32>
    %346 = vector.shape_cast %345 : vector<16x64xf32> to vector<2x8x64xf32>
    %347 = vector.extract_strided_slice %344 {offsets = [0, 128], sizes = [16, 64], strides = [1, 1]} : vector<16x384xf32> to vector<16x64xf32>
    %348 = vector.shape_cast %347 : vector<16x64xf32> to vector<2x8x64xf32>
    %349 = vector.extract_strided_slice %344 {offsets = [0, 256], sizes = [16, 64], strides = [1, 1]} : vector<16x384xf32> to vector<16x64xf32>
    %350 = vector.shape_cast %349 : vector<16x64xf32> to vector<2x8x64xf32>
    %351 = arith.truncf %346 : vector<2x8x64xf32> to vector<2x8x64xbf16>
    %352 = arith.truncf %348 : vector<2x8x64xf32> to vector<2x8x64xbf16>
    "tpu.trace_start"() <{level = 10 : i32, message = "bqd,bkd->bqk"}> : () -> ()
    %cst_130 = arith.constant dense<0.000000e+00> : vector<2x8x8xf32>
    %353 = tpu.matmul %351, %352, %cst_130 {dimension_numbers = #tpu.dot_dimension_numbers<[2], [2], [1], [1], [0, 0, 0, 1, 1, 1], [0], [0]>} : vector<2x8x64xbf16>, vector<2x8x64xbf16>, vector<2x8x8xf32> -> vector<2x8x8xf32>
    "tpu.trace_stop"() : () -> ()
    %cst_131 = arith.constant 1.250000e-01 : f32
    %354 = vector.broadcast %cst_131 : f32 to vector<2x8x8xf32>
    %355 = arith.mulf %353, %354 : vector<2x8x8xf32>
    %356 = arith.addf %355, %4 : vector<2x8x8xf32>
    %cst_132 = arith.constant dense<0xFF800000> : vector<2x8xf32>
    %357 = vector.multi_reduction <maximumf>, %356, %cst_132 [2] : vector<2x8x8xf32> to vector<2x8xf32>
    %358 = vector.shape_cast %357 : vector<2x8xf32> to vector<2x8x1xf32>
    %359 = vector.broadcast %358 : vector<2x8x1xf32> to vector<2x8x8xf32>
    %360 = arith.subf %356, %359 : vector<2x8x8xf32>
    %361 = math.exp %360 : vector<2x8x8xf32>
    %cst_133 = arith.constant dense<0.000000e+00> : vector<2x8xf32>
    %362 = vector.multi_reduction <add>, %361, %cst_133 [2] : vector<2x8x8xf32> to vector<2x8xf32>
    %363 = vector.shape_cast %362 : vector<2x8xf32> to vector<2x8x1xf32>
    %364 = tpu.reciprocal %363 {approx = true} : vector<2x8x1xf32> -> vector<2x8x1xf32>
    %365 = vector.broadcast %364 : vector<2x8x1xf32> to vector<2x8x8xf32>
    %366 = arith.mulf %361, %365 : vector<2x8x8xf32>
    %367 = arith.truncf %366 : vector<2x8x8xf32> to vector<2x8x8xbf16>
    %368 = arith.truncf %350 : vector<2x8x64xf32> to vector<2x8x64xbf16>
    "tpu.trace_start"() <{level = 10 : i32, message = "bqk,bkd->bqd"}> : () -> ()
    %cst_134 = arith.constant dense<0.000000e+00> : vector<2x8x64xf32>
    %369 = tpu.matmul %367, %368, %cst_134 {dimension_numbers = #tpu.dot_dimension_numbers<[2], [1], [1], [2], [0, 0, 0, 1, 1, 2], [0], [0]>} : vector<2x8x8xbf16>, vector<2x8x64xbf16>, vector<2x8x64xf32> -> vector<2x8x64xf32>
    "tpu.trace_stop"() : () -> ()
    %370 = vector.shape_cast %369 : vector<2x8x64xf32> to vector<16x64xf32>
    %371 = vector.extract_strided_slice %344 {offsets = [0, 64], sizes = [16, 64], strides = [1, 1]} : vector<16x384xf32> to vector<16x64xf32>
    %372 = vector.shape_cast %371 : vector<16x64xf32> to vector<2x8x64xf32>
    %373 = vector.extract_strided_slice %344 {offsets = [0, 192], sizes = [16, 64], strides = [1, 1]} : vector<16x384xf32> to vector<16x64xf32>
    %374 = vector.shape_cast %373 : vector<16x64xf32> to vector<2x8x64xf32>
    %375 = vector.extract_strided_slice %344 {offsets = [0, 320], sizes = [16, 64], strides = [1, 1]} : vector<16x384xf32> to vector<16x64xf32>
    %376 = vector.shape_cast %375 : vector<16x64xf32> to vector<2x8x64xf32>
    %377 = arith.truncf %372 : vector<2x8x64xf32> to vector<2x8x64xbf16>
    %378 = arith.truncf %374 : vector<2x8x64xf32> to vector<2x8x64xbf16>
    "tpu.trace_start"() <{level = 10 : i32, message = "bqd,bkd->bqk"}> : () -> ()
    %cst_135 = arith.constant dense<0.000000e+00> : vector<2x8x8xf32>
    %379 = tpu.matmul %377, %378, %cst_135 {dimension_numbers = #tpu.dot_dimension_numbers<[2], [2], [1], [1], [0, 0, 0, 1, 1, 1], [0], [0]>} : vector<2x8x64xbf16>, vector<2x8x64xbf16>, vector<2x8x8xf32> -> vector<2x8x8xf32>
    "tpu.trace_stop"() : () -> ()
    %cst_136 = arith.constant 1.250000e-01 : f32
    %380 = vector.broadcast %cst_136 : f32 to vector<2x8x8xf32>
    %381 = arith.mulf %379, %380 : vector<2x8x8xf32>
    %382 = arith.addf %381, %4 : vector<2x8x8xf32>
    %cst_137 = arith.constant dense<0xFF800000> : vector<2x8xf32>
    %383 = vector.multi_reduction <maximumf>, %382, %cst_137 [2] : vector<2x8x8xf32> to vector<2x8xf32>
    %384 = vector.shape_cast %383 : vector<2x8xf32> to vector<2x8x1xf32>
    %385 = vector.broadcast %384 : vector<2x8x1xf32> to vector<2x8x8xf32>
    %386 = arith.subf %382, %385 : vector<2x8x8xf32>
    %387 = math.exp %386 : vector<2x8x8xf32>
    %cst_138 = arith.constant dense<0.000000e+00> : vector<2x8xf32>
    %388 = vector.multi_reduction <add>, %387, %cst_138 [2] : vector<2x8x8xf32> to vector<2x8xf32>
    %389 = vector.shape_cast %388 : vector<2x8xf32> to vector<2x8x1xf32>
    %390 = tpu.reciprocal %389 {approx = true} : vector<2x8x1xf32> -> vector<2x8x1xf32>
    %391 = vector.broadcast %390 : vector<2x8x1xf32> to vector<2x8x8xf32>
    %392 = arith.mulf %387, %391 : vector<2x8x8xf32>
    %393 = arith.truncf %392 : vector<2x8x8xf32> to vector<2x8x8xbf16>
    %394 = arith.truncf %376 : vector<2x8x64xf32> to vector<2x8x64xbf16>
    "tpu.trace_start"() <{level = 10 : i32, message = "bqk,bkd->bqd"}> : () -> ()
    %cst_139 = arith.constant dense<0.000000e+00> : vector<2x8x64xf32>
    %395 = tpu.matmul %393, %394, %cst_139 {dimension_numbers = #tpu.dot_dimension_numbers<[2], [1], [1], [2], [0, 0, 0, 1, 1, 2], [0], [0]>} : vector<2x8x8xbf16>, vector<2x8x64xbf16>, vector<2x8x64xf32> -> vector<2x8x64xf32>
    "tpu.trace_stop"() : () -> ()
    %396 = vector.shape_cast %395 : vector<2x8x64xf32> to vector<16x64xf32>
    %397 = tpu.concatenate %370, %396 in 1 : vector<16x64xf32>, vector<16x64xf32> -> vector<16x128xf32>
    %398 = arith.truncf %397 : vector<16x128xf32> to vector<16x128xbf16>
    %cst_140 = arith.constant dense<0.000000e+00> : vector<16x128xf32>
    %399 = tpu.matmul %398, %339, %cst_140 {dimension_numbers = #tpu.dot_dimension_numbers<[1], [0], [0], [1], [0, 0, 1, 1], [], []>} : vector<16x128xbf16>, vector<128x128xbf16>, vector<16x128xf32> -> vector<16x128xf32>
    %400 = vector.broadcast %340 : vector<1x128xf32> to vector<16x128xf32>
    %401 = arith.addf %399, %400 : vector<16x128xf32>
    %402 = arith.addf %330, %401 : vector<16x128xf32>
    %c17 = arith.constant 17 : index
    %c0_141 = arith.constant 0 : index
    %403 = vector.load %arg9[%c17, %c0_141] : memref<32x128xf32, #tpu.memory_space<vmem>>, vector<1x128xf32>
    %c18 = arith.constant 18 : index
    %c0_142 = arith.constant 0 : index
    %404 = vector.load %arg9[%c18, %c0_142] : memref<32x128xf32, #tpu.memory_space<vmem>>, vector<1x128xf32>
    %cst_143 = arith.constant dense<0.000000e+00> : vector<16xf32>
    %405 = vector.multi_reduction <add>, %402, %cst_143 [1] : vector<16x128xf32> to vector<16xf32>
    %406 = vector.shape_cast %405 : vector<16xf32> to vector<16x1xf32>
    %cst_144 = arith.constant 1.280000e+02 : f32
    %407 = vector.broadcast %cst_144 : f32 to vector<16x1xf32>
    %408 = arith.divf %406, %407 : vector<16x1xf32>
    %409 = vector.broadcast %408 : vector<16x1xf32> to vector<16x128xf32>
    %410 = arith.subf %402, %409 : vector<16x128xf32>
    %411 = arith.mulf %410, %410 : vector<16x128xf32>
    %cst_145 = arith.constant dense<0.000000e+00> : vector<16xf32>
    %412 = vector.multi_reduction <add>, %411, %cst_145 [1] : vector<16x128xf32> to vector<16xf32>
    %413 = vector.shape_cast %412 : vector<16xf32> to vector<16x1xf32>
    %cst_146 = arith.constant 1.280000e+02 : f32
    %414 = vector.broadcast %cst_146 : f32 to vector<16x1xf32>
    %415 = arith.divf %413, %414 : vector<16x1xf32>
    %cst_147 = arith.constant 9.99999974E-6 : f32
    %416 = vector.broadcast %cst_147 : f32 to vector<16x1xf32>
    %417 = arith.addf %415, %416 : vector<16x1xf32>
    %418 = math.rsqrt %417 : vector<16x1xf32>
    %419 = vector.broadcast %418 : vector<16x1xf32> to vector<16x128xf32>
    %420 = arith.mulf %410, %419 : vector<16x128xf32>
    %421 = vector.broadcast %403 : vector<1x128xf32> to vector<16x128xf32>
    %422 = arith.mulf %420, %421 : vector<16x128xf32>
    %423 = vector.broadcast %404 : vector<1x128xf32> to vector<16x128xf32>
    %424 = arith.addf %422, %423 : vector<16x128xf32>
    %425 = arith.truncf %424 : vector<16x128xf32> to vector<16x128xbf16>
    %c0_148 = arith.constant 0 : index
    %c0_149 = arith.constant 0 : index
    %c0_150 = arith.constant 0 : index
    %426 = vector.load %arg13[%c0_148, %c0_149, %c0_150] : memref<2x128x2048xbf16, #tpu.memory_space<vmem>>, vector<1x128x2048xbf16>
    %427 = vector.shape_cast %426 : vector<1x128x2048xbf16> to vector<128x2048xbf16>
    %cst_151 = arith.constant dense<0.000000e+00> : vector<16x2048xf32>
    %428 = tpu.matmul %425, %427, %cst_151 {dimension_numbers = #tpu.dot_dimension_numbers<[1], [0], [0], [1], [0, 0, 1, 1], [], []>} : vector<16x128xbf16>, vector<128x2048xbf16>, vector<16x2048xf32> -> vector<16x2048xf32>
    %c2_152 = arith.constant 2 : index
    %c0_153 = arith.constant 0 : index
    %429 = vector.load %arg11[%c2_152, %c0_153] : memref<4x2048xf32, #tpu.memory_space<vmem>>, vector<1x2048xf32>
    %430 = vector.broadcast %429 : vector<1x2048xf32> to vector<16x2048xf32>
    %431 = arith.addf %428, %430 : vector<16x2048xf32>
    %cst_154 = arith.constant 0.000000e+00 : f32
    %432 = vector.broadcast %cst_154 : f32 to vector<16x2048xf32>
    %433 = arith.maximumf %431, %432 : vector<16x2048xf32>
    %434 = arith.truncf %433 : vector<16x2048xf32> to vector<16x2048xbf16>
    %c0_155 = arith.constant 0 : index
    %c0_156 = arith.constant 0 : index
    %c0_157 = arith.constant 0 : index
    %435 = vector.load %arg14[%c0_155, %c0_156, %c0_157] : memref<2x2048x128xbf16, #tpu.memory_space<vmem>>, vector<1x2048x128xbf16>
    %436 = vector.shape_cast %435 : vector<1x2048x128xbf16> to vector<2048x128xbf16>
    %cst_158 = arith.constant dense<0.000000e+00> : vector<16x128xf32>
    %437 = tpu.matmul %434, %436, %cst_158 {dimension_numbers = #tpu.dot_dimension_numbers<[1], [0], [0], [1], [0, 0, 1, 1], [], []>} : vector<16x2048xbf16>, vector<2048x128xbf16>, vector<16x128xf32> -> vector<16x128xf32>
    %c19 = arith.constant 19 : index
    %c0_159 = arith.constant 0 : index
    %438 = vector.load %arg9[%c19, %c0_159] : memref<32x128xf32, #tpu.memory_space<vmem>>, vector<1x128xf32>
    %439 = vector.broadcast %438 : vector<1x128xf32> to vector<16x128xf32>
    %440 = arith.addf %437, %439 : vector<16x128xf32>
    %441 = arith.addf %424, %440 : vector<16x128xf32>
    %c20 = arith.constant 20 : index
    %c0_160 = arith.constant 0 : index
    %442 = vector.load %arg9[%c20, %c0_160] : memref<32x128xf32, #tpu.memory_space<vmem>>, vector<1x128xf32>
    %c21 = arith.constant 21 : index
    %c0_161 = arith.constant 0 : index
    %443 = vector.load %arg9[%c21, %c0_161] : memref<32x128xf32, #tpu.memory_space<vmem>>, vector<1x128xf32>
    %cst_162 = arith.constant dense<0.000000e+00> : vector<16xf32>
    %444 = vector.multi_reduction <add>, %441, %cst_162 [1] : vector<16x128xf32> to vector<16xf32>
    %445 = vector.shape_cast %444 : vector<16xf32> to vector<16x1xf32>
    %cst_163 = arith.constant 1.280000e+02 : f32
    %446 = vector.broadcast %cst_163 : f32 to vector<16x1xf32>
    %447 = arith.divf %445, %446 : vector<16x1xf32>
    %448 = vector.broadcast %447 : vector<16x1xf32> to vector<16x128xf32>
    %449 = arith.subf %441, %448 : vector<16x128xf32>
    %450 = arith.mulf %449, %449 : vector<16x128xf32>
    %cst_164 = arith.constant dense<0.000000e+00> : vector<16xf32>
    %451 = vector.multi_reduction <add>, %450, %cst_164 [1] : vector<16x128xf32> to vector<16xf32>
    %452 = vector.shape_cast %451 : vector<16xf32> to vector<16x1xf32>
    %cst_165 = arith.constant 1.280000e+02 : f32
    %453 = vector.broadcast %cst_165 : f32 to vector<16x1xf32>
    %454 = arith.divf %452, %453 : vector<16x1xf32>
    %cst_166 = arith.constant 9.99999974E-6 : f32
    %455 = vector.broadcast %cst_166 : f32 to vector<16x1xf32>
    %456 = arith.addf %454, %455 : vector<16x1xf32>
    %457 = math.rsqrt %456 : vector<16x1xf32>
    %458 = vector.broadcast %457 : vector<16x1xf32> to vector<16x128xf32>
    %459 = arith.mulf %449, %458 : vector<16x128xf32>
    %460 = vector.broadcast %442 : vector<1x128xf32> to vector<16x128xf32>
    %461 = arith.mulf %459, %460 : vector<16x128xf32>
    %462 = vector.broadcast %443 : vector<1x128xf32> to vector<16x128xf32>
    %463 = arith.addf %461, %462 : vector<16x128xf32>
    %c3_167 = arith.constant 3 : index
    %c0_168 = arith.constant 0 : index
    %c0_169 = arith.constant 0 : index
    %464 = vector.load %arg2[%c3_167, %c0_168, %c0_169] : memref<4x128x384xbf16, #tpu.memory_space<vmem>>, vector<1x128x384xbf16>
    %465 = vector.shape_cast %464 : vector<1x128x384xbf16> to vector<128x384xbf16>
    %c3_170 = arith.constant 3 : index
    %c0_171 = arith.constant 0 : index
    %466 = vector.load %arg10[%c3_170, %c0_171] : memref<4x384xf32, #tpu.memory_space<vmem>>, vector<1x384xf32>
    %c3_172 = arith.constant 3 : index
    %c0_173 = arith.constant 0 : index
    %c0_174 = arith.constant 0 : index
    %467 = vector.load %arg3[%c3_172, %c0_173, %c0_174] : memref<4x128x128xbf16, #tpu.memory_space<vmem>>, vector<1x128x128xbf16>
    %468 = vector.shape_cast %467 : vector<1x128x128xbf16> to vector<128x128xbf16>
    %c22 = arith.constant 22 : index
    %c0_175 = arith.constant 0 : index
    %469 = vector.load %arg9[%c22, %c0_175] : memref<32x128xf32, #tpu.memory_space<vmem>>, vector<1x128xf32>
    %470 = arith.truncf %463 : vector<16x128xf32> to vector<16x128xbf16>
    %cst_176 = arith.constant dense<0.000000e+00> : vector<16x384xf32>
    %471 = tpu.matmul %470, %465, %cst_176 {dimension_numbers = #tpu.dot_dimension_numbers<[1], [0], [0], [1], [0, 0, 1, 1], [], []>} : vector<16x128xbf16>, vector<128x384xbf16>, vector<16x384xf32> -> vector<16x384xf32>
    %472 = vector.broadcast %466 : vector<1x384xf32> to vector<16x384xf32>
    %473 = arith.addf %471, %472 : vector<16x384xf32>
    %474 = vector.extract_strided_slice %473 {offsets = [0, 0], sizes = [16, 64], strides = [1, 1]} : vector<16x384xf32> to vector<16x64xf32>
    %475 = vector.shape_cast %474 : vector<16x64xf32> to vector<2x8x64xf32>
    %476 = vector.extract_strided_slice %473 {offsets = [0, 128], sizes = [16, 64], strides = [1, 1]} : vector<16x384xf32> to vector<16x64xf32>
    %477 = vector.shape_cast %476 : vector<16x64xf32> to vector<2x8x64xf32>
    %478 = vector.extract_strided_slice %473 {offsets = [0, 256], sizes = [16, 64], strides = [1, 1]} : vector<16x384xf32> to vector<16x64xf32>
    %479 = vector.shape_cast %478 : vector<16x64xf32> to vector<2x8x64xf32>
    %480 = arith.truncf %475 : vector<2x8x64xf32> to vector<2x8x64xbf16>
    %481 = arith.truncf %477 : vector<2x8x64xf32> to vector<2x8x64xbf16>
    "tpu.trace_start"() <{level = 10 : i32, message = "bqd,bkd->bqk"}> : () -> ()
    %cst_177 = arith.constant dense<0.000000e+00> : vector<2x8x8xf32>
    %482 = tpu.matmul %480, %481, %cst_177 {dimension_numbers = #tpu.dot_dimension_numbers<[2], [2], [1], [1], [0, 0, 0, 1, 1, 1], [0], [0]>} : vector<2x8x64xbf16>, vector<2x8x64xbf16>, vector<2x8x8xf32> -> vector<2x8x8xf32>
    "tpu.trace_stop"() : () -> ()
    %cst_178 = arith.constant 1.250000e-01 : f32
    %483 = vector.broadcast %cst_178 : f32 to vector<2x8x8xf32>
    %484 = arith.mulf %482, %483 : vector<2x8x8xf32>
    %485 = arith.addf %484, %4 : vector<2x8x8xf32>
    %cst_179 = arith.constant dense<0xFF800000> : vector<2x8xf32>
    %486 = vector.multi_reduction <maximumf>, %485, %cst_179 [2] : vector<2x8x8xf32> to vector<2x8xf32>
    %487 = vector.shape_cast %486 : vector<2x8xf32> to vector<2x8x1xf32>
    %488 = vector.broadcast %487 : vector<2x8x1xf32> to vector<2x8x8xf32>
    %489 = arith.subf %485, %488 : vector<2x8x8xf32>
    %490 = math.exp %489 : vector<2x8x8xf32>
    %cst_180 = arith.constant dense<0.000000e+00> : vector<2x8xf32>
    %491 = vector.multi_reduction <add>, %490, %cst_180 [2] : vector<2x8x8xf32> to vector<2x8xf32>
    %492 = vector.shape_cast %491 : vector<2x8xf32> to vector<2x8x1xf32>
    %493 = tpu.reciprocal %492 {approx = true} : vector<2x8x1xf32> -> vector<2x8x1xf32>
    %494 = vector.broadcast %493 : vector<2x8x1xf32> to vector<2x8x8xf32>
    %495 = arith.mulf %490, %494 : vector<2x8x8xf32>
    %496 = arith.truncf %495 : vector<2x8x8xf32> to vector<2x8x8xbf16>
    %497 = arith.truncf %479 : vector<2x8x64xf32> to vector<2x8x64xbf16>
    "tpu.trace_start"() <{level = 10 : i32, message = "bqk,bkd->bqd"}> : () -> ()
    %cst_181 = arith.constant dense<0.000000e+00> : vector<2x8x64xf32>
    %498 = tpu.matmul %496, %497, %cst_181 {dimension_numbers = #tpu.dot_dimension_numbers<[2], [1], [1], [2], [0, 0, 0, 1, 1, 2], [0], [0]>} : vector<2x8x8xbf16>, vector<2x8x64xbf16>, vector<2x8x64xf32> -> vector<2x8x64xf32>
    "tpu.trace_stop"() : () -> ()
    %499 = vector.shape_cast %498 : vector<2x8x64xf32> to vector<16x64xf32>
    %500 = vector.extract_strided_slice %473 {offsets = [0, 64], sizes = [16, 64], strides = [1, 1]} : vector<16x384xf32> to vector<16x64xf32>
    %501 = vector.shape_cast %500 : vector<16x64xf32> to vector<2x8x64xf32>
    %502 = vector.extract_strided_slice %473 {offsets = [0, 192], sizes = [16, 64], strides = [1, 1]} : vector<16x384xf32> to vector<16x64xf32>
    %503 = vector.shape_cast %502 : vector<16x64xf32> to vector<2x8x64xf32>
    %504 = vector.extract_strided_slice %473 {offsets = [0, 320], sizes = [16, 64], strides = [1, 1]} : vector<16x384xf32> to vector<16x64xf32>
    %505 = vector.shape_cast %504 : vector<16x64xf32> to vector<2x8x64xf32>
    %506 = arith.truncf %501 : vector<2x8x64xf32> to vector<2x8x64xbf16>
    %507 = arith.truncf %503 : vector<2x8x64xf32> to vector<2x8x64xbf16>
    "tpu.trace_start"() <{level = 10 : i32, message = "bqd,bkd->bqk"}> : () -> ()
    %cst_182 = arith.constant dense<0.000000e+00> : vector<2x8x8xf32>
    %508 = tpu.matmul %506, %507, %cst_182 {dimension_numbers = #tpu.dot_dimension_numbers<[2], [2], [1], [1], [0, 0, 0, 1, 1, 1], [0], [0]>} : vector<2x8x64xbf16>, vector<2x8x64xbf16>, vector<2x8x8xf32> -> vector<2x8x8xf32>
    "tpu.trace_stop"() : () -> ()
    %cst_183 = arith.constant 1.250000e-01 : f32
    %509 = vector.broadcast %cst_183 : f32 to vector<2x8x8xf32>
    %510 = arith.mulf %508, %509 : vector<2x8x8xf32>
    %511 = arith.addf %510, %4 : vector<2x8x8xf32>
    %cst_184 = arith.constant dense<0xFF800000> : vector<2x8xf32>
    %512 = vector.multi_reduction <maximumf>, %511, %cst_184 [2] : vector<2x8x8xf32> to vector<2x8xf32>
    %513 = vector.shape_cast %512 : vector<2x8xf32> to vector<2x8x1xf32>
    %514 = vector.broadcast %513 : vector<2x8x1xf32> to vector<2x8x8xf32>
    %515 = arith.subf %511, %514 : vector<2x8x8xf32>
    %516 = math.exp %515 : vector<2x8x8xf32>
    %cst_185 = arith.constant dense<0.000000e+00> : vector<2x8xf32>
    %517 = vector.multi_reduction <add>, %516, %cst_185 [2] : vector<2x8x8xf32> to vector<2x8xf32>
    %518 = vector.shape_cast %517 : vector<2x8xf32> to vector<2x8x1xf32>
    %519 = tpu.reciprocal %518 {approx = true} : vector<2x8x1xf32> -> vector<2x8x1xf32>
    %520 = vector.broadcast %519 : vector<2x8x1xf32> to vector<2x8x8xf32>
    %521 = arith.mulf %516, %520 : vector<2x8x8xf32>
    %522 = arith.truncf %521 : vector<2x8x8xf32> to vector<2x8x8xbf16>
    %523 = arith.truncf %505 : vector<2x8x64xf32> to vector<2x8x64xbf16>
    "tpu.trace_start"() <{level = 10 : i32, message = "bqk,bkd->bqd"}> : () -> ()
    %cst_186 = arith.constant dense<0.000000e+00> : vector<2x8x64xf32>
    %524 = tpu.matmul %522, %523, %cst_186 {dimension_numbers = #tpu.dot_dimension_numbers<[2], [1], [1], [2], [0, 0, 0, 1, 1, 2], [0], [0]>} : vector<2x8x8xbf16>, vector<2x8x64xbf16>, vector<2x8x64xf32> -> vector<2x8x64xf32>
    "tpu.trace_stop"() : () -> ()
    %525 = vector.shape_cast %524 : vector<2x8x64xf32> to vector<16x64xf32>
    %526 = tpu.concatenate %499, %525 in 1 : vector<16x64xf32>, vector<16x64xf32> -> vector<16x128xf32>
    %527 = arith.truncf %526 : vector<16x128xf32> to vector<16x128xbf16>
    %cst_187 = arith.constant dense<0.000000e+00> : vector<16x128xf32>
    %528 = tpu.matmul %527, %468, %cst_187 {dimension_numbers = #tpu.dot_dimension_numbers<[1], [0], [0], [1], [0, 0, 1, 1], [], []>} : vector<16x128xbf16>, vector<128x128xbf16>, vector<16x128xf32> -> vector<16x128xf32>
    %529 = vector.broadcast %469 : vector<1x128xf32> to vector<16x128xf32>
    %530 = arith.addf %528, %529 : vector<16x128xf32>
    %531 = arith.addf %463, %530 : vector<16x128xf32>
    %c23 = arith.constant 23 : index
    %c0_188 = arith.constant 0 : index
    %532 = vector.load %arg9[%c23, %c0_188] : memref<32x128xf32, #tpu.memory_space<vmem>>, vector<1x128xf32>
    %c24 = arith.constant 24 : index
    %c0_189 = arith.constant 0 : index
    %533 = vector.load %arg9[%c24, %c0_189] : memref<32x128xf32, #tpu.memory_space<vmem>>, vector<1x128xf32>
    %cst_190 = arith.constant dense<0.000000e+00> : vector<16xf32>
    %534 = vector.multi_reduction <add>, %531, %cst_190 [1] : vector<16x128xf32> to vector<16xf32>
    %535 = vector.shape_cast %534 : vector<16xf32> to vector<16x1xf32>
    %cst_191 = arith.constant 1.280000e+02 : f32
    %536 = vector.broadcast %cst_191 : f32 to vector<16x1xf32>
    %537 = arith.divf %535, %536 : vector<16x1xf32>
    %538 = vector.broadcast %537 : vector<16x1xf32> to vector<16x128xf32>
    %539 = arith.subf %531, %538 : vector<16x128xf32>
    %540 = arith.mulf %539, %539 : vector<16x128xf32>
    %cst_192 = arith.constant dense<0.000000e+00> : vector<16xf32>
    %541 = vector.multi_reduction <add>, %540, %cst_192 [1] : vector<16x128xf32> to vector<16xf32>
    %542 = vector.shape_cast %541 : vector<16xf32> to vector<16x1xf32>
    %cst_193 = arith.constant 1.280000e+02 : f32
    %543 = vector.broadcast %cst_193 : f32 to vector<16x1xf32>
    %544 = arith.divf %542, %543 : vector<16x1xf32>
    %cst_194 = arith.constant 9.99999974E-6 : f32
    %545 = vector.broadcast %cst_194 : f32 to vector<16x1xf32>
    %546 = arith.addf %544, %545 : vector<16x1xf32>
    %547 = math.rsqrt %546 : vector<16x1xf32>
    %548 = vector.broadcast %547 : vector<16x1xf32> to vector<16x128xf32>
    %549 = arith.mulf %539, %548 : vector<16x128xf32>
    %550 = vector.broadcast %532 : vector<1x128xf32> to vector<16x128xf32>
    %551 = arith.mulf %549, %550 : vector<16x128xf32>
    %552 = vector.broadcast %533 : vector<1x128xf32> to vector<16x128xf32>
    %553 = arith.addf %551, %552 : vector<16x128xf32>
    %554 = arith.truncf %553 : vector<16x128xf32> to vector<16x128xbf16>
    %c1_195 = arith.constant 1 : index
    %c0_196 = arith.constant 0 : index
    %c0_197 = arith.constant 0 : index
    %555 = vector.load %arg13[%c1_195, %c0_196, %c0_197] : memref<2x128x2048xbf16, #tpu.memory_space<vmem>>, vector<1x128x2048xbf16>
    %556 = vector.shape_cast %555 : vector<1x128x2048xbf16> to vector<128x2048xbf16>
    %cst_198 = arith.constant dense<0.000000e+00> : vector<16x2048xf32>
    %557 = tpu.matmul %554, %556, %cst_198 {dimension_numbers = #tpu.dot_dimension_numbers<[1], [0], [0], [1], [0, 0, 1, 1], [], []>} : vector<16x128xbf16>, vector<128x2048xbf16>, vector<16x2048xf32> -> vector<16x2048xf32>
    %c3_199 = arith.constant 3 : index
    %c0_200 = arith.constant 0 : index
    %558 = vector.load %arg11[%c3_199, %c0_200] : memref<4x2048xf32, #tpu.memory_space<vmem>>, vector<1x2048xf32>
    %559 = vector.broadcast %558 : vector<1x2048xf32> to vector<16x2048xf32>
    %560 = arith.addf %557, %559 : vector<16x2048xf32>
    %cst_201 = arith.constant 0.000000e+00 : f32
    %561 = vector.broadcast %cst_201 : f32 to vector<16x2048xf32>
    %562 = arith.maximumf %560, %561 : vector<16x2048xf32>
    %563 = arith.truncf %562 : vector<16x2048xf32> to vector<16x2048xbf16>
    %c1_202 = arith.constant 1 : index
    %c0_203 = arith.constant 0 : index
    %c0_204 = arith.constant 0 : index
    %564 = vector.load %arg14[%c1_202, %c0_203, %c0_204] : memref<2x2048x128xbf16, #tpu.memory_space<vmem>>, vector<1x2048x128xbf16>
    %565 = vector.shape_cast %564 : vector<1x2048x128xbf16> to vector<2048x128xbf16>
    %cst_205 = arith.constant dense<0.000000e+00> : vector<16x128xf32>
    %566 = tpu.matmul %563, %565, %cst_205 {dimension_numbers = #tpu.dot_dimension_numbers<[1], [0], [0], [1], [0, 0, 1, 1], [], []>} : vector<16x2048xbf16>, vector<2048x128xbf16>, vector<16x128xf32> -> vector<16x128xf32>
    %c25 = arith.constant 25 : index
    %c0_206 = arith.constant 0 : index
    %567 = vector.load %arg9[%c25, %c0_206] : memref<32x128xf32, #tpu.memory_space<vmem>>, vector<1x128xf32>
    %568 = vector.broadcast %567 : vector<1x128xf32> to vector<16x128xf32>
    %569 = arith.addf %566, %568 : vector<16x128xf32>
    %570 = arith.addf %553, %569 : vector<16x128xf32>
    %c26 = arith.constant 26 : index
    %c0_207 = arith.constant 0 : index
    %571 = vector.load %arg9[%c26, %c0_207] : memref<32x128xf32, #tpu.memory_space<vmem>>, vector<1x128xf32>
    %c27 = arith.constant 27 : index
    %c0_208 = arith.constant 0 : index
    %572 = vector.load %arg9[%c27, %c0_208] : memref<32x128xf32, #tpu.memory_space<vmem>>, vector<1x128xf32>
    %cst_209 = arith.constant dense<0.000000e+00> : vector<16xf32>
    %573 = vector.multi_reduction <add>, %570, %cst_209 [1] : vector<16x128xf32> to vector<16xf32>
    %574 = vector.shape_cast %573 : vector<16xf32> to vector<16x1xf32>
    %cst_210 = arith.constant 1.280000e+02 : f32
    %575 = vector.broadcast %cst_210 : f32 to vector<16x1xf32>
    %576 = arith.divf %574, %575 : vector<16x1xf32>
    %577 = vector.broadcast %576 : vector<16x1xf32> to vector<16x128xf32>
    %578 = arith.subf %570, %577 : vector<16x128xf32>
    %579 = arith.mulf %578, %578 : vector<16x128xf32>
    %cst_211 = arith.constant dense<0.000000e+00> : vector<16xf32>
    %580 = vector.multi_reduction <add>, %579, %cst_211 [1] : vector<16x128xf32> to vector<16xf32>
    %581 = vector.shape_cast %580 : vector<16xf32> to vector<16x1xf32>
    %cst_212 = arith.constant 1.280000e+02 : f32
    %582 = vector.broadcast %cst_212 : f32 to vector<16x1xf32>
    %583 = arith.divf %581, %582 : vector<16x1xf32>
    %cst_213 = arith.constant 9.99999974E-6 : f32
    %584 = vector.broadcast %cst_213 : f32 to vector<16x1xf32>
    %585 = arith.addf %583, %584 : vector<16x1xf32>
    %586 = math.rsqrt %585 : vector<16x1xf32>
    %587 = vector.broadcast %586 : vector<16x1xf32> to vector<16x128xf32>
    %588 = arith.mulf %578, %587 : vector<16x128xf32>
    %589 = vector.broadcast %571 : vector<1x128xf32> to vector<16x128xf32>
    %590 = arith.mulf %588, %589 : vector<16x128xf32>
    %591 = vector.broadcast %572 : vector<1x128xf32> to vector<16x128xf32>
    %592 = arith.addf %590, %591 : vector<16x128xf32>
    %593 = vector.shape_cast %592 : vector<16x128xf32> to vector<2x8x128xf32>
    %594 = vector.extract_strided_slice %593 {offsets = [0, 0, 0], sizes = [2, 1, 128], strides = [1, 1, 1]} : vector<2x8x128xf32> to vector<2x1x128xf32>
    %595 = vector.shape_cast %594 : vector<2x1x128xf32> to vector<2x128xf32>
    %596 = arith.truncf %595 : vector<2x128xf32> to vector<2x128xbf16>
    %c0_214 = arith.constant 0 : index
    %c0_215 = arith.constant 0 : index
    %597 = vector.load %arg8[%c0_214, %c0_215] : memref<128x128xbf16, #tpu.memory_space<vmem>>, vector<128x128xbf16>
    %cst_216 = arith.constant dense<0.000000e+00> : vector<2x128xf32>
    %598 = tpu.matmul %596, %597, %cst_216 {dimension_numbers = #tpu.dot_dimension_numbers<[1], [0], [0], [1], [0, 0, 1, 1], [], []>} : vector<2x128xbf16>, vector<128x128xbf16>, vector<2x128xf32> -> vector<2x128xf32>
    %c28 = arith.constant 28 : index
    %c0_217 = arith.constant 0 : index
    %599 = vector.load %arg9[%c28, %c0_217] : memref<32x128xf32, #tpu.memory_space<vmem>>, vector<1x128xf32>
    %600 = vector.broadcast %599 : vector<1x128xf32> to vector<2x128xf32>
    %601 = arith.addf %598, %600 : vector<2x128xf32>
    %c0_218 = arith.constant 0 : index
    %c0_219 = arith.constant 0 : index
    %602 = vector.load %arg12[%c0_218, %c0_219] : memref<2x128xf32, #tpu.memory_space<vmem>>, vector<2x128xf32>
    tpu.vector_store %arg12[%c0_218, %c0_219], %601 {strides = array<i32>} : memref<2x128xf32, #tpu.memory_space<vmem>>, vector<2x128xf32>,
    return
  }
}

</mosaic_0001>

<llo_original>
// kernel: global_model_forward.1
$region0: #{global_model_forward.1}
  #allocation0 [shape = 'u32[]', space=smem, size = 0x4, offset = 0x4, fixed_abs, tag = 'smem constant byte address 0x4 - core index']
  #allocation1 [shape = 'u32[144,128]{1,0:T(1,128)}', space=vmem, size = 0x12000, scoped, tag = 'internal scratch']
  #allocation2 [shape = 'bf16[2,128,2048]{2,1,0:T(16,128)(2,1)}', space=vmem, size = 0x100000, scoped, tag = 'scratch operand']
  #allocation3 [shape = 'bf16[2,2048,128]{2,1,0:T(16,128)(2,1)}', space=vmem, size = 0x100000, scoped, tag = 'scratch operand']
  #allocation4 [shape = 's32[2]{0}', space=sflag, size = 0x8, scoped, tag = 'scratch operand']
  #allocation17 [shape = 's32[]', space=sflag, size = 0x4, offset = 0, fixed_abs, tag = 'sflag constant byte address 0x0 - dummy sync flag']
  #allocation19 [shape = 's32[]', space=sflag, size = 0x4, offset = 0, fixed_abs, tag = 'sflag constant byte address 0x0 - dummy sync flag']
  #allocation20 [shape = 's32[]', space=sflag, size = 0x4, offset = 0, fixed_abs, tag = 'sflag constant byte address 0x0 - dummy sync flag']
  #allocation21 [shape = 'u32[]', space=smem, size = 0x4, offset = 0x44, fixed_abs, tag = 'smem constant byte address 0x44 - assertion arg 0']
  #allocation22 [shape = 'u32[]', space=smem, size = 0x4, offset = 0x48, fixed_abs, tag = 'smem constant byte address 0x48 - assertion arg 1']
  %s0 = inlined_call_operand.vmem [shape: f32[16,128], index: 0, kind: input, shape index: {}]
  %s1 = inlined_call_operand.vmem [shape: f32[2,8,8], index: 1, kind: input, shape index: {}]
  %s2 = inlined_call_operand.hbm [shape: bf16[4,128,384], index: 2, kind: input, shape index: {}]
  %s3 = inlined_call_operand.vmem [shape: bf16[4,128,128], index: 3, kind: input, shape index: {}]
  %s4 = inlined_call_operand.hbm [shape: bf16[2,128,512], index: 4, kind: input, shape index: {}]
  %s5 = inlined_call_operand.hbm [shape: bf16[2,512,128], index: 5, kind: input, shape index: {}]
  %s6 = inlined_call_operand.hbm [shape: bf16[2,128,2048], index: 6, kind: input, shape index: {}]
  %s7 = inlined_call_operand.hbm [shape: bf16[2,2048,128], index: 7, kind: input, shape index: {}]
  %s8 = inlined_call_operand.hbm [shape: bf16[128,128], index: 8, kind: input, shape index: {}]
  %s9 = inlined_call_operand.vmem [shape: f32[32,128], index: 9, kind: input, shape index: {}]
  %s10 = inlined_call_operand.hbm [shape: f32[4,384], index: 10, kind: input, shape index: {}]
  %s11 = inlined_call_operand.hbm [shape: f32[4,2048], index: 11, kind: input, shape index: {}]
  %s12 = inlined_call_operand.hbm [shape: f32[2,128], index: 12, kind: output, shape index: {}]
  %s13 = sld [smem:[#allocation0]]
  $region78: #{global_model_forward.1} parent=0
    _
  %s15 = ssub.s32 1, %s13
  %s16 = scalar_select 0, %s15, %s13
  $region1: #{global_model_forward.1} parent=0
    #allocation5 [shape = 'u8[393216]{0}', space=vmem, size = 0x60000, scoped, tag = 'input window, operand 2, single buffered']
    #allocation6 [shape = 's32[1]{0}', space=sflag, size = 0x4, scoped, tag = 'scoped memory for global_model_forward.1']
    #allocation7 [shape = 's32[1]{0}', space=sflag, size = 0x4, scoped, tag = 'scoped memory for global_model_forward.1']
    #allocation8 [shape = 'u8[262144]{0}', space=vmem, size = 0x40000, scoped, tag = 'input window, operand 4, single buffered']
    #allocation9 [shape = 's32[1]{0}', space=sflag, size = 0x4, scoped, tag = 'scoped memory for global_model_forward.1']
    #allocation10 [shape = 'u8[262144]{0}', space=vmem, size = 0x40000, scoped, tag = 'input window, operand 5, single buffered']
    #allocation11 [shape = 'u8[32768]{0}', space=vmem, size = 0x8000, scoped, tag = 'input window, operand 8, single buffered']
    #allocation12 [shape = 's32[1]{0}', space=sflag, size = 0x4, scoped, tag = 'scoped memory for global_model_forward.1']
    #allocation13 [shape = 'u8[6144]{0}', space=vmem, size = 0x1800, scoped, tag = 'input window, operand 10, single buffered']
    #allocation14 [shape = 'u8[32768]{0}', space=vmem, size = 0x8000, scoped, tag = 'input window, operand 11, single buffered']
    #allocation15 [shape = 's32[1]{0}', space=sflag, size = 0x4, scoped, tag = 'scoped memory for global_model_forward.1']
    #allocation16 [shape = 'u8[1024]{0}', space=vmem, size = 0x400, scoped, tag = 'output window, operand 0, single buffered']
    #allocation18 [shape = 'u32[9]{0}', space=smem, size = 0x24, scoped, tag = 'DMA stride descriptor']
    %17 = vsyncpa [#allocation6], 0
    %18 = vsyncpa [#allocation9], 0
    %19 = vsyncpa [#allocation12], 0
    %20 = vsyncpa [#allocation15], 0
    %21 = vsyncpa [#allocation7], 0
    // Predicated region
    $region2: #{global_model_forward.1} parent=1 // pred_check
      _
    $region3: #{global_model_forward.1} parent=1 // pred_check_branch
      %23 = sbr.rel (0) target = $region5
    $region4: #{global_model_forward.1} parent=1 // pred_region
      _
    $region5: #{global_model_forward.1} parent=1 // pred_fallthru
      _
    // Predicated region
    $region6: #{global_model_forward.1} parent=1 // pred_check
      _
    $region7: #{global_model_forward.1} parent=1 // pred_check_branch
      %25 = sbr.rel (0) target = $region9
    $region8: #{global_model_forward.1} parent=1 // pred_region
      _
    $region9: #{global_model_forward.1} parent=1 // pred_fallthru
      _
    // Predicated region
    $region10: #{global_model_forward.1} parent=1 // pred_check
      _
    $region11: #{global_model_forward.1} parent=1 // pred_check_branch
      %27 = sbr.rel (0) target = $region13
    $region12: #{global_model_forward.1} parent=1 // pred_region
      %s29 = ssub.s32 12288, 12288
      %30 = vsyncadd [#allocation6], %s29
      %s31 = sshll.u32 [#allocation5], 4
      %s32 = int_to_ptr.vmem [resolvable:$true] %s31
      %37 = dma.hbm_to_vmem [thread:$0]  %s2, 12288, %s32, [#allocation6], 192, 192, 12
    $region13: #{global_model_forward.1} parent=1 // pred_fallthru
      _
    // Predicated region
    $region14: #{global_model_forward.1} parent=1 // pred_check
      _
    $region15: #{global_model_forward.1} parent=1 // pred_check_branch
      %39 = sbr.rel (0) target = $region17
    $region16: #{global_model_forward.1} parent=1 // pred_region
      _
    $region17: #{global_model_forward.1} parent=1 // pred_fallthru
      _
    // Predicated region
    $region18: #{global_model_forward.1} parent=1 // pred_check
      _
    $region19: #{global_model_forward.1} parent=1 // pred_check_branch
      %41 = sbr.rel (0) target = $region21
    $region20: #{global_model_forward.1} parent=1 // pred_region
      %s43 = ssub.s32 8192, 8192
      %44 = vsyncadd [#allocation9], %s43
      %s45 = sshll.u32 [#allocation8], 4
      %s46 = int_to_ptr.vmem [resolvable:$true] %s45
      %51 = dma.hbm_to_vmem [thread:$0]  %s4, 8192, %s46, [#allocation9], 256, 256, 16
    $region21: #{global_model_forward.1} parent=1 // pred_fallthru
      _
    // Predicated region
    $region22: #{global_model_forward.1} parent=1 // pred_check
      _
    $region23: #{global_model_forward.1} parent=1 // pred_check_branch
      %53 = sbr.rel (0) target = $region25
    $region24: #{global_model_forward.1} parent=1 // pred_region
      %s55 = ssub.s32 8192, 8192
      %56 = vsyncadd [#allocation9], %s55
      %s57 = sshll.u32 [#allocation10], 4
      %s58 = int_to_ptr.vmem [resolvable:$true] %s57
      %63 = dma.hbm_to_vmem [thread:$0]  %s5, 8192, %s58, [#allocation9], 64, 64, 4
    $region25: #{global_model_forward.1} parent=1 // pred_fallthru
      _
    // Predicated region
    $region26: #{global_model_forward.1} parent=1 // pred_check
      _
    $region27: #{global_model_forward.1} parent=1 // pred_check_branch
      %65 = sbr.rel (0) target = $region29
    $region28: #{global_model_forward.1} parent=1 // pred_region
      %s67 = ssub.s32 1024, 1024
      %68 = vsyncadd [#allocation12], %s67
      %s69 = sshll.u32 [#allocation11], 4
      %s70 = int_to_ptr.vmem [resolvable:$true] %s69
      %75 = dma.hbm_to_vmem [thread:$0]  %s8, 1024, %s70, [#allocation12], 64, 64, 4
    $region29: #{global_model_forward.1} parent=1 // pred_fallthru
      _
    // Predicated region
    $region30: #{global_model_forward.1} parent=1 // pred_check
      _
    $region31: #{global_model_forward.1} parent=1 // pred_check_branch
      %77 = sbr.rel (0) target = $region33
    $region32: #{global_model_forward.1} parent=1 // pred_region
      _
    $region33: #{global_model_forward.1} parent=1 // pred_fallthru
      _
    // Predicated region
    $region34: #{global_model_forward.1} parent=1 // pred_check
      _
    $region35: #{global_model_forward.1} parent=1 // pred_check_branch
      %79 = sbr.rel (0) target = $region37
    $region36: #{global_model_forward.1} parent=1 // pred_region
      %s81 = ssub.s32 192, 192
      %82 = vsyncadd [#allocation12], %s81
      %s84 = sshll.u32 [#allocation13], 4
      %s85 = int_to_ptr.vmem [resolvable:$true] %s84
      %87 = dma.hbm_to_vmem [thread:$0]  %s10, 192, %s85, [#allocation12]
    $region37: #{global_model_forward.1} parent=1 // pred_fallthru
      _
    // Predicated region
    $region38: #{global_model_forward.1} parent=1 // pred_check
      _
    $region39: #{global_model_forward.1} parent=1 // pred_check_branch
      %89 = sbr.rel (0) target = $region41
    $region40: #{global_model_forward.1} parent=1 // pred_region
      %s91 = ssub.s32 1024, 1024
      %92 = vsyncadd [#allocation15], %s91
      %s94 = sshll.u32 [#allocation14], 4
      %s95 = int_to_ptr.vmem [resolvable:$true] %s94
      %97 = dma.hbm_to_vmem [thread:$0]  %s11, 1024, %s95, [#allocation15]
    $region41: #{global_model_forward.1} parent=1 // pred_fallthru
      _
    // Predicated region
    $region42: #{global_model_forward.1} parent=1 // pred_check
      _
    $region43: #{global_model_forward.1} parent=1 // pred_check_branch
      %99 = sbr.rel (0) target = $region45
    $region44: #{global_model_forward.1} parent=1 // pred_region
      %100 = dma.done [#allocation6], 12288
    $region45: #{global_model_forward.1} parent=1 // pred_fallthru
      _
    // Predicated region
    $region46: #{global_model_forward.1} parent=1 // pred_check
      _
    $region47: #{global_model_forward.1} parent=1 // pred_check_branch
      %102 = sbr.rel (0) target = $region49
    $region48: #{global_model_forward.1} parent=1 // pred_region
      %103 = dma.done [#allocation9], 8192
    $region49: #{global_model_forward.1} parent=1 // pred_fallthru
      _
    // Predicated region
    $region50: #{global_model_forward.1} parent=1 // pred_check
      _
    $region51: #{global_model_forward.1} parent=1 // pred_check_branch
      %105 = sbr.rel (0) target = $region53
    $region52: #{global_model_forward.1} parent=1 // pred_region
      %106 = dma.done [#allocation9], 8192
    $region53: #{global_model_forward.1} parent=1 // pred_fallthru
      _
    // Predicated region
    $region54: #{global_model_forward.1} parent=1 // pred_check
      _
    $region55: #{global_model_forward.1} parent=1 // pred_check_branch
      %108 = sbr.rel (0) target = $region57
    $region56: #{global_model_forward.1} parent=1 // pred_region
      %109 = dma.done [#allocation12], 1024
    $region57: #{global_model_forward.1} parent=1 // pred_fallthru
      _
    // Predicated region
    $region58: #{global_model_forward.1} parent=1 // pred_check
      _
    $region59: #{global_model_forward.1} parent=1 // pred_check_branch
      %111 = sbr.rel (0) target = $region61
    $region60: #{global_model_forward.1} parent=1 // pred_region
      %112 = dma.done [#allocation12], 192
    $region61: #{global_model_forward.1} parent=1 // pred_fallthru
      _
    // Predicated region
    $region62: #{global_model_forward.1} parent=1 // pred_check
      _
    $region63: #{global_model_forward.1} parent=1 // pred_check_branch
      %114 = sbr.rel (0) target = $region65
    $region64: #{global_model_forward.1} parent=1 // pred_region
      %115 = dma.done [#allocation15], 1024
    $region65: #{global_model_forward.1} parent=1 // pred_fallthru
      _
    %s118 = sshll.u32 1, 14
    %s119 = sxor.u32 4294967295, %s118
    %s121 = sld [smem:[#allocation0]]
    %s122 = sadd.s32 2, %s121
    %s124 = sshll.u32 7, 26
    %s125 = sxor.u32 4294967295, %s124
    %s126 = sand.u32 0, %s125
    %s127 = sshll.u32 %s122, 26
    %s128 = sor.u32 %s126, %s127
    %s129 = sshll.u32 [#allocation2], 4
    %s130 = int_to_ptr.vmem [resolvable:$true] %s129
    %133 = sst [smem:[#allocation18]] 2048
    %s134 = scalar_lea.smem [#allocation18], 1
    %135 = sst [smem:[%s134]] 2048
    %s136 = scalar_lea.smem [#allocation18], 2
    %137 = sst [smem:[%s136]] 16
    %s138 = scalar_lea.smem [#allocation18], 3
    %139 = sst [smem:[%s138]] 64
    %s140 = scalar_lea.smem [#allocation18], 4
    %141 = sst [smem:[%s140]] 128
    %s142 = scalar_lea.smem [#allocation18], 5
    %143 = sst [smem:[%s142]] 2
    %s144 = scalar_lea.smem [#allocation18], 6
    %145 = sst [smem:[%s144]] 1024
    %s146 = scalar_lea.smem [#allocation18], 7
    %147 = sst [smem:[%s146]] 64
    %s148 = scalar_lea.smem [#allocation18], 8
    %149 = sst [smem:[%s148]] 4
    %151 = dma.general %s6, 32768, %s130, [#allocation4], [#allocation17], [#allocation18], %s128, 0
    %s152 = scalar_lea.sflag [#allocation4], 1
    // Predicated region
    $region66: #{global_model_forward.1} parent=1 // pred_check
      _
    $region67: #{global_model_forward.1} parent=1 // pred_check_branch
      %154 = sbr.rel target = $region69
    $region68: #{global_model_forward.1} parent=1 // pred_region
      %155 = sst [smem:[#allocation21]] [#allocation20]
      %156 = sst [smem:[#allocation22]] [#allocation19]
    $region69: #{global_model_forward.1} parent=1 // pred_fallthru
      _
    %158 = shalt.err (0)
    %s160 = sshll.u32 [#allocation3], 4
    %s161 = int_to_ptr.vmem [resolvable:$true] %s160
    %163 = dma.hbm_to_vmem [thread:$0]  %s7, 32768, %s161, %s152
    %v164 = vld [vmem:[%s1] sm:$0xff]
    %v165 = vld [vmem:[%s1 + $0x8] sm:$0xff]
    %v166 = vld [vmem:[%s0] sm:$0xff]
    %v167 = vld [vmem:[%s0 + $0x8] sm:$0xff]
    %v168 = vld [vmem:[%s9] sm:$0x1]
    %v169 = vld [vmem:[%s9 + $0x1] sm:$0x1]
    %170 = vadd.xlane.f32.xlu0 %v166
    %v171 = vpop.xlane.xlu0 %170
    %172 = vadd.xlane.f32.xlu0 %v167
    %v173 = vpop.xlane.xlu0 %172
    %v174 = vrcp.pop 128.0
    %v175 = vmul.f32 %v171, %v174
    %v176 = vmul.f32 %v173, %v174
    %v177 = vsub.f32 %v166, %v175
    %v178 = vsub.f32 %v167, %v176
    %v179 = vmul.f32 %v177, %v177
    %v180 = vmul.f32 %v178, %v178
    %181 = vadd.xlane.f32.xlu0 %v179
    %v182 = vpop.xlane.xlu0 %181
    %183 = vadd.xlane.f32.xlu0 %v180
    %v184 = vpop.xlane.xlu0 %183
    %v185 = vmul.f32 %v182, %v174
    %v186 = vmul.f32 %v184, %v174
    %v187 = vadd.f32 %v185, 1e-12
    %v188 = vadd.f32 %v186, 1e-12
    %v189 = vrsqrt.pop %v187
    %v190 = vrsqrt.pop %v188
    %v191 = vmul.f32 %v177, %v189
    %v192 = vmul.f32 %v178, %v190
    %v193 = vlaneseq
    %v194 = vshrl.u32 %v193, 7
    %v195 = vsub.s32 0, %v194
    %v196 = vrot.slane %v168, %v195
    %v197 = vmul.f32 %v191, %v196
    %v198 = vmul.f32 %v192, %v196
    %v199 = vlaneseq
    %v200 = vshrl.u32 %v199, 7
    %v201 = vsub.s32 0, %v200
    %v202 = vrot.slane %v169, %v201
    %v203 = vadd.f32 %v197, %v202
    %v204 = vadd.f32 %v198, %v202
    %v205 = vld [vmem:[#allocation5] sm:$0xff]
    %v206 = vld [vmem:[#allocation5 + $0x8] sm:$0xf]
    %v207 = vld [vmem:[#allocation5 + $0xc] sm:$0xff]
    %v208 = vld [vmem:[#allocation5 + $0x14] sm:$0xf]
    %v209 = vld [vmem:[#allocation5 + $0x18] sm:$0xff]
    %v210 = vld [vmem:[#allocation5 + $0x20] sm:$0xf]
    %v211 = vld [vmem:[#allocation5 + $0x24] sm:$0xff]
    %v212 = vld [vmem:[#allocation5 + $0x2c] sm:$0xf]
    %v213 = vld [vmem:[#allocation5 + $0x30] sm:$0xff]
    %v214 = vld [vmem:[#allocation5 + $0x38] sm:$0xf]
    %v215 = vld [vmem:[#allocation5 + $0x3c] sm:$0xff]
    %v216 = vld [vmem:[#allocation5 + $0x44] sm:$0xf]
    %v217 = vld [vmem:[#allocation5 + $0x48] sm:$0xff]
    %v218 = vld [vmem:[#allocation5 + $0x50] sm:$0xf]
    %v219 = vld [vmem:[#allocation5 + $0x54] sm:$0xff]
    %v220 = vld [vmem:[#allocation5 + $0x5c] sm:$0xf]
    %v221 = vld [vmem:[#allocation5 + $0x60] sm:$0xff]
    %v222 = vld [vmem:[#allocation5 + $0x68] sm:$0xf]
    %v223 = vld [vmem:[#allocation5 + $0x6c] sm:$0xff]
    %v224 = vld [vmem:[#allocation5 + $0x74] sm:$0xf]
    %v225 = vld [vmem:[#allocation5 + $0x78] sm:$0xff]
    %v226 = vld [vmem:[#allocation5 + $0x80] sm:$0xf]
    %v227 = vld [vmem:[#allocation5 + $0x84] sm:$0xff]
    %v228 = vld [vmem:[#allocation5 + $0x8c] sm:$0xf]
    %v229 = vld [vmem:[#allocation5 + $0x90] sm:$0xff]
    %v230 = vld [vmem:[#allocation5 + $0x98] sm:$0xf]
    %v231 = vld [vmem:[#allocation5 + $0x9c] sm:$0xff]
    %v232 = vld [vmem:[#allocation5 + $0xa4] sm:$0xf]
    %v233 = vld [vmem:[#allocation5 + $0xa8] sm:$0xff]
    %v234 = vld [vmem:[#allocation5 + $0xb0] sm:$0xf]
    %v235 = vld [vmem:[#allocation5 + $0xb4] sm:$0xff]
    %v236 = vld [vmem:[#allocation5 + $0xbc] sm:$0xf]
    %v237 = vld [vmem:[#allocation13] ss:$4 sm:$0x7]
    %v238 = vld [vmem:[%s3] sm:$0xf]
    %v239 = vld [vmem:[%s3 + $0x4] sm:$0xf]
    %v240 = vld [vmem:[%s3 + $0x8] sm:$0xf]
    %v241 = vld [vmem:[%s3 + $0xc] sm:$0xf]
    %v242 = vld [vmem:[%s3 + $0x10] sm:$0xf]
    %v243 = vld [vmem:[%s3 + $0x14] sm:$0xf]
    %v244 = vld [vmem:[%s3 + $0x18] sm:$0xf]
    %v245 = vld [vmem:[%s3 + $0x1c] sm:$0xf]
    %v246 = vld [vmem:[%s3 + $0x20] sm:$0xf]
    %v247 = vld [vmem:[%s3 + $0x24] sm:$0xf]
    %v248 = vld [vmem:[%s3 + $0x28] sm:$0xf]
    %v249 = vld [vmem:[%s3 + $0x2c] sm:$0xf]
    %v250 = vld [vmem:[%s3 + $0x30] sm:$0xf]
    %v251 = vld [vmem:[%s3 + $0x34] sm:$0xf]
    %v252 = vld [vmem:[%s3 + $0x38] sm:$0xf]
    %v253 = vld [vmem:[%s3 + $0x3c] sm:$0xf]
    %v254 = vld [vmem:[%s9 + $0x2] sm:$0x1]
    %v255 = vpack.c.bf16 %v204, %v203
    %v257 = vlaneseq
    %v258 = vshrl.u32 %v257, 7
    %v259 = vsub.s32 0, %v258
    %v260 = vrot.slane %v237, %v259
    %v261 = vlaneseq
    %v262 = vshrl.u32 %v261, 7
    %v263 = vsub.s32 1, %v262
    %v264 = vrot.slane %v237, %v263
    %v265 = vlaneseq
    %v266 = vshrl.u32 %v265, 7
    %v267 = vsub.s32 2, %v266
    %v268 = vrot.slane %v237, %v267
    %v304 = vunpack.c.l.b16 %v205
    %v305 = vunpack.c.h.b16 %v205
    %v306 = vunpack.c.l.b16 %v206
    %v307 = vunpack.c.l.b16 %v207
    %v308 = vunpack.c.h.b16 %v207
    %v309 = vunpack.c.l.b16 %v208
    %v310 = vunpack.c.l.b16 %v209
    %v311 = vunpack.c.h.b16 %v209
    %v312 = vunpack.c.l.b16 %v210
    %v313 = vunpack.c.l.b16 %v211
    %v314 = vunpack.c.h.b16 %v211
    %v315 = vunpack.c.l.b16 %v212
    %v316 = vunpack.c.l.b16 %v213
    %v317 = vunpack.c.h.b16 %v213
    %v318 = vunpack.c.l.b16 %v214
    %v319 = vunpack.c.l.b16 %v215
    %v320 = vunpack.c.h.b16 %v215
    %v321 = vunpack.c.l.b16 %v216
    %v322 = vunpack.c.l.b16 %v217
    %v323 = vunpack.c.h.b16 %v217
    %v324 = vunpack.c.l.b16 %v218
    %v325 = vunpack.c.l.b16 %v219
    %v326 = vunpack.c.h.b16 %v219
    %v327 = vunpack.c.l.b16 %v220
    %v328 = vunpack.c.l.b16 %v221
    %v329 = vunpack.c.h.b16 %v221
    %v330 = vunpack.c.l.b16 %v222
    %v331 = vunpack.c.l.b16 %v223
    %v332 = vunpack.c.h.b16 %v223
    %v333 = vunpack.c.l.b16 %v224
    %v334 = vunpack.c.l.b16 %v225
    %v335 = vunpack.c.h.b16 %v225
    %v336 = vunpack.c.l.b16 %v226
    %v337 = vunpack.c.l.b16 %v227
    %v338 = vunpack.c.h.b16 %v227
    %v339 = vunpack.c.l.b16 %v228
    %v340 = vunpack.c.l.b16 %v229
    %v341 = vunpack.c.h.b16 %v229
    %v342 = vunpack.c.l.b16 %v230
    %v343 = vunpack.c.l.b16 %v231
    %v344 = vunpack.c.h.b16 %v231
    %v345 = vunpack.c.l.b16 %v232
    %v346 = vunpack.c.l.b16 %v233
    %v347 = vunpack.c.h.b16 %v233
    %v348 = vunpack.c.l.b16 %v234
    %v349 = vunpack.c.l.b16 %v235
    %v350 = vunpack.c.h.b16 %v235
    %v351 = vunpack.c.l.b16 %v236
    %v352 = vpack.c.b16 %v307, %v304
    %v353 = vpack.c.b16 %v308, %v305
    %v354 = vpack.c.b16 %v309, %v306
    %v355 = vpack.c.b16 %v313, %v310
    %v356 = vpack.c.b16 %v314, %v311
    %v357 = vpack.c.b16 %v315, %v312
    %v358 = vpack.c.b16 %v319, %v316
    %v359 = vpack.c.b16 %v320, %v317
    %v360 = vpack.c.b16 %v321, %v318
    %v361 = vpack.c.b16 %v325, %v322
    %v362 = vpack.c.b16 %v326, %v323
    %v363 = vpack.c.b16 %v327, %v324
    %v364 = vpack.c.b16 %v331, %v328
    %v365 = vpack.c.b16 %v332, %v329
    %v366 = vpack.c.b16 %v333, %v330
    %v367 = vpack.c.b16 %v337, %v334
    %v368 = vpack.c.b16 %v338, %v335
    %v369 = vpack.c.b16 %v339, %v336
    %v370 = vpack.c.b16 %v343, %v340
    %v371 = vpack.c.b16 %v344, %v341
    %v372 = vpack.c.b16 %v345, %v342
    %v373 = vpack.c.b16 %v349, %v346
    %v374 = vpack.c.b16 %v350, %v347
    %v375 = vpack.c.b16 %v351, %v348
    %400 = vmatprep.subr.bf16.mxu0 %v353
    %401 = vmatpush1.bf16.msra.mxu0 %v352
    %402 = vmatprep.subr.bf16.mxu0 %v356
    %403 = vmatpush1.bf16.msra.mxu0 %v355
    %404 = vmatprep.subr.bf16.mxu0 %v359
    %405 = vmatpush1.bf16.msra.mxu0 %v358
    %406 = vmatprep.subr.bf16.mxu0 %v362
    %407 = vmatpush1.bf16.msra.mxu0 %v361
    %408 = vmatprep.subr.bf16.mxu0 %v365
    %409 = vmatpush1.bf16.msra.mxu0 %v364
    %410 = vmatprep.subr.bf16.mxu0 %v368
    %411 = vmatpush1.bf16.msra.mxu0 %v367
    %412 = vmatprep.subr.bf16.mxu0 %v371
    %413 = vmatpush1.bf16.msra.mxu0 %v370
    %414 = vmatprep.subr.bf16.mxu0 %v374
    %415 = vmatpush1.bf16.msra.mxu0 %v373
    %416 = vmatprep.subr.bf16.mxu0 0
    %417 = vmatpush1.bf16.msra.mxu0 0
    %418 = vmatprep.subr.bf16.mxu0 0
    %419 = vmatpush1.bf16.msra.mxu0 0
    %420 = vmatprep.subr.bf16.mxu0 0
    %421 = vmatpush1.bf16.msra.mxu0 0
    %422 = vmatprep.subr.bf16.mxu0 0
    %423 = vmatpush1.bf16.msra.mxu0 0
    %424 = vmatprep.subr.bf16.mxu0 0
    %425 = vmatpush1.bf16.msra.mxu0 0
    %426 = vmatprep.subr.bf16.mxu0 0
    %427 = vmatpush1.bf16.msra.mxu0 0
    %428 = vmatprep.subr.bf16.mxu0 0
    %429 = vmatpush1.bf16.msra.mxu0 0
    %430 = vmatprep.subr.bf16.mxu0 0
    %431 = vmatpush1.bf16.msra.mxu0 0
    %432 = vmatprep.mubr.bf16.mxu0 0
    %433 = vmatmul.mubr.bf16.gmra.mrb[0].mxu0 %v255
    %v434 = vpop.f32.mrb[0].mxu0
    %v435 = vadd.f32 %v260, %v434
    %v436 = vpop.f32.mrb[0].mxu0
    %v437 = vadd.f32 %v264, %v436
    %v438 = vpop.f32.mrb[0].mxu0
    %v439 = vadd.f32 %v260, %v438
    %v440 = vpop.f32.mrb[0].mxu0
    %v441 = vadd.f32 %v264, %v440
    %442 = vdwg.mxu0
    %443 = vmatprep.subr.bf16.mxu0 0
    %444 = vmatpush1.bf16.msra.mxu0 %v354
    %445 = vmatprep.subr.bf16.mxu0 0
    %446 = vmatpush1.bf16.msra.mxu0 %v357
    %447 = vmatprep.subr.bf16.mxu0 0
    %448 = vmatpush1.bf16.msra.mxu0 %v360
    %449 = vmatprep.subr.bf16.mxu0 0
    %450 = vmatpush1.bf16.msra.mxu0 %v363
    %451 = vmatprep.subr.bf16.mxu0 0
    %452 = vmatpush1.bf16.msra.mxu0 %v366
    %453 = vmatprep.subr.bf16.mxu0 0
    %454 = vmatpush1.bf16.msra.mxu0 %v369
    %455 = vmatprep.subr.bf16.mxu0 0
    %456 = vmatpush1.bf16.msra.mxu0 %v372
    %457 = vmatprep.subr.bf16.mxu0 0
    %458 = vmatpush1.bf16.msra.mxu0 %v375
    %459 = vmatprep.subr.bf16.mxu0 0
    %460 = vmatpush1.bf16.msra.mxu0 0
    %461 = vmatprep.subr.bf16.mxu0 0
    %462 = vmatpush1.bf16.msra.mxu0 0
    %463 = vmatprep.subr.bf16.mxu0 0
    %464 = vmatpush1.bf16.msra.mxu0 0
    %465 = vmatprep.subr.bf16.mxu0 0
    %466 = vmatpush1.bf16.msra.mxu0 0
    %467 = vmatprep.subr.bf16.mxu0 0
    %468 = vmatpush1.bf16.msra.mxu0 0
    %469 = vmatprep.subr.bf16.mxu0 0
    %470 = vmatpush1.bf16.msra.mxu0 0
    %471 = vmatprep.subr.bf16.mxu0 0
    %472 = vmatpush1.bf16.msra.mxu0 0
    %473 = vmatprep.subr.bf16.mxu0 0
    %474 = vmatpush1.bf16.msra.mxu0 0
    %475 = vmatprep.mubr.bf16.mxu0 0
    %476 = vmatmul.mubr.bf16.gmra.mrb[0].mxu0 %v255
    %v477 = vpop.f32.mrb[0].mxu0
    %v478 = vadd.f32 %v268, %v477
    %v479 = vpop.f32.mrb[0].mxu0
    %v480 = vpop.f32.mrb[0].mxu0
    %v481 = vadd.f32 %v268, %v480
    %v482 = vpop.f32.mrb[0].mxu0
    %483 = vdwg.mxu0
    %v484 = vpack.c.bf16 %v435, %v435
    %v485 = vpack.c.bf16 %v439, %v439
    %v486 = vpack.c.bf16 %v437, %v437
    %v487 = vpack.c.bf16 %v441, %v441
    %vm488 = vcmask 523264
    %v490 = vsel %vm488, %v484, 0
    %v493 = vsel %vm488, %v486, 0
    %495 = vmatprep.subr.bf16.mxu0 0
    %496 = vmatpush1.bf16.xpose.msra.mxu0 %v493
    %497 = vmatprep.subr.bf16.mxu0 0
    %498 = vmatpush1.bf16.xpose.msra.mxu0 0
    %499 = vmatprep.subr.bf16.mxu0 0
    %500 = vmatpush1.bf16.xpose.msra.mxu0 0
    %501 = vmatprep.subr.bf16.mxu0 0
    %502 = vmatpush1.bf16.xpose.msra.mxu0 0
    %503 = vmatprep.subr.bf16.mxu0 0
    %504 = vmatpush1.bf16.xpose.msra.mxu0 0
    %505 = vmatprep.subr.bf16.mxu0 0
    %506 = vmatpush1.bf16.xpose.msra.mxu0 0
    %507 = vmatprep.subr.bf16.mxu0 0
    %508 = vmatpush1.bf16.xpose.msra.mxu0 0
    %509 = vmatprep.subr.bf16.mxu0 0
    %510 = vmatpush1.bf16.xpose.msra.mxu0 0
    %511 = vmatprep.subr.bf16.mxu0 0
    %512 = vmatpush1.bf16.xpose.msra.mxu0 0
    %513 = vmatprep.subr.bf16.mxu0 0
    %514 = vmatpush1.bf16.xpose.msra.mxu0 0
    %515 = vmatprep.subr.bf16.mxu0 0
    %516 = vmatpush1.bf16.xpose.msra.mxu0 0
    %517 = vmatprep.subr.bf16.mxu0 0
    %518 = vmatpush1.bf16.xpose.msra.mxu0 0
    %519 = vmatprep.subr.bf16.mxu0 0
    %520 = vmatpush1.bf16.xpose.msra.mxu0 0
    %521 = vmatprep.subr.bf16.mxu0 0
    %522 = vmatpush1.bf16.xpose.msra.mxu0 0
    %523 = vmatprep.subr.bf16.mxu0 0
    %524 = vmatpush1.bf16.xpose.msra.mxu0 0
    %525 = vmatprep.subr.bf16.mxu0 0
    %526 = vmatpush1.bf16.xpose.msra.mxu0 0
    %527 = vmatprep.mubr.bf16.mxu0 0
    %528 = vmatmul.mubr.bf16.gmra.mrb[0].mxu0 %v490
    %v529 = vpop.f32.mrb[0].mxu0
    %v530 = vadd.f32 0.0, %v529
    %v531 = vpop.f32.mrb[0].mxu0
    %v532 = vpop.f32.mrb[0].mxu0
    %v533 = vpop.f32.mrb[0].mxu0
    %534 = vdwg.mxu0
    %v536 = vsel %vm488, %v485, 0
    %v539 = vsel %vm488, %v487, 0
    %541 = vmatprep.subr.bf16.mxu0 0
    %542 = vmatpush1.bf16.xpose.msra.mxu0 %v539
    %543 = vmatprep.subr.bf16.mxu0 0
    %544 = vmatpush1.bf16.xpose.msra.mxu0 0
    %545 = vmatprep.subr.bf16.mxu0 0
    %546 = vmatpush1.bf16.xpose.msra.mxu0 0
    %547 = vmatprep.subr.bf16.mxu0 0
    %548 = vmatpush1.bf16.xpose.msra.mxu0 0
    %549 = vmatprep.subr.bf16.mxu0 0
    %550 = vmatpush1.bf16.xpose.msra.mxu0 0
    %551 = vmatprep.subr.bf16.mxu0 0
    %552 = vmatpush1.bf16.xpose.msra.mxu0 0
    %553 = vmatprep.subr.bf16.mxu0 0
    %554 = vmatpush1.bf16.xpose.msra.mxu0 0
    %555 = vmatprep.subr.bf16.mxu0 0
    %556 = vmatpush1.bf16.xpose.msra.mxu0 0
    %557 = vmatprep.subr.bf16.mxu0 0
    %558 = vmatpush1.bf16.xpose.msra.mxu0 0
    %559 = vmatprep.subr.bf16.mxu0 0
    %560 = vmatpush1.bf16.xpose.msra.mxu0 0
    %561 = vmatprep.subr.bf16.mxu0 0
    %562 = vmatpush1.bf16.xpose.msra.mxu0 0
    %563 = vmatprep.subr.bf16.mxu0 0
    %564 = vmatpush1.bf16.xpose.msra.mxu0 0
    %565 = vmatprep.subr.bf16.mxu0 0
    %566 = vmatpush1.bf16.xpose.msra.mxu0 0
    %567 = vmatprep.subr.bf16.mxu0 0
    %568 = vmatpush1.bf16.xpose.msra.mxu0 0
    %569 = vmatprep.subr.bf16.mxu0 0
    %570 = vmatpush1.bf16.xpose.msra.mxu0 0
    %571 = vmatprep.subr.bf16.mxu0 0
    %572 = vmatpush1.bf16.xpose.msra.mxu0 0
    %573 = vmatprep.mubr.bf16.mxu0 0
    %574 = vmatmul.mubr.bf16.gmra.mrb[0].mxu0 %v536
    %v575 = vpop.f32.mrb[0].mxu0
    %v576 = vadd.f32 0.0, %v575
    %v577 = vpop.f32.mrb[0].mxu0
    %v578 = vpop.f32.mrb[0].mxu0
    %v579 = vpop.f32.mrb[0].mxu0
    %580 = vdwg.mxu0
    %v581 = vmul.f32 %v530, 0.125
    %v582 = vmul.f32 %v576, 0.125
    %v583 = vadd.f32 %v581, %v164
    %v584 = vadd.f32 %v582, %v165
    %vm585 = vcmask 64512
    %v586 = vsel %vm585, %v583, -inf
    %587 = vmax.xlane.f32.xlu0 %v586
    %v588 = vpop.xlane.xlu0 %587
    %v589 = vsel %vm585, %v584, -inf
    %590 = vmax.xlane.f32.xlu0 %v589
    %v591 = vpop.xlane.xlu0 %590
    %v592 = vsub.f32 %v583, %v588
    %v593 = vsub.f32 %v584, %v591
    %v594 = vmul.f32 %v592, 1.442695
    %v595 = vpow.pop %v594
    %v596 = vmul.f32 %v593, 1.442695
    %v597 = vpow.pop %v596
    %v598 = vsel %vm585, %v595, 0.0
    %599 = vadd.xlane.f32.xlu0 %v598
    %v600 = vpop.xlane.xlu0 %599
    %v601 = vsel %vm585, %v597, 0.0
    %602 = vadd.xlane.f32.xlu0 %v601
    %v603 = vpop.xlane.xlu0 %602
    %v604 = vrcp.pop %v600
    %v605 = vrcp.pop %v603
    %v606 = vmul.f32 %v595, %v604
    %v607 = vmul.f32 %v597, %v605
    %v608 = vpack.c.bf16 %v606, %v606
    %v609 = vpack.c.bf16 %v607, %v607
    %v610 = vpack.c.bf16 %v478, %v478
    %v611 = vpack.c.bf16 %v481, %v481
    %v613 = vsel %vm585, %v608, 0
    %vm615 = vcmask 1043456
    %v617 = vsel %vm615, %v610, 0
    %619 = vmatprep.subr.bf16.mxu0 0
    %620 = vmatpush1.bf16.msra.mxu0 %v617
    %621 = vmatprep.subr.bf16.mxu0 0
    %622 = vmatpush1.bf16.msra.mxu0 0
    %623 = vmatprep.subr.bf16.mxu0 0
    %624 = vmatpush1.bf16.msra.mxu0 0
    %625 = vmatprep.subr.bf16.mxu0 0
    %626 = vmatpush1.bf16.msra.mxu0 0
    %627 = vmatprep.subr.bf16.mxu0 0
    %628 = vmatpush1.bf16.msra.mxu0 0
    %629 = vmatprep.subr.bf16.mxu0 0
    %630 = vmatpush1.bf16.msra.mxu0 0
    %631 = vmatprep.subr.bf16.mxu0 0
    %632 = vmatpush1.bf16.msra.mxu0 0
    %633 = vmatprep.subr.bf16.mxu0 0
    %634 = vmatpush1.bf16.msra.mxu0 0
    %635 = vmatprep.subr.bf16.mxu0 0
    %636 = vmatpush1.bf16.msra.mxu0 0
    %637 = vmatprep.subr.bf16.mxu0 0
    %638 = vmatpush1.bf16.msra.mxu0 0
    %639 = vmatprep.subr.bf16.mxu0 0
    %640 = vmatpush1.bf16.msra.mxu0 0
    %641 = vmatprep.subr.bf16.mxu0 0
    %642 = vmatpush1.bf16.msra.mxu0 0
    %643 = vmatprep.subr.bf16.mxu0 0
    %644 = vmatpush1.bf16.msra.mxu0 0
    %645 = vmatprep.subr.bf16.mxu0 0
    %646 = vmatpush1.bf16.msra.mxu0 0
    %647 = vmatprep.subr.bf16.mxu0 0
    %648 = vmatpush1.bf16.msra.mxu0 0
    %649 = vmatprep.subr.bf16.mxu0 0
    %650 = vmatpush1.bf16.msra.mxu0 0
    %651 = vmatprep.mubr.bf16.mxu0 0
    %652 = vmatmul.mubr.bf16.gmra.mrb[0].mxu0 %v613
    %v653 = vpop.f32.mrb[0].mxu0
    %v654 = vadd.f32 0.0, %v653
    %v655 = vpop.f32.mrb[0].mxu0
    %v656 = vpop.f32.mrb[0].mxu0
    %v657 = vpop.f32.mrb[0].mxu0
    %658 = vdwg.mxu0
    %v660 = vsel %vm585, %v609, 0
    %v663 = vsel %vm615, %v611, 0
    %665 = vmatprep.subr.bf16.mxu0 0
    %666 = vmatpush1.bf16.msra.mxu0 %v663
    %667 = vmatprep.subr.bf16.mxu0 0
    %668 = vmatpush1.bf16.msra.mxu0 0
    %669 = vmatprep.subr.bf16.mxu0 0
    %670 = vmatpush1.bf16.msra.mxu0 0
    %671 = vmatprep.subr.bf16.mxu0 0
    %672 = vmatpush1.bf16.msra.mxu0 0
    %673 = vmatprep.subr.bf16.mxu0 0
    %674 = vmatpush1.bf16.msra.mxu0 0
    %675 = vmatprep.subr.bf16.mxu0 0
    %676 = vmatpush1.bf16.msra.mxu0 0
    %677 = vmatprep.subr.bf16.mxu0 0
    %678 = vmatpush1.bf16.msra.mxu0 0
    %679 = vmatprep.subr.bf16.mxu0 0
    %680 = vmatpush1.bf16.msra.mxu0 0
    %681 = vmatprep.subr.bf16.mxu0 0
    %682 = vmatpush1.bf16.msra.mxu0 0
    %683 = vmatprep.subr.bf16.mxu0 0
    %684 = vmatpush1.bf16.msra.mxu0 0
    %685 = vmatprep.subr.bf16.mxu0 0
    %686 = vmatpush1.bf16.msra.mxu0 0
    %687 = vmatprep.subr.bf16.mxu0 0
    %688 = vmatpush1.bf16.msra.mxu0 0
    %689 = vmatprep.subr.bf16.mxu0 0
    %690 = vmatpush1.bf16.msra.mxu0 0
    %691 = vmatprep.subr.bf16.mxu0 0
    %692 = vmatpush1.bf16.msra.mxu0 0
    %693 = vmatprep.subr.bf16.mxu0 0
    %694 = vmatpush1.bf16.msra.mxu0 0
    %695 = vmatprep.subr.bf16.mxu0 0
    %696 = vmatpush1.bf16.msra.mxu0 0
    %697 = vmatprep.mubr.bf16.mxu0 0
    %698 = vmatmul.mubr.bf16.gmra.mrb[0].mxu0 %v660
    %v699 = vpop.f32.mrb[0].mxu0
    %v700 = vadd.f32 0.0, %v699
    %v701 = vpop.f32.mrb[0].mxu0
    %v702 = vpop.f32.mrb[0].mxu0
    %v703 = vpop.f32.mrb[0].mxu0
    %704 = vdwg.mxu0
    %706 = vrot.lane.b32.xlu0 %v484, 64
    %v707 = vpop.permute.xlu0 %706
    %709 = vrot.lane.b32.xlu0 %v486, 64
    %v710 = vpop.permute.xlu0 %709
    %v712 = vsel %vm488, %v707, 0
    %v715 = vsel %vm488, %v710, 0
    %717 = vmatprep.subr.bf16.mxu0 0
    %718 = vmatpush1.bf16.xpose.msra.mxu0 %v715
    %719 = vmatprep.subr.bf16.mxu0 0
    %720 = vmatpush1.bf16.xpose.msra.mxu0 0
    %721 = vmatprep.subr.bf16.mxu0 0
    %722 = vmatpush1.bf16.xpose.msra.mxu0 0
    %723 = vmatprep.subr.bf16.mxu0 0
    %724 = vmatpush1.bf16.xpose.msra.mxu0 0
    %725 = vmatprep.subr.bf16.mxu0 0
    %726 = vmatpush1.bf16.xpose.msra.mxu0 0
    %727 = vmatprep.subr.bf16.mxu0 0
    %728 = vmatpush1.bf16.xpose.msra.mxu0 0
    %729 = vmatprep.subr.bf16.mxu0 0
    %730 = vmatpush1.bf16.xpose.msra.mxu0 0
    %731 = vmatprep.subr.bf16.mxu0 0
    %732 = vmatpush1.bf16.xpose.msra.mxu0 0
    %733 = vmatprep.subr.bf16.mxu0 0
    %734 = vmatpush1.bf16.xpose.msra.mxu0 0
    %735 = vmatprep.subr.bf16.mxu0 0
    %736 = vmatpush1.bf16.xpose.msra.mxu0 0
    %737 = vmatprep.subr.bf16.mxu0 0
    %738 = vmatpush1.bf16.xpose.msra.mxu0 0
    %739 = vmatprep.subr.bf16.mxu0 0
    %740 = vmatpush1.bf16.xpose.msra.mxu0 0
    %741 = vmatprep.subr.bf16.mxu0 0
    %742 = vmatpush1.bf16.xpose.msra.mxu0 0
    %743 = vmatprep.subr.bf16.mxu0 0
    %744 = vmatpush1.bf16.xpose.msra.mxu0 0
    %745 = vmatprep.subr.bf16.mxu0 0
    %746 = vmatpush1.bf16.xpose.msra.mxu0 0
    %747 = vmatprep.subr.bf16.mxu0 0
    %748 = vmatpush1.bf16.xpose.msra.mxu0 0
    %749 = vmatprep.mubr.bf16.mxu0 0
    %750 = vmatmul.mubr.bf16.gmra.mrb[0].mxu0 %v712
    %v751 = vpop.f32.mrb[0].mxu0
    %v752 = vadd.f32 0.0, %v751
    %v753 = vpop.f32.mrb[0].mxu0
    %v754 = vpop.f32.mrb[0].mxu0
    %v755 = vpop.f32.mrb[0].mxu0
    %756 = vdwg.mxu0
    %758 = vrot.lane.b32.xlu0 %v485, 64
    %v759 = vpop.permute.xlu0 %758
    %761 = vrot.lane.b32.xlu0 %v487, 64
    %v762 = vpop.permute.xlu0 %761
    %v764 = vsel %vm488, %v759, 0
    %v767 = vsel %vm488, %v762, 0
    %769 = vmatprep.subr.bf16.mxu0 0
    %770 = vmatpush1.bf16.xpose.msra.mxu0 %v767
    %771 = vmatprep.subr.bf16.mxu0 0
    %772 = vmatpush1.bf16.xpose.msra.mxu0 0
    %773 = vmatprep.subr.bf16.mxu0 0
    %774 = vmatpush1.bf16.xpose.msra.mxu0 0
    %775 = vmatprep.subr.bf16.mxu0 0
    %776 = vmatpush1.bf16.xpose.msra.mxu0 0
    %777 = vmatprep.subr.bf16.mxu0 0
    %778 = vmatpush1.bf16.xpose.msra.mxu0 0
    %779 = vmatprep.subr.bf16.mxu0 0
    %780 = vmatpush1.bf16.xpose.msra.mxu0 0
    %781 = vmatprep.subr.bf16.mxu0 0
    %782 = vmatpush1.bf16.xpose.msra.mxu0 0
    %783 = vmatprep.subr.bf16.mxu0 0
    %784 = vmatpush1.bf16.xpose.msra.mxu0 0
    %785 = vmatprep.subr.bf16.mxu0 0
    %786 = vmatpush1.bf16.xpose.msra.mxu0 0
    %787 = vmatprep.subr.bf16.mxu0 0
    %788 = vmatpush1.bf16.xpose.msra.mxu0 0
    %789 = vmatprep.subr.bf16.mxu0 0
    %790 = vmatpush1.bf16.xpose.msra.mxu0 0
    %791 = vmatprep.subr.bf16.mxu0 0
    %792 = vmatpush1.bf16.xpose.msra.mxu0 0
    %793 = vmatprep.subr.bf16.mxu0 0
    %794 = vmatpush1.bf16.xpose.msra.mxu0 0
    %795 = vmatprep.subr.bf16.mxu0 0
    %796 = vmatpush1.bf16.xpose.msra.mxu0 0
    %797 = vmatprep.subr.bf16.mxu0 0
    %798 = vmatpush1.bf16.xpose.msra.mxu0 0
    %799 = vmatprep.subr.bf16.mxu0 0
    %800 = vmatpush1.bf16.xpose.msra.mxu0 0
    %801 = vmatprep.mubr.bf16.mxu0 0
    %802 = vmatmul.mubr.bf16.gmra.mrb[0].mxu0 %v764
    %v803 = vpop.f32.mrb[0].mxu0
    %v804 = vadd.f32 0.0, %v803
    %v805 = vpop.f32.mrb[0].mxu0
    %v806 = vpop.f32.mrb[0].mxu0
    %v807 = vpop.f32.mrb[0].mxu0
    %808 = vdwg.mxu0
    %v809 = vmul.f32 %v752, 0.125
    %v810 = vmul.f32 %v804, 0.125
    %v811 = vadd.f32 %v809, %v164
    %v812 = vadd.f32 %v810, %v165
    %v813 = vsel %vm585, %v811, -inf
    %814 = vmax.xlane.f32.xlu0 %v813
    %v815 = vpop.xlane.xlu0 %814
    %v816 = vsel %vm585, %v812, -inf
    %817 = vmax.xlane.f32.xlu0 %v816
    %v818 = vpop.xlane.xlu0 %817
    %v819 = vsub.f32 %v811, %v815
    %v820 = vsub.f32 %v812, %v818
    %v821 = vmul.f32 %v819, 1.442695
    %v822 = vpow.pop %v821
    %v823 = vmul.f32 %v820, 1.442695
    %v824 = vpow.pop %v823
    %v825 = vsel %vm585, %v822, 0.0
    %826 = vadd.xlane.f32.xlu0 %v825
    %v827 = vpop.xlane.xlu0 %826
    %v828 = vsel %vm585, %v824, 0.0
    %829 = vadd.xlane.f32.xlu0 %v828
    %v830 = vpop.xlane.xlu0 %829
    %v831 = vrcp.pop %v827
    %v832 = vrcp.pop %v830
    %v833 = vmul.f32 %v822, %v831
    %v834 = vmul.f32 %v824, %v832
    %v835 = vpack.c.bf16 %v833, %v833
    %v836 = vpack.c.bf16 %v834, %v834
    %838 = vrot.lane.b32.xlu0 %v610, 64
    %v839 = vpop.permute.xlu0 %838
    %v841 = vsel %vm585, %v835, 0
    %v844 = vsel %vm615, %v839, 0
    %846 = vmatprep.subr.bf16.mxu0 0
    %847 = vmatpush1.bf16.msra.mxu0 %v844
    %848 = vmatprep.subr.bf16.mxu0 0
    %849 = vmatpush1.bf16.msra.mxu0 0
    %850 = vmatprep.subr.bf16.mxu0 0
    %851 = vmatpush1.bf16.msra.mxu0 0
    %852 = vmatprep.subr.bf16.mxu0 0
    %853 = vmatpush1.bf16.msra.mxu0 0
    %854 = vmatprep.subr.bf16.mxu0 0
    %855 = vmatpush1.bf16.msra.mxu0 0
    %856 = vmatprep.subr.bf16.mxu0 0
    %857 = vmatpush1.bf16.msra.mxu0 0
    %858 = vmatprep.subr.bf16.mxu0 0
    %859 = vmatpush1.bf16.msra.mxu0 0
    %860 = vmatprep.subr.bf16.mxu0 0
    %861 = vmatpush1.bf16.msra.mxu0 0
    %862 = vmatprep.subr.bf16.mxu0 0
    %863 = vmatpush1.bf16.msra.mxu0 0
    %864 = vmatprep.subr.bf16.mxu0 0
    %865 = vmatpush1.bf16.msra.mxu0 0
    %866 = vmatprep.subr.bf16.mxu0 0
    %867 = vmatpush1.bf16.msra.mxu0 0
    %868 = vmatprep.subr.bf16.mxu0 0
    %869 = vmatpush1.bf16.msra.mxu0 0
    %870 = vmatprep.subr.bf16.mxu0 0
    %871 = vmatpush1.bf16.msra.mxu0 0
    %872 = vmatprep.subr.bf16.mxu0 0
    %873 = vmatpush1.bf16.msra.mxu0 0
    %874 = vmatprep.subr.bf16.mxu0 0
    %875 = vmatpush1.bf16.msra.mxu0 0
    %876 = vmatprep.subr.bf16.mxu0 0
    %877 = vmatpush1.bf16.msra.mxu0 0
    %878 = vmatprep.mubr.bf16.mxu0 0
    %879 = vmatmul.mubr.bf16.gmra.mrb[0].mxu0 %v841
    %v880 = vpop.f32.mrb[0].mxu0
    %v881 = vadd.f32 0.0, %v880
    %v882 = vpop.f32.mrb[0].mxu0
    %v883 = vpop.f32.mrb[0].mxu0
    %v884 = vpop.f32.mrb[0].mxu0
    %885 = vdwg.mxu0
    %887 = vrot.lane.b32.xlu0 %v611, 64
    %v888 = vpop.permute.xlu0 %887
    %v890 = vsel %vm585, %v836, 0
    %v893 = vsel %vm615, %v888, 0
    %895 = vmatprep.subr.bf16.mxu0 0
    %896 = vmatpush1.bf16.msra.mxu0 %v893
    %897 = vmatprep.subr.bf16.mxu0 0
    %898 = vmatpush1.bf16.msra.mxu0 0
    %899 = vmatprep.subr.bf16.mxu0 0
    %900 = vmatpush1.bf16.msra.mxu0 0
    %901 = vmatprep.subr.bf16.mxu0 0
    %902 = vmatpush1.bf16.msra.mxu0 0
    %903 = vmatprep.subr.bf16.mxu0 0
    %904 = vmatpush1.bf16.msra.mxu0 0
    %905 = vmatprep.subr.bf16.mxu0 0
    %906 = vmatpush1.bf16.msra.mxu0 0
    %907 = vmatprep.subr.bf16.mxu0 0
    %908 = vmatpush1.bf16.msra.mxu0 0
    %909 = vmatprep.subr.bf16.mxu0 0
    %910 = vmatpush1.bf16.msra.mxu0 0
    %911 = vmatprep.subr.bf16.mxu0 0
    %912 = vmatpush1.bf16.msra.mxu0 0
    %913 = vmatprep.subr.bf16.mxu0 0
    %914 = vmatpush1.bf16.msra.mxu0 0
    %915 = vmatprep.subr.bf16.mxu0 0
    %916 = vmatpush1.bf16.msra.mxu0 0
    %917 = vmatprep.subr.bf16.mxu0 0
    %918 = vmatpush1.bf16.msra.mxu0 0
    %919 = vmatprep.subr.bf16.mxu0 0
    %920 = vmatpush1.bf16.msra.mxu0 0
    %921 = vmatprep.subr.bf16.mxu0 0
    %922 = vmatpush1.bf16.msra.mxu0 0
    %923 = vmatprep.subr.bf16.mxu0 0
    %924 = vmatpush1.bf16.msra.mxu0 0
    %925 = vmatprep.subr.bf16.mxu0 0
    %926 = vmatpush1.bf16.msra.mxu0 0
    %927 = vmatprep.mubr.bf16.mxu0 0
    %928 = vmatmul.mubr.bf16.gmra.mrb[0].mxu0 %v890
    %v929 = vpop.f32.mrb[0].mxu0
    %v930 = vadd.f32 0.0, %v929
    %v931 = vpop.f32.mrb[0].mxu0
    %v932 = vpop.f32.mrb[0].mxu0
    %v933 = vpop.f32.mrb[0].mxu0
    %934 = vdwg.mxu0
    %937 = vrot.lane.b32.xlu0 %v881, 64
    %v938 = vpop.permute.xlu0 %937
    %939 = vrot.lane.b32.xlu0 %v930, 64
    %v940 = vpop.permute.xlu0 %939
    %v943 = vsel %vm488, %v654, %v938
    %v944 = vsel %vm488, %v700, %v940
    %v945 = vpack.c.bf16 %v944, %v943
    %v946 = vlaneseq
    %v947 = vshrl.u32 %v946, 7
    %v948 = vsub.s32 0, %v947
    %v949 = vrot.slane %v254, %v948
    %v966 = vunpack.c.l.b16 %v238
    %v967 = vunpack.c.l.b16 %v239
    %v968 = vunpack.c.l.b16 %v240
    %v969 = vunpack.c.l.b16 %v241
    %v970 = vunpack.c.l.b16 %v242
    %v971 = vunpack.c.l.b16 %v243
    %v972 = vunpack.c.l.b16 %v244
    %v973 = vunpack.c.l.b16 %v245
    %v974 = vunpack.c.l.b16 %v246
    %v975 = vunpack.c.l.b16 %v247
    %v976 = vunpack.c.l.b16 %v248
    %v977 = vunpack.c.l.b16 %v249
    %v978 = vunpack.c.l.b16 %v250
    %v979 = vunpack.c.l.b16 %v251
    %v980 = vunpack.c.l.b16 %v252
    %v981 = vunpack.c.l.b16 %v253
    %v982 = vpack.c.b16 %v967, %v966
    %v983 = vpack.c.b16 %v969, %v968
    %v984 = vpack.c.b16 %v971, %v970
    %v985 = vpack.c.b16 %v973, %v972
    %v986 = vpack.c.b16 %v975, %v974
    %v987 = vpack.c.b16 %v977, %v976
    %v988 = vpack.c.b16 %v979, %v978
    %v989 = vpack.c.b16 %v981, %v980
    %998 = vmatprep.subr.bf16.mxu0 0
    %999 = vmatpush1.bf16.msra.mxu0 %v982
    %1000 = vmatprep.subr.bf16.mxu0 0
    %1001 = vmatpush1.bf16.msra.mxu0 %v983
    %1002 = vmatprep.subr.bf16.mxu0 0
    %1003 = vmatpush1.bf16.msra.mxu0 %v984
    %1004 = vmatprep.subr.bf16.mxu0 0
    %1005 = vmatpush1.bf16.msra.mxu0 %v985
    %1006 = vmatprep.subr.bf16.mxu0 0
    %1007 = vmatpush1.bf16.msra.mxu0 %v986
    %1008 = vmatprep.subr.bf16.mxu0 0
    %1009 = vmatpush1.bf16.msra.mxu0 %v987
    %1010 = vmatprep.subr.bf16.mxu0 0
    %1011 = vmatpush1.bf16.msra.mxu0 %v988
    %1012 = vmatprep.subr.bf16.mxu0 0
    %1013 = vmatpush1.bf16.msra.mxu0 %v989
    %1014 = vmatprep.subr.bf16.mxu0 0
    %1015 = vmatpush1.bf16.msra.mxu0 0
    %1016 = vmatprep.subr.bf16.mxu0 0
    %1017 = vmatpush1.bf16.msra.mxu0 0
    %1018 = vmatprep.subr.bf16.mxu0 0
    %1019 = vmatpush1.bf16.msra.mxu0 0
    %1020 = vmatprep.subr.bf16.mxu0 0
    %1021 = vmatpush1.bf16.msra.mxu0 0
    %1022 = vmatprep.subr.bf16.mxu0 0
    %1023 = vmatpush1.bf16.msra.mxu0 0
    %1024 = vmatprep.subr.bf16.mxu0 0
    %1025 = vmatpush1.bf16.msra.mxu0 0
    %1026 = vmatprep.subr.bf16.mxu0 0
    %1027 = vmatpush1.bf16.msra.mxu0 0
    %1028 = vmatprep.subr.bf16.mxu0 0
    %1029 = vmatpush1.bf16.msra.mxu0 0
    %1030 = vmatprep.mubr.bf16.mxu0 0
    %1031 = vmatmul.mubr.bf16.gmra.mrb[0].mxu0 %v945
    %v1032 = vpop.f32.mrb[0].mxu0
    %v1033 = vadd.f32 %v949, %v1032
    %v1034 = vpop.f32.mrb[0].mxu0
    %v1035 = vpop.f32.mrb[0].mxu0
    %v1036 = vadd.f32 %v949, %v1035
    %v1037 = vpop.f32.mrb[0].mxu0
    %1038 = vdwg.mxu0
    %v1039 = vadd.f32 %v203, %v1033
    %v1040 = vadd.f32 %v204, %v1036
    %v1041 = vld [vmem:[%s9 + $0x3] sm:$0x1]
    %v1042 = vld [vmem:[%s9 + $0x4] sm:$0x1]
    %1043 = vadd.xlane.f32.xlu0 %v1039
    %v1044 = vpop.xlane.xlu0 %1043
    %1045 = vadd.xlane.f32.xlu0 %v1040
    %v1046 = vpop.xlane.xlu0 %1045
    %v1047 = vmul.f32 %v1044, %v174
    %v1048 = vmul.f32 %v1046, %v174
    %v1049 = vsub.f32 %v1039, %v1047
    %v1050 = vsub.f32 %v1040, %v1048
    %v1051 = vmul.f32 %v1049, %v1049
    %v1052 = vmul.f32 %v1050, %v1050
    %1053 = vadd.xlane.f32.xlu0 %v1051
    %v1054 = vpop.xlane.xlu0 %1053
    %1055 = vadd.xlane.f32.xlu0 %v1052
    %v1056 = vpop.xlane.xlu0 %1055
    %v1057 = vmul.f32 %v1054, %v174
    %v1058 = vmul.f32 %v1056, %v174
    %v1059 = vadd.f32 %v1057, 1e-12
    %v1060 = vadd.f32 %v1058, 1e-12
    %v1061 = vrsqrt.pop %v1059
    %v1062 = vrsqrt.pop %v1060
    %v1063 = vmul.f32 %v1049, %v1061
    %v1064 = vmul.f32 %v1050, %v1062
    %v1065 = vlaneseq
    %v1066 = vshrl.u32 %v1065, 7
    %v1067 = vsub.s32 0, %v1066
    %v1068 = vrot.slane %v1041, %v1067
    %v1069 = vmul.f32 %v1063, %v1068
    %v1070 = vmul.f32 %v1064, %v1068
    %v1071 = vlaneseq
    %v1072 = vshrl.u32 %v1071, 7
    %v1073 = vsub.s32 0, %v1072
    %v1074 = vrot.slane %v1042, %v1073
    %v1075 = vadd.f32 %v1069, %v1074
    %v1076 = vadd.f32 %v1070, %v1074
    %v1077 = vpack.c.bf16 %v1076, %v1075
    %v1078 = vld [vmem:[#allocation8] sm:$0xff]
    %v1079 = vld [vmem:[#allocation8 + $0x8] sm:$0xff]
    %v1080 = vld [vmem:[#allocation8 + $0x10] sm:$0xff]
    %v1081 = vld [vmem:[#allocation8 + $0x18] sm:$0xff]
    %v1082 = vld [vmem:[#allocation8 + $0x20] sm:$0xff]
    %v1083 = vld [vmem:[#allocation8 + $0x28] sm:$0xff]
    %v1084 = vld [vmem:[#allocation8 + $0x30] sm:$0xff]
    %v1085 = vld [vmem:[#allocation8 + $0x38] sm:$0xff]
    %v1086 = vld [vmem:[#allocation8 + $0x40] sm:$0xff]
    %v1087 = vld [vmem:[#allocation8 + $0x48] sm:$0xff]
    %v1088 = vld [vmem:[#allocation8 + $0x50] sm:$0xff]
    %v1089 = vld [vmem:[#allocation8 + $0x58] sm:$0xff]
    %v1090 = vld [vmem:[#allocation8 + $0x60] sm:$0xff]
    %v1091 = vld [vmem:[#allocation8 + $0x68] sm:$0xff]
    %v1092 = vld [vmem:[#allocation8 + $0x70] sm:$0xff]
    %v1093 = vld [vmem:[#allocation8 + $0x78] sm:$0xff]
    %v1094 = vld [vmem:[#allocation8 + $0x80] sm:$0xff]
    %v1095 = vld [vmem:[#allocation8 + $0x88] sm:$0xff]
    %v1096 = vld [vmem:[#allocation8 + $0x90] sm:$0xff]
    %v1097 = vld [vmem:[#allocation8 + $0x98] sm:$0xff]
    %v1098 = vld [vmem:[#allocation8 + $0xa0] sm:$0xff]
    %v1099 = vld [vmem:[#allocation8 + $0xa8] sm:$0xff]
    %v1100 = vld [vmem:[#allocation8 + $0xb0] sm:$0xff]
    %v1101 = vld [vmem:[#allocation8 + $0xb8] sm:$0xff]
    %v1102 = vld [vmem:[#allocation8 + $0xc0] sm:$0xff]
    %v1103 = vld [vmem:[#allocation8 + $0xc8] sm:$0xff]
    %v1104 = vld [vmem:[#allocation8 + $0xd0] sm:$0xff]
    %v1105 = vld [vmem:[#allocation8 + $0xd8] sm:$0xff]
    %v1106 = vld [vmem:[#allocation8 + $0xe0] sm:$0xff]
    %v1107 = vld [vmem:[#allocation8 + $0xe8] sm:$0xff]
    %v1108 = vld [vmem:[#allocation8 + $0xf0] sm:$0xff]
    %v1109 = vld [vmem:[#allocation8 + $0xf8] sm:$0xff]
    %v1110 = vld [vmem:[#allocation14] ss:$4 sm:$0xf]
    %v1112 = vlaneseq
    %v1113 = vshrl.u32 %v1112, 7
    %v1114 = vsub.s32 0, %v1113
    %v1115 = vrot.slane %v1110, %v1114
    %v1116 = vlaneseq
    %v1117 = vshrl.u32 %v1116, 7
    %v1118 = vsub.s32 1, %v1117
    %v1119 = vrot.slane %v1110, %v1118
    %v1120 = vlaneseq
    %v1121 = vshrl.u32 %v1120, 7
    %v1122 = vsub.s32 2, %v1121
    %v1123 = vrot.slane %v1110, %v1122
    %v1124 = vlaneseq
    %v1125 = vshrl.u32 %v1124, 7
    %v1126 = vsub.s32 3, %v1125
    %v1127 = vrot.slane %v1110, %v1126
    %v1164 = vunpack.c.l.b16 %v1078
    %v1165 = vunpack.c.h.b16 %v1078
    %v1166 = vunpack.c.l.b16 %v1079
    %v1167 = vunpack.c.h.b16 %v1079
    %v1168 = vunpack.c.l.b16 %v1080
    %v1169 = vunpack.c.h.b16 %v1080
    %v1170 = vunpack.c.l.b16 %v1081
    %v1171 = vunpack.c.h.b16 %v1081
    %v1172 = vunpack.c.l.b16 %v1082
    %v1173 = vunpack.c.h.b16 %v1082
    %v1174 = vunpack.c.l.b16 %v1083
    %v1175 = vunpack.c.h.b16 %v1083
    %v1176 = vunpack.c.l.b16 %v1084
    %v1177 = vunpack.c.h.b16 %v1084
    %v1178 = vunpack.c.l.b16 %v1085
    %v1179 = vunpack.c.h.b16 %v1085
    %v1180 = vunpack.c.l.b16 %v1086
    %v1181 = vunpack.c.h.b16 %v1086
    %v1182 = vunpack.c.l.b16 %v1087
    %v1183 = vunpack.c.h.b16 %v1087
    %v1184 = vunpack.c.l.b16 %v1088
    %v1185 = vunpack.c.h.b16 %v1088
    %v1186 = vunpack.c.l.b16 %v1089
    %v1187 = vunpack.c.h.b16 %v1089
    %v1188 = vunpack.c.l.b16 %v1090
    %v1189 = vunpack.c.h.b16 %v1090
    %v1190 = vunpack.c.l.b16 %v1091
    %v1191 = vunpack.c.h.b16 %v1091
    %v1192 = vunpack.c.l.b16 %v1092
    %v1193 = vunpack.c.h.b16 %v1092
    %v1194 = vunpack.c.l.b16 %v1093
    %v1195 = vunpack.c.h.b16 %v1093
    %v1196 = vunpack.c.l.b16 %v1094
    %v1197 = vunpack.c.h.b16 %v1094
    %v1198 = vunpack.c.l.b16 %v1095
    %v1199 = vunpack.c.h.b16 %v1095
    %v1200 = vunpack.c.l.b16 %v1096
    %v1201 = vunpack.c.h.b16 %v1096
    %v1202 = vunpack.c.l.b16 %v1097
    %v1203 = vunpack.c.h.b16 %v1097
    %v1204 = vunpack.c.l.b16 %v1098
    %v1205 = vunpack.c.h.b16 %v1098
    %v1206 = vunpack.c.l.b16 %v1099
    %v1207 = vunpack.c.h.b16 %v1099
    %v1208 = vunpack.c.l.b16 %v1100
    %v1209 = vunpack.c.h.b16 %v1100
    %v1210 = vunpack.c.l.b16 %v1101
    %v1211 = vunpack.c.h.b16 %v1101
    %v1212 = vunpack.c.l.b16 %v1102
    %v1213 = vunpack.c.h.b16 %v1102
    %v1214 = vunpack.c.l.b16 %v1103
    %v1215 = vunpack.c.h.b16 %v1103
    %v1216 = vunpack.c.l.b16 %v1104
    %v1217 = vunpack.c.h.b16 %v1104
    %v1218 = vunpack.c.l.b16 %v1105
    %v1219 = vunpack.c.h.b16 %v1105
    %v1220 = vunpack.c.l.b16 %v1106
    %v1221 = vunpack.c.h.b16 %v1106
    %v1222 = vunpack.c.l.b16 %v1107
    %v1223 = vunpack.c.h.b16 %v1107
    %v1224 = vunpack.c.l.b16 %v1108
    %v1225 = vunpack.c.h.b16 %v1108
    %v1226 = vunpack.c.l.b16 %v1109
    %v1227 = vunpack.c.h.b16 %v1109
    %v1228 = vpack.c.b16 %v1168, %v1164
    %v1229 = vpack.c.b16 %v1169, %v1165
    %v1230 = vpack.c.b16 %v1170, %v1166
    %v1231 = vpack.c.b16 %v1171, %v1167
    %v1232 = vpack.c.b16 %v1176, %v1172
    %v1233 = vpack.c.b16 %v1177, %v1173
    %v1234 = vpack.c.b16 %v1178, %v1174
    %v1235 = vpack.c.b16 %v1179, %v1175
    %v1236 = vpack.c.b16 %v1184, %v1180
    %v1237 = vpack.c.b16 %v1185, %v1181
    %v1238 = vpack.c.b16 %v1186, %v1182
    %v1239 = vpack.c.b16 %v1187, %v1183
    %v1240 = vpack.c.b16 %v1192, %v1188
    %v1241 = vpack.c.b16 %v1193, %v1189
    %v1242 = vpack.c.b16 %v1194, %v1190
    %v1243 = vpack.c.b16 %v1195, %v1191
    %v1244 = vpack.c.b16 %v1200, %v1196
    %v1245 = vpack.c.b16 %v1201, %v1197
    %v1246 = vpack.c.b16 %v1202, %v1198
    %v1247 = vpack.c.b16 %v1203, %v1199
    %v1248 = vpack.c.b16 %v1208, %v1204
    %v1249 = vpack.c.b16 %v1209, %v1205
    %v1250 = vpack.c.b16 %v1210, %v1206
    %v1251 = vpack.c.b16 %v1211, %v1207
    %v1252 = vpack.c.b16 %v1216, %v1212
    %v1253 = vpack.c.b16 %v1217, %v1213
    %v1254 = vpack.c.b16 %v1218, %v1214
    %v1255 = vpack.c.b16 %v1219, %v1215
    %v1256 = vpack.c.b16 %v1224, %v1220
    %v1257 = vpack.c.b16 %v1225, %v1221
    %v1258 = vpack.c.b16 %v1226, %v1222
    %v1259 = vpack.c.b16 %v1227, %v1223
    %1292 = vmatprep.subr.bf16.mxu0 %v1229
    %1293 = vmatpush1.bf16.msra.mxu0 %v1228
    %1294 = vmatprep.subr.bf16.mxu0 %v1233
    %1295 = vmatpush1.bf16.msra.mxu0 %v1232
    %1296 = vmatprep.subr.bf16.mxu0 %v1237
    %1297 = vmatpush1.bf16.msra.mxu0 %v1236
    %1298 = vmatprep.subr.bf16.mxu0 %v1241
    %1299 = vmatpush1.bf16.msra.mxu0 %v1240
    %1300 = vmatprep.subr.bf16.mxu0 %v1245
    %1301 = vmatpush1.bf16.msra.mxu0 %v1244
    %1302 = vmatprep.subr.bf16.mxu0 %v1249
    %1303 = vmatpush1.bf16.msra.mxu0 %v1248
    %1304 = vmatprep.subr.bf16.mxu0 %v1253
    %1305 = vmatpush1.bf16.msra.mxu0 %v1252
    %1306 = vmatprep.subr.bf16.mxu0 %v1257
    %1307 = vmatpush1.bf16.msra.mxu0 %v1256
    %1308 = vmatprep.subr.bf16.mxu0 0
    %1309 = vmatpush1.bf16.msra.mxu0 0
    %1310 = vmatprep.subr.bf16.mxu0 0
    %1311 = vmatpush1.bf16.msra.mxu0 0
    %1312 = vmatprep.subr.bf16.mxu0 0
    %1313 = vmatpush1.bf16.msra.mxu0 0
    %1314 = vmatprep.subr.bf16.mxu0 0
    %1315 = vmatpush1.bf16.msra.mxu0 0
    %1316 = vmatprep.subr.bf16.mxu0 0
    %1317 = vmatpush1.bf16.msra.mxu0 0
    %1318 = vmatprep.subr.bf16.mxu0 0
    %1319 = vmatpush1.bf16.msra.mxu0 0
    %1320 = vmatprep.subr.bf16.mxu0 0
    %1321 = vmatpush1.bf16.msra.mxu0 0
    %1322 = vmatprep.subr.bf16.mxu0 0
    %1323 = vmatpush1.bf16.msra.mxu0 0
    %1324 = vmatprep.mubr.bf16.mxu0 0
    %1325 = vmatmul.mubr.bf16.gmra.mrb[0].mxu0 %v1077
    %v1326 = vpop.f32.mrb[0].mxu0
    %v1327 = vadd.f32 %v1115, %v1326
    %v1328 = vpop.f32.mrb[0].mxu0
    %v1329 = vadd.f32 %v1119, %v1328
    %v1330 = vpop.f32.mrb[0].mxu0
    %v1331 = vadd.f32 %v1115, %v1330
    %v1332 = vpop.f32.mrb[0].mxu0
    %v1333 = vadd.f32 %v1119, %v1332
    %1334 = vdwg.mxu0
    %1335 = vmatprep.subr.bf16.mxu0 %v1231
    %1336 = vmatpush1.bf16.msra.mxu0 %v1230
    %1337 = vmatprep.subr.bf16.mxu0 %v1235
    %1338 = vmatpush1.bf16.msra.mxu0 %v1234
    %1339 = vmatprep.subr.bf16.mxu0 %v1239
    %1340 = vmatpush1.bf16.msra.mxu0 %v1238
    %1341 = vmatprep.subr.bf16.mxu0 %v1243
    %1342 = vmatpush1.bf16.msra.mxu0 %v1242
    %1343 = vmatprep.subr.bf16.mxu0 %v1247
    %1344 = vmatpush1.bf16.msra.mxu0 %v1246
    %1345 = vmatprep.subr.bf16.mxu0 %v1251
    %1346 = vmatpush1.bf16.msra.mxu0 %v1250
    %1347 = vmatprep.subr.bf16.mxu0 %v1255
    %1348 = vmatpush1.bf16.msra.mxu0 %v1254
    %1349 = vmatprep.subr.bf16.mxu0 %v1259
    %1350 = vmatpush1.bf16.msra.mxu0 %v1258
    %1351 = vmatprep.subr.bf16.mxu0 0
    %1352 = vmatpush1.bf16.msra.mxu0 0
    %1353 = vmatprep.subr.bf16.mxu0 0
    %1354 = vmatpush1.bf16.msra.mxu0 0
    %1355 = vmatprep.subr.bf16.mxu0 0
    %1356 = vmatpush1.bf16.msra.mxu0 0
    %1357 = vmatprep.subr.bf16.mxu0 0
    %1358 = vmatpush1.bf16.msra.mxu0 0
    %1359 = vmatprep.subr.bf16.mxu0 0
    %1360 = vmatpush1.bf16.msra.mxu0 0
    %1361 = vmatprep.subr.bf16.mxu0 0
    %1362 = vmatpush1.bf16.msra.mxu0 0
    %1363 = vmatprep.subr.bf16.mxu0 0
    %1364 = vmatpush1.bf16.msra.mxu0 0
    %1365 = vmatprep.subr.bf16.mxu0 0
    %1366 = vmatpush1.bf16.msra.mxu0 0
    %1367 = vmatprep.mubr.bf16.mxu0 0
    %1368 = vmatmul.mubr.bf16.gmra.mrb[0].mxu0 %v1077
    %v1369 = vpop.f32.mrb[0].mxu0
    %v1370 = vadd.f32 %v1123, %v1369
    %v1371 = vpop.f32.mrb[0].mxu0
    %v1372 = vadd.f32 %v1127, %v1371
    %v1373 = vpop.f32.mrb[0].mxu0
    %v1374 = vadd.f32 %v1123, %v1373
    %v1375 = vpop.f32.mrb[0].mxu0
    %v1376 = vadd.f32 %v1127, %v1375
    %1377 = vdwg.mxu0
    %v1378 = vmul.f32 %v1327, %v1327
    %v1379 = vmul.f32 %v1329, %v1329
    %v1380 = vmul.f32 %v1370, %v1370
    %v1381 = vmul.f32 %v1372, %v1372
    %v1382 = vmul.f32 %v1331, %v1331
    %v1383 = vmul.f32 %v1333, %v1333
    %v1384 = vmul.f32 %v1374, %v1374
    %v1385 = vmul.f32 %v1376, %v1376
    %v1386 = vmul.f32 %v1327, %v1378
    %v1387 = vmul.f32 %v1329, %v1379
    %v1388 = vmul.f32 %v1370, %v1380
    %v1389 = vmul.f32 %v1372, %v1381
    %v1390 = vmul.f32 %v1331, %v1382
    %v1391 = vmul.f32 %v1333, %v1383
    %v1392 = vmul.f32 %v1374, %v1384
    %v1393 = vmul.f32 %v1376, %v1385
    %v1394 = vmul.f32 %v1386, 0.044715
    %v1395 = vmul.f32 %v1387, 0.044715
    %v1396 = vmul.f32 %v1388, 0.044715
    %v1397 = vmul.f32 %v1389, 0.044715
    %v1398 = vmul.f32 %v1390, 0.044715
    %v1399 = vmul.f32 %v1391, 0.044715
    %v1400 = vmul.f32 %v1392, 0.044715
    %v1401 = vmul.f32 %v1393, 0.044715
    %v1402 = vadd.f32 %v1327, %v1394
    %v1403 = vadd.f32 %v1329, %v1395
    %v1404 = vadd.f32 %v1370, %v1396
    %v1405 = vadd.f32 %v1372, %v1397
    %v1406 = vadd.f32 %v1331, %v1398
    %v1407 = vadd.f32 %v1333, %v1399
    %v1408 = vadd.f32 %v1374, %v1400
    %v1409 = vadd.f32 %v1376, %v1401
    %v1410 = vmul.f32 %v1402, 0.7978846
    %v1411 = vmul.f32 %v1403, 0.7978846
    %v1412 = vmul.f32 %v1404, 0.7978846
    %v1413 = vmul.f32 %v1405, 0.7978846
    %v1414 = vmul.f32 %v1406, 0.7978846
    %v1415 = vmul.f32 %v1407, 0.7978846
    %v1416 = vmul.f32 %v1408, 0.7978846
    %v1417 = vmul.f32 %v1409, 0.7978846
    %v1418 = vtanh.pop %v1410
    %v1419 = vtanh.pop %v1411
    %v1420 = vtanh.pop %v1412
    %v1421 = vtanh.pop %v1413
    %v1422 = vtanh.pop %v1414
    %v1423 = vtanh.pop %v1415
    %v1424 = vtanh.pop %v1416
    %v1425 = vtanh.pop %v1417
    %v1426 = vadd.f32 %v1418, 1.0
    %v1427 = vadd.f32 %v1419, 1.0
    %v1428 = vadd.f32 %v1420, 1.0
    %v1429 = vadd.f32 %v1421, 1.0
    %v1430 = vadd.f32 %v1422, 1.0
    %v1431 = vadd.f32 %v1423, 1.0
    %v1432 = vadd.f32 %v1424, 1.0
    %v1433 = vadd.f32 %v1425, 1.0
    %v1434 = vmul.f32 %v1426, 0.5
    %v1435 = vmul.f32 %v1427, 0.5
    %v1436 = vmul.f32 %v1428, 0.5
    %v1437 = vmul.f32 %v1429, 0.5
    %v1438 = vmul.f32 %v1430, 0.5
    %v1439 = vmul.f32 %v1431, 0.5
    %v1440 = vmul.f32 %v1432, 0.5
    %v1441 = vmul.f32 %v1433, 0.5
    %v1442 = vmul.f32 %v1327, %v1434
    %v1443 = vmul.f32 %v1329, %v1435
    %v1444 = vmul.f32 %v1370, %v1436
    %v1445 = vmul.f32 %v1372, %v1437
    %v1446 = vmul.f32 %v1331, %v1438
    %v1447 = vmul.f32 %v1333, %v1439
    %v1448 = vmul.f32 %v1374, %v1440
    %v1449 = vmul.f32 %v1376, %v1441
    %v1450 = vpack.c.bf16 %v1446, %v1442
    %v1451 = vpack.c.bf16 %v1447, %v1443
    %v1452 = vpack.c.bf16 %v1448, %v1444
    %v1453 = vpack.c.bf16 %v1449, %v1445
    %v1454 = vld [vmem:[#allocation10] sm:$0xf]
    %v1455 = vld [vmem:[#allocation10 + $0x4] sm:$0xf]
    %v1456 = vld [vmem:[#allocation10 + $0x8] sm:$0xf]
    %v1457 = vld [vmem:[#allocation10 + $0xc] sm:$0xf]
    %v1458 = vld [vmem:[#allocation10 + $0x10] sm:$0xf]
    %v1459 = vld [vmem:[#allocation10 + $0x14] sm:$0xf]
    %v1460 = vld [vmem:[#allocation10 + $0x18] sm:$0xf]
    %v1461 = vld [vmem:[#allocation10 + $0x1c] sm:$0xf]
    %v1462 = vld [vmem:[#allocation10 + $0x20] sm:$0xf]
    %v1463 = vld [vmem:[#allocation10 + $0x24] sm:$0xf]
    %v1464 = vld [vmem:[#allocation10 + $0x28] sm:$0xf]
    %v1465 = vld [vmem:[#allocation10 + $0x2c] sm:$0xf]
    %v1466 = vld [vmem:[#allocation10 + $0x30] sm:$0xf]
    %v1467 = vld [vmem:[#allocation10 + $0x34] sm:$0xf]
    %v1468 = vld [vmem:[#allocation10 + $0x38] sm:$0xf]
    %v1469 = vld [vmem:[#allocation10 + $0x3c] sm:$0xf]
    %v1470 = vld [vmem:[#allocation10 + $0x40] sm:$0xf]
    %v1471 = vld [vmem:[#allocation10 + $0x44] sm:$0xf]
    %v1472 = vld [vmem:[#allocation10 + $0x48] sm:$0xf]
    %v1473 = vld [vmem:[#allocation10 + $0x4c] sm:$0xf]
    %v1474 = vld [vmem:[#allocation10 + $0x50] sm:$0xf]
    %v1475 = vld [vmem:[#allocation10 + $0x54] sm:$0xf]
    %v1476 = vld [vmem:[#allocation10 + $0x58] sm:$0xf]
    %v1477 = vld [vmem:[#allocation10 + $0x5c] sm:$0xf]
    %v1478 = vld [vmem:[#allocation10 + $0x60] sm:$0xf]
    %v1479 = vld [vmem:[#allocation10 + $0x64] sm:$0xf]
    %v1480 = vld [vmem:[#allocation10 + $0x68] sm:$0xf]
    %v1481 = vld [vmem:[#allocation10 + $0x6c] sm:$0xf]
    %v1482 = vld [vmem:[#allocation10 + $0x70] sm:$0xf]
    %v1483 = vld [vmem:[#allocation10 + $0x74] sm:$0xf]
    %v1484 = vld [vmem:[#allocation10 + $0x78] sm:$0xf]
    %v1485 = vld [vmem:[#allocation10 + $0x7c] sm:$0xf]
    %v1486 = vld [vmem:[#allocation10 + $0x80] sm:$0xf]
    %v1487 = vld [vmem:[#allocation10 + $0x84] sm:$0xf]
    %v1488 = vld [vmem:[#allocation10 + $0x88] sm:$0xf]
    %v1489 = vld [vmem:[#allocation10 + $0x8c] sm:$0xf]
    %v1490 = vld [vmem:[#allocation10 + $0x90] sm:$0xf]
    %v1491 = vld [vmem:[#allocation10 + $0x94] sm:$0xf]
    %v1492 = vld [vmem:[#allocation10 + $0x98] sm:$0xf]
    %v1493 = vld [vmem:[#allocation10 + $0x9c] sm:$0xf]
    %v1494 = vld [vmem:[#allocation10 + $0xa0] sm:$0xf]
    %v1495 = vld [vmem:[#allocation10 + $0xa4] sm:$0xf]
    %v1496 = vld [vmem:[#allocation10 + $0xa8] sm:$0xf]
    %v1497 = vld [vmem:[#allocation10 + $0xac] sm:$0xf]
    %v1498 = vld [vmem:[#allocation10 + $0xb0] sm:$0xf]
    %v1499 = vld [vmem:[#allocation10 + $0xb4] sm:$0xf]
    %v1500 = vld [vmem:[#allocation10 + $0xb8] sm:$0xf]
    %v1501 = vld [vmem:[#allocation10 + $0xbc] sm:$0xf]
    %v1502 = vld [vmem:[#allocation10 + $0xc0] sm:$0xf]
    %v1503 = vld [vmem:[#allocation10 + $0xc4] sm:$0xf]
    %v1504 = vld [vmem:[#allocation10 + $0xc8] sm:$0xf]
    %v1505 = vld [vmem:[#allocation10 + $0xcc] sm:$0xf]
    %v1506 = vld [vmem:[#allocation10 + $0xd0] sm:$0xf]
    %v1507 = vld [vmem:[#allocation10 + $0xd4] sm:$0xf]
    %v1508 = vld [vmem:[#allocation10 + $0xd8] sm:$0xf]
    %v1509 = vld [vmem:[#allocation10 + $0xdc] sm:$0xf]
    %v1510 = vld [vmem:[#allocation10 + $0xe0] sm:$0xf]
    %v1511 = vld [vmem:[#allocation10 + $0xe4] sm:$0xf]
    %v1512 = vld [vmem:[#allocation10 + $0xe8] sm:$0xf]
    %v1513 = vld [vmem:[#allocation10 + $0xec] sm:$0xf]
    %v1514 = vld [vmem:[#allocation10 + $0xf0] sm:$0xf]
    %v1515 = vld [vmem:[#allocation10 + $0xf4] sm:$0xf]
    %v1516 = vld [vmem:[#allocation10 + $0xf8] sm:$0xf]
    %v1517 = vld [vmem:[#allocation10 + $0xfc] sm:$0xf]
    %v1518 = vld [vmem:[%s9 + $0x5] sm:$0x1]
    %v1519 = vlaneseq
    %v1520 = vshrl.u32 %v1519, 7
    %v1521 = vsub.s32 0, %v1520
    %v1522 = vrot.slane %v1518, %v1521
    %v1587 = vunpack.c.l.b16 %v1454
    %v1588 = vunpack.c.l.b16 %v1455
    %v1589 = vunpack.c.l.b16 %v1456
    %v1590 = vunpack.c.l.b16 %v1457
    %v1591 = vunpack.c.l.b16 %v1458
    %v1592 = vunpack.c.l.b16 %v1459
    %v1593 = vunpack.c.l.b16 %v1460
    %v1594 = vunpack.c.l.b16 %v1461
    %v1595 = vunpack.c.l.b16 %v1462
    %v1596 = vunpack.c.l.b16 %v1463
    %v1597 = vunpack.c.l.b16 %v1464
    %v1598 = vunpack.c.l.b16 %v1465
    %v1599 = vunpack.c.l.b16 %v1466
    %v1600 = vunpack.c.l.b16 %v1467
    %v1601 = vunpack.c.l.b16 %v1468
    %v1602 = vunpack.c.l.b16 %v1469
    %v1603 = vunpack.c.l.b16 %v1470
    %v1604 = vunpack.c.l.b16 %v1471
    %v1605 = vunpack.c.l.b16 %v1472
    %v1606 = vunpack.c.l.b16 %v1473
    %v1607 = vunpack.c.l.b16 %v1474
    %v1608 = vunpack.c.l.b16 %v1475
    %v1609 = vunpack.c.l.b16 %v1476
    %v1610 = vunpack.c.l.b16 %v1477
    %v1611 = vunpack.c.l.b16 %v1478
    %v1612 = vunpack.c.l.b16 %v1479
    %v1613 = vunpack.c.l.b16 %v1480
    %v1614 = vunpack.c.l.b16 %v1481
    %v1615 = vunpack.c.l.b16 %v1482
    %v1616 = vunpack.c.l.b16 %v1483
    %v1617 = vunpack.c.l.b16 %v1484
    %v1618 = vunpack.c.l.b16 %v1485
    %v1619 = vunpack.c.l.b16 %v1486
    %v1620 = vunpack.c.l.b16 %v1487
    %v1621 = vunpack.c.l.b16 %v1488
    %v1622 = vunpack.c.l.b16 %v1489
    %v1623 = vunpack.c.l.b16 %v1490
    %v1624 = vunpack.c.l.b16 %v1491
    %v1625 = vunpack.c.l.b16 %v1492
    %v1626 = vunpack.c.l.b16 %v1493
    %v1627 = vunpack.c.l.b16 %v1494
    %v1628 = vunpack.c.l.b16 %v1495
    %v1629 = vunpack.c.l.b16 %v1496
    %v1630 = vunpack.c.l.b16 %v1497
    %v1631 = vunpack.c.l.b16 %v1498
    %v1632 = vunpack.c.l.b16 %v1499
    %v1633 = vunpack.c.l.b16 %v1500
    %v1634 = vunpack.c.l.b16 %v1501
    %v1635 = vunpack.c.l.b16 %v1502
    %v1636 = vunpack.c.l.b16 %v1503
    %v1637 = vunpack.c.l.b16 %v1504
    %v1638 = vunpack.c.l.b16 %v1505
    %v1639 = vunpack.c.l.b16 %v1506
    %v1640 = vunpack.c.l.b16 %v1507
    %v1641 = vunpack.c.l.b16 %v1508
    %v1642 = vunpack.c.l.b16 %v1509
    %v1643 = vunpack.c.l.b16 %v1510
    %v1644 = vunpack.c.l.b16 %v1511
    %v1645 = vunpack.c.l.b16 %v1512
    %v1646 = vunpack.c.l.b16 %v1513
    %v1647 = vunpack.c.l.b16 %v1514
    %v1648 = vunpack.c.l.b16 %v1515
    %v1649 = vunpack.c.l.b16 %v1516
    %v1650 = vunpack.c.l.b16 %v1517
    %v1651 = vpack.c.b16 %v1588, %v1587
    %v1652 = vpack.c.b16 %v1590, %v1589
    %v1653 = vpack.c.b16 %v1592, %v1591
    %v1654 = vpack.c.b16 %v1594, %v1593
    %v1655 = vpack.c.b16 %v1596, %v1595
    %v1656 = vpack.c.b16 %v1598, %v1597
    %v1657 = vpack.c.b16 %v1600, %v1599
    %v1658 = vpack.c.b16 %v1602, %v1601
    %v1659 = vpack.c.b16 %v1604, %v1603
    %v1660 = vpack.c.b16 %v1606, %v1605
    %v1661 = vpack.c.b16 %v1608, %v1607
    %v1662 = vpack.c.b16 %v1610, %v1609
    %v1663 = vpack.c.b16 %v1612, %v1611
    %v1664 = vpack.c.b16 %v1614, %v1613
    %v1665 = vpack.c.b16 %v1616, %v1615
    %v1666 = vpack.c.b16 %v1618, %v1617
    %v1667 = vpack.c.b16 %v1620, %v1619
    %v1668 = vpack.c.b16 %v1622, %v1621
    %v1669 = vpack.c.b16 %v1624, %v1623
    %v1670 = vpack.c.b16 %v1626, %v1625
    %v1671 = vpack.c.b16 %v1628, %v1627
    %v1672 = vpack.c.b16 %v1630, %v1629
    %v1673 = vpack.c.b16 %v1632, %v1631
    %v1674 = vpack.c.b16 %v1634, %v1633
    %v1675 = vpack.c.b16 %v1636, %v1635
    %v1676 = vpack.c.b16 %v1638, %v1637
    %v1677 = vpack.c.b16 %v1640, %v1639
    %v1678 = vpack.c.b16 %v1642, %v1641
    %v1679 = vpack.c.b16 %v1644, %v1643
    %v1680 = vpack.c.b16 %v1646, %v1645
    %v1681 = vpack.c.b16 %v1648, %v1647
    %v1682 = vpack.c.b16 %v1650, %v1649
    %1715 = vmatprep.subr.bf16.mxu0 0
    %1716 = vmatpush1.bf16.msra.mxu0 %v1651
    %1717 = vmatprep.subr.bf16.mxu0 0
    %1718 = vmatpush1.bf16.msra.mxu0 %v1652
    %1719 = vmatprep.subr.bf16.mxu0 0
    %1720 = vmatpush1.bf16.msra.mxu0 %v1653
    %1721 = vmatprep.subr.bf16.mxu0 0
    %1722 = vmatpush1.bf16.msra.mxu0 %v1654
    %1723 = vmatprep.subr.bf16.mxu0 0
    %1724 = vmatpush1.bf16.msra.mxu0 %v1655
    %1725 = vmatprep.subr.bf16.mxu0 0
    %1726 = vmatpush1.bf16.msra.mxu0 %v1656
    %1727 = vmatprep.subr.bf16.mxu0 0
    %1728 = vmatpush1.bf16.msra.mxu0 %v1657
    %1729 = vmatprep.subr.bf16.mxu0 0
    %1730 = vmatpush1.bf16.msra.mxu0 %v1658
    %1731 = vmatprep.subr.bf16.mxu0 0
    %1732 = vmatpush1.bf16.msra.mxu0 %v1659
    %1733 = vmatprep.subr.bf16.mxu0 0
    %1734 = vmatpush1.bf16.msra.mxu0 %v1660
    %1735 = vmatprep.subr.bf16.mxu0 0
    %1736 = vmatpush1.bf16.msra.mxu0 %v1661
    %1737 = vmatprep.subr.bf16.mxu0 0
    %1738 = vmatpush1.bf16.msra.mxu0 %v1662
    %1739 = vmatprep.subr.bf16.mxu0 0
    %1740 = vmatpush1.bf16.msra.mxu0 %v1663
    %1741 = vmatprep.subr.bf16.mxu0 0
    %1742 = vmatpush1.bf16.msra.mxu0 %v1664
    %1743 = vmatprep.subr.bf16.mxu0 0
    %1744 = vmatpush1.bf16.msra.mxu0 %v1665
    %1745 = vmatprep.subr.bf16.mxu0 0
    %1746 = vmatpush1.bf16.msra.mxu0 %v1666
    %1747 = vmatprep.mubr.bf16.mxu0 %v1451
    %1748 = vmatmul.mubr.bf16.gmra.mrb[0].mxu0 %v1450
    %v1749 = vpop.f32.mrb[0].mxu0
    %v1750 = vadd.f32 %v1522, %v1749
    %v1751 = vpop.f32.mrb[0].mxu0
    %v1752 = vpop.f32.mrb[0].mxu0
    %v1753 = vadd.f32 %v1522, %v1752
    %v1754 = vpop.f32.mrb[0].mxu0
    %1755 = vdwg.mxu0
    %1756 = vmatprep.subr.bf16.mxu0 0
    %1757 = vmatpush1.bf16.msra.mxu0 %v1667
    %1758 = vmatprep.subr.bf16.mxu0 0
    %1759 = vmatpush1.bf16.msra.mxu0 %v1668
    %1760 = vmatprep.subr.bf16.mxu0 0
    %1761 = vmatpush1.bf16.msra.mxu0 %v1669
    %1762 = vmatprep.subr.bf16.mxu0 0
    %1763 = vmatpush1.bf16.msra.mxu0 %v1670
    %1764 = vmatprep.subr.bf16.mxu0 0
    %1765 = vmatpush1.bf16.msra.mxu0 %v1671
    %1766 = vmatprep.subr.bf16.mxu0 0
    %1767 = vmatpush1.bf16.msra.mxu0 %v1672
    %1768 = vmatprep.subr.bf16.mxu0 0
    %1769 = vmatpush1.bf16.msra.mxu0 %v1673
    %1770 = vmatprep.subr.bf16.mxu0 0
    %1771 = vmatpush1.bf16.msra.mxu0 %v1674
    %1772 = vmatprep.subr.bf16.mxu0 0
    %1773 = vmatpush1.bf16.msra.mxu0 %v1675
    %1774 = vmatprep.subr.bf16.mxu0 0
    %1775 = vmatpush1.bf16.msra.mxu0 %v1676
    %1776 = vmatprep.subr.bf16.mxu0 0
    %1777 = vmatpush1.bf16.msra.mxu0 %v1677
    %1778 = vmatprep.subr.bf16.mxu0 0
    %1779 = vmatpush1.bf16.msra.mxu0 %v1678
    %1780 = vmatprep.subr.bf16.mxu0 0
    %1781 = vmatpush1.bf16.msra.mxu0 %v1679
    %1782 = vmatprep.subr.bf16.mxu0 0
    %1783 = vmatpush1.bf16.msra.mxu0 %v1680
    %1784 = vmatprep.subr.bf16.mxu0 0
    %1785 = vmatpush1.bf16.msra.mxu0 %v1681
    %1786 = vmatprep.subr.bf16.mxu0 0
    %1787 = vmatpush1.bf16.msra.mxu0 %v1682
    %1788 = vmatprep.mubr.bf16.mxu0 %v1453
    %1789 = vmatmul.mubr.bf16.gmra.mrb[0].mxu0 %v1452
    %v1790 = vpop.f32.mrb[0].mxu0
    %v1791 = vadd.f32 %v1750, %v1790
    %v1792 = vpop.f32.mrb[0].mxu0
    %v1793 = vpop.f32.mrb[0].mxu0
    %v1794 = vadd.f32 %v1753, %v1793
    %v1795 = vpop.f32.mrb[0].mxu0
    %1796 = vdwg.mxu0
    %v1797 = vadd.f32 %v1075, %v1791
    %v1798 = vadd.f32 %v1076, %v1794
    %v1799 = vld [vmem:[%s9 + $0x6] sm:$0x1]
    %v1800 = vld [vmem:[%s9 + $0x7] sm:$0x1]
    %1801 = vadd.xlane.f32.xlu0 %v1797
    %v1802 = vpop.xlane.xlu0 %1801
    %1803 = vadd.xlane.f32.xlu0 %v1798
    %v1804 = vpop.xlane.xlu0 %1803
    %v1805 = vmul.f32 %v1802, %v174
    %v1806 = vmul.f32 %v1804, %v174
    %v1807 = vsub.f32 %v1797, %v1805
    %v1808 = vsub.f32 %v1798, %v1806
    %v1809 = vmul.f32 %v1807, %v1807
    %v1810 = vmul.f32 %v1808, %v1808
    %1811 = vadd.xlane.f32.xlu0 %v1809
    %v1812 = vpop.xlane.xlu0 %1811
    %1813 = vadd.xlane.f32.xlu0 %v1810
    %v1814 = vpop.xlane.xlu0 %1813
    %v1815 = vmul.f32 %v1812, %v174
    %v1816 = vmul.f32 %v1814, %v174
    %v1817 = vadd.f32 %v1815, 1e-12
    %v1818 = vadd.f32 %v1816, 1e-12
    %v1819 = vrsqrt.pop %v1817
    %v1820 = vrsqrt.pop %v1818
    %v1821 = vmul.f32 %v1807, %v1819
    %v1822 = vmul.f32 %v1808, %v1820
    %v1823 = vlaneseq
    %v1824 = vshrl.u32 %v1823, 7
    %v1825 = vsub.s32 0, %v1824
    %v1826 = vrot.slane %v1799, %v1825
    %v1827 = vmul.f32 %v1821, %v1826
    %v1828 = vmul.f32 %v1822, %v1826
    %v1829 = vlaneseq
    %v1830 = vshrl.u32 %v1829, 7
    %v1831 = vsub.s32 0, %v1830
    %v1832 = vrot.slane %v1800, %v1831
    %v1833 = vadd.f32 %v1827, %v1832
    %v1834 = vadd.f32 %v1828, %v1832
    %s1835 = scalar_lea.vmem [#allocation5], 192
    %v1836 = vld [vmem:[%s1835] sm:$0xff]
    %v1837 = vld [vmem:[%s1835 + $0x8] sm:$0xf]
    %v1838 = vld [vmem:[%s1835 + $0xc] sm:$0xff]
    %v1839 = vld [vmem:[%s1835 + $0x14] sm:$0xf]
    %v1840 = vld [vmem:[%s1835 + $0x18] sm:$0xff]
    %v1841 = vld [vmem:[%s1835 + $0x20] sm:$0xf]
    %v1842 = vld [vmem:[%s1835 + $0x24] sm:$0xff]
    %v1843 = vld [vmem:[%s1835 + $0x2c] sm:$0xf]
    %v1844 = vld [vmem:[%s1835 + $0x30] sm:$0xff]
    %v1845 = vld [vmem:[%s1835 + $0x38] sm:$0xf]
    %v1846 = vld [vmem:[%s1835 + $0x3c] sm:$0xff]
    %v1847 = vld [vmem:[%s1835 + $0x44] sm:$0xf]
    %v1848 = vld [vmem:[%s1835 + $0x48] sm:$0xff]
    %v1849 = vld [vmem:[%s1835 + $0x50] sm:$0xf]
    %v1850 = vld [vmem:[%s1835 + $0x54] sm:$0xff]
    %v1851 = vld [vmem:[%s1835 + $0x5c] sm:$0xf]
    %v1852 = vld [vmem:[%s1835 + $0x60] sm:$0xff]
    %v1853 = vld [vmem:[%s1835 + $0x68] sm:$0xf]
    %v1854 = vld [vmem:[%s1835 + $0x6c] sm:$0xff]
    %v1855 = vld [vmem:[%s1835 + $0x74] sm:$0xf]
    %v1856 = vld [vmem:[%s1835 + $0x78] sm:$0xff]
    %v1857 = vld [vmem:[%s1835 + $0x80] sm:$0xf]
    %v1858 = vld [vmem:[%s1835 + $0x84] sm:$0xff]
    %v1859 = vld [vmem:[%s1835 + $0x8c] sm:$0xf]
    %v1860 = vld [vmem:[%s1835 + $0x90] sm:$0xff]
    %v1861 = vld [vmem:[%s1835 + $0x98] sm:$0xf]
    %v1862 = vld [vmem:[%s1835 + $0x9c] sm:$0xff]
    %v1863 = vld [vmem:[%s1835 + $0xa4] sm:$0xf]
    %v1864 = vld [vmem:[%s1835 + $0xa8] sm:$0xff]
    %v1865 = vld [vmem:[%s1835 + $0xb0] sm:$0xf]
    %v1866 = vld [vmem:[%s1835 + $0xb4] sm:$0xff]
    %v1867 = vld [vmem:[%s1835 + $0xbc] sm:$0xf]
    %s1868 = scalar_lea.vmem [#allocation13], 1
    %v1869 = vld [vmem:[%s1868] ss:$4 sm:$0x7]
    %s1870 = scalar_lea.vmem %s3, 64
    %v1871 = vld [vmem:[%s1870] sm:$0xf]
    %v1872 = vld [vmem:[%s1870 + $0x4] sm:$0xf]
    %v1873 = vld [vmem:[%s1870 + $0x8] sm:$0xf]
    %v1874 = vld [vmem:[%s1870 + $0xc] sm:$0xf]
    %v1875 = vld [vmem:[%s1870 + $0x10] sm:$0xf]
    %v1876 = vld [vmem:[%s1870 + $0x14] sm:$0xf]
    %v1877 = vld [vmem:[%s1870 + $0x18] sm:$0xf]
    %v1878 = vld [vmem:[%s1870 + $0x1c] sm:$0xf]
    %v1879 = vld [vmem:[%s1870 + $0x20] sm:$0xf]
    %v1880 = vld [vmem:[%s1870 + $0x24] sm:$0xf]
    %v1881 = vld [vmem:[%s1870 + $0x28] sm:$0xf]
    %v1882 = vld [vmem:[%s1870 + $0x2c] sm:$0xf]
    %v1883 = vld [vmem:[%s1870 + $0x30] sm:$0xf]
    %v1884 = vld [vmem:[%s1870 + $0x34] sm:$0xf]
    %v1885 = vld [vmem:[%s1870 + $0x38] sm:$0xf]
    %v1886 = vld [vmem:[%s1870 + $0x3c] sm:$0xf]
    %v1887 = vld [vmem:[%s9 + $0x8] sm:$0x1]
    %v1888 = vpack.c.bf16 %v1834, %v1833
    %v1890 = vlaneseq
    %v1891 = vshrl.u32 %v1890, 7
    %v1892 = vsub.s32 0, %v1891
    %v1893 = vrot.slane %v1869, %v1892
    %v1894 = vlaneseq
    %v1895 = vshrl.u32 %v1894, 7
    %v1896 = vsub.s32 1, %v1895
    %v1897 = vrot.slane %v1869, %v1896
    %v1898 = vlaneseq
    %v1899 = vshrl.u32 %v1898, 7
    %v1900 = vsub.s32 2, %v1899
    %v1901 = vrot.slane %v1869, %v1900
    %v1937 = vunpack.c.l.b16 %v1836
    %v1938 = vunpack.c.h.b16 %v1836
    %v1939 = vunpack.c.l.b16 %v1837
    %v1940 = vunpack.c.l.b16 %v1838
    %v1941 = vunpack.c.h.b16 %v1838
    %v1942 = vunpack.c.l.b16 %v1839
    %v1943 = vunpack.c.l.b16 %v1840
    %v1944 = vunpack.c.h.b16 %v1840
    %v1945 = vunpack.c.l.b16 %v1841
    %v1946 = vunpack.c.l.b16 %v1842
    %v1947 = vunpack.c.h.b16 %v1842
    %v1948 = vunpack.c.l.b16 %v1843
    %v1949 = vunpack.c.l.b16 %v1844
    %v1950 = vunpack.c.h.b16 %v1844
    %v1951 = vunpack.c.l.b16 %v1845
    %v1952 = vunpack.c.l.b16 %v1846
    %v1953 = vunpack.c.h.b16 %v1846
    %v1954 = vunpack.c.l.b16 %v1847
    %v1955 = vunpack.c.l.b16 %v1848
    %v1956 = vunpack.c.h.b16 %v1848
    %v1957 = vunpack.c.l.b16 %v1849
    %v1958 = vunpack.c.l.b16 %v1850
    %v1959 = vunpack.c.h.b16 %v1850
    %v1960 = vunpack.c.l.b16 %v1851
    %v1961 = vunpack.c.l.b16 %v1852
    %v1962 = vunpack.c.h.b16 %v1852
    %v1963 = vunpack.c.l.b16 %v1853
    %v1964 = vunpack.c.l.b16 %v1854
    %v1965 = vunpack.c.h.b16 %v1854
    %v1966 = vunpack.c.l.b16 %v1855
    %v1967 = vunpack.c.l.b16 %v1856
    %v1968 = vunpack.c.h.b16 %v1856
    %v1969 = vunpack.c.l.b16 %v1857
    %v1970 = vunpack.c.l.b16 %v1858
    %v1971 = vunpack.c.h.b16 %v1858
    %v1972 = vunpack.c.l.b16 %v1859
    %v1973 = vunpack.c.l.b16 %v1860
    %v1974 = vunpack.c.h.b16 %v1860
    %v1975 = vunpack.c.l.b16 %v1861
    %v1976 = vunpack.c.l.b16 %v1862
    %v1977 = vunpack.c.h.b16 %v1862
    %v1978 = vunpack.c.l.b16 %v1863
    %v1979 = vunpack.c.l.b16 %v1864
    %v1980 = vunpack.c.h.b16 %v1864
    %v1981 = vunpack.c.l.b16 %v1865
    %v1982 = vunpack.c.l.b16 %v1866
    %v1983 = vunpack.c.h.b16 %v1866
    %v1984 = vunpack.c.l.b16 %v1867
    %v1985 = vpack.c.b16 %v1940, %v1937
    %v1986 = vpack.c.b16 %v1941, %v1938
    %v1987 = vpack.c.b16 %v1942, %v1939
    %v1988 = vpack.c.b16 %v1946, %v1943
    %v1989 = vpack.c.b16 %v1947, %v1944
    %v1990 = vpack.c.b16 %v1948, %v1945
    %v1991 = vpack.c.b16 %v1952, %v1949
    %v1992 = vpack.c.b16 %v1953, %v1950
    %v1993 = vpack.c.b16 %v1954, %v1951
    %v1994 = vpack.c.b16 %v1958, %v1955
    %v1995 = vpack.c.b16 %v1959, %v1956
    %v1996 = vpack.c.b16 %v1960, %v1957
    %v1997 = vpack.c.b16 %v1964, %v1961
    %v1998 = vpack.c.b16 %v1965, %v1962
    %v1999 = vpack.c.b16 %v1966, %v1963
    %v2000 = vpack.c.b16 %v1970, %v1967
    %v2001 = vpack.c.b16 %v1971, %v1968
    %v2002 = vpack.c.b16 %v1972, %v1969
    %v2003 = vpack.c.b16 %v1976, %v1973
    %v2004 = vpack.c.b16 %v1977, %v1974
    %v2005 = vpack.c.b16 %v1978, %v1975
    %v2006 = vpack.c.b16 %v1982, %v1979
    %v2007 = vpack.c.b16 %v1983, %v1980
    %v2008 = vpack.c.b16 %v1984, %v1981
    %2033 = vmatprep.subr.bf16.mxu0 %v1986
    %2034 = vmatpush1.bf16.msra.mxu0 %v1985
    %2035 = vmatprep.subr.bf16.mxu0 %v1989
    %2036 = vmatpush1.bf16.msra.mxu0 %v1988
    %2037 = vmatprep.subr.bf16.mxu0 %v1992
    %2038 = vmatpush1.bf16.msra.mxu0 %v1991
    %2039 = vmatprep.subr.bf16.mxu0 %v1995
    %2040 = vmatpush1.bf16.msra.mxu0 %v1994
    %2041 = vmatprep.subr.bf16.mxu0 %v1998
    %2042 = vmatpush1.bf16.msra.mxu0 %v1997
    %2043 = vmatprep.subr.bf16.mxu0 %v2001
    %2044 = vmatpush1.bf16.msra.mxu0 %v2000
    %2045 = vmatprep.subr.bf16.mxu0 %v2004
    %2046 = vmatpush1.bf16.msra.mxu0 %v2003
    %2047 = vmatprep.subr.bf16.mxu0 %v2007
    %2048 = vmatpush1.bf16.msra.mxu0 %v2006
    %2049 = vmatprep.subr.bf16.mxu0 0
    %2050 = vmatpush1.bf16.msra.mxu0 0
    %2051 = vmatprep.subr.bf16.mxu0 0
    %2052 = vmatpush1.bf16.msra.mxu0 0
    %2053 = vmatprep.subr.bf16.mxu0 0
    %2054 = vmatpush1.bf16.msra.mxu0 0
    %2055 = vmatprep.subr.bf16.mxu0 0
    %2056 = vmatpush1.bf16.msra.mxu0 0
    %2057 = vmatprep.subr.bf16.mxu0 0
    %2058 = vmatpush1.bf16.msra.mxu0 0
    %2059 = vmatprep.subr.bf16.mxu0 0
    %2060 = vmatpush1.bf16.msra.mxu0 0
    %2061 = vmatprep.subr.bf16.mxu0 0
    %2062 = vmatpush1.bf16.msra.mxu0 0
    %2063 = vmatprep.subr.bf16.mxu0 0
    %2064 = vmatpush1.bf16.msra.mxu0 0
    %2065 = vmatprep.mubr.bf16.mxu0 0
    %2066 = vmatmul.mubr.bf16.gmra.mrb[0].mxu0 %v1888
    %v2067 = vpop.f32.mrb[0].mxu0
    %v2068 = vadd.f32 %v1893, %v2067
    %v2069 = vpop.f32.mrb[0].mxu0
    %v2070 = vadd.f32 %v1897, %v2069
    %v2071 = vpop.f32.mrb[0].mxu0
    %v2072 = vadd.f32 %v1893, %v2071
    %v2073 = vpop.f32.mrb[0].mxu0
    %v2074 = vadd.f32 %v1897, %v2073
    %2075 = vdwg.mxu0
    %2076 = vmatprep.subr.bf16.mxu0 0
    %2077 = vmatpush1.bf16.msra.mxu0 %v1987
    %2078 = vmatprep.subr.bf16.mxu0 0
    %2079 = vmatpush1.bf16.msra.mxu0 %v1990
    %2080 = vmatprep.subr.bf16.mxu0 0
    %2081 = vmatpush1.bf16.msra.mxu0 %v1993
    %2082 = vmatprep.subr.bf16.mxu0 0
    %2083 = vmatpush1.bf16.msra.mxu0 %v1996
    %2084 = vmatprep.subr.bf16.mxu0 0
    %2085 = vmatpush1.bf16.msra.mxu0 %v1999
    %2086 = vmatprep.subr.bf16.mxu0 0
    %2087 = vmatpush1.bf16.msra.mxu0 %v2002
    %2088 = vmatprep.subr.bf16.mxu0 0
    %2089 = vmatpush1.bf16.msra.mxu0 %v2005
    %2090 = vmatprep.subr.bf16.mxu0 0
    %2091 = vmatpush1.bf16.msra.mxu0 %v2008
    %2092 = vmatprep.subr.bf16.mxu0 0
    %2093 = vmatpush1.bf16.msra.mxu0 0
    %2094 = vmatprep.subr.bf16.mxu0 0
    %2095 = vmatpush1.bf16.msra.mxu0 0
    %2096 = vmatprep.subr.bf16.mxu0 0
    %2097 = vmatpush1.bf16.msra.mxu0 0
    %2098 = vmatprep.subr.bf16.mxu0 0
    %2099 = vmatpush1.bf16.msra.mxu0 0
    %2100 = vmatprep.subr.bf16.mxu0 0
    %2101 = vmatpush1.bf16.msra.mxu0 0
    %2102 = vmatprep.subr.bf16.mxu0 0
    %2103 = vmatpush1.bf16.msra.mxu0 0
    %2104 = vmatprep.subr.bf16.mxu0 0
    %2105 = vmatpush1.bf16.msra.mxu0 0
    %2106 = vmatprep.subr.bf16.mxu0 0
    %2107 = vmatpush1.bf16.msra.mxu0 0
    %2108 = vmatprep.mubr.bf16.mxu0 0
    %2109 = vmatmul.mubr.bf16.gmra.mrb[0].mxu0 %v1888
    %v2110 = vpop.f32.mrb[0].mxu0
    %v2111 = vadd.f32 %v1901, %v2110
    %v2112 = vpop.f32.mrb[0].mxu0
    %v2113 = vpop.f32.mrb[0].mxu0
    %v2114 = vadd.f32 %v1901, %v2113
    %v2115 = vpop.f32.mrb[0].mxu0
    %2116 = vdwg.mxu0
    %v2117 = vpack.c.bf16 %v2068, %v2068
    %v2118 = vpack.c.bf16 %v2072, %v2072
    %v2119 = vpack.c.bf16 %v2070, %v2070
    %v2120 = vpack.c.bf16 %v2074, %v2074
    %v2122 = vsel %vm488, %v2117, 0
    %v2125 = vsel %vm488, %v2119, 0
    %2127 = vmatprep.subr.bf16.mxu0 0
    %2128 = vmatpush1.bf16.xpose.msra.mxu0 %v2125
    %2129 = vmatprep.subr.bf16.mxu0 0
    %2130 = vmatpush1.bf16.xpose.msra.mxu0 0
    %2131 = vmatprep.subr.bf16.mxu0 0
    %2132 = vmatpush1.bf16.xpose.msra.mxu0 0
    %2133 = vmatprep.subr.bf16.mxu0 0
    %2134 = vmatpush1.bf16.xpose.msra.mxu0 0
    %2135 = vmatprep.subr.bf16.mxu0 0
    %2136 = vmatpush1.bf16.xpose.msra.mxu0 0
    %2137 = vmatprep.subr.bf16.mxu0 0
    %2138 = vmatpush1.bf16.xpose.msra.mxu0 0
    %2139 = vmatprep.subr.bf16.mxu0 0
    %2140 = vmatpush1.bf16.xpose.msra.mxu0 0
    %2141 = vmatprep.subr.bf16.mxu0 0
    %2142 = vmatpush1.bf16.xpose.msra.mxu0 0
    %2143 = vmatprep.subr.bf16.mxu0 0
    %2144 = vmatpush1.bf16.xpose.msra.mxu0 0
    %2145 = vmatprep.subr.bf16.mxu0 0
    %2146 = vmatpush1.bf16.xpose.msra.mxu0 0
    %2147 = vmatprep.subr.bf16.mxu0 0
    %2148 = vmatpush1.bf16.xpose.msra.mxu0 0
    %2149 = vmatprep.subr.bf16.mxu0 0
    %2150 = vmatpush1.bf16.xpose.msra.mxu0 0
    %2151 = vmatprep.subr.bf16.mxu0 0
    %2152 = vmatpush1.bf16.xpose.msra.mxu0 0
    %2153 = vmatprep.subr.bf16.mxu0 0
    %2154 = vmatpush1.bf16.xpose.msra.mxu0 0
    %2155 = vmatprep.subr.bf16.mxu0 0
    %2156 = vmatpush1.bf16.xpose.msra.mxu0 0
    %2157 = vmatprep.subr.bf16.mxu0 0
    %2158 = vmatpush1.bf16.xpose.msra.mxu0 0
    %2159 = vmatprep.mubr.bf16.mxu0 0
    %2160 = vmatmul.mubr.bf16.gmra.mrb[0].mxu0 %v2122
    %v2161 = vpop.f32.mrb[0].mxu0
    %v2162 = vadd.f32 0.0, %v2161
    %v2163 = vpop.f32.mrb[0].mxu0
    %v2164 = vpop.f32.mrb[0].mxu0
    %v2165 = vpop.f32.mrb[0].mxu0
    %2166 = vdwg.mxu0
    %v2168 = vsel %vm488, %v2118, 0
    %v2171 = vsel %vm488, %v2120, 0
    %2173 = vmatprep.subr.bf16.mxu0 0
    %2174 = vmatpush1.bf16.xpose.msra.mxu0 %v2171
    %2175 = vmatprep.subr.bf16.mxu0 0
    %2176 = vmatpush1.bf16.xpose.msra.mxu0 0
    %2177 = vmatprep.subr.bf16.mxu0 0
    %2178 = vmatpush1.bf16.xpose.msra.mxu0 0
    %2179 = vmatprep.subr.bf16.mxu0 0
    %2180 = vmatpush1.bf16.xpose.msra.mxu0 0
    %2181 = vmatprep.subr.bf16.mxu0 0
    %2182 = vmatpush1.bf16.xpose.msra.mxu0 0
    %2183 = vmatprep.subr.bf16.mxu0 0
    %2184 = vmatpush1.bf16.xpose.msra.mxu0 0
    %2185 = vmatprep.subr.bf16.mxu0 0
    %2186 = vmatpush1.bf16.xpose.msra.mxu0 0
    %2187 = vmatprep.subr.bf16.mxu0 0
    %2188 = vmatpush1.bf16.xpose.msra.mxu0 0
    %2189 = vmatprep.subr.bf16.mxu0 0
    %2190 = vmatpush1.bf16.xpose.msra.mxu0 0
    %2191 = vmatprep.subr.bf16.mxu0 0
    %2192 = vmatpush1.bf16.xpose.msra.mxu0 0
    %2193 = vmatprep.subr.bf16.mxu0 0
    %2194 = vmatpush1.bf16.xpose.msra.mxu0 0
    %2195 = vmatprep.subr.bf16.mxu0 0
    %2196 = vmatpush1.bf16.xpose.msra.mxu0 0
    %2197 = vmatprep.subr.bf16.mxu0 0
    %2198 = vmatpush1.bf16.xpose.msra.mxu0 0
    %2199 = vmatprep.subr.bf16.mxu0 0
    %2200 = vmatpush1.bf16.xpose.msra.mxu0 0
    %2201 = vmatprep.subr.bf16.mxu0 0
    %2202 = vmatpush1.bf16.xpose.msra.mxu0 0
    %2203 = vmatprep.subr.bf16.mxu0 0
    %2204 = vmatpush1.bf16.xpose.msra.mxu0 0
    %2205 = vmatprep.mubr.bf16.mxu0 0
    %2206 = vmatmul.mubr.bf16.gmra.mrb[0].mxu0 %v2168
    %v2207 = vpop.f32.mrb[0].mxu0
    %v2208 = vadd.f32 0.0, %v2207
    %v2209 = vpop.f32.mrb[0].mxu0
    %v2210 = vpop.f32.mrb[0].mxu0
    %v2211 = vpop.f32.mrb[0].mxu0
    %2212 = vdwg.mxu0
    %v2213 = vmul.f32 %v2162, 0.125
    %v2214 = vmul.f32 %v2208, 0.125
    %v2215 = vadd.f32 %v2213, %v164
    %v2216 = vadd.f32 %v2214, %v165
    %v2217 = vsel %vm585, %v2215, -inf
    %2218 = vmax.xlane.f32.xlu0 %v2217
    %v2219 = vpop.xlane.xlu0 %2218
    %v2220 = vsel %vm585, %v2216, -inf
    %2221 = vmax.xlane.f32.xlu0 %v2220
    %v2222 = vpop.xlane.xlu0 %2221
    %v2223 = vsub.f32 %v2215, %v2219
    %v2224 = vsub.f32 %v2216, %v2222
    %v2225 = vmul.f32 %v2223, 1.442695
    %v2226 = vpow.pop %v2225
    %v2227 = vmul.f32 %v2224, 1.442695
    %v2228 = vpow.pop %v2227
    %v2229 = vsel %vm585, %v2226, 0.0
    %2230 = vadd.xlane.f32.xlu0 %v2229
    %v2231 = vpop.xlane.xlu0 %2230
    %v2232 = vsel %vm585, %v2228, 0.0
    %2233 = vadd.xlane.f32.xlu0 %v2232
    %v2234 = vpop.xlane.xlu0 %2233
    %v2235 = vrcp.pop %v2231
    %v2236 = vrcp.pop %v2234
    %v2237 = vmul.f32 %v2226, %v2235
    %v2238 = vmul.f32 %v2228, %v2236
    %v2239 = vpack.c.bf16 %v2237, %v2237
    %v2240 = vpack.c.bf16 %v2238, %v2238
    %v2241 = vpack.c.bf16 %v2111, %v2111
    %v2242 = vpack.c.bf16 %v2114, %v2114
    %v2244 = vsel %vm585, %v2239, 0
    %v2247 = vsel %vm615, %v2241, 0
    %2249 = vmatprep.subr.bf16.mxu0 0
    %2250 = vmatpush1.bf16.msra.mxu0 %v2247
    %2251 = vmatprep.subr.bf16.mxu0 0
    %2252 = vmatpush1.bf16.msra.mxu0 0
    %2253 = vmatprep.subr.bf16.mxu0 0
    %2254 = vmatpush1.bf16.msra.mxu0 0
    %2255 = vmatprep.subr.bf16.mxu0 0
    %2256 = vmatpush1.bf16.msra.mxu0 0
    %2257 = vmatprep.subr.bf16.mxu0 0
    %2258 = vmatpush1.bf16.msra.mxu0 0
    %2259 = vmatprep.subr.bf16.mxu0 0
    %2260 = vmatpush1.bf16.msra.mxu0 0
    %2261 = vmatprep.subr.bf16.mxu0 0
    %2262 = vmatpush1.bf16.msra.mxu0 0
    %2263 = vmatprep.subr.bf16.mxu0 0
    %2264 = vmatpush1.bf16.msra.mxu0 0
    %2265 = vmatprep.subr.bf16.mxu0 0
    %2266 = vmatpush1.bf16.msra.mxu0 0
    %2267 = vmatprep.subr.bf16.mxu0 0
    %2268 = vmatpush1.bf16.msra.mxu0 0
    %2269 = vmatprep.subr.bf16.mxu0 0
    %2270 = vmatpush1.bf16.msra.mxu0 0
    %2271 = vmatprep.subr.bf16.mxu0 0
    %2272 = vmatpush1.bf16.msra.mxu0 0
    %2273 = vmatprep.subr.bf16.mxu0 0
    %2274 = vmatpush1.bf16.msra.mxu0 0
    %2275 = vmatprep.subr.bf16.mxu0 0
    %2276 = vmatpush1.bf16.msra.mxu0 0
    %2277 = vmatprep.subr.bf16.mxu0 0
    %2278 = vmatpush1.bf16.msra.mxu0 0
    %2279 = vmatprep.subr.bf16.mxu0 0
    %2280 = vmatpush1.bf16.msra.mxu0 0
    %2281 = vmatprep.mubr.bf16.mxu0 0
    %2282 = vmatmul.mubr.bf16.gmra.mrb[0].mxu0 %v2244
    %v2283 = vpop.f32.mrb[0].mxu0
    %v2284 = vadd.f32 0.0, %v2283
    %v2285 = vpop.f32.mrb[0].mxu0
    %v2286 = vpop.f32.mrb[0].mxu0
    %v2287 = vpop.f32.mrb[0].mxu0
    %2288 = vdwg.mxu0
    %v2290 = vsel %vm585, %v2240, 0
    %v2293 = vsel %vm615, %v2242, 0
    %2295 = vmatprep.subr.bf16.mxu0 0
    %2296 = vmatpush1.bf16.msra.mxu0 %v2293
    %2297 = vmatprep.subr.bf16.mxu0 0
    %2298 = vmatpush1.bf16.msra.mxu0 0
    %2299 = vmatprep.subr.bf16.mxu0 0
    %2300 = vmatpush1.bf16.msra.mxu0 0
    %2301 = vmatprep.subr.bf16.mxu0 0
    %2302 = vmatpush1.bf16.msra.mxu0 0
    %2303 = vmatprep.subr.bf16.mxu0 0
    %2304 = vmatpush1.bf16.msra.mxu0 0
    %2305 = vmatprep.subr.bf16.mxu0 0
    %2306 = vmatpush1.bf16.msra.mxu0 0
    %2307 = vmatprep.subr.bf16.mxu0 0
    %2308 = vmatpush1.bf16.msra.mxu0 0
    %2309 = vmatprep.subr.bf16.mxu0 0
    %2310 = vmatpush1.bf16.msra.mxu0 0
    %2311 = vmatprep.subr.bf16.mxu0 0
    %2312 = vmatpush1.bf16.msra.mxu0 0
    %2313 = vmatprep.subr.bf16.mxu0 0
    %2314 = vmatpush1.bf16.msra.mxu0 0
    %2315 = vmatprep.subr.bf16.mxu0 0
    %2316 = vmatpush1.bf16.msra.mxu0 0
    %2317 = vmatprep.subr.bf16.mxu0 0
    %2318 = vmatpush1.bf16.msra.mxu0 0
    %2319 = vmatprep.subr.bf16.mxu0 0
    %2320 = vmatpush1.bf16.msra.mxu0 0
    %2321 = vmatprep.subr.bf16.mxu0 0
    %2322 = vmatpush1.bf16.msra.mxu0 0
    %2323 = vmatprep.subr.bf16.mxu0 0
    %2324 = vmatpush1.bf16.msra.mxu0 0
    %2325 = vmatprep.subr.bf16.mxu0 0
    %2326 = vmatpush1.bf16.msra.mxu0 0
    %2327 = vmatprep.mubr.bf16.mxu0 0
    %2328 = vmatmul.mubr.bf16.gmra.mrb[0].mxu0 %v2290
    %v2329 = vpop.f32.mrb[0].mxu0
    %v2330 = vadd.f32 0.0, %v2329
    %v2331 = vpop.f32.mrb[0].mxu0
    %v2332 = vpop.f32.mrb[0].mxu0
    %v2333 = vpop.f32.mrb[0].mxu0
    %2334 = vdwg.mxu0
    %2336 = vrot.lane.b32.xlu0 %v2117, 64
    %v2337 = vpop.permute.xlu0 %2336
    %2339 = vrot.lane.b32.xlu0 %v2119, 64
    %v2340 = vpop.permute.xlu0 %2339
    %v2342 = vsel %vm488, %v2337, 0
    %v2345 = vsel %vm488, %v2340, 0
    %2347 = vmatprep.subr.bf16.mxu0 0
    %2348 = vmatpush1.bf16.xpose.msra.mxu0 %v2345
    %2349 = vmatprep.subr.bf16.mxu0 0
    %2350 = vmatpush1.bf16.xpose.msra.mxu0 0
    %2351 = vmatprep.subr.bf16.mxu0 0
    %2352 = vmatpush1.bf16.xpose.msra.mxu0 0
    %2353 = vmatprep.subr.bf16.mxu0 0
    %2354 = vmatpush1.bf16.xpose.msra.mxu0 0
    %2355 = vmatprep.subr.bf16.mxu0 0
    %2356 = vmatpush1.bf16.xpose.msra.mxu0 0
    %2357 = vmatprep.subr.bf16.mxu0 0
    %2358 = vmatpush1.bf16.xpose.msra.mxu0 0
    %2359 = vmatprep.subr.bf16.mxu0 0
    %2360 = vmatpush1.bf16.xpose.msra.mxu0 0
    %2361 = vmatprep.subr.bf16.mxu0 0
    %2362 = vmatpush1.bf16.xpose.msra.mxu0 0
    %2363 = vmatprep.subr.bf16.mxu0 0
    %2364 = vmatpush1.bf16.xpose.msra.mxu0 0
    %2365 = vmatprep.subr.bf16.mxu0 0
    %2366 = vmatpush1.bf16.xpose.msra.mxu0 0
    %2367 = vmatprep.subr.bf16.mxu0 0
    %2368 = vmatpush1.bf16.xpose.msra.mxu0 0
    %2369 = vmatprep.subr.bf16.mxu0 0
    %2370 = vmatpush1.bf16.xpose.msra.mxu0 0
    %2371 = vmatprep.subr.bf16.mxu0 0
    %2372 = vmatpush1.bf16.xpose.msra.mxu0 0
    %2373 = vmatprep.subr.bf16.mxu0 0
    %2374 = vmatpush1.bf16.xpose.msra.mxu0 0
    %2375 = vmatprep.subr.bf16.mxu0 0
    %2376 = vmatpush1.bf16.xpose.msra.mxu0 0
    %2377 = vmatprep.subr.bf16.mxu0 0
    %2378 = vmatpush1.bf16.xpose.msra.mxu0 0
    %2379 = vmatprep.mubr.bf16.mxu0 0
    %2380 = vmatmul.mubr.bf16.gmra.mrb[0].mxu0 %v2342
    %v2381 = vpop.f32.mrb[0].mxu0
    %v2382 = vadd.f32 0.0, %v2381
    %v2383 = vpop.f32.mrb[0].mxu0
    %v2384 = vpop.f32.mrb[0].mxu0
    %v2385 = vpop.f32.mrb[0].mxu0
    %2386 = vdwg.mxu0
    %2388 = vrot.lane.b32.xlu0 %v2118, 64
    %v2389 = vpop.permute.xlu0 %2388
    %2391 = vrot.lane.b32.xlu0 %v2120, 64
    %v2392 = vpop.permute.xlu0 %2391
    %v2394 = vsel %vm488, %v2389, 0
    %v2397 = vsel %vm488, %v2392, 0
    %2399 = vmatprep.subr.bf16.mxu0 0
    %2400 = vmatpush1.bf16.xpose.msra.mxu0 %v2397
    %2401 = vmatprep.subr.bf16.mxu0 0
    %2402 = vmatpush1.bf16.xpose.msra.mxu0 0
    %2403 = vmatprep.subr.bf16.mxu0 0
    %2404 = vmatpush1.bf16.xpose.msra.mxu0 0
    %2405 = vmatprep.subr.bf16.mxu0 0
    %2406 = vmatpush1.bf16.xpose.msra.mxu0 0
    %2407 = vmatprep.subr.bf16.mxu0 0
    %2408 = vmatpush1.bf16.xpose.msra.mxu0 0
    %2409 = vmatprep.subr.bf16.mxu0 0
    %2410 = vmatpush1.bf16.xpose.msra.mxu0 0
    %2411 = vmatprep.subr.bf16.mxu0 0
    %2412 = vmatpush1.bf16.xpose.msra.mxu0 0
    %2413 = vmatprep.subr.bf16.mxu0 0
    %2414 = vmatpush1.bf16.xpose.msra.mxu0 0
    %2415 = vmatprep.subr.bf16.mxu0 0
    %2416 = vmatpush1.bf16.xpose.msra.mxu0 0
    %2417 = vmatprep.subr.bf16.mxu0 0
    %2418 = vmatpush1.bf16.xpose.msra.mxu0 0
    %2419 = vmatprep.subr.bf16.mxu0 0
    %2420 = vmatpush1.bf16.xpose.msra.mxu0 0
    %2421 = vmatprep.subr.bf16.mxu0 0
    %2422 = vmatpush1.bf16.xpose.msra.mxu0 0
    %2423 = vmatprep.subr.bf16.mxu0 0
    %2424 = vmatpush1.bf16.xpose.msra.mxu0 0
    %2425 = vmatprep.subr.bf16.mxu0 0
    %2426 = vmatpush1.bf16.xpose.msra.mxu0 0
    %2427 = vmatprep.subr.bf16.mxu0 0
    %2428 = vmatpush1.bf16.xpose.msra.mxu0 0
    %2429 = vmatprep.subr.bf16.mxu0 0
    %2430 = vmatpush1.bf16.xpose.msra.mxu0 0
    %2431 = vmatprep.mubr.bf16.mxu0 0
    %2432 = vmatmul.mubr.bf16.gmra.mrb[0].mxu0 %v2394
    %v2433 = vpop.f32.mrb[0].mxu0
    %v2434 = vadd.f32 0.0, %v2433
    %v2435 = vpop.f32.mrb[0].mxu0
    %v2436 = vpop.f32.mrb[0].mxu0
    %v2437 = vpop.f32.mrb[0].mxu0
    %2438 = vdwg.mxu0
    %v2439 = vmul.f32 %v2382, 0.125
    %v2440 = vmul.f32 %v2434, 0.125
    %v2441 = vadd.f32 %v2439, %v164
    %v2442 = vadd.f32 %v2440, %v165
    %v2443 = vsel %vm585, %v2441, -inf
    %2444 = vmax.xlane.f32.xlu0 %v2443
    %v2445 = vpop.xlane.xlu0 %2444
    %v2446 = vsel %vm585, %v2442, -inf
    %2447 = vmax.xlane.f32.xlu0 %v2446
    %v2448 = vpop.xlane.xlu0 %2447
    %v2449 = vsub.f32 %v2441, %v2445
    %v2450 = vsub.f32 %v2442, %v2448
    %v2451 = vmul.f32 %v2449, 1.442695
    %v2452 = vpow.pop %v2451
    %v2453 = vmul.f32 %v2450, 1.442695
    %v2454 = vpow.pop %v2453
    %v2455 = vsel %vm585, %v2452, 0.0
    %2456 = vadd.xlane.f32.xlu0 %v2455
    %v2457 = vpop.xlane.xlu0 %2456
    %v2458 = vsel %vm585, %v2454, 0.0
    %2459 = vadd.xlane.f32.xlu0 %v2458
    %v2460 = vpop.xlane.xlu0 %2459
    %v2461 = vrcp.pop %v2457
    %v2462 = vrcp.pop %v2460
    %v2463 = vmul.f32 %v2452, %v2461
    %v2464 = vmul.f32 %v2454, %v2462
    %v2465 = vpack.c.bf16 %v2463, %v2463
    %v2466 = vpack.c.bf16 %v2464, %v2464
    %2468 = vrot.lane.b32.xlu0 %v2241, 64
    %v2469 = vpop.permute.xlu0 %2468
    %v2471 = vsel %vm585, %v2465, 0
    %v2474 = vsel %vm615, %v2469, 0
    %2476 = vmatprep.subr.bf16.mxu0 0
    %2477 = vmatpush1.bf16.msra.mxu0 %v2474
    %2478 = vmatprep.subr.bf16.mxu0 0
    %2479 = vmatpush1.bf16.msra.mxu0 0
    %2480 = vmatprep.subr.bf16.mxu0 0
    %2481 = vmatpush1.bf16.msra.mxu0 0
    %2482 = vmatprep.subr.bf16.mxu0 0
    %2483 = vmatpush1.bf16.msra.mxu0 0
    %2484 = vmatprep.subr.bf16.mxu0 0
    %2485 = vmatpush1.bf16.msra.mxu0 0
    %2486 = vmatprep.subr.bf16.mxu0 0
    %2487 = vmatpush1.bf16.msra.mxu0 0
    %2488 = vmatprep.subr.bf16.mxu0 0
    %2489 = vmatpush1.bf16.msra.mxu0 0
    %2490 = vmatprep.subr.bf16.mxu0 0
    %2491 = vmatpush1.bf16.msra.mxu0 0
    %2492 = vmatprep.subr.bf16.mxu0 0
    %2493 = vmatpush1.bf16.msra.mxu0 0
    %2494 = vmatprep.subr.bf16.mxu0 0
    %2495 = vmatpush1.bf16.msra.mxu0 0
    %2496 = vmatprep.subr.bf16.mxu0 0
    %2497 = vmatpush1.bf16.msra.mxu0 0
    %2498 = vmatprep.subr.bf16.mxu0 0
    %2499 = vmatpush1.bf16.msra.mxu0 0
    %2500 = vmatprep.subr.bf16.mxu0 0
    %2501 = vmatpush1.bf16.msra.mxu0 0
    %2502 = vmatprep.subr.bf16.mxu0 0
    %2503 = vmatpush1.bf16.msra.mxu0 0
    %2504 = vmatprep.subr.bf16.mxu0 0
    %2505 = vmatpush1.bf16.msra.mxu0 0
    %2506 = vmatprep.subr.bf16.mxu0 0
    %2507 = vmatpush1.bf16.msra.mxu0 0
    %2508 = vmatprep.mubr.bf16.mxu0 0
    %2509 = vmatmul.mubr.bf16.gmra.mrb[0].mxu0 %v2471
    %v2510 = vpop.f32.mrb[0].mxu0
    %v2511 = vadd.f32 0.0, %v2510
    %v2512 = vpop.f32.mrb[0].mxu0
    %v2513 = vpop.f32.mrb[0].mxu0
    %v2514 = vpop.f32.mrb[0].mxu0
    %2515 = vdwg.mxu0
    %2517 = vrot.lane.b32.xlu0 %v2242, 64
    %v2518 = vpop.permute.xlu0 %2517
    %v2520 = vsel %vm585, %v2466, 0
    %v2523 = vsel %vm615, %v2518, 0
    %2525 = vmatprep.subr.bf16.mxu0 0
    %2526 = vmatpush1.bf16.msra.mxu0 %v2523
    %2527 = vmatprep.subr.bf16.mxu0 0
    %2528 = vmatpush1.bf16.msra.mxu0 0
    %2529 = vmatprep.subr.bf16.mxu0 0
    %2530 = vmatpush1.bf16.msra.mxu0 0
    %2531 = vmatprep.subr.bf16.mxu0 0
    %2532 = vmatpush1.bf16.msra.mxu0 0
    %2533 = vmatprep.subr.bf16.mxu0 0
    %2534 = vmatpush1.bf16.msra.mxu0 0
    %2535 = vmatprep.subr.bf16.mxu0 0
    %2536 = vmatpush1.bf16.msra.mxu0 0
    %2537 = vmatprep.subr.bf16.mxu0 0
    %2538 = vmatpush1.bf16.msra.mxu0 0
    %2539 = vmatprep.subr.bf16.mxu0 0
    %2540 = vmatpush1.bf16.msra.mxu0 0
    %2541 = vmatprep.subr.bf16.mxu0 0
    %2542 = vmatpush1.bf16.msra.mxu0 0
    %2543 = vmatprep.subr.bf16.mxu0 0
    %2544 = vmatpush1.bf16.msra.mxu0 0
    %2545 = vmatprep.subr.bf16.mxu0 0
    %2546 = vmatpush1.bf16.msra.mxu0 0
    %2547 = vmatprep.subr.bf16.mxu0 0
    %2548 = vmatpush1.bf16.msra.mxu0 0
    %2549 = vmatprep.subr.bf16.mxu0 0
    %2550 = vmatpush1.bf16.msra.mxu0 0
    %2551 = vmatprep.subr.bf16.mxu0 0
    %2552 = vmatpush1.bf16.msra.mxu0 0
    %2553 = vmatprep.subr.bf16.mxu0 0
    %2554 = vmatpush1.bf16.msra.mxu0 0
    %2555 = vmatprep.subr.bf16.mxu0 0
    %2556 = vmatpush1.bf16.msra.mxu0 0
    %2557 = vmatprep.mubr.bf16.mxu0 0
    %2558 = vmatmul.mubr.bf16.gmra.mrb[0].mxu0 %v2520
    %v2559 = vpop.f32.mrb[0].mxu0
    %v2560 = vadd.f32 0.0, %v2559
    %v2561 = vpop.f32.mrb[0].mxu0
    %v2562 = vpop.f32.mrb[0].mxu0
    %v2563 = vpop.f32.mrb[0].mxu0
    %2564 = vdwg.mxu0
    %2567 = vrot.lane.b32.xlu0 %v2511, 64
    %v2568 = vpop.permute.xlu0 %2567
    %2569 = vrot.lane.b32.xlu0 %v2560, 64
    %v2570 = vpop.permute.xlu0 %2569
    %v2573 = vsel %vm488, %v2284, %v2568
    %v2574 = vsel %vm488, %v2330, %v2570
    %v2575 = vpack.c.bf16 %v2574, %v2573
    %v2576 = vlaneseq
    %v2577 = vshrl.u32 %v2576, 7
    %v2578 = vsub.s32 0, %v2577
    %v2579 = vrot.slane %v1887, %v2578
    %v2596 = vunpack.c.l.b16 %v1871
    %v2597 = vunpack.c.l.b16 %v1872
    %v2598 = vunpack.c.l.b16 %v1873
    %v2599 = vunpack.c.l.b16 %v1874
    %v2600 = vunpack.c.l.b16 %v1875
    %v2601 = vunpack.c.l.b16 %v1876
    %v2602 = vunpack.c.l.b16 %v1877
    %v2603 = vunpack.c.l.b16 %v1878
    %v2604 = vunpack.c.l.b16 %v1879
    %v2605 = vunpack.c.l.b16 %v1880
    %v2606 = vunpack.c.l.b16 %v1881
    %v2607 = vunpack.c.l.b16 %v1882
    %v2608 = vunpack.c.l.b16 %v1883
    %v2609 = vunpack.c.l.b16 %v1884
    %v2610 = vunpack.c.l.b16 %v1885
    %v2611 = vunpack.c.l.b16 %v1886
    %v2612 = vpack.c.b16 %v2597, %v2596
    %v2613 = vpack.c.b16 %v2599, %v2598
    %v2614 = vpack.c.b16 %v2601, %v2600
    %v2615 = vpack.c.b16 %v2603, %v2602
    %v2616 = vpack.c.b16 %v2605, %v2604
    %v2617 = vpack.c.b16 %v2607, %v2606
    %v2618 = vpack.c.b16 %v2609, %v2608
    %v2619 = vpack.c.b16 %v2611, %v2610
    %2628 = vmatprep.subr.bf16.mxu0 0
    %2629 = vmatpush1.bf16.msra.mxu0 %v2612
    %2630 = vmatprep.subr.bf16.mxu0 0
    %2631 = vmatpush1.bf16.msra.mxu0 %v2613
    %2632 = vmatprep.subr.bf16.mxu0 0
    %2633 = vmatpush1.bf16.msra.mxu0 %v2614
    %2634 = vmatprep.subr.bf16.mxu0 0
    %2635 = vmatpush1.bf16.msra.mxu0 %v2615
    %2636 = vmatprep.subr.bf16.mxu0 0
    %2637 = vmatpush1.bf16.msra.mxu0 %v2616
    %2638 = vmatprep.subr.bf16.mxu0 0
    %2639 = vmatpush1.bf16.msra.mxu0 %v2617
    %2640 = vmatprep.subr.bf16.mxu0 0
    %2641 = vmatpush1.bf16.msra.mxu0 %v2618
    %2642 = vmatprep.subr.bf16.mxu0 0
    %2643 = vmatpush1.bf16.msra.mxu0 %v2619
    %2644 = vmatprep.subr.bf16.mxu0 0
    %2645 = vmatpush1.bf16.msra.mxu0 0
    %2646 = vmatprep.subr.bf16.mxu0 0
    %2647 = vmatpush1.bf16.msra.mxu0 0
    %2648 = vmatprep.subr.bf16.mxu0 0
    %2649 = vmatpush1.bf16.msra.mxu0 0
    %2650 = vmatprep.subr.bf16.mxu0 0
    %2651 = vmatpush1.bf16.msra.mxu0 0
    %2652 = vmatprep.subr.bf16.mxu0 0
    %2653 = vmatpush1.bf16.msra.mxu0 0
    %2654 = vmatprep.subr.bf16.mxu0 0
    %2655 = vmatpush1.bf16.msra.mxu0 0
    %2656 = vmatprep.subr.bf16.mxu0 0
    %2657 = vmatpush1.bf16.msra.mxu0 0
    %2658 = vmatprep.subr.bf16.mxu0 0
    %2659 = vmatpush1.bf16.msra.mxu0 0
    %2660 = vmatprep.mubr.bf16.mxu0 0
    %2661 = vmatmul.mubr.bf16.gmra.mrb[0].mxu0 %v2575
    %v2662 = vpop.f32.mrb[0].mxu0
    %v2663 = vadd.f32 %v2579, %v2662
    %v2664 = vpop.f32.mrb[0].mxu0
    %v2665 = vpop.f32.mrb[0].mxu0
    %v2666 = vadd.f32 %v2579, %v2665
    %v2667 = vpop.f32.mrb[0].mxu0
    %2668 = vdwg.mxu0
    %v2669 = vadd.f32 %v1833, %v2663
    %v2670 = vadd.f32 %v1834, %v2666
    %v2671 = vld [vmem:[%s9 + $0x9] sm:$0x1]
    %v2672 = vld [vmem:[%s9 + $0xa] sm:$0x1]
    %2673 = vadd.xlane.f32.xlu0 %v2669
    %v2674 = vpop.xlane.xlu0 %2673
    %2675 = vadd.xlane.f32.xlu0 %v2670
    %v2676 = vpop.xlane.xlu0 %2675
    %v2677 = vmul.f32 %v2674, %v174
    %v2678 = vmul.f32 %v2676, %v174
    %v2679 = vsub.f32 %v2669, %v2677
    %v2680 = vsub.f32 %v2670, %v2678
    %v2681 = vmul.f32 %v2679, %v2679
    %v2682 = vmul.f32 %v2680, %v2680
    %2683 = vadd.xlane.f32.xlu0 %v2681
    %v2684 = vpop.xlane.xlu0 %2683
    %2685 = vadd.xlane.f32.xlu0 %v2682
    %v2686 = vpop.xlane.xlu0 %2685
    %v2687 = vmul.f32 %v2684, %v174
    %v2688 = vmul.f32 %v2686, %v174
    %v2689 = vadd.f32 %v2687, 1e-12
    %v2690 = vadd.f32 %v2688, 1e-12
    %v2691 = vrsqrt.pop %v2689
    %v2692 = vrsqrt.pop %v2690
    %v2693 = vmul.f32 %v2679, %v2691
    %v2694 = vmul.f32 %v2680, %v2692
    %v2695 = vlaneseq
    %v2696 = vshrl.u32 %v2695, 7
    %v2697 = vsub.s32 0, %v2696
    %v2698 = vrot.slane %v2671, %v2697
    %v2699 = vmul.f32 %v2693, %v2698
    %v2700 = vmul.f32 %v2694, %v2698
    %v2701 = vlaneseq
    %v2702 = vshrl.u32 %v2701, 7
    %v2703 = vsub.s32 0, %v2702
    %v2704 = vrot.slane %v2672, %v2703
    %v2705 = vadd.f32 %v2699, %v2704
    %v2706 = vadd.f32 %v2700, %v2704
    %v2707 = vpack.c.bf16 %v2706, %v2705
    %s2708 = scalar_lea.vmem [#allocation8], 256
    %v2709 = vld [vmem:[%s2708] sm:$0xff]
    %v2710 = vld [vmem:[%s2708 + $0x8] sm:$0xff]
    %v2711 = vld [vmem:[%s2708 + $0x10] sm:$0xff]
    %v2712 = vld [vmem:[%s2708 + $0x18] sm:$0xff]
    %v2713 = vld [vmem:[%s2708 + $0x20] sm:$0xff]
    %v2714 = vld [vmem:[%s2708 + $0x28] sm:$0xff]
    %v2715 = vld [vmem:[%s2708 + $0x30] sm:$0xff]
    %v2716 = vld [vmem:[%s2708 + $0x38] sm:$0xff]
    %v2717 = vld [vmem:[%s2708 + $0x40] sm:$0xff]
    %v2718 = vld [vmem:[%s2708 + $0x48] sm:$0xff]
    %v2719 = vld [vmem:[%s2708 + $0x50] sm:$0xff]
    %v2720 = vld [vmem:[%s2708 + $0x58] sm:$0xff]
    %v2721 = vld [vmem:[%s2708 + $0x60] sm:$0xff]
    %v2722 = vld [vmem:[%s2708 + $0x68] sm:$0xff]
    %v2723 = vld [vmem:[%s2708 + $0x70] sm:$0xff]
    %v2724 = vld [vmem:[%s2708 + $0x78] sm:$0xff]
    %v2725 = vld [vmem:[%s2708 + $0x80] sm:$0xff]
    %v2726 = vld [vmem:[%s2708 + $0x88] sm:$0xff]
    %v2727 = vld [vmem:[%s2708 + $0x90] sm:$0xff]
    %v2728 = vld [vmem:[%s2708 + $0x98] sm:$0xff]
    %v2729 = vld [vmem:[%s2708 + $0xa0] sm:$0xff]
    %v2730 = vld [vmem:[%s2708 + $0xa8] sm:$0xff]
    %v2731 = vld [vmem:[%s2708 + $0xb0] sm:$0xff]
    %v2732 = vld [vmem:[%s2708 + $0xb8] sm:$0xff]
    %v2733 = vld [vmem:[%s2708 + $0xc0] sm:$0xff]
    %v2734 = vld [vmem:[%s2708 + $0xc8] sm:$0xff]
    %v2735 = vld [vmem:[%s2708 + $0xd0] sm:$0xff]
    %v2736 = vld [vmem:[%s2708 + $0xd8] sm:$0xff]
    %v2737 = vld [vmem:[%s2708 + $0xe0] sm:$0xff]
    %v2738 = vld [vmem:[%s2708 + $0xe8] sm:$0xff]
    %v2739 = vld [vmem:[%s2708 + $0xf0] sm:$0xff]
    %v2740 = vld [vmem:[%s2708 + $0xf8] sm:$0xff]
    %s2741 = scalar_lea.vmem [#allocation14], 1
    %v2742 = vld [vmem:[%s2741] ss:$4 sm:$0xf]
    %v2744 = vlaneseq
    %v2745 = vshrl.u32 %v2744, 7
    %v2746 = vsub.s32 0, %v2745
    %v2747 = vrot.slane %v2742, %v2746
    %v2748 = vlaneseq
    %v2749 = vshrl.u32 %v2748, 7
    %v2750 = vsub.s32 1, %v2749
    %v2751 = vrot.slane %v2742, %v2750
    %v2752 = vlaneseq
    %v2753 = vshrl.u32 %v2752, 7
    %v2754 = vsub.s32 2, %v2753
    %v2755 = vrot.slane %v2742, %v2754
    %v2756 = vlaneseq
    %v2757 = vshrl.u32 %v2756, 7
    %v2758 = vsub.s32 3, %v2757
    %v2759 = vrot.slane %v2742, %v2758
    %v2796 = vunpack.c.l.b16 %v2709
    %v2797 = vunpack.c.h.b16 %v2709
    %v2798 = vunpack.c.l.b16 %v2710
    %v2799 = vunpack.c.h.b16 %v2710
    %v2800 = vunpack.c.l.b16 %v2711
    %v2801 = vunpack.c.h.b16 %v2711
    %v2802 = vunpack.c.l.b16 %v2712
    %v2803 = vunpack.c.h.b16 %v2712
    %v2804 = vunpack.c.l.b16 %v2713
    %v2805 = vunpack.c.h.b16 %v2713
    %v2806 = vunpack.c.l.b16 %v2714
    %v2807 = vunpack.c.h.b16 %v2714
    %v2808 = vunpack.c.l.b16 %v2715
    %v2809 = vunpack.c.h.b16 %v2715
    %v2810 = vunpack.c.l.b16 %v2716
    %v2811 = vunpack.c.h.b16 %v2716
    %v2812 = vunpack.c.l.b16 %v2717
    %v2813 = vunpack.c.h.b16 %v2717
    %v2814 = vunpack.c.l.b16 %v2718
    %v2815 = vunpack.c.h.b16 %v2718
    %v2816 = vunpack.c.l.b16 %v2719
    %v2817 = vunpack.c.h.b16 %v2719
    %v2818 = vunpack.c.l.b16 %v2720
    %v2819 = vunpack.c.h.b16 %v2720
    %v2820 = vunpack.c.l.b16 %v2721
    %v2821 = vunpack.c.h.b16 %v2721
    %v2822 = vunpack.c.l.b16 %v2722
    %v2823 = vunpack.c.h.b16 %v2722
    %v2824 = vunpack.c.l.b16 %v2723
    %v2825 = vunpack.c.h.b16 %v2723
    %v2826 = vunpack.c.l.b16 %v2724
    %v2827 = vunpack.c.h.b16 %v2724
    %v2828 = vunpack.c.l.b16 %v2725
    %v2829 = vunpack.c.h.b16 %v2725
    %v2830 = vunpack.c.l.b16 %v2726
    %v2831 = vunpack.c.h.b16 %v2726
    %v2832 = vunpack.c.l.b16 %v2727
    %v2833 = vunpack.c.h.b16 %v2727
    %v2834 = vunpack.c.l.b16 %v2728
    %v2835 = vunpack.c.h.b16 %v2728
    %v2836 = vunpack.c.l.b16 %v2729
    %v2837 = vunpack.c.h.b16 %v2729
    %v2838 = vunpack.c.l.b16 %v2730
    %v2839 = vunpack.c.h.b16 %v2730
    %v2840 = vunpack.c.l.b16 %v2731
    %v2841 = vunpack.c.h.b16 %v2731
    %v2842 = vunpack.c.l.b16 %v2732
    %v2843 = vunpack.c.h.b16 %v2732
    %v2844 = vunpack.c.l.b16 %v2733
    %v2845 = vunpack.c.h.b16 %v2733
    %v2846 = vunpack.c.l.b16 %v2734
    %v2847 = vunpack.c.h.b16 %v2734
    %v2848 = vunpack.c.l.b16 %v2735
    %v2849 = vunpack.c.h.b16 %v2735
    %v2850 = vunpack.c.l.b16 %v2736
    %v2851 = vunpack.c.h.b16 %v2736
    %v2852 = vunpack.c.l.b16 %v2737
    %v2853 = vunpack.c.h.b16 %v2737
    %v2854 = vunpack.c.l.b16 %v2738
    %v2855 = vunpack.c.h.b16 %v2738
    %v2856 = vunpack.c.l.b16 %v2739
    %v2857 = vunpack.c.h.b16 %v2739
    %v2858 = vunpack.c.l.b16 %v2740
    %v2859 = vunpack.c.h.b16 %v2740
    %v2860 = vpack.c.b16 %v2800, %v2796
    %v2861 = vpack.c.b16 %v2801, %v2797
    %v2862 = vpack.c.b16 %v2802, %v2798
    %v2863 = vpack.c.b16 %v2803, %v2799
    %v2864 = vpack.c.b16 %v2808, %v2804
    %v2865 = vpack.c.b16 %v2809, %v2805
    %v2866 = vpack.c.b16 %v2810, %v2806
    %v2867 = vpack.c.b16 %v2811, %v2807
    %v2868 = vpack.c.b16 %v2816, %v2812
    %v2869 = vpack.c.b16 %v2817, %v2813
    %v2870 = vpack.c.b16 %v2818, %v2814
    %v2871 = vpack.c.b16 %v2819, %v2815
    %v2872 = vpack.c.b16 %v2824, %v2820
    %v2873 = vpack.c.b16 %v2825, %v2821
    %v2874 = vpack.c.b16 %v2826, %v2822
    %v2875 = vpack.c.b16 %v2827, %v2823
    %v2876 = vpack.c.b16 %v2832, %v2828
    %v2877 = vpack.c.b16 %v2833, %v2829
    %v2878 = vpack.c.b16 %v2834, %v2830
    %v2879 = vpack.c.b16 %v2835, %v2831
    %v2880 = vpack.c.b16 %v2840, %v2836
    %v2881 = vpack.c.b16 %v2841, %v2837
    %v2882 = vpack.c.b16 %v2842, %v2838
    %v2883 = vpack.c.b16 %v2843, %v2839
    %v2884 = vpack.c.b16 %v2848, %v2844
    %v2885 = vpack.c.b16 %v2849, %v2845
    %v2886 = vpack.c.b16 %v2850, %v2846
    %v2887 = vpack.c.b16 %v2851, %v2847
    %v2888 = vpack.c.b16 %v2856, %v2852
    %v2889 = vpack.c.b16 %v2857, %v2853
    %v2890 = vpack.c.b16 %v2858, %v2854
    %v2891 = vpack.c.b16 %v2859, %v2855
    %2924 = vmatprep.subr.bf16.mxu0 %v2861
    %2925 = vmatpush1.bf16.msra.mxu0 %v2860
    %2926 = vmatprep.subr.bf16.mxu0 %v2865
    %2927 = vmatpush1.bf16.msra.mxu0 %v2864
    %2928 = vmatprep.subr.bf16.mxu0 %v2869
    %2929 = vmatpush1.bf16.msra.mxu0 %v2868
    %2930 = vmatprep.subr.bf16.mxu0 %v2873
    %2931 = vmatpush1.bf16.msra.mxu0 %v2872
    %2932 = vmatprep.subr.bf16.mxu0 %v2877
    %2933 = vmatpush1.bf16.msra.mxu0 %v2876
    %2934 = vmatprep.subr.bf16.mxu0 %v2881
    %2935 = vmatpush1.bf16.msra.mxu0 %v2880
    %2936 = vmatprep.subr.bf16.mxu0 %v2885
    %2937 = vmatpush1.bf16.msra.mxu0 %v2884
    %2938 = vmatprep.subr.bf16.mxu0 %v2889
    %2939 = vmatpush1.bf16.msra.mxu0 %v2888
    %2940 = vmatprep.subr.bf16.mxu0 0
    %2941 = vmatpush1.bf16.msra.mxu0 0
    %2942 = vmatprep.subr.bf16.mxu0 0
    %2943 = vmatpush1.bf16.msra.mxu0 0
    %2944 = vmatprep.subr.bf16.mxu0 0
    %2945 = vmatpush1.bf16.msra.mxu0 0
    %2946 = vmatprep.subr.bf16.mxu0 0
    %2947 = vmatpush1.bf16.msra.mxu0 0
    %2948 = vmatprep.subr.bf16.mxu0 0
    %2949 = vmatpush1.bf16.msra.mxu0 0
    %2950 = vmatprep.subr.bf16.mxu0 0
    %2951 = vmatpush1.bf16.msra.mxu0 0
    %2952 = vmatprep.subr.bf16.mxu0 0
    %2953 = vmatpush1.bf16.msra.mxu0 0
    %2954 = vmatprep.subr.bf16.mxu0 0
    %2955 = vmatpush1.bf16.msra.mxu0 0
    %2956 = vmatprep.mubr.bf16.mxu0 0
    %2957 = vmatmul.mubr.bf16.gmra.mrb[0].mxu0 %v2707
    %v2958 = vpop.f32.mrb[0].mxu0
    %v2959 = vadd.f32 %v2747, %v2958
    %v2960 = vpop.f32.mrb[0].mxu0
    %v2961 = vadd.f32 %v2751, %v2960
    %v2962 = vpop.f32.mrb[0].mxu0
    %v2963 = vadd.f32 %v2747, %v2962
    %v2964 = vpop.f32.mrb[0].mxu0
    %v2965 = vadd.f32 %v2751, %v2964
    %2966 = vdwg.mxu0
    %2967 = vmatprep.subr.bf16.mxu0 %v2863
    %2968 = vmatpush1.bf16.msra.mxu0 %v2862
    %2969 = vmatprep.subr.bf16.mxu0 %v2867
    %2970 = vmatpush1.bf16.msra.mxu0 %v2866
    %2971 = vmatprep.subr.bf16.mxu0 %v2871
    %2972 = vmatpush1.bf16.msra.mxu0 %v2870
    %2973 = vmatprep.subr.bf16.mxu0 %v2875
    %2974 = vmatpush1.bf16.msra.mxu0 %v2874
    %2975 = vmatprep.subr.bf16.mxu0 %v2879
    %2976 = vmatpush1.bf16.msra.mxu0 %v2878
    %2977 = vmatprep.subr.bf16.mxu0 %v2883
    %2978 = vmatpush1.bf16.msra.mxu0 %v2882
    %2979 = vmatprep.subr.bf16.mxu0 %v2887
    %2980 = vmatpush1.bf16.msra.mxu0 %v2886
    %2981 = vmatprep.subr.bf16.mxu0 %v2891
    %2982 = vmatpush1.bf16.msra.mxu0 %v2890
    %2983 = vmatprep.subr.bf16.mxu0 0
    %2984 = vmatpush1.bf16.msra.mxu0 0
    %2985 = vmatprep.subr.bf16.mxu0 0
    %2986 = vmatpush1.bf16.msra.mxu0 0
    %2987 = vmatprep.subr.bf16.mxu0 0
    %2988 = vmatpush1.bf16.msra.mxu0 0
    %2989 = vmatprep.subr.bf16.mxu0 0
    %2990 = vmatpush1.bf16.msra.mxu0 0
    %2991 = vmatprep.subr.bf16.mxu0 0
    %2992 = vmatpush1.bf16.msra.mxu0 0
    %2993 = vmatprep.subr.bf16.mxu0 0
    %2994 = vmatpush1.bf16.msra.mxu0 0
    %2995 = vmatprep.subr.bf16.mxu0 0
    %2996 = vmatpush1.bf16.msra.mxu0 0
    %2997 = vmatprep.subr.bf16.mxu0 0
    %2998 = vmatpush1.bf16.msra.mxu0 0
    %2999 = vmatprep.mubr.bf16.mxu0 0
    %3000 = vmatmul.mubr.bf16.gmra.mrb[0].mxu0 %v2707
    %v3001 = vpop.f32.mrb[0].mxu0
    %v3002 = vadd.f32 %v2755, %v3001
    %v3003 = vpop.f32.mrb[0].mxu0
    %v3004 = vadd.f32 %v2759, %v3003
    %v3005 = vpop.f32.mrb[0].mxu0
    %v3006 = vadd.f32 %v2755, %v3005
    %v3007 = vpop.f32.mrb[0].mxu0
    %v3008 = vadd.f32 %v2759, %v3007
    %3009 = vdwg.mxu0
    %v3010 = vmul.f32 %v2959, %v2959
    %v3011 = vmul.f32 %v2961, %v2961
    %v3012 = vmul.f32 %v3002, %v3002
    %v3013 = vmul.f32 %v3004, %v3004
    %v3014 = vmul.f32 %v2963, %v2963
    %v3015 = vmul.f32 %v2965, %v2965
    %v3016 = vmul.f32 %v3006, %v3006
    %v3017 = vmul.f32 %v3008, %v3008
    %v3018 = vmul.f32 %v2959, %v3010
    %v3019 = vmul.f32 %v2961, %v3011
    %v3020 = vmul.f32 %v3002, %v3012
    %v3021 = vmul.f32 %v3004, %v3013
    %v3022 = vmul.f32 %v2963, %v3014
    %v3023 = vmul.f32 %v2965, %v3015
    %v3024 = vmul.f32 %v3006, %v3016
    %v3025 = vmul.f32 %v3008, %v3017
    %v3026 = vmul.f32 %v3018, 0.044715
    %v3027 = vmul.f32 %v3019, 0.044715
    %v3028 = vmul.f32 %v3020, 0.044715
    %v3029 = vmul.f32 %v3021, 0.044715
    %v3030 = vmul.f32 %v3022, 0.044715
    %v3031 = vmul.f32 %v3023, 0.044715
    %v3032 = vmul.f32 %v3024, 0.044715
    %v3033 = vmul.f32 %v3025, 0.044715
    %v3034 = vadd.f32 %v2959, %v3026
    %v3035 = vadd.f32 %v2961, %v3027
    %v3036 = vadd.f32 %v3002, %v3028
    %v3037 = vadd.f32 %v3004, %v3029
    %v3038 = vadd.f32 %v2963, %v3030
    %v3039 = vadd.f32 %v2965, %v3031
    %v3040 = vadd.f32 %v3006, %v3032
    %v3041 = vadd.f32 %v3008, %v3033
    %v3042 = vmul.f32 %v3034, 0.7978846
    %v3043 = vmul.f32 %v3035, 0.7978846
    %v3044 = vmul.f32 %v3036, 0.7978846
    %v3045 = vmul.f32 %v3037, 0.7978846
    %v3046 = vmul.f32 %v3038, 0.7978846
    %v3047 = vmul.f32 %v3039, 0.7978846
    %v3048 = vmul.f32 %v3040, 0.7978846
    %v3049 = vmul.f32 %v3041, 0.7978846
    %v3050 = vtanh.pop %v3042
    %v3051 = vtanh.pop %v3043
    %v3052 = vtanh.pop %v3044
    %v3053 = vtanh.pop %v3045
    %v3054 = vtanh.pop %v3046
    %v3055 = vtanh.pop %v3047
    %v3056 = vtanh.pop %v3048
    %v3057 = vtanh.pop %v3049
    %v3058 = vadd.f32 %v3050, 1.0
    %v3059 = vadd.f32 %v3051, 1.0
    %v3060 = vadd.f32 %v3052, 1.0
    %v3061 = vadd.f32 %v3053, 1.0
    %v3062 = vadd.f32 %v3054, 1.0
    %v3063 = vadd.f32 %v3055, 1.0
    %v3064 = vadd.f32 %v3056, 1.0
    %v3065 = vadd.f32 %v3057, 1.0
    %v3066 = vmul.f32 %v3058, 0.5
    %v3067 = vmul.f32 %v3059, 0.5
    %v3068 = vmul.f32 %v3060, 0.5
    %v3069 = vmul.f32 %v3061, 0.5
    %v3070 = vmul.f32 %v3062, 0.5
    %v3071 = vmul.f32 %v3063, 0.5
    %v3072 = vmul.f32 %v3064, 0.5
    %v3073 = vmul.f32 %v3065, 0.5
    %v3074 = vmul.f32 %v2959, %v3066
    %v3075 = vmul.f32 %v2961, %v3067
    %v3076 = vmul.f32 %v3002, %v3068
    %v3077 = vmul.f32 %v3004, %v3069
    %v3078 = vmul.f32 %v2963, %v3070
    %v3079 = vmul.f32 %v2965, %v3071
    %v3080 = vmul.f32 %v3006, %v3072
    %v3081 = vmul.f32 %v3008, %v3073
    %v3082 = vpack.c.bf16 %v3078, %v3074
    %v3083 = vpack.c.bf16 %v3079, %v3075
    %v3084 = vpack.c.bf16 %v3080, %v3076
    %v3085 = vpack.c.bf16 %v3081, %v3077
    %s3086 = scalar_lea.vmem [#allocation10], 256
    %v3087 = vld [vmem:[%s3086] sm:$0xf]
    %v3088 = vld [vmem:[%s3086 + $0x4] sm:$0xf]
    %v3089 = vld [vmem:[%s3086 + $0x8] sm:$0xf]
    %v3090 = vld [vmem:[%s3086 + $0xc] sm:$0xf]
    %v3091 = vld [vmem:[%s3086 + $0x10] sm:$0xf]
    %v3092 = vld [vmem:[%s3086 + $0x14] sm:$0xf]
    %v3093 = vld [vmem:[%s3086 + $0x18] sm:$0xf]
    %v3094 = vld [vmem:[%s3086 + $0x1c] sm:$0xf]
    %v3095 = vld [vmem:[%s3086 + $0x20] sm:$0xf]
    %v3096 = vld [vmem:[%s3086 + $0x24] sm:$0xf]
    %v3097 = vld [vmem:[%s3086 + $0x28] sm:$0xf]
    %v3098 = vld [vmem:[%s3086 + $0x2c] sm:$0xf]
    %v3099 = vld [vmem:[%s3086 + $0x30] sm:$0xf]
    %v3100 = vld [vmem:[%s3086 + $0x34] sm:$0xf]
    %v3101 = vld [vmem:[%s3086 + $0x38] sm:$0xf]
    %v3102 = vld [vmem:[%s3086 + $0x3c] sm:$0xf]
    %v3103 = vld [vmem:[%s3086 + $0x40] sm:$0xf]
    %v3104 = vld [vmem:[%s3086 + $0x44] sm:$0xf]
    %v3105 = vld [vmem:[%s3086 + $0x48] sm:$0xf]
    %v3106 = vld [vmem:[%s3086 + $0x4c] sm:$0xf]
    %v3107 = vld [vmem:[%s3086 + $0x50] sm:$0xf]
    %v3108 = vld [vmem:[%s3086 + $0x54] sm:$0xf]
    %v3109 = vld [vmem:[%s3086 + $0x58] sm:$0xf]
    %v3110 = vld [vmem:[%s3086 + $0x5c] sm:$0xf]
    %v3111 = vld [vmem:[%s3086 + $0x60] sm:$0xf]
    %v3112 = vld [vmem:[%s3086 + $0x64] sm:$0xf]
    %v3113 = vld [vmem:[%s3086 + $0x68] sm:$0xf]
    %v3114 = vld [vmem:[%s3086 + $0x6c] sm:$0xf]
    %v3115 = vld [vmem:[%s3086 + $0x70] sm:$0xf]
    %v3116 = vld [vmem:[%s3086 + $0x74] sm:$0xf]
    %v3117 = vld [vmem:[%s3086 + $0x78] sm:$0xf]
    %v3118 = vld [vmem:[%s3086 + $0x7c] sm:$0xf]
    %v3119 = vld [vmem:[%s3086 + $0x80] sm:$0xf]
    %v3120 = vld [vmem:[%s3086 + $0x84] sm:$0xf]
    %v3121 = vld [vmem:[%s3086 + $0x88] sm:$0xf]
    %v3122 = vld [vmem:[%s3086 + $0x8c] sm:$0xf]
    %v3123 = vld [vmem:[%s3086 + $0x90] sm:$0xf]
    %v3124 = vld [vmem:[%s3086 + $0x94] sm:$0xf]
    %v3125 = vld [vmem:[%s3086 + $0x98] sm:$0xf]
    %v3126 = vld [vmem:[%s3086 + $0x9c] sm:$0xf]
    %v3127 = vld [vmem:[%s3086 + $0xa0] sm:$0xf]
    %v3128 = vld [vmem:[%s3086 + $0xa4] sm:$0xf]
    %v3129 = vld [vmem:[%s3086 + $0xa8] sm:$0xf]
    %v3130 = vld [vmem:[%s3086 + $0xac] sm:$0xf]
    %v3131 = vld [vmem:[%s3086 + $0xb0] sm:$0xf]
    %v3132 = vld [vmem:[%s3086 + $0xb4] sm:$0xf]
    %v3133 = vld [vmem:[%s3086 + $0xb8] sm:$0xf]
    %v3134 = vld [vmem:[%s3086 + $0xbc] sm:$0xf]
    %v3135 = vld [vmem:[%s3086 + $0xc0] sm:$0xf]
    %v3136 = vld [vmem:[%s3086 + $0xc4] sm:$0xf]
    %v3137 = vld [vmem:[%s3086 + $0xc8] sm:$0xf]
    %v3138 = vld [vmem:[%s3086 + $0xcc] sm:$0xf]
    %v3139 = vld [vmem:[%s3086 + $0xd0] sm:$0xf]
    %v3140 = vld [vmem:[%s3086 + $0xd4] sm:$0xf]
    %v3141 = vld [vmem:[%s3086 + $0xd8] sm:$0xf]
    %v3142 = vld [vmem:[%s3086 + $0xdc] sm:$0xf]
    %v3143 = vld [vmem:[%s3086 + $0xe0] sm:$0xf]
    %v3144 = vld [vmem:[%s3086 + $0xe4] sm:$0xf]
    %v3145 = vld [vmem:[%s3086 + $0xe8] sm:$0xf]
    %v3146 = vld [vmem:[%s3086 + $0xec] sm:$0xf]
    %v3147 = vld [vmem:[%s3086 + $0xf0] sm:$0xf]
    %v3148 = vld [vmem:[%s3086 + $0xf4] sm:$0xf]
    %v3149 = vld [vmem:[%s3086 + $0xf8] sm:$0xf]
    %v3150 = vld [vmem:[%s3086 + $0xfc] sm:$0xf]
    %v3151 = vld [vmem:[%s9 + $0xb] sm:$0x1]
    %v3152 = vlaneseq
    %v3153 = vshrl.u32 %v3152, 7
    %v3154 = vsub.s32 0, %v3153
    %v3155 = vrot.slane %v3151, %v3154
    %v3220 = vunpack.c.l.b16 %v3087
    %v3221 = vunpack.c.l.b16 %v3088
    %v3222 = vunpack.c.l.b16 %v3089
    %v3223 = vunpack.c.l.b16 %v3090
    %v3224 = vunpack.c.l.b16 %v3091
    %v3225 = vunpack.c.l.b16 %v3092
    %v3226 = vunpack.c.l.b16 %v3093
    %v3227 = vunpack.c.l.b16 %v3094
    %v3228 = vunpack.c.l.b16 %v3095
    %v3229 = vunpack.c.l.b16 %v3096
    %v3230 = vunpack.c.l.b16 %v3097
    %v3231 = vunpack.c.l.b16 %v3098
    %v3232 = vunpack.c.l.b16 %v3099
    %v3233 = vunpack.c.l.b16 %v3100
    %v3234 = vunpack.c.l.b16 %v3101
    %v3235 = vunpack.c.l.b16 %v3102
    %v3236 = vunpack.c.l.b16 %v3103
    %v3237 = vunpack.c.l.b16 %v3104
    %v3238 = vunpack.c.l.b16 %v3105
    %v3239 = vunpack.c.l.b16 %v3106
    %v3240 = vunpack.c.l.b16 %v3107
    %v3241 = vunpack.c.l.b16 %v3108
    %v3242 = vunpack.c.l.b16 %v3109
    %v3243 = vunpack.c.l.b16 %v3110
    %v3244 = vunpack.c.l.b16 %v3111
    %v3245 = vunpack.c.l.b16 %v3112
    %v3246 = vunpack.c.l.b16 %v3113
    %v3247 = vunpack.c.l.b16 %v3114
    %v3248 = vunpack.c.l.b16 %v3115
    %v3249 = vunpack.c.l.b16 %v3116
    %v3250 = vunpack.c.l.b16 %v3117
    %v3251 = vunpack.c.l.b16 %v3118
    %v3252 = vunpack.c.l.b16 %v3119
    %v3253 = vunpack.c.l.b16 %v3120
    %v3254 = vunpack.c.l.b16 %v3121
    %v3255 = vunpack.c.l.b16 %v3122
    %v3256 = vunpack.c.l.b16 %v3123
    %v3257 = vunpack.c.l.b16 %v3124
    %v3258 = vunpack.c.l.b16 %v3125
    %v3259 = vunpack.c.l.b16 %v3126
    %v3260 = vunpack.c.l.b16 %v3127
    %v3261 = vunpack.c.l.b16 %v3128
    %v3262 = vunpack.c.l.b16 %v3129
    %v3263 = vunpack.c.l.b16 %v3130
    %v3264 = vunpack.c.l.b16 %v3131
    %v3265 = vunpack.c.l.b16 %v3132
    %v3266 = vunpack.c.l.b16 %v3133
    %v3267 = vunpack.c.l.b16 %v3134
    %v3268 = vunpack.c.l.b16 %v3135
    %v3269 = vunpack.c.l.b16 %v3136
    %v3270 = vunpack.c.l.b16 %v3137
    %v3271 = vunpack.c.l.b16 %v3138
    %v3272 = vunpack.c.l.b16 %v3139
    %v3273 = vunpack.c.l.b16 %v3140
    %v3274 = vunpack.c.l.b16 %v3141
    %v3275 = vunpack.c.l.b16 %v3142
    %v3276 = vunpack.c.l.b16 %v3143
    %v3277 = vunpack.c.l.b16 %v3144
    %v3278 = vunpack.c.l.b16 %v3145
    %v3279 = vunpack.c.l.b16 %v3146
    %v3280 = vunpack.c.l.b16 %v3147
    %v3281 = vunpack.c.l.b16 %v3148
    %v3282 = vunpack.c.l.b16 %v3149
    %v3283 = vunpack.c.l.b16 %v3150
    %v3284 = vpack.c.b16 %v3221, %v3220
    %v3285 = vpack.c.b16 %v3223, %v3222
    %v3286 = vpack.c.b16 %v3225, %v3224
    %v3287 = vpack.c.b16 %v3227, %v3226
    %v3288 = vpack.c.b16 %v3229, %v3228
    %v3289 = vpack.c.b16 %v3231, %v3230
    %v3290 = vpack.c.b16 %v3233, %v3232
    %v3291 = vpack.c.b16 %v3235, %v3234
    %v3292 = vpack.c.b16 %v3237, %v3236
    %v3293 = vpack.c.b16 %v3239, %v3238
    %v3294 = vpack.c.b16 %v3241, %v3240
    %v3295 = vpack.c.b16 %v3243, %v3242
    %v3296 = vpack.c.b16 %v3245, %v3244
    %v3297 = vpack.c.b16 %v3247, %v3246
    %v3298 = vpack.c.b16 %v3249, %v3248
    %v3299 = vpack.c.b16 %v3251, %v3250
    %v3300 = vpack.c.b16 %v3253, %v3252
    %v3301 = vpack.c.b16 %v3255, %v3254
    %v3302 = vpack.c.b16 %v3257, %v3256
    %v3303 = vpack.c.b16 %v3259, %v3258
    %v3304 = vpack.c.b16 %v3261, %v3260
    %v3305 = vpack.c.b16 %v3263, %v3262
    %v3306 = vpack.c.b16 %v3265, %v3264
    %v3307 = vpack.c.b16 %v3267, %v3266
    %v3308 = vpack.c.b16 %v3269, %v3268
    %v3309 = vpack.c.b16 %v3271, %v3270
    %v3310 = vpack.c.b16 %v3273, %v3272
    %v3311 = vpack.c.b16 %v3275, %v3274
    %v3312 = vpack.c.b16 %v3277, %v3276
    %v3313 = vpack.c.b16 %v3279, %v3278
    %v3314 = vpack.c.b16 %v3281, %v3280
    %v3315 = vpack.c.b16 %v3283, %v3282
    %3348 = vmatprep.subr.bf16.mxu0 0
    %3349 = vmatpush1.bf16.msra.mxu0 %v3284
    %3350 = vmatprep.subr.bf16.mxu0 0
    %3351 = vmatpush1.bf16.msra.mxu0 %v3285
    %3352 = vmatprep.subr.bf16.mxu0 0
    %3353 = vmatpush1.bf16.msra.mxu0 %v3286
    %3354 = vmatprep.subr.bf16.mxu0 0
    %3355 = vmatpush1.bf16.msra.mxu0 %v3287
    %3356 = vmatprep.subr.bf16.mxu0 0
    %3357 = vmatpush1.bf16.msra.mxu0 %v3288
    %3358 = vmatprep.subr.bf16.mxu0 0
    %3359 = vmatpush1.bf16.msra.mxu0 %v3289
    %3360 = vmatprep.subr.bf16.mxu0 0
    %3361 = vmatpush1.bf16.msra.mxu0 %v3290
    %3362 = vmatprep.subr.bf16.mxu0 0
    %3363 = vmatpush1.bf16.msra.mxu0 %v3291
    %3364 = vmatprep.subr.bf16.mxu0 0
    %3365 = vmatpush1.bf16.msra.mxu0 %v3292
    %3366 = vmatprep.subr.bf16.mxu0 0
    %3367 = vmatpush1.bf16.msra.mxu0 %v3293
    %3368 = vmatprep.subr.bf16.mxu0 0
    %3369 = vmatpush1.bf16.msra.mxu0 %v3294
    %3370 = vmatprep.subr.bf16.mxu0 0
    %3371 = vmatpush1.bf16.msra.mxu0 %v3295
    %3372 = vmatprep.subr.bf16.mxu0 0
    %3373 = vmatpush1.bf16.msra.mxu0 %v3296
    %3374 = vmatprep.subr.bf16.mxu0 0
    %3375 = vmatpush1.bf16.msra.mxu0 %v3297
    %3376 = vmatprep.subr.bf16.mxu0 0
    %3377 = vmatpush1.bf16.msra.mxu0 %v3298
    %3378 = vmatprep.subr.bf16.mxu0 0
    %3379 = vmatpush1.bf16.msra.mxu0 %v3299
    %3380 = vmatprep.mubr.bf16.mxu0 %v3083
    %3381 = vmatmul.mubr.bf16.gmra.mrb[0].mxu0 %v3082
    %v3382 = vpop.f32.mrb[0].mxu0
    %v3383 = vadd.f32 %v3155, %v3382
    %v3384 = vpop.f32.mrb[0].mxu0
    %v3385 = vpop.f32.mrb[0].mxu0
    %v3386 = vadd.f32 %v3155, %v3385
    %v3387 = vpop.f32.mrb[0].mxu0
    %3388 = vdwg.mxu0
    %3389 = vmatprep.subr.bf16.mxu0 0
    %3390 = vmatpush1.bf16.msra.mxu0 %v3300
    %3391 = vmatprep.subr.bf16.mxu0 0
    %3392 = vmatpush1.bf16.msra.mxu0 %v3301
    %3393 = vmatprep.subr.bf16.mxu0 0
    %3394 = vmatpush1.bf16.msra.mxu0 %v3302
    %3395 = vmatprep.subr.bf16.mxu0 0
    %3396 = vmatpush1.bf16.msra.mxu0 %v3303
    %3397 = vmatprep.subr.bf16.mxu0 0
    %3398 = vmatpush1.bf16.msra.mxu0 %v3304
    %3399 = vmatprep.subr.bf16.mxu0 0
    %3400 = vmatpush1.bf16.msra.mxu0 %v3305
    %3401 = vmatprep.subr.bf16.mxu0 0
    %3402 = vmatpush1.bf16.msra.mxu0 %v3306
    %3403 = vmatprep.subr.bf16.mxu0 0
    %3404 = vmatpush1.bf16.msra.mxu0 %v3307
    %3405 = vmatprep.subr.bf16.mxu0 0
    %3406 = vmatpush1.bf16.msra.mxu0 %v3308
    %3407 = vmatprep.subr.bf16.mxu0 0
    %3408 = vmatpush1.bf16.msra.mxu0 %v3309
    %3409 = vmatprep.subr.bf16.mxu0 0
    %3410 = vmatpush1.bf16.msra.mxu0 %v3310
    %3411 = vmatprep.subr.bf16.mxu0 0
    %3412 = vmatpush1.bf16.msra.mxu0 %v3311
    %3413 = vmatprep.subr.bf16.mxu0 0
    %3414 = vmatpush1.bf16.msra.mxu0 %v3312
    %3415 = vmatprep.subr.bf16.mxu0 0
    %3416 = vmatpush1.bf16.msra.mxu0 %v3313
    %3417 = vmatprep.subr.bf16.mxu0 0
    %3418 = vmatpush1.bf16.msra.mxu0 %v3314
    %3419 = vmatprep.subr.bf16.mxu0 0
    %3420 = vmatpush1.bf16.msra.mxu0 %v3315
    %3421 = vmatprep.mubr.bf16.mxu0 %v3085
    %3422 = vmatmul.mubr.bf16.gmra.mrb[0].mxu0 %v3084
    %v3423 = vpop.f32.mrb[0].mxu0
    %v3424 = vadd.f32 %v3383, %v3423
    %v3425 = vpop.f32.mrb[0].mxu0
    %v3426 = vpop.f32.mrb[0].mxu0
    %v3427 = vadd.f32 %v3386, %v3426
    %v3428 = vpop.f32.mrb[0].mxu0
    %3429 = vdwg.mxu0
    %v3430 = vadd.f32 %v2705, %v3424
    %v3431 = vadd.f32 %v2706, %v3427
    %v3432 = vld [vmem:[%s9 + $0xc] sm:$0x1]
    %v3433 = vld [vmem:[%s9 + $0xd] sm:$0x1]
    %3434 = vadd.xlane.f32.xlu0 %v3430
    %v3435 = vpop.xlane.xlu0 %3434
    %3436 = vadd.xlane.f32.xlu0 %v3431
    %v3437 = vpop.xlane.xlu0 %3436
    %v3438 = vmul.f32 %v3435, %v174
    %v3439 = vmul.f32 %v3437, %v174
    %v3440 = vsub.f32 %v3430, %v3438
    %v3441 = vsub.f32 %v3431, %v3439
    %v3442 = vmul.f32 %v3440, %v3440
    %v3443 = vmul.f32 %v3441, %v3441
    %3444 = vadd.xlane.f32.xlu0 %v3442
    %v3445 = vpop.xlane.xlu0 %3444
    %3446 = vadd.xlane.f32.xlu0 %v3443
    %v3447 = vpop.xlane.xlu0 %3446
    %v3448 = vmul.f32 %v3445, %v174
    %v3449 = vmul.f32 %v3447, %v174
    %v3450 = vadd.f32 %v3448, 1e-12
    %v3451 = vadd.f32 %v3449, 1e-12
    %v3452 = vrsqrt.pop %v3450
    %v3453 = vrsqrt.pop %v3451
    %v3454 = vmul.f32 %v3440, %v3452
    %v3455 = vmul.f32 %v3441, %v3453
    %v3456 = vlaneseq
    %v3457 = vshrl.u32 %v3456, 7
    %v3458 = vsub.s32 0, %v3457
    %v3459 = vrot.slane %v3432, %v3458
    %v3460 = vmul.f32 %v3454, %v3459
    %v3461 = vmul.f32 %v3455, %v3459
    %v3462 = vlaneseq
    %v3463 = vshrl.u32 %v3462, 7
    %v3464 = vsub.s32 0, %v3463
    %v3465 = vrot.slane %v3433, %v3464
    %v3466 = vadd.f32 %v3460, %v3465
    %v3467 = vadd.f32 %v3461, %v3465
    %v3468 = vadd.f32 %v3466, %v203
    %v3469 = vadd.f32 %v3467, %v204
    %v3470 = vld [vmem:[%s9 + $0xe] sm:$0x1]
    %v3471 = vld [vmem:[%s9 + $0xf] sm:$0x1]
    %3472 = vadd.xlane.f32.xlu0 %v3468
    %v3473 = vpop.xlane.xlu0 %3472
    %3474 = vadd.xlane.f32.xlu0 %v3469
    %v3475 = vpop.xlane.xlu0 %3474
    %v3476 = vmul.f32 %v3473, %v174
    %v3477 = vmul.f32 %v3475, %v174
    %v3478 = vsub.f32 %v3468, %v3476
    %v3479 = vsub.f32 %v3469, %v3477
    %v3480 = vmul.f32 %v3478, %v3478
    %v3481 = vmul.f32 %v3479, %v3479
    %3482 = vadd.xlane.f32.xlu0 %v3480
    %v3483 = vpop.xlane.xlu0 %3482
    %3484 = vadd.xlane.f32.xlu0 %v3481
    %v3485 = vpop.xlane.xlu0 %3484
    %v3486 = vmul.f32 %v3483, %v174
    %v3487 = vmul.f32 %v3485, %v174
    %v3488 = vadd.f32 %v3486, 1e-05
    %v3489 = vadd.f32 %v3487, 1e-05
    %v3490 = vrsqrt.pop %v3488
    %v3491 = vrsqrt.pop %v3489
    %v3492 = vmul.f32 %v3478, %v3490
    %v3493 = vmul.f32 %v3479, %v3491
    %v3494 = vlaneseq
    %v3495 = vshrl.u32 %v3494, 7
    %v3496 = vsub.s32 0, %v3495
    %v3497 = vrot.slane %v3470, %v3496
    %v3498 = vmul.f32 %v3492, %v3497
    %v3499 = vmul.f32 %v3493, %v3497
    %v3500 = vlaneseq
    %v3501 = vshrl.u32 %v3500, 7
    %v3502 = vsub.s32 0, %v3501
    %v3503 = vrot.slane %v3471, %v3502
    %v3504 = vadd.f32 %v3498, %v3503
    %v3505 = vadd.f32 %v3499, %v3503
    %s3506 = smul.u32 4, 2
    %s3507 = smul.u32 %s3506, 16
    %s3508 = smul.u32 %s3507, 16
    %s3509 = sshll.u32 %s3508, 4
    %3510 = dma.done [#allocation4], %s3509
    %s3511 = smul.u32 %s3506, 256
    %s3512 = smul.u32 %s3511, 1
    %s3513 = sshll.u32 %s3512, 4
    %3514 = dma.done %s152, %s3513
    %s3515 = scalar_lea.vmem [#allocation5], 384
    %v3516 = vld [vmem:[%s3515] sm:$0xff]
    %v3517 = vld [vmem:[%s3515 + $0x8] sm:$0xf]
    %v3518 = vld [vmem:[%s3515 + $0xc] sm:$0xff]
    %v3519 = vld [vmem:[%s3515 + $0x14] sm:$0xf]
    %v3520 = vld [vmem:[%s3515 + $0x18] sm:$0xff]
    %v3521 = vld [vmem:[%s3515 + $0x20] sm:$0xf]
    %v3522 = vld [vmem:[%s3515 + $0x24] sm:$0xff]
    %v3523 = vld [vmem:[%s3515 + $0x2c] sm:$0xf]
    %v3524 = vld [vmem:[%s3515 + $0x30] sm:$0xff]
    %v3525 = vld [vmem:[%s3515 + $0x38] sm:$0xf]
    %v3526 = vld [vmem:[%s3515 + $0x3c] sm:$0xff]
    %v3527 = vld [vmem:[%s3515 + $0x44] sm:$0xf]
    %v3528 = vld [vmem:[%s3515 + $0x48] sm:$0xff]
    %v3529 = vld [vmem:[%s3515 + $0x50] sm:$0xf]
    %v3530 = vld [vmem:[%s3515 + $0x54] sm:$0xff]
    %v3531 = vld [vmem:[%s3515 + $0x5c] sm:$0xf]
    %v3532 = vld [vmem:[%s3515 + $0x60] sm:$0xff]
    %v3533 = vld [vmem:[%s3515 + $0x68] sm:$0xf]
    %v3534 = vld [vmem:[%s3515 + $0x6c] sm:$0xff]
    %v3535 = vld [vmem:[%s3515 + $0x74] sm:$0xf]
    %v3536 = vld [vmem:[%s3515 + $0x78] sm:$0xff]
    %v3537 = vld [vmem:[%s3515 + $0x80] sm:$0xf]
    %v3538 = vld [vmem:[%s3515 + $0x84] sm:$0xff]
    %v3539 = vld [vmem:[%s3515 + $0x8c] sm:$0xf]
    %v3540 = vld [vmem:[%s3515 + $0x90] sm:$0xff]
    %v3541 = vld [vmem:[%s3515 + $0x98] sm:$0xf]
    %v3542 = vld [vmem:[%s3515 + $0x9c] sm:$0xff]
    %v3543 = vld [vmem:[%s3515 + $0xa4] sm:$0xf]
    %v3544 = vld [vmem:[%s3515 + $0xa8] sm:$0xff]
    %v3545 = vld [vmem:[%s3515 + $0xb0] sm:$0xf]
    %v3546 = vld [vmem:[%s3515 + $0xb4] sm:$0xff]
    %v3547 = vld [vmem:[%s3515 + $0xbc] sm:$0xf]
    %s3548 = scalar_lea.vmem [#allocation13], 2
    %v3549 = vld [vmem:[%s3548] ss:$4 sm:$0x7]
    %s3550 = scalar_lea.vmem %s3, 128
    %v3551 = vld [vmem:[%s3550] sm:$0xf]
    %v3552 = vld [vmem:[%s3550 + $0x4] sm:$0xf]
    %v3553 = vld [vmem:[%s3550 + $0x8] sm:$0xf]
    %v3554 = vld [vmem:[%s3550 + $0xc] sm:$0xf]
    %v3555 = vld [vmem:[%s3550 + $0x10] sm:$0xf]
    %v3556 = vld [vmem:[%s3550 + $0x14] sm:$0xf]
    %v3557 = vld [vmem:[%s3550 + $0x18] sm:$0xf]
    %v3558 = vld [vmem:[%s3550 + $0x1c] sm:$0xf]
    %v3559 = vld [vmem:[%s3550 + $0x20] sm:$0xf]
    %v3560 = vld [vmem:[%s3550 + $0x24] sm:$0xf]
    %v3561 = vld [vmem:[%s3550 + $0x28] sm:$0xf]
    %v3562 = vld [vmem:[%s3550 + $0x2c] sm:$0xf]
    %v3563 = vld [vmem:[%s3550 + $0x30] sm:$0xf]
    %v3564 = vld [vmem:[%s3550 + $0x34] sm:$0xf]
    %v3565 = vld [vmem:[%s3550 + $0x38] sm:$0xf]
    %v3566 = vld [vmem:[%s3550 + $0x3c] sm:$0xf]
    %v3567 = vld [vmem:[%s9 + $0x10] sm:$0x1]
    %v3568 = vpack.c.bf16 %v3505, %v3504
    %v3570 = vlaneseq
    %v3571 = vshrl.u32 %v3570, 7
    %v3572 = vsub.s32 0, %v3571
    %v3573 = vrot.slane %v3549, %v3572
    %v3574 = vlaneseq
    %v3575 = vshrl.u32 %v3574, 7
    %v3576 = vsub.s32 1, %v3575
    %v3577 = vrot.slane %v3549, %v3576
    %v3578 = vlaneseq
    %v3579 = vshrl.u32 %v3578, 7
    %v3580 = vsub.s32 2, %v3579
    %v3581 = vrot.slane %v3549, %v3580
    %v3617 = vunpack.c.l.b16 %v3516
    %v3618 = vunpack.c.h.b16 %v3516
    %v3619 = vunpack.c.l.b16 %v3517
    %v3620 = vunpack.c.l.b16 %v3518
    %v3621 = vunpack.c.h.b16 %v3518
    %v3622 = vunpack.c.l.b16 %v3519
    %v3623 = vunpack.c.l.b16 %v3520
    %v3624 = vunpack.c.h.b16 %v3520
    %v3625 = vunpack.c.l.b16 %v3521
    %v3626 = vunpack.c.l.b16 %v3522
    %v3627 = vunpack.c.h.b16 %v3522
    %v3628 = vunpack.c.l.b16 %v3523
    %v3629 = vunpack.c.l.b16 %v3524
    %v3630 = vunpack.c.h.b16 %v3524
    %v3631 = vunpack.c.l.b16 %v3525
    %v3632 = vunpack.c.l.b16 %v3526
    %v3633 = vunpack.c.h.b16 %v3526
    %v3634 = vunpack.c.l.b16 %v3527
    %v3635 = vunpack.c.l.b16 %v3528
    %v3636 = vunpack.c.h.b16 %v3528
    %v3637 = vunpack.c.l.b16 %v3529
    %v3638 = vunpack.c.l.b16 %v3530
    %v3639 = vunpack.c.h.b16 %v3530
    %v3640 = vunpack.c.l.b16 %v3531
    %v3641 = vunpack.c.l.b16 %v3532
    %v3642 = vunpack.c.h.b16 %v3532
    %v3643 = vunpack.c.l.b16 %v3533
    %v3644 = vunpack.c.l.b16 %v3534
    %v3645 = vunpack.c.h.b16 %v3534
    %v3646 = vunpack.c.l.b16 %v3535
    %v3647 = vunpack.c.l.b16 %v3536
    %v3648 = vunpack.c.h.b16 %v3536
    %v3649 = vunpack.c.l.b16 %v3537
    %v3650 = vunpack.c.l.b16 %v3538
    %v3651 = vunpack.c.h.b16 %v3538
    %v3652 = vunpack.c.l.b16 %v3539
    %v3653 = vunpack.c.l.b16 %v3540
    %v3654 = vunpack.c.h.b16 %v3540
    %v3655 = vunpack.c.l.b16 %v3541
    %v3656 = vunpack.c.l.b16 %v3542
    %v3657 = vunpack.c.h.b16 %v3542
    %v3658 = vunpack.c.l.b16 %v3543
    %v3659 = vunpack.c.l.b16 %v3544
    %v3660 = vunpack.c.h.b16 %v3544
    %v3661 = vunpack.c.l.b16 %v3545
    %v3662 = vunpack.c.l.b16 %v3546
    %v3663 = vunpack.c.h.b16 %v3546
    %v3664 = vunpack.c.l.b16 %v3547
    %v3665 = vpack.c.b16 %v3620, %v3617
    %v3666 = vpack.c.b16 %v3621, %v3618
    %v3667 = vpack.c.b16 %v3622, %v3619
    %v3668 = vpack.c.b16 %v3626, %v3623
    %v3669 = vpack.c.b16 %v3627, %v3624
    %v3670 = vpack.c.b16 %v3628, %v3625
    %v3671 = vpack.c.b16 %v3632, %v3629
    %v3672 = vpack.c.b16 %v3633, %v3630
    %v3673 = vpack.c.b16 %v3634, %v3631
    %v3674 = vpack.c.b16 %v3638, %v3635
    %v3675 = vpack.c.b16 %v3639, %v3636
    %v3676 = vpack.c.b16 %v3640, %v3637
    %v3677 = vpack.c.b16 %v3644, %v3641
    %v3678 = vpack.c.b16 %v3645, %v3642
    %v3679 = vpack.c.b16 %v3646, %v3643
    %v3680 = vpack.c.b16 %v3650, %v3647
    %v3681 = vpack.c.b16 %v3651, %v3648
    %v3682 = vpack.c.b16 %v3652, %v3649
    %v3683 = vpack.c.b16 %v3656, %v3653
    %v3684 = vpack.c.b16 %v3657, %v3654
    %v3685 = vpack.c.b16 %v3658, %v3655
    %v3686 = vpack.c.b16 %v3662, %v3659
    %v3687 = vpack.c.b16 %v3663, %v3660
    %v3688 = vpack.c.b16 %v3664, %v3661
    %3713 = vmatprep.subr.bf16.mxu0 %v3666
    %3714 = vmatpush1.bf16.msra.mxu0 %v3665
    %3715 = vmatprep.subr.bf16.mxu0 %v3669
    %3716 = vmatpush1.bf16.msra.mxu0 %v3668
    %3717 = vmatprep.subr.bf16.mxu0 %v3672
    %3718 = vmatpush1.bf16.msra.mxu0 %v3671
    %3719 = vmatprep.subr.bf16.mxu0 %v3675
    %3720 = vmatpush1.bf16.msra.mxu0 %v3674
    %3721 = vmatprep.subr.bf16.mxu0 %v3678
    %3722 = vmatpush1.bf16.msra.mxu0 %v3677
    %3723 = vmatprep.subr.bf16.mxu0 %v3681
    %3724 = vmatpush1.bf16.msra.mxu0 %v3680
    %3725 = vmatprep.subr.bf16.mxu0 %v3684
    %3726 = vmatpush1.bf16.msra.mxu0 %v3683
    %3727 = vmatprep.subr.bf16.mxu0 %v3687
    %3728 = vmatpush1.bf16.msra.mxu0 %v3686
    %3729 = vmatprep.subr.bf16.mxu0 0
    %3730 = vmatpush1.bf16.msra.mxu0 0
    %3731 = vmatprep.subr.bf16.mxu0 0
    %3732 = vmatpush1.bf16.msra.mxu0 0
    %3733 = vmatprep.subr.bf16.mxu0 0
    %3734 = vmatpush1.bf16.msra.mxu0 0
    %3735 = vmatprep.subr.bf16.mxu0 0
    %3736 = vmatpush1.bf16.msra.mxu0 0
    %3737 = vmatprep.subr.bf16.mxu0 0
    %3738 = vmatpush1.bf16.msra.mxu0 0
    %3739 = vmatprep.subr.bf16.mxu0 0
    %3740 = vmatpush1.bf16.msra.mxu0 0
    %3741 = vmatprep.subr.bf16.mxu0 0
    %3742 = vmatpush1.bf16.msra.mxu0 0
    %3743 = vmatprep.subr.bf16.mxu0 0
    %3744 = vmatpush1.bf16.msra.mxu0 0
    %3745 = vmatprep.mubr.bf16.mxu0 0
    %3746 = vmatmul.mubr.bf16.gmra.mrb[0].mxu0 %v3568
    %v3747 = vpop.f32.mrb[0].mxu0
    %v3748 = vadd.f32 %v3573, %v3747
    %v3749 = vpop.f32.mrb[0].mxu0
    %v3750 = vadd.f32 %v3577, %v3749
    %v3751 = vpop.f32.mrb[0].mxu0
    %v3752 = vadd.f32 %v3573, %v3751
    %v3753 = vpop.f32.mrb[0].mxu0
    %v3754 = vadd.f32 %v3577, %v3753
    %3755 = vdwg.mxu0
    %3756 = vmatprep.subr.bf16.mxu0 0
    %3757 = vmatpush1.bf16.msra.mxu0 %v3667
    %3758 = vmatprep.subr.bf16.mxu0 0
    %3759 = vmatpush1.bf16.msra.mxu0 %v3670
    %3760 = vmatprep.subr.bf16.mxu0 0
    %3761 = vmatpush1.bf16.msra.mxu0 %v3673
    %3762 = vmatprep.subr.bf16.mxu0 0
    %3763 = vmatpush1.bf16.msra.mxu0 %v3676
    %3764 = vmatprep.subr.bf16.mxu0 0
    %3765 = vmatpush1.bf16.msra.mxu0 %v3679
    %3766 = vmatprep.subr.bf16.mxu0 0
    %3767 = vmatpush1.bf16.msra.mxu0 %v3682
    %3768 = vmatprep.subr.bf16.mxu0 0
    %3769 = vmatpush1.bf16.msra.mxu0 %v3685
    %3770 = vmatprep.subr.bf16.mxu0 0
    %3771 = vmatpush1.bf16.msra.mxu0 %v3688
    %3772 = vmatprep.subr.bf16.mxu0 0
    %3773 = vmatpush1.bf16.msra.mxu0 0
    %3774 = vmatprep.subr.bf16.mxu0 0
    %3775 = vmatpush1.bf16.msra.mxu0 0
    %3776 = vmatprep.subr.bf16.mxu0 0
    %3777 = vmatpush1.bf16.msra.mxu0 0
    %3778 = vmatprep.subr.bf16.mxu0 0
    %3779 = vmatpush1.bf16.msra.mxu0 0
    %3780 = vmatprep.subr.bf16.mxu0 0
    %3781 = vmatpush1.bf16.msra.mxu0 0
    %3782 = vmatprep.subr.bf16.mxu0 0
    %3783 = vmatpush1.bf16.msra.mxu0 0
    %3784 = vmatprep.subr.bf16.mxu0 0
    %3785 = vmatpush1.bf16.msra.mxu0 0
    %3786 = vmatprep.subr.bf16.mxu0 0
    %3787 = vmatpush1.bf16.msra.mxu0 0
    %3788 = vmatprep.mubr.bf16.mxu0 0
    %3789 = vmatmul.mubr.bf16.gmra.mrb[0].mxu0 %v3568
    %v3790 = vpop.f32.mrb[0].mxu0
    %v3791 = vadd.f32 %v3581, %v3790
    %v3792 = vpop.f32.mrb[0].mxu0
    %v3793 = vpop.f32.mrb[0].mxu0
    %v3794 = vadd.f32 %v3581, %v3793
    %v3795 = vpop.f32.mrb[0].mxu0
    %3796 = vdwg.mxu0
    %v3797 = vpack.c.bf16 %v3748, %v3748
    %v3798 = vpack.c.bf16 %v3752, %v3752
    %v3799 = vpack.c.bf16 %v3750, %v3750
    %v3800 = vpack.c.bf16 %v3754, %v3754
    %v3802 = vsel %vm488, %v3797, 0
    %v3805 = vsel %vm488, %v3799, 0
    %3807 = vmatprep.subr.bf16.mxu0 0
    %3808 = vmatpush1.bf16.xpose.msra.mxu0 %v3805
    %3809 = vmatprep.subr.bf16.mxu0 0
    %3810 = vmatpush1.bf16.xpose.msra.mxu0 0
    %3811 = vmatprep.subr.bf16.mxu0 0
    %3812 = vmatpush1.bf16.xpose.msra.mxu0 0
    %3813 = vmatprep.subr.bf16.mxu0 0
    %3814 = vmatpush1.bf16.xpose.msra.mxu0 0
    %3815 = vmatprep.subr.bf16.mxu0 0
    %3816 = vmatpush1.bf16.xpose.msra.mxu0 0
    %3817 = vmatprep.subr.bf16.mxu0 0
    %3818 = vmatpush1.bf16.xpose.msra.mxu0 0
    %3819 = vmatprep.subr.bf16.mxu0 0
    %3820 = vmatpush1.bf16.xpose.msra.mxu0 0
    %3821 = vmatprep.subr.bf16.mxu0 0
    %3822 = vmatpush1.bf16.xpose.msra.mxu0 0
    %3823 = vmatprep.subr.bf16.mxu0 0
    %3824 = vmatpush1.bf16.xpose.msra.mxu0 0
    %3825 = vmatprep.subr.bf16.mxu0 0
    %3826 = vmatpush1.bf16.xpose.msra.mxu0 0
    %3827 = vmatprep.subr.bf16.mxu0 0
    %3828 = vmatpush1.bf16.xpose.msra.mxu0 0
    %3829 = vmatprep.subr.bf16.mxu0 0
    %3830 = vmatpush1.bf16.xpose.msra.mxu0 0
    %3831 = vmatprep.subr.bf16.mxu0 0
    %3832 = vmatpush1.bf16.xpose.msra.mxu0 0
    %3833 = vmatprep.subr.bf16.mxu0 0
    %3834 = vmatpush1.bf16.xpose.msra.mxu0 0
    %3835 = vmatprep.subr.bf16.mxu0 0
    %3836 = vmatpush1.bf16.xpose.msra.mxu0 0
    %3837 = vmatprep.subr.bf16.mxu0 0
    %3838 = vmatpush1.bf16.xpose.msra.mxu0 0
    %3839 = vmatprep.mubr.bf16.mxu0 0
    %3840 = vmatmul.mubr.bf16.gmra.mrb[0].mxu0 %v3802
    %v3841 = vpop.f32.mrb[0].mxu0
    %v3842 = vadd.f32 0.0, %v3841
    %v3843 = vpop.f32.mrb[0].mxu0
    %v3844 = vpop.f32.mrb[0].mxu0
    %v3845 = vpop.f32.mrb[0].mxu0
    %3846 = vdwg.mxu0
    %v3848 = vsel %vm488, %v3798, 0
    %v3851 = vsel %vm488, %v3800, 0
    %3853 = vmatprep.subr.bf16.mxu0 0
    %3854 = vmatpush1.bf16.xpose.msra.mxu0 %v3851
    %3855 = vmatprep.subr.bf16.mxu0 0
    %3856 = vmatpush1.bf16.xpose.msra.mxu0 0
    %3857 = vmatprep.subr.bf16.mxu0 0
    %3858 = vmatpush1.bf16.xpose.msra.mxu0 0
    %3859 = vmatprep.subr.bf16.mxu0 0
    %3860 = vmatpush1.bf16.xpose.msra.mxu0 0
    %3861 = vmatprep.subr.bf16.mxu0 0
    %3862 = vmatpush1.bf16.xpose.msra.mxu0 0
    %3863 = vmatprep.subr.bf16.mxu0 0
    %3864 = vmatpush1.bf16.xpose.msra.mxu0 0
    %3865 = vmatprep.subr.bf16.mxu0 0
    %3866 = vmatpush1.bf16.xpose.msra.mxu0 0
    %3867 = vmatprep.subr.bf16.mxu0 0
    %3868 = vmatpush1.bf16.xpose.msra.mxu0 0
    %3869 = vmatprep.subr.bf16.mxu0 0
    %3870 = vmatpush1.bf16.xpose.msra.mxu0 0
    %3871 = vmatprep.subr.bf16.mxu0 0
    %3872 = vmatpush1.bf16.xpose.msra.mxu0 0
    %3873 = vmatprep.subr.bf16.mxu0 0
    %3874 = vmatpush1.bf16.xpose.msra.mxu0 0
    %3875 = vmatprep.subr.bf16.mxu0 0
    %3876 = vmatpush1.bf16.xpose.msra.mxu0 0
    %3877 = vmatprep.subr.bf16.mxu0 0
    %3878 = vmatpush1.bf16.xpose.msra.mxu0 0
    %3879 = vmatprep.subr.bf16.mxu0 0
    %3880 = vmatpush1.bf16.xpose.msra.mxu0 0
    %3881 = vmatprep.subr.bf16.mxu0 0
    %3882 = vmatpush1.bf16.xpose.msra.mxu0 0
    %3883 = vmatprep.subr.bf16.mxu0 0
    %3884 = vmatpush1.bf16.xpose.msra.mxu0 0
    %3885 = vmatprep.mubr.bf16.mxu0 0
    %3886 = vmatmul.mubr.bf16.gmra.mrb[0].mxu0 %v3848
    %v3887 = vpop.f32.mrb[0].mxu0
    %v3888 = vadd.f32 0.0, %v3887
    %v3889 = vpop.f32.mrb[0].mxu0
    %v3890 = vpop.f32.mrb[0].mxu0
    %v3891 = vpop.f32.mrb[0].mxu0
    %3892 = vdwg.mxu0
    %v3893 = vmul.f32 %v3842, 0.125
    %v3894 = vmul.f32 %v3888, 0.125
    %v3895 = vadd.f32 %v3893, %v164
    %v3896 = vadd.f32 %v3894, %v165
    %v3897 = vsel %vm585, %v3895, -inf
    %3898 = vmax.xlane.f32.xlu0 %v3897
    %v3899 = vpop.xlane.xlu0 %3898
    %v3900 = vsel %vm585, %v3896, -inf
    %3901 = vmax.xlane.f32.xlu0 %v3900
    %v3902 = vpop.xlane.xlu0 %3901
    %v3903 = vsub.f32 %v3895, %v3899
    %v3904 = vsub.f32 %v3896, %v3902
    %v3905 = vmul.f32 %v3903, 1.442695
    %v3906 = vpow.pop %v3905
    %v3907 = vmul.f32 %v3904, 1.442695
    %v3908 = vpow.pop %v3907
    %v3909 = vsel %vm585, %v3906, 0.0
    %3910 = vadd.xlane.f32.xlu0 %v3909
    %v3911 = vpop.xlane.xlu0 %3910
    %v3912 = vsel %vm585, %v3908, 0.0
    %3913 = vadd.xlane.f32.xlu0 %v3912
    %v3914 = vpop.xlane.xlu0 %3913
    %v3915 = vrcp.pop %v3911
    %v3916 = vrcp.pop %v3914
    %v3917 = vmul.f32 %v3906, %v3915
    %v3918 = vmul.f32 %v3908, %v3916
    %v3919 = vpack.c.bf16 %v3917, %v3917
    %v3920 = vpack.c.bf16 %v3918, %v3918
    %v3921 = vpack.c.bf16 %v3791, %v3791
    %v3922 = vpack.c.bf16 %v3794, %v3794
    %v3924 = vsel %vm585, %v3919, 0
    %v3927 = vsel %vm615, %v3921, 0
    %3929 = vmatprep.subr.bf16.mxu0 0
    %3930 = vmatpush1.bf16.msra.mxu0 %v3927
    %3931 = vmatprep.subr.bf16.mxu0 0
    %3932 = vmatpush1.bf16.msra.mxu0 0
    %3933 = vmatprep.subr.bf16.mxu0 0
    %3934 = vmatpush1.bf16.msra.mxu0 0
    %3935 = vmatprep.subr.bf16.mxu0 0
    %3936 = vmatpush1.bf16.msra.mxu0 0
    %3937 = vmatprep.subr.bf16.mxu0 0
    %3938 = vmatpush1.bf16.msra.mxu0 0
    %3939 = vmatprep.subr.bf16.mxu0 0
    %3940 = vmatpush1.bf16.msra.mxu0 0
    %3941 = vmatprep.subr.bf16.mxu0 0
    %3942 = vmatpush1.bf16.msra.mxu0 0
    %3943 = vmatprep.subr.bf16.mxu0 0
    %3944 = vmatpush1.bf16.msra.mxu0 0
    %3945 = vmatprep.subr.bf16.mxu0 0
    %3946 = vmatpush1.bf16.msra.mxu0 0
    %3947 = vmatprep.subr.bf16.mxu0 0
    %3948 = vmatpush1.bf16.msra.mxu0 0
    %3949 = vmatprep.subr.bf16.mxu0 0
    %3950 = vmatpush1.bf16.msra.mxu0 0
    %3951 = vmatprep.subr.bf16.mxu0 0
    %3952 = vmatpush1.bf16.msra.mxu0 0
    %3953 = vmatprep.subr.bf16.mxu0 0
    %3954 = vmatpush1.bf16.msra.mxu0 0
    %3955 = vmatprep.subr.bf16.mxu0 0
    %3956 = vmatpush1.bf16.msra.mxu0 0
    %3957 = vmatprep.subr.bf16.mxu0 0
    %3958 = vmatpush1.bf16.msra.mxu0 0
    %3959 = vmatprep.subr.bf16.mxu0 0
    %3960 = vmatpush1.bf16.msra.mxu0 0
    %3961 = vmatprep.mubr.bf16.mxu0 0
    %3962 = vmatmul.mubr.bf16.gmra.mrb[0].mxu0 %v3924
    %v3963 = vpop.f32.mrb[0].mxu0
    %v3964 = vadd.f32 0.0, %v3963
    %v3965 = vpop.f32.mrb[0].mxu0
    %v3966 = vpop.f32.mrb[0].mxu0
    %v3967 = vpop.f32.mrb[0].mxu0
    %3968 = vdwg.mxu0
    %v3970 = vsel %vm585, %v3920, 0
    %v3973 = vsel %vm615, %v3922, 0
    %3975 = vmatprep.subr.bf16.mxu0 0
    %3976 = vmatpush1.bf16.msra.mxu0 %v3973
    %3977 = vmatprep.subr.bf16.mxu0 0
    %3978 = vmatpush1.bf16.msra.mxu0 0
    %3979 = vmatprep.subr.bf16.mxu0 0
    %3980 = vmatpush1.bf16.msra.mxu0 0
    %3981 = vmatprep.subr.bf16.mxu0 0
    %3982 = vmatpush1.bf16.msra.mxu0 0
    %3983 = vmatprep.subr.bf16.mxu0 0
    %3984 = vmatpush1.bf16.msra.mxu0 0
    %3985 = vmatprep.subr.bf16.mxu0 0
    %3986 = vmatpush1.bf16.msra.mxu0 0
    %3987 = vmatprep.subr.bf16.mxu0 0
    %3988 = vmatpush1.bf16.msra.mxu0 0
    %3989 = vmatprep.subr.bf16.mxu0 0
    %3990 = vmatpush1.bf16.msra.mxu0 0
    %3991 = vmatprep.subr.bf16.mxu0 0
    %3992 = vmatpush1.bf16.msra.mxu0 0
    %3993 = vmatprep.subr.bf16.mxu0 0
    %3994 = vmatpush1.bf16.msra.mxu0 0
    %3995 = vmatprep.subr.bf16.mxu0 0
    %3996 = vmatpush1.bf16.msra.mxu0 0
    %3997 = vmatprep.subr.bf16.mxu0 0
    %3998 = vmatpush1.bf16.msra.mxu0 0
    %3999 = vmatprep.subr.bf16.mxu0 0
    %4000 = vmatpush1.bf16.msra.mxu0 0
    %4001 = vmatprep.subr.bf16.mxu0 0
    %4002 = vmatpush1.bf16.msra.mxu0 0
    %4003 = vmatprep.subr.bf16.mxu0 0
    %4004 = vmatpush1.bf16.msra.mxu0 0
    %4005 = vmatprep.subr.bf16.mxu0 0
    %4006 = vmatpush1.bf16.msra.mxu0 0
    %4007 = vmatprep.mubr.bf16.mxu0 0
    %4008 = vmatmul.mubr.bf16.gmra.mrb[0].mxu0 %v3970
    %v4009 = vpop.f32.mrb[0].mxu0
    %v4010 = vadd.f32 0.0, %v4009
    %v4011 = vpop.f32.mrb[0].mxu0
    %v4012 = vpop.f32.mrb[0].mxu0
    %v4013 = vpop.f32.mrb[0].mxu0
    %4014 = vdwg.mxu0
    %4016 = vrot.lane.b32.xlu0 %v3797, 64
    %v4017 = vpop.permute.xlu0 %4016
    %4019 = vrot.lane.b32.xlu0 %v3799, 64
    %v4020 = vpop.permute.xlu0 %4019
    %v4022 = vsel %vm488, %v4017, 0
    %v4025 = vsel %vm488, %v4020, 0
    %4027 = vmatprep.subr.bf16.mxu0 0
    %4028 = vmatpush1.bf16.xpose.msra.mxu0 %v4025
    %4029 = vmatprep.subr.bf16.mxu0 0
    %4030 = vmatpush1.bf16.xpose.msra.mxu0 0
    %4031 = vmatprep.subr.bf16.mxu0 0
    %4032 = vmatpush1.bf16.xpose.msra.mxu0 0
    %4033 = vmatprep.subr.bf16.mxu0 0
    %4034 = vmatpush1.bf16.xpose.msra.mxu0 0
    %4035 = vmatprep.subr.bf16.mxu0 0
    %4036 = vmatpush1.bf16.xpose.msra.mxu0 0
    %4037 = vmatprep.subr.bf16.mxu0 0
    %4038 = vmatpush1.bf16.xpose.msra.mxu0 0
    %4039 = vmatprep.subr.bf16.mxu0 0
    %4040 = vmatpush1.bf16.xpose.msra.mxu0 0
    %4041 = vmatprep.subr.bf16.mxu0 0
    %4042 = vmatpush1.bf16.xpose.msra.mxu0 0
    %4043 = vmatprep.subr.bf16.mxu0 0
    %4044 = vmatpush1.bf16.xpose.msra.mxu0 0
    %4045 = vmatprep.subr.bf16.mxu0 0
    %4046 = vmatpush1.bf16.xpose.msra.mxu0 0
    %4047 = vmatprep.subr.bf16.mxu0 0
    %4048 = vmatpush1.bf16.xpose.msra.mxu0 0
    %4049 = vmatprep.subr.bf16.mxu0 0
    %4050 = vmatpush1.bf16.xpose.msra.mxu0 0
    %4051 = vmatprep.subr.bf16.mxu0 0
    %4052 = vmatpush1.bf16.xpose.msra.mxu0 0
    %4053 = vmatprep.subr.bf16.mxu0 0
    %4054 = vmatpush1.bf16.xpose.msra.mxu0 0
    %4055 = vmatprep.subr.bf16.mxu0 0
    %4056 = vmatpush1.bf16.xpose.msra.mxu0 0
    %4057 = vmatprep.subr.bf16.mxu0 0
    %4058 = vmatpush1.bf16.xpose.msra.mxu0 0
    %4059 = vmatprep.mubr.bf16.mxu0 0
    %4060 = vmatmul.mubr.bf16.gmra.mrb[0].mxu0 %v4022
    %v4061 = vpop.f32.mrb[0].mxu0
    %v4062 = vadd.f32 0.0, %v4061
    %v4063 = vpop.f32.mrb[0].mxu0
    %v4064 = vpop.f32.mrb[0].mxu0
    %v4065 = vpop.f32.mrb[0].mxu0
    %4066 = vdwg.mxu0
    %4068 = vrot.lane.b32.xlu0 %v3798, 64
    %v4069 = vpop.permute.xlu0 %4068
    %4071 = vrot.lane.b32.xlu0 %v3800, 64
    %v4072 = vpop.permute.xlu0 %4071
    %v4074 = vsel %vm488, %v4069, 0
    %v4077 = vsel %vm488, %v4072, 0
    %4079 = vmatprep.subr.bf16.mxu0 0
    %4080 = vmatpush1.bf16.xpose.msra.mxu0 %v4077
    %4081 = vmatprep.subr.bf16.mxu0 0
    %4082 = vmatpush1.bf16.xpose.msra.mxu0 0
    %4083 = vmatprep.subr.bf16.mxu0 0
    %4084 = vmatpush1.bf16.xpose.msra.mxu0 0
    %4085 = vmatprep.subr.bf16.mxu0 0
    %4086 = vmatpush1.bf16.xpose.msra.mxu0 0
    %4087 = vmatprep.subr.bf16.mxu0 0
    %4088 = vmatpush1.bf16.xpose.msra.mxu0 0
    %4089 = vmatprep.subr.bf16.mxu0 0
    %4090 = vmatpush1.bf16.xpose.msra.mxu0 0
    %4091 = vmatprep.subr.bf16.mxu0 0
    %4092 = vmatpush1.bf16.xpose.msra.mxu0 0
    %4093 = vmatprep.subr.bf16.mxu0 0
    %4094 = vmatpush1.bf16.xpose.msra.mxu0 0
    %4095 = vmatprep.subr.bf16.mxu0 0
    %4096 = vmatpush1.bf16.xpose.msra.mxu0 0
    %4097 = vmatprep.subr.bf16.mxu0 0
    %4098 = vmatpush1.bf16.xpose.msra.mxu0 0
    %4099 = vmatprep.subr.bf16.mxu0 0
    %4100 = vmatpush1.bf16.xpose.msra.mxu0 0
    %4101 = vmatprep.subr.bf16.mxu0 0
    %4102 = vmatpush1.bf16.xpose.msra.mxu0 0
    %4103 = vmatprep.subr.bf16.mxu0 0
    %4104 = vmatpush1.bf16.xpose.msra.mxu0 0
    %4105 = vmatprep.subr.bf16.mxu0 0
    %4106 = vmatpush1.bf16.xpose.msra.mxu0 0
    %4107 = vmatprep.subr.bf16.mxu0 0
    %4108 = vmatpush1.bf16.xpose.msra.mxu0 0
    %4109 = vmatprep.subr.bf16.mxu0 0
    %4110 = vmatpush1.bf16.xpose.msra.mxu0 0
    %4111 = vmatprep.mubr.bf16.mxu0 0
    %4112 = vmatmul.mubr.bf16.gmra.mrb[0].mxu0 %v4074
    %v4113 = vpop.f32.mrb[0].mxu0
    %v4114 = vadd.f32 0.0, %v4113
    %v4115 = vpop.f32.mrb[0].mxu0
    %v4116 = vpop.f32.mrb[0].mxu0
    %v4117 = vpop.f32.mrb[0].mxu0
    %4118 = vdwg.mxu0
    %v4119 = vmul.f32 %v4062, 0.125
    %v4120 = vmul.f32 %v4114, 0.125
    %v4121 = vadd.f32 %v4119, %v164
    %v4122 = vadd.f32 %v4120, %v165
    %v4123 = vsel %vm585, %v4121, -inf
    %4124 = vmax.xlane.f32.xlu0 %v4123
    %v4125 = vpop.xlane.xlu0 %4124
    %v4126 = vsel %vm585, %v4122, -inf
    %4127 = vmax.xlane.f32.xlu0 %v4126
    %v4128 = vpop.xlane.xlu0 %4127
    %v4129 = vsub.f32 %v4121, %v4125
    %v4130 = vsub.f32 %v4122, %v4128
    %v4131 = vmul.f32 %v4129, 1.442695
    %v4132 = vpow.pop %v4131
    %v4133 = vmul.f32 %v4130, 1.442695
    %v4134 = vpow.pop %v4133
    %v4135 = vsel %vm585, %v4132, 0.0
    %4136 = vadd.xlane.f32.xlu0 %v4135
    %v4137 = vpop.xlane.xlu0 %4136
    %v4138 = vsel %vm585, %v4134, 0.0
    %4139 = vadd.xlane.f32.xlu0 %v4138
    %v4140 = vpop.xlane.xlu0 %4139
    %v4141 = vrcp.pop %v4137
    %v4142 = vrcp.pop %v4140
    %v4143 = vmul.f32 %v4132, %v4141
    %v4144 = vmul.f32 %v4134, %v4142
    %v4145 = vpack.c.bf16 %v4143, %v4143
    %v4146 = vpack.c.bf16 %v4144, %v4144
    %4148 = vrot.lane.b32.xlu0 %v3921, 64
    %v4149 = vpop.permute.xlu0 %4148
    %v4151 = vsel %vm585, %v4145, 0
    %v4154 = vsel %vm615, %v4149, 0
    %4156 = vmatprep.subr.bf16.mxu0 0
    %4157 = vmatpush1.bf16.msra.mxu0 %v4154
    %4158 = vmatprep.subr.bf16.mxu0 0
    %4159 = vmatpush1.bf16.msra.mxu0 0
    %4160 = vmatprep.subr.bf16.mxu0 0
    %4161 = vmatpush1.bf16.msra.mxu0 0
    %4162 = vmatprep.subr.bf16.mxu0 0
    %4163 = vmatpush1.bf16.msra.mxu0 0
    %4164 = vmatprep.subr.bf16.mxu0 0
    %4165 = vmatpush1.bf16.msra.mxu0 0
    %4166 = vmatprep.subr.bf16.mxu0 0
    %4167 = vmatpush1.bf16.msra.mxu0 0
    %4168 = vmatprep.subr.bf16.mxu0 0
    %4169 = vmatpush1.bf16.msra.mxu0 0
    %4170 = vmatprep.subr.bf16.mxu0 0
    %4171 = vmatpush1.bf16.msra.mxu0 0
    %4172 = vmatprep.subr.bf16.mxu0 0
    %4173 = vmatpush1.bf16.msra.mxu0 0
    %4174 = vmatprep.subr.bf16.mxu0 0
    %4175 = vmatpush1.bf16.msra.mxu0 0
    %4176 = vmatprep.subr.bf16.mxu0 0
    %4177 = vmatpush1.bf16.msra.mxu0 0
    %4178 = vmatprep.subr.bf16.mxu0 0
    %4179 = vmatpush1.bf16.msra.mxu0 0
    %4180 = vmatprep.subr.bf16.mxu0 0
    %4181 = vmatpush1.bf16.msra.mxu0 0
    %4182 = vmatprep.subr.bf16.mxu0 0
    %4183 = vmatpush1.bf16.msra.mxu0 0
    %4184 = vmatprep.subr.bf16.mxu0 0
    %4185 = vmatpush1.bf16.msra.mxu0 0
    %4186 = vmatprep.subr.bf16.mxu0 0
    %4187 = vmatpush1.bf16.msra.mxu0 0
    %4188 = vmatprep.mubr.bf16.mxu0 0
    %4189 = vmatmul.mubr.bf16.gmra.mrb[0].mxu0 %v4151
    %v4190 = vpop.f32.mrb[0].mxu0
    %v4191 = vadd.f32 0.0, %v4190
    %v4192 = vpop.f32.mrb[0].mxu0
    %v4193 = vpop.f32.mrb[0].mxu0
    %v4194 = vpop.f32.mrb[0].mxu0
    %4195 = vdwg.mxu0
    %4197 = vrot.lane.b32.xlu0 %v3922, 64
    %v4198 = vpop.permute.xlu0 %4197
    %v4200 = vsel %vm585, %v4146, 0
    %v4203 = vsel %vm615, %v4198, 0
    %4205 = vmatprep.subr.bf16.mxu0 0
    %4206 = vmatpush1.bf16.msra.mxu0 %v4203
    %4207 = vmatprep.subr.bf16.mxu0 0
    %4208 = vmatpush1.bf16.msra.mxu0 0
    %4209 = vmatprep.subr.bf16.mxu0 0
    %4210 = vmatpush1.bf16.msra.mxu0 0
    %4211 = vmatprep.subr.bf16.mxu0 0
    %4212 = vmatpush1.bf16.msra.mxu0 0
    %4213 = vmatprep.subr.bf16.mxu0 0
    %4214 = vmatpush1.bf16.msra.mxu0 0
    %4215 = vmatprep.subr.bf16.mxu0 0
    %4216 = vmatpush1.bf16.msra.mxu0 0
    %4217 = vmatprep.subr.bf16.mxu0 0
    %4218 = vmatpush1.bf16.msra.mxu0 0
    %4219 = vmatprep.subr.bf16.mxu0 0
    %4220 = vmatpush1.bf16.msra.mxu0 0
    %4221 = vmatprep.subr.bf16.mxu0 0
    %4222 = vmatpush1.bf16.msra.mxu0 0
    %4223 = vmatprep.subr.bf16.mxu0 0
    %4224 = vmatpush1.bf16.msra.mxu0 0
    %4225 = vmatprep.subr.bf16.mxu0 0
    %4226 = vmatpush1.bf16.msra.mxu0 0
    %4227 = vmatprep.subr.bf16.mxu0 0
    %4228 = vmatpush1.bf16.msra.mxu0 0
    %4229 = vmatprep.subr.bf16.mxu0 0
    %4230 = vmatpush1.bf16.msra.mxu0 0
    %4231 = vmatprep.subr.bf16.mxu0 0
    %4232 = vmatpush1.bf16.msra.mxu0 0
    %4233 = vmatprep.subr.bf16.mxu0 0
    %4234 = vmatpush1.bf16.msra.mxu0 0
    %4235 = vmatprep.subr.bf16.mxu0 0
    %4236 = vmatpush1.bf16.msra.mxu0 0
    %4237 = vmatprep.mubr.bf16.mxu0 0
    %4238 = vmatmul.mubr.bf16.gmra.mrb[0].mxu0 %v4200
    %v4239 = vpop.f32.mrb[0].mxu0
    %v4240 = vadd.f32 0.0, %v4239
    %v4241 = vpop.f32.mrb[0].mxu0
    %v4242 = vpop.f32.mrb[0].mxu0
    %v4243 = vpop.f32.mrb[0].mxu0
    %4244 = vdwg.mxu0
    %4247 = vrot.lane.b32.xlu0 %v4191, 64
    %v4248 = vpop.permute.xlu0 %4247
    %4249 = vrot.lane.b32.xlu0 %v4240, 64
    %v4250 = vpop.permute.xlu0 %4249
    %v4253 = vsel %vm488, %v3964, %v4248
    %v4254 = vsel %vm488, %v4010, %v4250
    %v4255 = vpack.c.bf16 %v4254, %v4253
    %v4256 = vlaneseq
    %v4257 = vshrl.u32 %v4256, 7
    %v4258 = vsub.s32 0, %v4257
    %v4259 = vrot.slane %v3567, %v4258
    %v4276 = vunpack.c.l.b16 %v3551
    %v4277 = vunpack.c.l.b16 %v3552
    %v4278 = vunpack.c.l.b16 %v3553
    %v4279 = vunpack.c.l.b16 %v3554
    %v4280 = vunpack.c.l.b16 %v3555
    %v4281 = vunpack.c.l.b16 %v3556
    %v4282 = vunpack.c.l.b16 %v3557
    %v4283 = vunpack.c.l.b16 %v3558
    %v4284 = vunpack.c.l.b16 %v3559
    %v4285 = vunpack.c.l.b16 %v3560
    %v4286 = vunpack.c.l.b16 %v3561
    %v4287 = vunpack.c.l.b16 %v3562
    %v4288 = vunpack.c.l.b16 %v3563
    %v4289 = vunpack.c.l.b16 %v3564
    %v4290 = vunpack.c.l.b16 %v3565
    %v4291 = vunpack.c.l.b16 %v3566
    %v4292 = vpack.c.b16 %v4277, %v4276
    %v4293 = vpack.c.b16 %v4279, %v4278
    %v4294 = vpack.c.b16 %v4281, %v4280
    %v4295 = vpack.c.b16 %v4283, %v4282
    %v4296 = vpack.c.b16 %v4285, %v4284
    %v4297 = vpack.c.b16 %v4287, %v4286
    %v4298 = vpack.c.b16 %v4289, %v4288
    %v4299 = vpack.c.b16 %v4291, %v4290
    %4308 = vmatprep.subr.bf16.mxu0 0
    %4309 = vmatpush1.bf16.msra.mxu0 %v4292
    %4310 = vmatprep.subr.bf16.mxu0 0
    %4311 = vmatpush1.bf16.msra.mxu0 %v4293
    %4312 = vmatprep.subr.bf16.mxu0 0
    %4313 = vmatpush1.bf16.msra.mxu0 %v4294
    %4314 = vmatprep.subr.bf16.mxu0 0
    %4315 = vmatpush1.bf16.msra.mxu0 %v4295
    %4316 = vmatprep.subr.bf16.mxu0 0
    %4317 = vmatpush1.bf16.msra.mxu0 %v4296
    %4318 = vmatprep.subr.bf16.mxu0 0
    %4319 = vmatpush1.bf16.msra.mxu0 %v4297
    %4320 = vmatprep.subr.bf16.mxu0 0
    %4321 = vmatpush1.bf16.msra.mxu0 %v4298
    %4322 = vmatprep.subr.bf16.mxu0 0
    %4323 = vmatpush1.bf16.msra.mxu0 %v4299
    %4324 = vmatprep.subr.bf16.mxu0 0
    %4325 = vmatpush1.bf16.msra.mxu0 0
    %4326 = vmatprep.subr.bf16.mxu0 0
    %4327 = vmatpush1.bf16.msra.mxu0 0
    %4328 = vmatprep.subr.bf16.mxu0 0
    %4329 = vmatpush1.bf16.msra.mxu0 0
    %4330 = vmatprep.subr.bf16.mxu0 0
    %4331 = vmatpush1.bf16.msra.mxu0 0
    %4332 = vmatprep.subr.bf16.mxu0 0
    %4333 = vmatpush1.bf16.msra.mxu0 0
    %4334 = vmatprep.subr.bf16.mxu0 0
    %4335 = vmatpush1.bf16.msra.mxu0 0
    %4336 = vmatprep.subr.bf16.mxu0 0
    %4337 = vmatpush1.bf16.msra.mxu0 0
    %4338 = vmatprep.subr.bf16.mxu0 0
    %4339 = vmatpush1.bf16.msra.mxu0 0
    %4340 = vmatprep.mubr.bf16.mxu0 0
    %4341 = vmatmul.mubr.bf16.gmra.mrb[0].mxu0 %v4255
    %v4342 = vpop.f32.mrb[0].mxu0
    %v4343 = vadd.f32 %v4259, %v4342
    %v4344 = vpop.f32.mrb[0].mxu0
    %v4345 = vpop.f32.mrb[0].mxu0
    %v4346 = vadd.f32 %v4259, %v4345
    %v4347 = vpop.f32.mrb[0].mxu0
    %4348 = vdwg.mxu0
    %v4349 = vadd.f32 %v3504, %v4343
    %v4350 = vadd.f32 %v3505, %v4346
    %v4351 = vld [vmem:[%s9 + $0x11] sm:$0x1]
    %v4352 = vld [vmem:[%s9 + $0x12] sm:$0x1]
    %4353 = vadd.xlane.f32.xlu0 %v4349
    %v4354 = vpop.xlane.xlu0 %4353
    %4355 = vadd.xlane.f32.xlu0 %v4350
    %v4356 = vpop.xlane.xlu0 %4355
    %v4357 = vmul.f32 %v4354, %v174
    %v4358 = vmul.f32 %v4356, %v174
    %v4359 = vsub.f32 %v4349, %v4357
    %v4360 = vsub.f32 %v4350, %v4358
    %v4361 = vmul.f32 %v4359, %v4359
    %v4362 = vmul.f32 %v4360, %v4360
    %4363 = vadd.xlane.f32.xlu0 %v4361
    %v4364 = vpop.xlane.xlu0 %4363
    %4365 = vadd.xlane.f32.xlu0 %v4362
    %v4366 = vpop.xlane.xlu0 %4365
    %v4367 = vmul.f32 %v4364, %v174
    %v4368 = vmul.f32 %v4366, %v174
    %v4369 = vadd.f32 %v4367, 1e-05
    %v4370 = vadd.f32 %v4368, 1e-05
    %v4371 = vrsqrt.pop %v4369
    %v4372 = vrsqrt.pop %v4370
    %v4373 = vmul.f32 %v4359, %v4371
    %v4374 = vmul.f32 %v4360, %v4372
    %v4375 = vlaneseq
    %v4376 = vshrl.u32 %v4375, 7
    %v4377 = vsub.s32 0, %v4376
    %v4378 = vrot.slane %v4351, %v4377
    %v4379 = vmul.f32 %v4373, %v4378
    %v4380 = vmul.f32 %v4374, %v4378
    %v4381 = vlaneseq
    %v4382 = vshrl.u32 %v4381, 7
    %v4383 = vsub.s32 0, %v4382
    %v4384 = vrot.slane %v4352, %v4383
    %v4385 = vadd.f32 %v4379, %v4384
    %v4386 = vadd.f32 %v4380, %v4384
    %v4387 = vpack.c.bf16 %v4386, %v4385
    %v4388 = vld [vmem:[#allocation2] sm:$0xff]
    %v4389 = vld [vmem:[#allocation2 + $0x8] sm:$0xff]
    %v4390 = vld [vmem:[#allocation2 + $0x10] sm:$0xff]
    %v4391 = vld [vmem:[#allocation2 + $0x18] sm:$0xff]
    %v4392 = vld [vmem:[#allocation2 + $0x20] sm:$0xff]
    %v4393 = vld [vmem:[#allocation2 + $0x28] sm:$0xff]
    %v4394 = vld [vmem:[#allocation2 + $0x30] sm:$0xff]
    %v4395 = vld [vmem:[#allocation2 + $0x38] sm:$0xff]
    %v4396 = vld [vmem:[#allocation2 + $0x40] sm:$0xff]
    %v4397 = vld [vmem:[#allocation2 + $0x48] sm:$0xff]
    %v4398 = vld [vmem:[#allocation2 + $0x50] sm:$0xff]
    %v4399 = vld [vmem:[#allocation2 + $0x58] sm:$0xff]
    %v4400 = vld [vmem:[#allocation2 + $0x60] sm:$0xff]
    %v4401 = vld [vmem:[#allocation2 + $0x68] sm:$0xff]
    %v4402 = vld [vmem:[#allocation2 + $0x70] sm:$0xff]
    %v4403 = vld [vmem:[#allocation2 + $0x78] sm:$0xff]
    %v4404 = vld [vmem:[#allocation2 + $0x80] sm:$0xff]
    %v4405 = vld [vmem:[#allocation2 + $0x88] sm:$0xff]
    %v4406 = vld [vmem:[#allocation2 + $0x90] sm:$0xff]
    %v4407 = vld [vmem:[#allocation2 + $0x98] sm:$0xff]
    %v4408 = vld [vmem:[#allocation2 + $0xa0] sm:$0xff]
    %v4409 = vld [vmem:[#allocation2 + $0xa8] sm:$0xff]
    %v4410 = vld [vmem:[#allocation2 + $0xb0] sm:$0xff]
    %v4411 = vld [vmem:[#allocation2 + $0xb8] sm:$0xff]
    %v4412 = vld [vmem:[#allocation2 + $0xc0] sm:$0xff]
    %v4413 = vld [vmem:[#allocation2 + $0xc8] sm:$0xff]
    %v4414 = vld [vmem:[#allocation2 + $0xd0] sm:$0xff]
    %v4415 = vld [vmem:[#allocation2 + $0xd8] sm:$0xff]
    %v4416 = vld [vmem:[#allocation2 + $0xe0] sm:$0xff]
    %v4417 = vld [vmem:[#allocation2 + $0xe8] sm:$0xff]
    %v4418 = vld [vmem:[#allocation2 + $0xf0] sm:$0xff]
    %v4419 = vld [vmem:[#allocation2 + $0xf8] sm:$0xff]
    %v4420 = vld [vmem:[#allocation2 + $0x100] sm:$0xff]
    %v4421 = vld [vmem:[#allocation2 + $0x108] sm:$0xff]
    %v4422 = vld [vmem:[#allocation2 + $0x110] sm:$0xff]
    %v4423 = vld [vmem:[#allocation2 + $0x118] sm:$0xff]
    %v4424 = vld [vmem:[#allocation2 + $0x120] sm:$0xff]
    %v4425 = vld [vmem:[#allocation2 + $0x128] sm:$0xff]
    %v4426 = vld [vmem:[#allocation2 + $0x130] sm:$0xff]
    %v4427 = vld [vmem:[#allocation2 + $0x138] sm:$0xff]
    %v4428 = vld [vmem:[#allocation2 + $0x140] sm:$0xff]
    %v4429 = vld [vmem:[#allocation2 + $0x148] sm:$0xff]
    %v4430 = vld [vmem:[#allocation2 + $0x150] sm:$0xff]
    %v4431 = vld [vmem:[#allocation2 + $0x158] sm:$0xff]
    %v4432 = vld [vmem:[#allocation2 + $0x160] sm:$0xff]
    %v4433 = vld [vmem:[#allocation2 + $0x168] sm:$0xff]
    %v4434 = vld [vmem:[#allocation2 + $0x170] sm:$0xff]
    %v4435 = vld [vmem:[#allocation2 + $0x178] sm:$0xff]
    %v4436 = vld [vmem:[#allocation2 + $0x180] sm:$0xff]
    %v4437 = vld [vmem:[#allocation2 + $0x188] sm:$0xff]
    %v4438 = vld [vmem:[#allocation2 + $0x190] sm:$0xff]
    %v4439 = vld [vmem:[#allocation2 + $0x198] sm:$0xff]
    %v4440 = vld [vmem:[#allocation2 + $0x1a0] sm:$0xff]
    %v4441 = vld [vmem:[#allocation2 + $0x1a8] sm:$0xff]
    %v4442 = vld [vmem:[#allocation2 + $0x1b0] sm:$0xff]
    %v4443 = vld [vmem:[#allocation2 + $0x1b8] sm:$0xff]
    %v4444 = vld [vmem:[#allocation2 + $0x1c0] sm:$0xff]
    %v4445 = vld [vmem:[#allocation2 + $0x1c8] sm:$0xff]
    %v4446 = vld [vmem:[#allocation2 + $0x1d0] sm:$0xff]
    %v4447 = vld [vmem:[#allocation2 + $0x1d8] sm:$0xff]
    %v4448 = vld [vmem:[#allocation2 + $0x1e0] sm:$0xff]
    %v4449 = vld [vmem:[#allocation2 + $0x1e8] sm:$0xff]
    %v4450 = vld [vmem:[#allocation2 + $0x1f0] sm:$0xff]
    %v4451 = vld [vmem:[#allocation2 + $0x1f8] sm:$0xff]
    %v4452 = vld [vmem:[#allocation2 + $0x200] sm:$0xff]
    %v4453 = vld [vmem:[#allocation2 + $0x208] sm:$0xff]
    %v4454 = vld [vmem:[#allocation2 + $0x210] sm:$0xff]
    %v4455 = vld [vmem:[#allocation2 + $0x218] sm:$0xff]
    %v4456 = vld [vmem:[#allocation2 + $0x220] sm:$0xff]
    %v4457 = vld [vmem:[#allocation2 + $0x228] sm:$0xff]
    %v4458 = vld [vmem:[#allocation2 + $0x230] sm:$0xff]
    %v4459 = vld [vmem:[#allocation2 + $0x238] sm:$0xff]
    %v4460 = vld [vmem:[#allocation2 + $0x240] sm:$0xff]
    %v4461 = vld [vmem:[#allocation2 + $0x248] sm:$0xff]
    %v4462 = vld [vmem:[#allocation2 + $0x250] sm:$0xff]
    %v4463 = vld [vmem:[#allocation2 + $0x258] sm:$0xff]
    %v4464 = vld [vmem:[#allocation2 + $0x260] sm:$0xff]
    %v4465 = vld [vmem:[#allocation2 + $0x268] sm:$0xff]
    %v4466 = vld [vmem:[#allocation2 + $0x270] sm:$0xff]
    %v4467 = vld [vmem:[#allocation2 + $0x278] sm:$0xff]
    %v4468 = vld [vmem:[#allocation2 + $0x280] sm:$0xff]
    %v4469 = vld [vmem:[#allocation2 + $0x288] sm:$0xff]
    %v4470 = vld [vmem:[#allocation2 + $0x290] sm:$0xff]
    %v4471 = vld [vmem:[#allocation2 + $0x298] sm:$0xff]
    %v4472 = vld [vmem:[#allocation2 + $0x2a0] sm:$0xff]
    %v4473 = vld [vmem:[#allocation2 + $0x2a8] sm:$0xff]
    %v4474 = vld [vmem:[#allocation2 + $0x2b0] sm:$0xff]
    %v4475 = vld [vmem:[#allocation2 + $0x2b8] sm:$0xff]
    %v4476 = vld [vmem:[#allocation2 + $0x2c0] sm:$0xff]
    %v4477 = vld [vmem:[#allocation2 + $0x2c8] sm:$0xff]
    %v4478 = vld [vmem:[#allocation2 + $0x2d0] sm:$0xff]
    %v4479 = vld [vmem:[#allocation2 + $0x2d8] sm:$0xff]
    %v4480 = vld [vmem:[#allocation2 + $0x2e0] sm:$0xff]
    %v4481 = vld [vmem:[#allocation2 + $0x2e8] sm:$0xff]
    %v4482 = vld [vmem:[#allocation2 + $0x2f0] sm:$0xff]
    %v4483 = vld [vmem:[#allocation2 + $0x2f8] sm:$0xff]
    %v4484 = vld [vmem:[#allocation2 + $0x300] sm:$0xff]
    %v4485 = vld [vmem:[#allocation2 + $0x308] sm:$0xff]
    %v4486 = vld [vmem:[#allocation2 + $0x310] sm:$0xff]
    %v4487 = vld [vmem:[#allocation2 + $0x318] sm:$0xff]
    %v4488 = vld [vmem:[#allocation2 + $0x320] sm:$0xff]
    %v4489 = vld [vmem:[#allocation2 + $0x328] sm:$0xff]
    %v4490 = vld [vmem:[#allocation2 + $0x330] sm:$0xff]
    %v4491 = vld [vmem:[#allocation2 + $0x338] sm:$0xff]
    %v4492 = vld [vmem:[#allocation2 + $0x340] sm:$0xff]
    %v4493 = vld [vmem:[#allocation2 + $0x348] sm:$0xff]
    %v4494 = vld [vmem:[#allocation2 + $0x350] sm:$0xff]
    %v4495 = vld [vmem:[#allocation2 + $0x358] sm:$0xff]
    %v4496 = vld [vmem:[#allocation2 + $0x360] sm:$0xff]
    %v4497 = vld [vmem:[#allocation2 + $0x368] sm:$0xff]
    %v4498 = vld [vmem:[#allocation2 + $0x370] sm:$0xff]
    %v4499 = vld [vmem:[#allocation2 + $0x378] sm:$0xff]
    %v4500 = vld [vmem:[#allocation2 + $0x380] sm:$0xff]
    %v4501 = vld [vmem:[#allocation2 + $0x388] sm:$0xff]
    %v4502 = vld [vmem:[#allocation2 + $0x390] sm:$0xff]
    %v4503 = vld [vmem:[#allocation2 + $0x398] sm:$0xff]
    %v4504 = vld [vmem:[#allocation2 + $0x3a0] sm:$0xff]
    %v4505 = vld [vmem:[#allocation2 + $0x3a8] sm:$0xff]
    %v4506 = vld [vmem:[#allocation2 + $0x3b0] sm:$0xff]
    %v4507 = vld [vmem:[#allocation2 + $0x3b8] sm:$0xff]
    %v4508 = vld [vmem:[#allocation2 + $0x3c0] sm:$0xff]
    %v4509 = vld [vmem:[#allocation2 + $0x3c8] sm:$0xff]
    %v4510 = vld [vmem:[#allocation2 + $0x3d0] sm:$0xff]
    %v4511 = vld [vmem:[#allocation2 + $0x3d8] sm:$0xff]
    %v4512 = vld [vmem:[#allocation2 + $0x3e0] sm:$0xff]
    %v4513 = vld [vmem:[#allocation2 + $0x3e8] sm:$0xff]
    %v4514 = vld [vmem:[#allocation2 + $0x3f0] sm:$0xff]
    %v4515 = vld [vmem:[#allocation2 + $0x3f8] sm:$0xff]
    %s4516 = scalar_lea.vmem [#allocation14], 2
    %v4517 = vld [vmem:[%s4516] ss:$4 sm:$0xff]
    %s4518 = scalar_lea.vmem [#allocation14], 34
    %v4519 = vld [vmem:[%s4518] ss:$4 sm:$0xff]
    %v4522 = vlaneseq
    %v4523 = vshrl.u32 %v4522, 7
    %v4524 = vsub.s32 0, %v4523
    %v4525 = vrot.slane %v4517, %v4524
    %v4526 = vlaneseq
    %v4527 = vshrl.u32 %v4526, 7
    %v4528 = vsub.s32 1, %v4527
    %v4529 = vrot.slane %v4517, %v4528
    %v4530 = vlaneseq
    %v4531 = vshrl.u32 %v4530, 7
    %v4532 = vsub.s32 2, %v4531
    %v4533 = vrot.slane %v4517, %v4532
    %v4534 = vlaneseq
    %v4535 = vshrl.u32 %v4534, 7
    %v4536 = vsub.s32 3, %v4535
    %v4537 = vrot.slane %v4517, %v4536
    %v4538 = vlaneseq
    %v4539 = vshrl.u32 %v4538, 7
    %v4540 = vsub.s32 4, %v4539
    %v4541 = vrot.slane %v4517, %v4540
    %v4542 = vlaneseq
    %v4543 = vshrl.u32 %v4542, 7
    %v4544 = vsub.s32 5, %v4543
    %v4545 = vrot.slane %v4517, %v4544
    %v4546 = vlaneseq
    %v4547 = vshrl.u32 %v4546, 7
    %v4548 = vsub.s32 6, %v4547
    %v4549 = vrot.slane %v4517, %v4548
    %v4550 = vlaneseq
    %v4551 = vshrl.u32 %v4550, 7
    %v4552 = vsub.s32 7, %v4551
    %v4553 = vrot.slane %v4517, %v4552
    %v4554 = vlaneseq
    %v4555 = vshrl.u32 %v4554, 7
    %v4556 = vsub.s32 0, %v4555
    %v4557 = vrot.slane %v4519, %v4556
    %v4558 = vlaneseq
    %v4559 = vshrl.u32 %v4558, 7
    %v4560 = vsub.s32 1, %v4559
    %v4561 = vrot.slane %v4519, %v4560
    %v4562 = vlaneseq
    %v4563 = vshrl.u32 %v4562, 7
    %v4564 = vsub.s32 2, %v4563
    %v4565 = vrot.slane %v4519, %v4564
    %v4566 = vlaneseq
    %v4567 = vshrl.u32 %v4566, 7
    %v4568 = vsub.s32 3, %v4567
    %v4569 = vrot.slane %v4519, %v4568
    %v4570 = vlaneseq
    %v4571 = vshrl.u32 %v4570, 7
    %v4572 = vsub.s32 4, %v4571
    %v4573 = vrot.slane %v4519, %v4572
    %v4574 = vlaneseq
    %v4575 = vshrl.u32 %v4574, 7
    %v4576 = vsub.s32 5, %v4575
    %v4577 = vrot.slane %v4519, %v4576
    %v4578 = vlaneseq
    %v4579 = vshrl.u32 %v4578, 7
    %v4580 = vsub.s32 6, %v4579
    %v4581 = vrot.slane %v4519, %v4580
    %v4582 = vlaneseq
    %v4583 = vshrl.u32 %v4582, 7
    %v4584 = vsub.s32 7, %v4583
    %v4585 = vrot.slane %v4519, %v4584
    %4602 = vmatprep.subr.bf16.mxu0 %v4389
    %4603 = vmatpush1.bf16.msra.mxu0 %v4388
    %4604 = vmatprep.subr.bf16.mxu0 %v4405
    %4605 = vmatpush1.bf16.msra.mxu0 %v4404
    %4606 = vmatprep.subr.bf16.mxu0 %v4421
    %4607 = vmatpush1.bf16.msra.mxu0 %v4420
    %4608 = vmatprep.subr.bf16.mxu0 %v4437
    %4609 = vmatpush1.bf16.msra.mxu0 %v4436
    %4610 = vmatprep.subr.bf16.mxu0 %v4453
    %4611 = vmatpush1.bf16.msra.mxu0 %v4452
    %4612 = vmatprep.subr.bf16.mxu0 %v4469
    %4613 = vmatpush1.bf16.msra.mxu0 %v4468
    %4614 = vmatprep.subr.bf16.mxu0 %v4485
    %4615 = vmatpush1.bf16.msra.mxu0 %v4484
    %4616 = vmatprep.subr.bf16.mxu0 %v4501
    %4617 = vmatpush1.bf16.msra.mxu0 %v4500
    %4618 = vmatprep.subr.bf16.mxu0 0
    %4619 = vmatpush1.bf16.msra.mxu0 0
    %4620 = vmatprep.subr.bf16.mxu0 0
    %4621 = vmatpush1.bf16.msra.mxu0 0
    %4622 = vmatprep.subr.bf16.mxu0 0
    %4623 = vmatpush1.bf16.msra.mxu0 0
    %4624 = vmatprep.subr.bf16.mxu0 0
    %4625 = vmatpush1.bf16.msra.mxu0 0
    %4626 = vmatprep.subr.bf16.mxu0 0
    %4627 = vmatpush1.bf16.msra.mxu0 0
    %4628 = vmatprep.subr.bf16.mxu0 0
    %4629 = vmatpush1.bf16.msra.mxu0 0
    %4630 = vmatprep.subr.bf16.mxu0 0
    %4631 = vmatpush1.bf16.msra.mxu0 0
    %4632 = vmatprep.subr.bf16.mxu0 0
    %4633 = vmatpush1.bf16.msra.mxu0 0
    %4634 = vmatprep.mubr.bf16.mxu0 0
    %4635 = vmatmul.mubr.bf16.gmra.mrb[0].mxu0 %v4387
    %v4636 = vpop.f32.mrb[0].mxu0
    %v4637 = vadd.f32 %v4525, %v4636
    %v4638 = vpop.f32.mrb[0].mxu0
    %v4639 = vadd.f32 %v4529, %v4638
    %v4640 = vpop.f32.mrb[0].mxu0
    %v4641 = vadd.f32 %v4525, %v4640
    %v4642 = vpop.f32.mrb[0].mxu0
    %v4643 = vadd.f32 %v4529, %v4642
    %4644 = vdwg.mxu0
    %4645 = vmatprep.subr.bf16.mxu0 %v4391
    %4646 = vmatpush1.bf16.msra.mxu0 %v4390
    %4647 = vmatprep.subr.bf16.mxu0 %v4407
    %4648 = vmatpush1.bf16.msra.mxu0 %v4406
    %4649 = vmatprep.subr.bf16.mxu0 %v4423
    %4650 = vmatpush1.bf16.msra.mxu0 %v4422
    %4651 = vmatprep.subr.bf16.mxu0 %v4439
    %4652 = vmatpush1.bf16.msra.mxu0 %v4438
    %4653 = vmatprep.subr.bf16.mxu0 %v4455
    %4654 = vmatpush1.bf16.msra.mxu0 %v4454
    %4655 = vmatprep.subr.bf16.mxu0 %v4471
    %4656 = vmatpush1.bf16.msra.mxu0 %v4470
    %4657 = vmatprep.subr.bf16.mxu0 %v4487
    %4658 = vmatpush1.bf16.msra.mxu0 %v4486
    %4659 = vmatprep.subr.bf16.mxu0 %v4503
    %4660 = vmatpush1.bf16.msra.mxu0 %v4502
    %4661 = vmatprep.subr.bf16.mxu0 0
    %4662 = vmatpush1.bf16.msra.mxu0 0
    %4663 = vmatprep.subr.bf16.mxu0 0
    %4664 = vmatpush1.bf16.msra.mxu0 0
    %4665 = vmatprep.subr.bf16.mxu0 0
    %4666 = vmatpush1.bf16.msra.mxu0 0
    %4667 = vmatprep.subr.bf16.mxu0 0
    %4668 = vmatpush1.bf16.msra.mxu0 0
    %4669 = vmatprep.subr.bf16.mxu0 0
    %4670 = vmatpush1.bf16.msra.mxu0 0
    %4671 = vmatprep.subr.bf16.mxu0 0
    %4672 = vmatpush1.bf16.msra.mxu0 0
    %4673 = vmatprep.subr.bf16.mxu0 0
    %4674 = vmatpush1.bf16.msra.mxu0 0
    %4675 = vmatprep.subr.bf16.mxu0 0
    %4676 = vmatpush1.bf16.msra.mxu0 0
    %4677 = vmatprep.mubr.bf16.mxu0 0
    %4678 = vmatmul.mubr.bf16.gmra.mrb[0].mxu0 %v4387
    %v4679 = vpop.f32.mrb[0].mxu0
    %v4680 = vadd.f32 %v4533, %v4679
    %v4681 = vpop.f32.mrb[0].mxu0
    %v4682 = vadd.f32 %v4537, %v4681
    %v4683 = vpop.f32.mrb[0].mxu0
    %v4684 = vadd.f32 %v4533, %v4683
    %v4685 = vpop.f32.mrb[0].mxu0
    %v4686 = vadd.f32 %v4537, %v4685
    %4687 = vdwg.mxu0
    %4688 = vmatprep.subr.bf16.mxu0 %v4393
    %4689 = vmatpush1.bf16.msra.mxu0 %v4392
    %4690 = vmatprep.subr.bf16.mxu0 %v4409
    %4691 = vmatpush1.bf16.msra.mxu0 %v4408
    %4692 = vmatprep.subr.bf16.mxu0 %v4425
    %4693 = vmatpush1.bf16.msra.mxu0 %v4424
    %4694 = vmatprep.subr.bf16.mxu0 %v4441
    %4695 = vmatpush1.bf16.msra.mxu0 %v4440
    %4696 = vmatprep.subr.bf16.mxu0 %v4457
    %4697 = vmatpush1.bf16.msra.mxu0 %v4456
    %4698 = vmatprep.subr.bf16.mxu0 %v4473
    %4699 = vmatpush1.bf16.msra.mxu0 %v4472
    %4700 = vmatprep.subr.bf16.mxu0 %v4489
    %4701 = vmatpush1.bf16.msra.mxu0 %v4488
    %4702 = vmatprep.subr.bf16.mxu0 %v4505
    %4703 = vmatpush1.bf16.msra.mxu0 %v4504
    %4704 = vmatprep.subr.bf16.mxu0 0
    %4705 = vmatpush1.bf16.msra.mxu0 0
    %4706 = vmatprep.subr.bf16.mxu0 0
    %4707 = vmatpush1.bf16.msra.mxu0 0
    %4708 = vmatprep.subr.bf16.mxu0 0
    %4709 = vmatpush1.bf16.msra.mxu0 0
    %4710 = vmatprep.subr.bf16.mxu0 0
    %4711 = vmatpush1.bf16.msra.mxu0 0
    %4712 = vmatprep.subr.bf16.mxu0 0
    %4713 = vmatpush1.bf16.msra.mxu0 0
    %4714 = vmatprep.subr.bf16.mxu0 0
    %4715 = vmatpush1.bf16.msra.mxu0 0
    %4716 = vmatprep.subr.bf16.mxu0 0
    %4717 = vmatpush1.bf16.msra.mxu0 0
    %4718 = vmatprep.subr.bf16.mxu0 0
    %4719 = vmatpush1.bf16.msra.mxu0 0
    %4720 = vmatprep.mubr.bf16.mxu0 0
    %4721 = vmatmul.mubr.bf16.gmra.mrb[0].mxu0 %v4387
    %v4722 = vpop.f32.mrb[0].mxu0
    %v4723 = vadd.f32 %v4541, %v4722
    %v4724 = vpop.f32.mrb[0].mxu0
    %v4725 = vadd.f32 %v4545, %v4724
    %v4726 = vpop.f32.mrb[0].mxu0
    %v4727 = vadd.f32 %v4541, %v4726
    %v4728 = vpop.f32.mrb[0].mxu0
    %v4729 = vadd.f32 %v4545, %v4728
    %4730 = vdwg.mxu0
    %4731 = vmatprep.subr.bf16.mxu0 %v4395
    %4732 = vmatpush1.bf16.msra.mxu0 %v4394
    %4733 = vmatprep.subr.bf16.mxu0 %v4411
    %4734 = vmatpush1.bf16.msra.mxu0 %v4410
    %4735 = vmatprep.subr.bf16.mxu0 %v4427
    %4736 = vmatpush1.bf16.msra.mxu0 %v4426
    %4737 = vmatprep.subr.bf16.mxu0 %v4443
    %4738 = vmatpush1.bf16.msra.mxu0 %v4442
    %4739 = vmatprep.subr.bf16.mxu0 %v4459
    %4740 = vmatpush1.bf16.msra.mxu0 %v4458
    %4741 = vmatprep.subr.bf16.mxu0 %v4475
    %4742 = vmatpush1.bf16.msra.mxu0 %v4474
    %4743 = vmatprep.subr.bf16.mxu0 %v4491
    %4744 = vmatpush1.bf16.msra.mxu0 %v4490
    %4745 = vmatprep.subr.bf16.mxu0 %v4507
    %4746 = vmatpush1.bf16.msra.mxu0 %v4506
    %4747 = vmatprep.subr.bf16.mxu0 0
    %4748 = vmatpush1.bf16.msra.mxu0 0
    %4749 = vmatprep.subr.bf16.mxu0 0
    %4750 = vmatpush1.bf16.msra.mxu0 0
    %4751 = vmatprep.subr.bf16.mxu0 0
    %4752 = vmatpush1.bf16.msra.mxu0 0
    %4753 = vmatprep.subr.bf16.mxu0 0
    %4754 = vmatpush1.bf16.msra.mxu0 0
    %4755 = vmatprep.subr.bf16.mxu0 0
    %4756 = vmatpush1.bf16.msra.mxu0 0
    %4757 = vmatprep.subr.bf16.mxu0 0
    %4758 = vmatpush1.bf16.msra.mxu0 0
    %4759 = vmatprep.subr.bf16.mxu0 0
    %4760 = vmatpush1.bf16.msra.mxu0 0
    %4761 = vmatprep.subr.bf16.mxu0 0
    %4762 = vmatpush1.bf16.msra.mxu0 0
    %4763 = vmatprep.mubr.bf16.mxu0 0
    %4764 = vmatmul.mubr.bf16.gmra.mrb[0].mxu0 %v4387
    %v4765 = vpop.f32.mrb[0].mxu0
    %v4766 = vadd.f32 %v4549, %v4765
    %v4767 = vpop.f32.mrb[0].mxu0
    %v4768 = vadd.f32 %v4553, %v4767
    %v4769 = vpop.f32.mrb[0].mxu0
    %v4770 = vadd.f32 %v4549, %v4769
    %v4771 = vpop.f32.mrb[0].mxu0
    %v4772 = vadd.f32 %v4553, %v4771
    %4773 = vdwg.mxu0
    %4774 = vmatprep.subr.bf16.mxu0 %v4397
    %4775 = vmatpush1.bf16.msra.mxu0 %v4396
    %4776 = vmatprep.subr.bf16.mxu0 %v4413
    %4777 = vmatpush1.bf16.msra.mxu0 %v4412
    %4778 = vmatprep.subr.bf16.mxu0 %v4429
    %4779 = vmatpush1.bf16.msra.mxu0 %v4428
    %4780 = vmatprep.subr.bf16.mxu0 %v4445
    %4781 = vmatpush1.bf16.msra.mxu0 %v4444
    %4782 = vmatprep.subr.bf16.mxu0 %v4461
    %4783 = vmatpush1.bf16.msra.mxu0 %v4460
    %4784 = vmatprep.subr.bf16.mxu0 %v4477
    %4785 = vmatpush1.bf16.msra.mxu0 %v4476
    %4786 = vmatprep.subr.bf16.mxu0 %v4493
    %4787 = vmatpush1.bf16.msra.mxu0 %v4492
    %4788 = vmatprep.subr.bf16.mxu0 %v4509
    %4789 = vmatpush1.bf16.msra.mxu0 %v4508
    %4790 = vmatprep.subr.bf16.mxu0 0
    %4791 = vmatpush1.bf16.msra.mxu0 0
    %4792 = vmatprep.subr.bf16.mxu0 0
    %4793 = vmatpush1.bf16.msra.mxu0 0
    %4794 = vmatprep.subr.bf16.mxu0 0
    %4795 = vmatpush1.bf16.msra.mxu0 0
    %4796 = vmatprep.subr.bf16.mxu0 0
    %4797 = vmatpush1.bf16.msra.mxu0 0
    %4798 = vmatprep.subr.bf16.mxu0 0
    %4799 = vmatpush1.bf16.msra.mxu0 0
    %4800 = vmatprep.subr.bf16.mxu0 0
    %4801 = vmatpush1.bf16.msra.mxu0 0
    %4802 = vmatprep.subr.bf16.mxu0 0
    %4803 = vmatpush1.bf16.msra.mxu0 0
    %4804 = vmatprep.subr.bf16.mxu0 0
    %4805 = vmatpush1.bf16.msra.mxu0 0
    %4806 = vmatprep.mubr.bf16.mxu0 0
    %4807 = vmatmul.mubr.bf16.gmra.mrb[0].mxu0 %v4387
    %v4808 = vpop.f32.mrb[0].mxu0
    %v4809 = vadd.f32 %v4557, %v4808
    %v4810 = vpop.f32.mrb[0].mxu0
    %v4811 = vadd.f32 %v4561, %v4810
    %v4812 = vpop.f32.mrb[0].mxu0
    %v4813 = vadd.f32 %v4557, %v4812
    %v4814 = vpop.f32.mrb[0].mxu0
    %v4815 = vadd.f32 %v4561, %v4814
    %4816 = vdwg.mxu0
    %4817 = vmatprep.subr.bf16.mxu0 %v4399
    %4818 = vmatpush1.bf16.msra.mxu0 %v4398
    %4819 = vmatprep.subr.bf16.mxu0 %v4415
    %4820 = vmatpush1.bf16.msra.mxu0 %v4414
    %4821 = vmatprep.subr.bf16.mxu0 %v4431
    %4822 = vmatpush1.bf16.msra.mxu0 %v4430
    %4823 = vmatprep.subr.bf16.mxu0 %v4447
    %4824 = vmatpush1.bf16.msra.mxu0 %v4446
    %4825 = vmatprep.subr.bf16.mxu0 %v4463
    %4826 = vmatpush1.bf16.msra.mxu0 %v4462
    %4827 = vmatprep.subr.bf16.mxu0 %v4479
    %4828 = vmatpush1.bf16.msra.mxu0 %v4478
    %4829 = vmatprep.subr.bf16.mxu0 %v4495
    %4830 = vmatpush1.bf16.msra.mxu0 %v4494
    %4831 = vmatprep.subr.bf16.mxu0 %v4511
    %4832 = vmatpush1.bf16.msra.mxu0 %v4510
    %4833 = vmatprep.subr.bf16.mxu0 0
    %4834 = vmatpush1.bf16.msra.mxu0 0
    %4835 = vmatprep.subr.bf16.mxu0 0
    %4836 = vmatpush1.bf16.msra.mxu0 0
    %4837 = vmatprep.subr.bf16.mxu0 0
    %4838 = vmatpush1.bf16.msra.mxu0 0
    %4839 = vmatprep.subr.bf16.mxu0 0
    %4840 = vmatpush1.bf16.msra.mxu0 0
    %4841 = vmatprep.subr.bf16.mxu0 0
    %4842 = vmatpush1.bf16.msra.mxu0 0
    %4843 = vmatprep.subr.bf16.mxu0 0
    %4844 = vmatpush1.bf16.msra.mxu0 0
    %4845 = vmatprep.subr.bf16.mxu0 0
    %4846 = vmatpush1.bf16.msra.mxu0 0
    %4847 = vmatprep.subr.bf16.mxu0 0
    %4848 = vmatpush1.bf16.msra.mxu0 0
    %4849 = vmatprep.mubr.bf16.mxu0 0
    %4850 = vmatmul.mubr.bf16.gmra.mrb[0].mxu0 %v4387
    %v4851 = vpop.f32.mrb[0].mxu0
    %v4852 = vadd.f32 %v4565, %v4851
    %v4853 = vpop.f32.mrb[0].mxu0
    %v4854 = vadd.f32 %v4569, %v4853
    %v4855 = vpop.f32.mrb[0].mxu0
    %v4856 = vadd.f32 %v4565, %v4855
    %v4857 = vpop.f32.mrb[0].mxu0
    %v4858 = vadd.f32 %v4569, %v4857
    %4859 = vdwg.mxu0
    %4860 = vmatprep.subr.bf16.mxu0 %v4401
    %4861 = vmatpush1.bf16.msra.mxu0 %v4400
    %4862 = vmatprep.subr.bf16.mxu0 %v4417
    %4863 = vmatpush1.bf16.msra.mxu0 %v4416
    %4864 = vmatprep.subr.bf16.mxu0 %v4433
    %4865 = vmatpush1.bf16.msra.mxu0 %v4432
    %4866 = vmatprep.subr.bf16.mxu0 %v4449
    %4867 = vmatpush1.bf16.msra.mxu0 %v4448
    %4868 = vmatprep.subr.bf16.mxu0 %v4465
    %4869 = vmatpush1.bf16.msra.mxu0 %v4464
    %4870 = vmatprep.subr.bf16.mxu0 %v4481
    %4871 = vmatpush1.bf16.msra.mxu0 %v4480
    %4872 = vmatprep.subr.bf16.mxu0 %v4497
    %4873 = vmatpush1.bf16.msra.mxu0 %v4496
    %4874 = vmatprep.subr.bf16.mxu0 %v4513
    %4875 = vmatpush1.bf16.msra.mxu0 %v4512
    %4876 = vmatprep.subr.bf16.mxu0 0
    %4877 = vmatpush1.bf16.msra.mxu0 0
    %4878 = vmatprep.subr.bf16.mxu0 0
    %4879 = vmatpush1.bf16.msra.mxu0 0
    %4880 = vmatprep.subr.bf16.mxu0 0
    %4881 = vmatpush1.bf16.msra.mxu0 0
    %4882 = vmatprep.subr.bf16.mxu0 0
    %4883 = vmatpush1.bf16.msra.mxu0 0
    %4884 = vmatprep.subr.bf16.mxu0 0
    %4885 = vmatpush1.bf16.msra.mxu0 0
    %4886 = vmatprep.subr.bf16.mxu0 0
    %4887 = vmatpush1.bf16.msra.mxu0 0
    %4888 = vmatprep.subr.bf16.mxu0 0
    %4889 = vmatpush1.bf16.msra.mxu0 0
    %4890 = vmatprep.subr.bf16.mxu0 0
    %4891 = vmatpush1.bf16.msra.mxu0 0
    %4892 = vmatprep.mubr.bf16.mxu0 0
    %4893 = vmatmul.mubr.bf16.gmra.mrb[0].mxu0 %v4387
    %v4894 = vpop.f32.mrb[0].mxu0
    %v4895 = vadd.f32 %v4573, %v4894
    %v4896 = vpop.f32.mrb[0].mxu0
    %v4897 = vadd.f32 %v4577, %v4896
    %v4898 = vpop.f32.mrb[0].mxu0
    %v4899 = vadd.f32 %v4573, %v4898
    %v4900 = vpop.f32.mrb[0].mxu0
    %v4901 = vadd.f32 %v4577, %v4900
    %4902 = vdwg.mxu0
    %4903 = vmatprep.subr.bf16.mxu0 %v4403
    %4904 = vmatpush1.bf16.msra.mxu0 %v4402
    %4905 = vmatprep.subr.bf16.mxu0 %v4419
    %4906 = vmatpush1.bf16.msra.mxu0 %v4418
    %4907 = vmatprep.subr.bf16.mxu0 %v4435
    %4908 = vmatpush1.bf16.msra.mxu0 %v4434
    %4909 = vmatprep.subr.bf16.mxu0 %v4451
    %4910 = vmatpush1.bf16.msra.mxu0 %v4450
    %4911 = vmatprep.subr.bf16.mxu0 %v4467
    %4912 = vmatpush1.bf16.msra.mxu0 %v4466
    %4913 = vmatprep.subr.bf16.mxu0 %v4483
    %4914 = vmatpush1.bf16.msra.mxu0 %v4482
    %4915 = vmatprep.subr.bf16.mxu0 %v4499
    %4916 = vmatpush1.bf16.msra.mxu0 %v4498
    %4917 = vmatprep.subr.bf16.mxu0 %v4515
    %4918 = vmatpush1.bf16.msra.mxu0 %v4514
    %4919 = vmatprep.subr.bf16.mxu0 0
    %4920 = vmatpush1.bf16.msra.mxu0 0
    %4921 = vmatprep.subr.bf16.mxu0 0
    %4922 = vmatpush1.bf16.msra.mxu0 0
    %4923 = vmatprep.subr.bf16.mxu0 0
    %4924 = vmatpush1.bf16.msra.mxu0 0
    %4925 = vmatprep.subr.bf16.mxu0 0
    %4926 = vmatpush1.bf16.msra.mxu0 0
    %4927 = vmatprep.subr.bf16.mxu0 0
    %4928 = vmatpush1.bf16.msra.mxu0 0
    %4929 = vmatprep.subr.bf16.mxu0 0
    %4930 = vmatpush1.bf16.msra.mxu0 0
    %4931 = vmatprep.subr.bf16.mxu0 0
    %4932 = vmatpush1.bf16.msra.mxu0 0
    %4933 = vmatprep.subr.bf16.mxu0 0
    %4934 = vmatpush1.bf16.msra.mxu0 0
    %4935 = vmatprep.mubr.bf16.mxu0 0
    %4936 = vmatmul.mubr.bf16.gmra.mrb[0].mxu0 %v4387
    %v4937 = vpop.f32.mrb[0].mxu0
    %v4938 = vadd.f32 %v4581, %v4937
    %v4939 = vpop.f32.mrb[0].mxu0
    %v4940 = vadd.f32 %v4585, %v4939
    %v4941 = vpop.f32.mrb[0].mxu0
    %v4942 = vadd.f32 %v4581, %v4941
    %v4943 = vpop.f32.mrb[0].mxu0
    %v4944 = vadd.f32 %v4585, %v4943
    %4945 = vdwg.mxu0
    %v4946 = vmax.f32 %v4637, 0.0
    %v4947 = vmax.f32 %v4639, 0.0
    %v4948 = vmax.f32 %v4680, 0.0
    %v4949 = vmax.f32 %v4682, 0.0
    %v4950 = vmax.f32 %v4723, 0.0
    %v4951 = vmax.f32 %v4725, 0.0
    %v4952 = vmax.f32 %v4766, 0.0
    %v4953 = vmax.f32 %v4768, 0.0
    %v4954 = vmax.f32 %v4809, 0.0
    %v4955 = vmax.f32 %v4811, 0.0
    %v4956 = vmax.f32 %v4852, 0.0
    %v4957 = vmax.f32 %v4854, 0.0
    %v4958 = vmax.f32 %v4895, 0.0
    %v4959 = vmax.f32 %v4897, 0.0
    %v4960 = vmax.f32 %v4938, 0.0
    %v4961 = vmax.f32 %v4940, 0.0
    %v4962 = vmax.f32 %v4641, 0.0
    %v4963 = vmax.f32 %v4643, 0.0
    %v4964 = vmax.f32 %v4684, 0.0
    %v4965 = vmax.f32 %v4686, 0.0
    %v4966 = vmax.f32 %v4727, 0.0
    %v4967 = vmax.f32 %v4729, 0.0
    %v4968 = vmax.f32 %v4770, 0.0
    %v4969 = vmax.f32 %v4772, 0.0
    %v4970 = vmax.f32 %v4813, 0.0
    %v4971 = vmax.f32 %v4815, 0.0
    %v4972 = vmax.f32 %v4856, 0.0
    %v4973 = vmax.f32 %v4858, 0.0
    %v4974 = vmax.f32 %v4899, 0.0
    %v4975 = vmax.f32 %v4901, 0.0
    %v4976 = vmax.f32 %v4942, 0.0
    %v4977 = vmax.f32 %v4944, 0.0
    %v4978 = vpack.c.bf16 %v4962, %v4946
    %v4979 = vpack.c.bf16 %v4963, %v4947
    %v4980 = vpack.c.bf16 %v4964, %v4948
    %v4981 = vpack.c.bf16 %v4965, %v4949
    %v4982 = vpack.c.bf16 %v4966, %v4950
    %v4983 = vpack.c.bf16 %v4967, %v4951
    %v4984 = vpack.c.bf16 %v4968, %v4952
    %v4985 = vpack.c.bf16 %v4969, %v4953
    %v4986 = vpack.c.bf16 %v4970, %v4954
    %v4987 = vpack.c.bf16 %v4971, %v4955
    %v4988 = vpack.c.bf16 %v4972, %v4956
    %v4989 = vpack.c.bf16 %v4973, %v4957
    %v4990 = vpack.c.bf16 %v4974, %v4958
    %v4991 = vpack.c.bf16 %v4975, %v4959
    %v4992 = vpack.c.bf16 %v4976, %v4960
    %v4993 = vpack.c.bf16 %v4977, %v4961
    %v4994 = vld [vmem:[#allocation3] sm:$0xff]
    %v4995 = vld [vmem:[#allocation3 + $0x8] sm:$0xff]
    %v4996 = vld [vmem:[#allocation3 + $0x10] sm:$0xff]
    %v4997 = vld [vmem:[#allocation3 + $0x18] sm:$0xff]
    %v4998 = vld [vmem:[#allocation3 + $0x20] sm:$0xff]
    %v4999 = vld [vmem:[#allocation3 + $0x28] sm:$0xff]
    %v5000 = vld [vmem:[#allocation3 + $0x30] sm:$0xff]
    %v5001 = vld [vmem:[#allocation3 + $0x38] sm:$0xff]
    %v5002 = vld [vmem:[#allocation3 + $0x40] sm:$0xff]
    %v5003 = vld [vmem:[#allocation3 + $0x48] sm:$0xff]
    %v5004 = vld [vmem:[#allocation3 + $0x50] sm:$0xff]
    %v5005 = vld [vmem:[#allocation3 + $0x58] sm:$0xff]
    %v5006 = vld [vmem:[#allocation3 + $0x60] sm:$0xff]
    %v5007 = vld [vmem:[#allocation3 + $0x68] sm:$0xff]
    %v5008 = vld [vmem:[#allocation3 + $0x70] sm:$0xff]
    %v5009 = vld [vmem:[#allocation3 + $0x78] sm:$0xff]
    %v5010 = vld [vmem:[#allocation3 + $0x80] sm:$0xff]
    %v5011 = vld [vmem:[#allocation3 + $0x88] sm:$0xff]
    %v5012 = vld [vmem:[#allocation3 + $0x90] sm:$0xff]
    %v5013 = vld [vmem:[#allocation3 + $0x98] sm:$0xff]
    %v5014 = vld [vmem:[#allocation3 + $0xa0] sm:$0xff]
    %v5015 = vld [vmem:[#allocation3 + $0xa8] sm:$0xff]
    %v5016 = vld [vmem:[#allocation3 + $0xb0] sm:$0xff]
    %v5017 = vld [vmem:[#allocation3 + $0xb8] sm:$0xff]
    %v5018 = vld [vmem:[#allocation3 + $0xc0] sm:$0xff]
    %v5019 = vld [vmem:[#allocation3 + $0xc8] sm:$0xff]
    %v5020 = vld [vmem:[#allocation3 + $0xd0] sm:$0xff]
    %v5021 = vld [vmem:[#allocation3 + $0xd8] sm:$0xff]
    %v5022 = vld [vmem:[#allocation3 + $0xe0] sm:$0xff]
    %v5023 = vld [vmem:[#allocation3 + $0xe8] sm:$0xff]
    %v5024 = vld [vmem:[#allocation3 + $0xf0] sm:$0xff]
    %v5025 = vld [vmem:[#allocation3 + $0xf8] sm:$0xff]
    %v5026 = vld [vmem:[#allocation3 + $0x100] sm:$0xff]
    %v5027 = vld [vmem:[#allocation3 + $0x108] sm:$0xff]
    %v5028 = vld [vmem:[#allocation3 + $0x110] sm:$0xff]
    %v5029 = vld [vmem:[#allocation3 + $0x118] sm:$0xff]
    %v5030 = vld [vmem:[#allocation3 + $0x120] sm:$0xff]
    %v5031 = vld [vmem:[#allocation3 + $0x128] sm:$0xff]
    %v5032 = vld [vmem:[#allocation3 + $0x130] sm:$0xff]
    %v5033 = vld [vmem:[#allocation3 + $0x138] sm:$0xff]
    %v5034 = vld [vmem:[#allocation3 + $0x140] sm:$0xff]
    %v5035 = vld [vmem:[#allocation3 + $0x148] sm:$0xff]
    %v5036 = vld [vmem:[#allocation3 + $0x150] sm:$0xff]
    %v5037 = vld [vmem:[#allocation3 + $0x158] sm:$0xff]
    %v5038 = vld [vmem:[#allocation3 + $0x160] sm:$0xff]
    %v5039 = vld [vmem:[#allocation3 + $0x168] sm:$0xff]
    %v5040 = vld [vmem:[#allocation3 + $0x170] sm:$0xff]
    %v5041 = vld [vmem:[#allocation3 + $0x178] sm:$0xff]
    %v5042 = vld [vmem:[#allocation3 + $0x180] sm:$0xff]
    %v5043 = vld [vmem:[#allocation3 + $0x188] sm:$0xff]
    %v5044 = vld [vmem:[#allocation3 + $0x190] sm:$0xff]
    %v5045 = vld [vmem:[#allocation3 + $0x198] sm:$0xff]
    %v5046 = vld [vmem:[#allocation3 + $0x1a0] sm:$0xff]
    %v5047 = vld [vmem:[#allocation3 + $0x1a8] sm:$0xff]
    %v5048 = vld [vmem:[#allocation3 + $0x1b0] sm:$0xff]
    %v5049 = vld [vmem:[#allocation3 + $0x1b8] sm:$0xff]
    %v5050 = vld [vmem:[#allocation3 + $0x1c0] sm:$0xff]
    %v5051 = vld [vmem:[#allocation3 + $0x1c8] sm:$0xff]
    %v5052 = vld [vmem:[#allocation3 + $0x1d0] sm:$0xff]
    %v5053 = vld [vmem:[#allocation3 + $0x1d8] sm:$0xff]
    %v5054 = vld [vmem:[#allocation3 + $0x1e0] sm:$0xff]
    %v5055 = vld [vmem:[#allocation3 + $0x1e8] sm:$0xff]
    %v5056 = vld [vmem:[#allocation3 + $0x1f0] sm:$0xff]
    %v5057 = vld [vmem:[#allocation3 + $0x1f8] sm:$0xff]
    %v5058 = vld [vmem:[#allocation3 + $0x200] sm:$0xff]
    %v5059 = vld [vmem:[#allocation3 + $0x208] sm:$0xff]
    %v5060 = vld [vmem:[#allocation3 + $0x210] sm:$0xff]
    %v5061 = vld [vmem:[#allocation3 + $0x218] sm:$0xff]
    %v5062 = vld [vmem:[#allocation3 + $0x220] sm:$0xff]
    %v5063 = vld [vmem:[#allocation3 + $0x228] sm:$0xff]
    %v5064 = vld [vmem:[#allocation3 + $0x230] sm:$0xff]
    %v5065 = vld [vmem:[#allocation3 + $0x238] sm:$0xff]
    %v5066 = vld [vmem:[#allocation3 + $0x240] sm:$0xff]
    %v5067 = vld [vmem:[#allocation3 + $0x248] sm:$0xff]
    %v5068 = vld [vmem:[#allocation3 + $0x250] sm:$0xff]
    %v5069 = vld [vmem:[#allocation3 + $0x258] sm:$0xff]
    %v5070 = vld [vmem:[#allocation3 + $0x260] sm:$0xff]
    %v5071 = vld [vmem:[#allocation3 + $0x268] sm:$0xff]
    %v5072 = vld [vmem:[#allocation3 + $0x270] sm:$0xff]
    %v5073 = vld [vmem:[#allocation3 + $0x278] sm:$0xff]
    %v5074 = vld [vmem:[#allocation3 + $0x280] sm:$0xff]
    %v5075 = vld [vmem:[#allocation3 + $0x288] sm:$0xff]
    %v5076 = vld [vmem:[#allocation3 + $0x290] sm:$0xff]
    %v5077 = vld [vmem:[#allocation3 + $0x298] sm:$0xff]
    %v5078 = vld [vmem:[#allocation3 + $0x2a0] sm:$0xff]
    %v5079 = vld [vmem:[#allocation3 + $0x2a8] sm:$0xff]
    %v5080 = vld [vmem:[#allocation3 + $0x2b0] sm:$0xff]
    %v5081 = vld [vmem:[#allocation3 + $0x2b8] sm:$0xff]
    %v5082 = vld [vmem:[#allocation3 + $0x2c0] sm:$0xff]
    %v5083 = vld [vmem:[#allocation3 + $0x2c8] sm:$0xff]
    %v5084 = vld [vmem:[#allocation3 + $0x2d0] sm:$0xff]
    %v5085 = vld [vmem:[#allocation3 + $0x2d8] sm:$0xff]
    %v5086 = vld [vmem:[#allocation3 + $0x2e0] sm:$0xff]
    %v5087 = vld [vmem:[#allocation3 + $0x2e8] sm:$0xff]
    %v5088 = vld [vmem:[#allocation3 + $0x2f0] sm:$0xff]
    %v5089 = vld [vmem:[#allocation3 + $0x2f8] sm:$0xff]
    %v5090 = vld [vmem:[#allocation3 + $0x300] sm:$0xff]
    %v5091 = vld [vmem:[#allocation3 + $0x308] sm:$0xff]
    %v5092 = vld [vmem:[#allocation3 + $0x310] sm:$0xff]
    %v5093 = vld [vmem:[#allocation3 + $0x318] sm:$0xff]
    %v5094 = vld [vmem:[#allocation3 + $0x320] sm:$0xff]
    %v5095 = vld [vmem:[#allocation3 + $0x328] sm:$0xff]
    %v5096 = vld [vmem:[#allocation3 + $0x330] sm:$0xff]
    %v5097 = vld [vmem:[#allocation3 + $0x338] sm:$0xff]
    %v5098 = vld [vmem:[#allocation3 + $0x340] sm:$0xff]
    %v5099 = vld [vmem:[#allocation3 + $0x348] sm:$0xff]
    %v5100 = vld [vmem:[#allocation3 + $0x350] sm:$0xff]
    %v5101 = vld [vmem:[#allocation3 + $0x358] sm:$0xff]
    %v5102 = vld [vmem:[#allocation3 + $0x360] sm:$0xff]
    %v5103 = vld [vmem:[#allocation3 + $0x368] sm:$0xff]
    %v5104 = vld [vmem:[#allocation3 + $0x370] sm:$0xff]
    %v5105 = vld [vmem:[#allocation3 + $0x378] sm:$0xff]
    %v5106 = vld [vmem:[#allocation3 + $0x380] sm:$0xff]
    %v5107 = vld [vmem:[#allocation3 + $0x388] sm:$0xff]
    %v5108 = vld [vmem:[#allocation3 + $0x390] sm:$0xff]
    %v5109 = vld [vmem:[#allocation3 + $0x398] sm:$0xff]
    %v5110 = vld [vmem:[#allocation3 + $0x3a0] sm:$0xff]
    %v5111 = vld [vmem:[#allocation3 + $0x3a8] sm:$0xff]
    %v5112 = vld [vmem:[#allocation3 + $0x3b0] sm:$0xff]
    %v5113 = vld [vmem:[#allocation3 + $0x3b8] sm:$0xff]
    %v5114 = vld [vmem:[#allocation3 + $0x3c0] sm:$0xff]
    %v5115 = vld [vmem:[#allocation3 + $0x3c8] sm:$0xff]
    %v5116 = vld [vmem:[#allocation3 + $0x3d0] sm:$0xff]
    %v5117 = vld [vmem:[#allocation3 + $0x3d8] sm:$0xff]
    %v5118 = vld [vmem:[#allocation3 + $0x3e0] sm:$0xff]
    %v5119 = vld [vmem:[#allocation3 + $0x3e8] sm:$0xff]
    %v5120 = vld [vmem:[#allocation3 + $0x3f0] sm:$0xff]
    %v5121 = vld [vmem:[#allocation3 + $0x3f8] sm:$0xff]
    %v5122 = vld [vmem:[%s9 + $0x13] sm:$0x1]
    %v5123 = vlaneseq
    %v5124 = vshrl.u32 %v5123, 7
    %v5125 = vsub.s32 0, %v5124
    %v5126 = vrot.slane %v5122, %v5125
    %5127 = vmatprep.subr.bf16.mxu0 0
    %5128 = vmatpush1.bf16.msra.mxu0 %v4994
    %5129 = vmatprep.subr.bf16.mxu0 0
    %5130 = vmatpush1.bf16.msra.mxu0 %v4995
    %5131 = vmatprep.subr.bf16.mxu0 0
    %5132 = vmatpush1.bf16.msra.mxu0 %v4996
    %5133 = vmatprep.subr.bf16.mxu0 0
    %5134 = vmatpush1.bf16.msra.mxu0 %v4997
    %5135 = vmatprep.subr.bf16.mxu0 0
    %5136 = vmatpush1.bf16.msra.mxu0 %v4998
    %5137 = vmatprep.subr.bf16.mxu0 0
    %5138 = vmatpush1.bf16.msra.mxu0 %v4999
    %5139 = vmatprep.subr.bf16.mxu0 0
    %5140 = vmatpush1.bf16.msra.mxu0 %v5000
    %5141 = vmatprep.subr.bf16.mxu0 0
    %5142 = vmatpush1.bf16.msra.mxu0 %v5001
    %5143 = vmatprep.subr.bf16.mxu0 0
    %5144 = vmatpush1.bf16.msra.mxu0 %v5002
    %5145 = vmatprep.subr.bf16.mxu0 0
    %5146 = vmatpush1.bf16.msra.mxu0 %v5003
    %5147 = vmatprep.subr.bf16.mxu0 0
    %5148 = vmatpush1.bf16.msra.mxu0 %v5004
    %5149 = vmatprep.subr.bf16.mxu0 0
    %5150 = vmatpush1.bf16.msra.mxu0 %v5005
    %5151 = vmatprep.subr.bf16.mxu0 0
    %5152 = vmatpush1.bf16.msra.mxu0 %v5006
    %5153 = vmatprep.subr.bf16.mxu0 0
    %5154 = vmatpush1.bf16.msra.mxu0 %v5007
    %5155 = vmatprep.subr.bf16.mxu0 0
    %5156 = vmatpush1.bf16.msra.mxu0 %v5008
    %5157 = vmatprep.subr.bf16.mxu0 0
    %5158 = vmatpush1.bf16.msra.mxu0 %v5009
    %5159 = vmatprep.mubr.bf16.mxu0 %v4979
    %5160 = vmatmul.mubr.bf16.gmra.mrb[0].mxu0 %v4978
    %v5161 = vpop.f32.mrb[0].mxu0
    %v5162 = vadd.f32 %v5126, %v5161
    %v5163 = vpop.f32.mrb[0].mxu0
    %v5164 = vpop.f32.mrb[0].mxu0
    %v5165 = vadd.f32 %v5126, %v5164
    %v5166 = vpop.f32.mrb[0].mxu0
    %5167 = vdwg.mxu0
    %5168 = vmatprep.subr.bf16.mxu0 0
    %5169 = vmatpush1.bf16.msra.mxu0 %v5010
    %5170 = vmatprep.subr.bf16.mxu0 0
    %5171 = vmatpush1.bf16.msra.mxu0 %v5011
    %5172 = vmatprep.subr.bf16.mxu0 0
    %5173 = vmatpush1.bf16.msra.mxu0 %v5012
    %5174 = vmatprep.subr.bf16.mxu0 0
    %5175 = vmatpush1.bf16.msra.mxu0 %v5013
    %5176 = vmatprep.subr.bf16.mxu0 0
    %5177 = vmatpush1.bf16.msra.mxu0 %v5014
    %5178 = vmatprep.subr.bf16.mxu0 0
    %5179 = vmatpush1.bf16.msra.mxu0 %v5015
    %5180 = vmatprep.subr.bf16.mxu0 0
    %5181 = vmatpush1.bf16.msra.mxu0 %v5016
    %5182 = vmatprep.subr.bf16.mxu0 0
    %5183 = vmatpush1.bf16.msra.mxu0 %v5017
    %5184 = vmatprep.subr.bf16.mxu0 0
    %5185 = vmatpush1.bf16.msra.mxu0 %v5018
    %5186 = vmatprep.subr.bf16.mxu0 0
    %5187 = vmatpush1.bf16.msra.mxu0 %v5019
    %5188 = vmatprep.subr.bf16.mxu0 0
    %5189 = vmatpush1.bf16.msra.mxu0 %v5020
    %5190 = vmatprep.subr.bf16.mxu0 0
    %5191 = vmatpush1.bf16.msra.mxu0 %v5021
    %5192 = vmatprep.subr.bf16.mxu0 0
    %5193 = vmatpush1.bf16.msra.mxu0 %v5022
    %5194 = vmatprep.subr.bf16.mxu0 0
    %5195 = vmatpush1.bf16.msra.mxu0 %v5023
    %5196 = vmatprep.subr.bf16.mxu0 0
    %5197 = vmatpush1.bf16.msra.mxu0 %v5024
    %5198 = vmatprep.subr.bf16.mxu0 0
    %5199 = vmatpush1.bf16.msra.mxu0 %v5025
    %5200 = vmatprep.mubr.bf16.mxu0 %v4981
    %5201 = vmatmul.mubr.bf16.gmra.mrb[0].mxu0 %v4980
    %v5202 = vpop.f32.mrb[0].mxu0
    %v5203 = vadd.f32 %v5162, %v5202
    %v5204 = vpop.f32.mrb[0].mxu0
    %v5205 = vpop.f32.mrb[0].mxu0
    %v5206 = vadd.f32 %v5165, %v5205
    %v5207 = vpop.f32.mrb[0].mxu0
    %5208 = vdwg.mxu0
    %5209 = vmatprep.subr.bf16.mxu0 0
    %5210 = vmatpush1.bf16.msra.mxu0 %v5026
    %5211 = vmatprep.subr.bf16.mxu0 0
    %5212 = vmatpush1.bf16.msra.mxu0 %v5027
    %5213 = vmatprep.subr.bf16.mxu0 0
    %5214 = vmatpush1.bf16.msra.mxu0 %v5028
    %5215 = vmatprep.subr.bf16.mxu0 0
    %5216 = vmatpush1.bf16.msra.mxu0 %v5029
    %5217 = vmatprep.subr.bf16.mxu0 0
    %5218 = vmatpush1.bf16.msra.mxu0 %v5030
    %5219 = vmatprep.subr.bf16.mxu0 0
    %5220 = vmatpush1.bf16.msra.mxu0 %v5031
    %5221 = vmatprep.subr.bf16.mxu0 0
    %5222 = vmatpush1.bf16.msra.mxu0 %v5032
    %5223 = vmatprep.subr.bf16.mxu0 0
    %5224 = vmatpush1.bf16.msra.mxu0 %v5033
    %5225 = vmatprep.subr.bf16.mxu0 0
    %5226 = vmatpush1.bf16.msra.mxu0 %v5034
    %5227 = vmatprep.subr.bf16.mxu0 0
    %5228 = vmatpush1.bf16.msra.mxu0 %v5035
    %5229 = vmatprep.subr.bf16.mxu0 0
    %5230 = vmatpush1.bf16.msra.mxu0 %v5036
    %5231 = vmatprep.subr.bf16.mxu0 0
    %5232 = vmatpush1.bf16.msra.mxu0 %v5037
    %5233 = vmatprep.subr.bf16.mxu0 0
    %5234 = vmatpush1.bf16.msra.mxu0 %v5038
    %5235 = vmatprep.subr.bf16.mxu0 0
    %5236 = vmatpush1.bf16.msra.mxu0 %v5039
    %5237 = vmatprep.subr.bf16.mxu0 0
    %5238 = vmatpush1.bf16.msra.mxu0 %v5040
    %5239 = vmatprep.subr.bf16.mxu0 0
    %5240 = vmatpush1.bf16.msra.mxu0 %v5041
    %5241 = vmatprep.mubr.bf16.mxu0 %v4983
    %5242 = vmatmul.mubr.bf16.gmra.mrb[0].mxu0 %v4982
    %v5243 = vpop.f32.mrb[0].mxu0
    %v5244 = vadd.f32 %v5203, %v5243
    %v5245 = vpop.f32.mrb[0].mxu0
    %v5246 = vpop.f32.mrb[0].mxu0
    %v5247 = vadd.f32 %v5206, %v5246
    %v5248 = vpop.f32.mrb[0].mxu0
    %5249 = vdwg.mxu0
    %5250 = vmatprep.subr.bf16.mxu0 0
    %5251 = vmatpush1.bf16.msra.mxu0 %v5042
    %5252 = vmatprep.subr.bf16.mxu0 0
    %5253 = vmatpush1.bf16.msra.mxu0 %v5043
    %5254 = vmatprep.subr.bf16.mxu0 0
    %5255 = vmatpush1.bf16.msra.mxu0 %v5044
    %5256 = vmatprep.subr.bf16.mxu0 0
    %5257 = vmatpush1.bf16.msra.mxu0 %v5045
    %5258 = vmatprep.subr.bf16.mxu0 0
    %5259 = vmatpush1.bf16.msra.mxu0 %v5046
    %5260 = vmatprep.subr.bf16.mxu0 0
    %5261 = vmatpush1.bf16.msra.mxu0 %v5047
    %5262 = vmatprep.subr.bf16.mxu0 0
    %5263 = vmatpush1.bf16.msra.mxu0 %v5048
    %5264 = vmatprep.subr.bf16.mxu0 0
    %5265 = vmatpush1.bf16.msra.mxu0 %v5049
    %5266 = vmatprep.subr.bf16.mxu0 0
    %5267 = vmatpush1.bf16.msra.mxu0 %v5050
    %5268 = vmatprep.subr.bf16.mxu0 0
    %5269 = vmatpush1.bf16.msra.mxu0 %v5051
    %5270 = vmatprep.subr.bf16.mxu0 0
    %5271 = vmatpush1.bf16.msra.mxu0 %v5052
    %5272 = vmatprep.subr.bf16.mxu0 0
    %5273 = vmatpush1.bf16.msra.mxu0 %v5053
    %5274 = vmatprep.subr.bf16.mxu0 0
    %5275 = vmatpush1.bf16.msra.mxu0 %v5054
    %5276 = vmatprep.subr.bf16.mxu0 0
    %5277 = vmatpush1.bf16.msra.mxu0 %v5055
    %5278 = vmatprep.subr.bf16.mxu0 0
    %5279 = vmatpush1.bf16.msra.mxu0 %v5056
    %5280 = vmatprep.subr.bf16.mxu0 0
    %5281 = vmatpush1.bf16.msra.mxu0 %v5057
    %5282 = vmatprep.mubr.bf16.mxu0 %v4985
    %5283 = vmatmul.mubr.bf16.gmra.mrb[0].mxu0 %v4984
    %v5284 = vpop.f32.mrb[0].mxu0
    %v5285 = vadd.f32 %v5244, %v5284
    %v5286 = vpop.f32.mrb[0].mxu0
    %v5287 = vpop.f32.mrb[0].mxu0
    %v5288 = vadd.f32 %v5247, %v5287
    %v5289 = vpop.f32.mrb[0].mxu0
    %5290 = vdwg.mxu0
    %5291 = vmatprep.subr.bf16.mxu0 0
    %5292 = vmatpush1.bf16.msra.mxu0 %v5058
    %5293 = vmatprep.subr.bf16.mxu0 0
    %5294 = vmatpush1.bf16.msra.mxu0 %v5059
    %5295 = vmatprep.subr.bf16.mxu0 0
    %5296 = vmatpush1.bf16.msra.mxu0 %v5060
    %5297 = vmatprep.subr.bf16.mxu0 0
    %5298 = vmatpush1.bf16.msra.mxu0 %v5061
    %5299 = vmatprep.subr.bf16.mxu0 0
    %5300 = vmatpush1.bf16.msra.mxu0 %v5062
    %5301 = vmatprep.subr.bf16.mxu0 0
    %5302 = vmatpush1.bf16.msra.mxu0 %v5063
    %5303 = vmatprep.subr.bf16.mxu0 0
    %5304 = vmatpush1.bf16.msra.mxu0 %v5064
    %5305 = vmatprep.subr.bf16.mxu0 0
    %5306 = vmatpush1.bf16.msra.mxu0 %v5065
    %5307 = vmatprep.subr.bf16.mxu0 0
    %5308 = vmatpush1.bf16.msra.mxu0 %v5066
    %5309 = vmatprep.subr.bf16.mxu0 0
    %5310 = vmatpush1.bf16.msra.mxu0 %v5067
    %5311 = vmatprep.subr.bf16.mxu0 0
    %5312 = vmatpush1.bf16.msra.mxu0 %v5068
    %5313 = vmatprep.subr.bf16.mxu0 0
    %5314 = vmatpush1.bf16.msra.mxu0 %v5069
    %5315 = vmatprep.subr.bf16.mxu0 0
    %5316 = vmatpush1.bf16.msra.mxu0 %v5070
    %5317 = vmatprep.subr.bf16.mxu0 0
    %5318 = vmatpush1.bf16.msra.mxu0 %v5071
    %5319 = vmatprep.subr.bf16.mxu0 0
    %5320 = vmatpush1.bf16.msra.mxu0 %v5072
    %5321 = vmatprep.subr.bf16.mxu0 0
    %5322 = vmatpush1.bf16.msra.mxu0 %v5073
    %5323 = vmatprep.mubr.bf16.mxu0 %v4987
    %5324 = vmatmul.mubr.bf16.gmra.mrb[0].mxu0 %v4986
    %v5325 = vpop.f32.mrb[0].mxu0
    %v5326 = vadd.f32 %v5285, %v5325
    %v5327 = vpop.f32.mrb[0].mxu0
    %v5328 = vpop.f32.mrb[0].mxu0
    %v5329 = vadd.f32 %v5288, %v5328
    %v5330 = vpop.f32.mrb[0].mxu0
    %5331 = vdwg.mxu0
    %5332 = vmatprep.subr.bf16.mxu0 0
    %5333 = vmatpush1.bf16.msra.mxu0 %v5074
    %5334 = vmatprep.subr.bf16.mxu0 0
    %5335 = vmatpush1.bf16.msra.mxu0 %v5075
    %5336 = vmatprep.subr.bf16.mxu0 0
    %5337 = vmatpush1.bf16.msra.mxu0 %v5076
    %5338 = vmatprep.subr.bf16.mxu0 0
    %5339 = vmatpush1.bf16.msra.mxu0 %v5077
    %5340 = vmatprep.subr.bf16.mxu0 0
    %5341 = vmatpush1.bf16.msra.mxu0 %v5078
    %5342 = vmatprep.subr.bf16.mxu0 0
    %5343 = vmatpush1.bf16.msra.mxu0 %v5079
    %5344 = vmatprep.subr.bf16.mxu0 0
    %5345 = vmatpush1.bf16.msra.mxu0 %v5080
    %5346 = vmatprep.subr.bf16.mxu0 0
    %5347 = vmatpush1.bf16.msra.mxu0 %v5081
    %5348 = vmatprep.subr.bf16.mxu0 0
    %5349 = vmatpush1.bf16.msra.mxu0 %v5082
    %5350 = vmatprep.subr.bf16.mxu0 0
    %5351 = vmatpush1.bf16.msra.mxu0 %v5083
    %5352 = vmatprep.subr.bf16.mxu0 0
    %5353 = vmatpush1.bf16.msra.mxu0 %v5084
    %5354 = vmatprep.subr.bf16.mxu0 0
    %5355 = vmatpush1.bf16.msra.mxu0 %v5085
    %5356 = vmatprep.subr.bf16.mxu0 0
    %5357 = vmatpush1.bf16.msra.mxu0 %v5086
    %5358 = vmatprep.subr.bf16.mxu0 0
    %5359 = vmatpush1.bf16.msra.mxu0 %v5087
    %5360 = vmatprep.subr.bf16.mxu0 0
    %5361 = vmatpush1.bf16.msra.mxu0 %v5088
    %5362 = vmatprep.subr.bf16.mxu0 0
    %5363 = vmatpush1.bf16.msra.mxu0 %v5089
    %5364 = vmatprep.mubr.bf16.mxu0 %v4989
    %5365 = vmatmul.mubr.bf16.gmra.mrb[0].mxu0 %v4988
    %v5366 = vpop.f32.mrb[0].mxu0
    %v5367 = vadd.f32 %v5326, %v5366
    %v5368 = vpop.f32.mrb[0].mxu0
    %v5369 = vpop.f32.mrb[0].mxu0
    %v5370 = vadd.f32 %v5329, %v5369
    %v5371 = vpop.f32.mrb[0].mxu0
    %5372 = vdwg.mxu0
    %5373 = vmatprep.subr.bf16.mxu0 0
    %5374 = vmatpush1.bf16.msra.mxu0 %v5090
    %5375 = vmatprep.subr.bf16.mxu0 0
    %5376 = vmatpush1.bf16.msra.mxu0 %v5091
    %5377 = vmatprep.subr.bf16.mxu0 0
    %5378 = vmatpush1.bf16.msra.mxu0 %v5092
    %5379 = vmatprep.subr.bf16.mxu0 0
    %5380 = vmatpush1.bf16.msra.mxu0 %v5093
    %5381 = vmatprep.subr.bf16.mxu0 0
    %5382 = vmatpush1.bf16.msra.mxu0 %v5094
    %5383 = vmatprep.subr.bf16.mxu0 0
    %5384 = vmatpush1.bf16.msra.mxu0 %v5095
    %5385 = vmatprep.subr.bf16.mxu0 0
    %5386 = vmatpush1.bf16.msra.mxu0 %v5096
    %5387 = vmatprep.subr.bf16.mxu0 0
    %5388 = vmatpush1.bf16.msra.mxu0 %v5097
    %5389 = vmatprep.subr.bf16.mxu0 0
    %5390 = vmatpush1.bf16.msra.mxu0 %v5098
    %5391 = vmatprep.subr.bf16.mxu0 0
    %5392 = vmatpush1.bf16.msra.mxu0 %v5099
    %5393 = vmatprep.subr.bf16.mxu0 0
    %5394 = vmatpush1.bf16.msra.mxu0 %v5100
    %5395 = vmatprep.subr.bf16.mxu0 0
    %5396 = vmatpush1.bf16.msra.mxu0 %v5101
    %5397 = vmatprep.subr.bf16.mxu0 0
    %5398 = vmatpush1.bf16.msra.mxu0 %v5102
    %5399 = vmatprep.subr.bf16.mxu0 0
    %5400 = vmatpush1.bf16.msra.mxu0 %v5103
    %5401 = vmatprep.subr.bf16.mxu0 0
    %5402 = vmatpush1.bf16.msra.mxu0 %v5104
    %5403 = vmatprep.subr.bf16.mxu0 0
    %5404 = vmatpush1.bf16.msra.mxu0 %v5105
    %5405 = vmatprep.mubr.bf16.mxu0 %v4991
    %5406 = vmatmul.mubr.bf16.gmra.mrb[0].mxu0 %v4990
    %v5407 = vpop.f32.mrb[0].mxu0
    %v5408 = vadd.f32 %v5367, %v5407
    %v5409 = vpop.f32.mrb[0].mxu0
    %v5410 = vpop.f32.mrb[0].mxu0
    %v5411 = vadd.f32 %v5370, %v5410
    %v5412 = vpop.f32.mrb[0].mxu0
    %5413 = vdwg.mxu0
    %5414 = vmatprep.subr.bf16.mxu0 0
    %5415 = vmatpush1.bf16.msra.mxu0 %v5106
    %5416 = vmatprep.subr.bf16.mxu0 0
    %5417 = vmatpush1.bf16.msra.mxu0 %v5107
    %5418 = vmatprep.subr.bf16.mxu0 0
    %5419 = vmatpush1.bf16.msra.mxu0 %v5108
    %5420 = vmatprep.subr.bf16.mxu0 0
    %5421 = vmatpush1.bf16.msra.mxu0 %v5109
    %5422 = vmatprep.subr.bf16.mxu0 0
    %5423 = vmatpush1.bf16.msra.mxu0 %v5110
    %5424 = vmatprep.subr.bf16.mxu0 0
    %5425 = vmatpush1.bf16.msra.mxu0 %v5111
    %5426 = vmatprep.subr.bf16.mxu0 0
    %5427 = vmatpush1.bf16.msra.mxu0 %v5112
    %5428 = vmatprep.subr.bf16.mxu0 0
    %5429 = vmatpush1.bf16.msra.mxu0 %v5113
    %5430 = vmatprep.subr.bf16.mxu0 0
    %5431 = vmatpush1.bf16.msra.mxu0 %v5114
    %5432 = vmatprep.subr.bf16.mxu0 0
    %5433 = vmatpush1.bf16.msra.mxu0 %v5115
    %5434 = vmatprep.subr.bf16.mxu0 0
    %5435 = vmatpush1.bf16.msra.mxu0 %v5116
    %5436 = vmatprep.subr.bf16.mxu0 0
    %5437 = vmatpush1.bf16.msra.mxu0 %v5117
    %5438 = vmatprep.subr.bf16.mxu0 0
    %5439 = vmatpush1.bf16.msra.mxu0 %v5118
    %5440 = vmatprep.subr.bf16.mxu0 0
    %5441 = vmatpush1.bf16.msra.mxu0 %v5119
    %5442 = vmatprep.subr.bf16.mxu0 0
    %5443 = vmatpush1.bf16.msra.mxu0 %v5120
    %5444 = vmatprep.subr.bf16.mxu0 0
    %5445 = vmatpush1.bf16.msra.mxu0 %v5121
    %5446 = vmatprep.mubr.bf16.mxu0 %v4993
    %5447 = vmatmul.mubr.bf16.gmra.mrb[0].mxu0 %v4992
    %v5448 = vpop.f32.mrb[0].mxu0
    %v5449 = vadd.f32 %v5408, %v5448
    %v5450 = vpop.f32.mrb[0].mxu0
    %v5451 = vpop.f32.mrb[0].mxu0
    %v5452 = vadd.f32 %v5411, %v5451
    %v5453 = vpop.f32.mrb[0].mxu0
    %5454 = vdwg.mxu0
    %v5455 = vadd.f32 %v4385, %v5449
    %v5456 = vadd.f32 %v4386, %v5452
    %v5457 = vld [vmem:[%s9 + $0x14] sm:$0x1]
    %v5458 = vld [vmem:[%s9 + $0x15] sm:$0x1]
    %5459 = vadd.xlane.f32.xlu0 %v5455
    %v5460 = vpop.xlane.xlu0 %5459
    %5461 = vadd.xlane.f32.xlu0 %v5456
    %v5462 = vpop.xlane.xlu0 %5461
    %v5463 = vmul.f32 %v5460, %v174
    %v5464 = vmul.f32 %v5462, %v174
    %v5465 = vsub.f32 %v5455, %v5463
    %v5466 = vsub.f32 %v5456, %v5464
    %v5467 = vmul.f32 %v5465, %v5465
    %v5468 = vmul.f32 %v5466, %v5466
    %5469 = vadd.xlane.f32.xlu0 %v5467
    %v5470 = vpop.xlane.xlu0 %5469
    %5471 = vadd.xlane.f32.xlu0 %v5468
    %v5472 = vpop.xlane.xlu0 %5471
    %v5473 = vmul.f32 %v5470, %v174
    %v5474 = vmul.f32 %v5472, %v174
    %v5475 = vadd.f32 %v5473, 1e-05
    %v5476 = vadd.f32 %v5474, 1e-05
    %v5477 = vrsqrt.pop %v5475
    %v5478 = vrsqrt.pop %v5476
    %v5479 = vmul.f32 %v5465, %v5477
    %v5480 = vmul.f32 %v5466, %v5478
    %v5481 = vlaneseq
    %v5482 = vshrl.u32 %v5481, 7
    %v5483 = vsub.s32 0, %v5482
    %v5484 = vrot.slane %v5457, %v5483
    %v5485 = vmul.f32 %v5479, %v5484
    %v5486 = vmul.f32 %v5480, %v5484
    %v5487 = vlaneseq
    %v5488 = vshrl.u32 %v5487, 7
    %v5489 = vsub.s32 0, %v5488
    %v5490 = vrot.slane %v5458, %v5489
    %v5491 = vadd.f32 %v5485, %v5490
    %v5492 = vadd.f32 %v5486, %v5490
    %s5493 = scalar_lea.vmem [#allocation5], 576
    %v5494 = vld [vmem:[%s5493] sm:$0xff]
    %v5495 = vld [vmem:[%s5493 + $0x8] sm:$0xf]
    %v5496 = vld [vmem:[%s5493 + $0xc] sm:$0xff]
    %v5497 = vld [vmem:[%s5493 + $0x14] sm:$0xf]
    %v5498 = vld [vmem:[%s5493 + $0x18] sm:$0xff]
    %v5499 = vld [vmem:[%s5493 + $0x20] sm:$0xf]
    %v5500 = vld [vmem:[%s5493 + $0x24] sm:$0xff]
    %v5501 = vld [vmem:[%s5493 + $0x2c] sm:$0xf]
    %v5502 = vld [vmem:[%s5493 + $0x30] sm:$0xff]
    %v5503 = vld [vmem:[%s5493 + $0x38] sm:$0xf]
    %v5504 = vld [vmem:[%s5493 + $0x3c] sm:$0xff]
    %v5505 = vld [vmem:[%s5493 + $0x44] sm:$0xf]
    %v5506 = vld [vmem:[%s5493 + $0x48] sm:$0xff]
    %v5507 = vld [vmem:[%s5493 + $0x50] sm:$0xf]
    %v5508 = vld [vmem:[%s5493 + $0x54] sm:$0xff]
    %v5509 = vld [vmem:[%s5493 + $0x5c] sm:$0xf]
    %v5510 = vld [vmem:[%s5493 + $0x60] sm:$0xff]
    %v5511 = vld [vmem:[%s5493 + $0x68] sm:$0xf]
    %v5512 = vld [vmem:[%s5493 + $0x6c] sm:$0xff]
    %v5513 = vld [vmem:[%s5493 + $0x74] sm:$0xf]
    %v5514 = vld [vmem:[%s5493 + $0x78] sm:$0xff]
    %v5515 = vld [vmem:[%s5493 + $0x80] sm:$0xf]
    %v5516 = vld [vmem:[%s5493 + $0x84] sm:$0xff]
    %v5517 = vld [vmem:[%s5493 + $0x8c] sm:$0xf]
    %v5518 = vld [vmem:[%s5493 + $0x90] sm:$0xff]
    %v5519 = vld [vmem:[%s5493 + $0x98] sm:$0xf]
    %v5520 = vld [vmem:[%s5493 + $0x9c] sm:$0xff]
    %v5521 = vld [vmem:[%s5493 + $0xa4] sm:$0xf]
    %v5522 = vld [vmem:[%s5493 + $0xa8] sm:$0xff]
    %v5523 = vld [vmem:[%s5493 + $0xb0] sm:$0xf]
    %v5524 = vld [vmem:[%s5493 + $0xb4] sm:$0xff]
    %v5525 = vld [vmem:[%s5493 + $0xbc] sm:$0xf]
    %s5526 = scalar_lea.vmem [#allocation13], 3
    %v5527 = vld [vmem:[%s5526] ss:$4 sm:$0x7]
    %s5528 = scalar_lea.vmem %s3, 192
    %v5529 = vld [vmem:[%s5528] sm:$0xf]
    %v5530 = vld [vmem:[%s5528 + $0x4] sm:$0xf]
    %v5531 = vld [vmem:[%s5528 + $0x8] sm:$0xf]
    %v5532 = vld [vmem:[%s5528 + $0xc] sm:$0xf]
    %v5533 = vld [vmem:[%s5528 + $0x10] sm:$0xf]
    %v5534 = vld [vmem:[%s5528 + $0x14] sm:$0xf]
    %v5535 = vld [vmem:[%s5528 + $0x18] sm:$0xf]
    %v5536 = vld [vmem:[%s5528 + $0x1c] sm:$0xf]
    %v5537 = vld [vmem:[%s5528 + $0x20] sm:$0xf]
    %v5538 = vld [vmem:[%s5528 + $0x24] sm:$0xf]
    %v5539 = vld [vmem:[%s5528 + $0x28] sm:$0xf]
    %v5540 = vld [vmem:[%s5528 + $0x2c] sm:$0xf]
    %v5541 = vld [vmem:[%s5528 + $0x30] sm:$0xf]
    %v5542 = vld [vmem:[%s5528 + $0x34] sm:$0xf]
    %v5543 = vld [vmem:[%s5528 + $0x38] sm:$0xf]
    %v5544 = vld [vmem:[%s5528 + $0x3c] sm:$0xf]
    %v5545 = vld [vmem:[%s9 + $0x16] sm:$0x1]
    %v5546 = vpack.c.bf16 %v5492, %v5491
    %v5548 = vlaneseq
    %v5549 = vshrl.u32 %v5548, 7
    %v5550 = vsub.s32 0, %v5549
    %v5551 = vrot.slane %v5527, %v5550
    %v5552 = vlaneseq
    %v5553 = vshrl.u32 %v5552, 7
    %v5554 = vsub.s32 1, %v5553
    %v5555 = vrot.slane %v5527, %v5554
    %v5556 = vlaneseq
    %v5557 = vshrl.u32 %v5556, 7
    %v5558 = vsub.s32 2, %v5557
    %v5559 = vrot.slane %v5527, %v5558
    %v5595 = vunpack.c.l.b16 %v5494
    %v5596 = vunpack.c.h.b16 %v5494
    %v5597 = vunpack.c.l.b16 %v5495
    %v5598 = vunpack.c.l.b16 %v5496
    %v5599 = vunpack.c.h.b16 %v5496
    %v5600 = vunpack.c.l.b16 %v5497
    %v5601 = vunpack.c.l.b16 %v5498
    %v5602 = vunpack.c.h.b16 %v5498
    %v5603 = vunpack.c.l.b16 %v5499
    %v5604 = vunpack.c.l.b16 %v5500
    %v5605 = vunpack.c.h.b16 %v5500
    %v5606 = vunpack.c.l.b16 %v5501
    %v5607 = vunpack.c.l.b16 %v5502
    %v5608 = vunpack.c.h.b16 %v5502
    %v5609 = vunpack.c.l.b16 %v5503
    %v5610 = vunpack.c.l.b16 %v5504
    %v5611 = vunpack.c.h.b16 %v5504
    %v5612 = vunpack.c.l.b16 %v5505
    %v5613 = vunpack.c.l.b16 %v5506
    %v5614 = vunpack.c.h.b16 %v5506
    %v5615 = vunpack.c.l.b16 %v5507
    %v5616 = vunpack.c.l.b16 %v5508
    %v5617 = vunpack.c.h.b16 %v5508
    %v5618 = vunpack.c.l.b16 %v5509
    %v5619 = vunpack.c.l.b16 %v5510
    %v5620 = vunpack.c.h.b16 %v5510
    %v5621 = vunpack.c.l.b16 %v5511
    %v5622 = vunpack.c.l.b16 %v5512
    %v5623 = vunpack.c.h.b16 %v5512
    %v5624 = vunpack.c.l.b16 %v5513
    %v5625 = vunpack.c.l.b16 %v5514
    %v5626 = vunpack.c.h.b16 %v5514
    %v5627 = vunpack.c.l.b16 %v5515
    %v5628 = vunpack.c.l.b16 %v5516
    %v5629 = vunpack.c.h.b16 %v5516
    %v5630 = vunpack.c.l.b16 %v5517
    %v5631 = vunpack.c.l.b16 %v5518
    %v5632 = vunpack.c.h.b16 %v5518
    %v5633 = vunpack.c.l.b16 %v5519
    %v5634 = vunpack.c.l.b16 %v5520
    %v5635 = vunpack.c.h.b16 %v5520
    %v5636 = vunpack.c.l.b16 %v5521
    %v5637 = vunpack.c.l.b16 %v5522
    %v5638 = vunpack.c.h.b16 %v5522
    %v5639 = vunpack.c.l.b16 %v5523
    %v5640 = vunpack.c.l.b16 %v5524
    %v5641 = vunpack.c.h.b16 %v5524
    %v5642 = vunpack.c.l.b16 %v5525
    %v5643 = vpack.c.b16 %v5598, %v5595
    %v5644 = vpack.c.b16 %v5599, %v5596
    %v5645 = vpack.c.b16 %v5600, %v5597
    %v5646 = vpack.c.b16 %v5604, %v5601
    %v5647 = vpack.c.b16 %v5605, %v5602
    %v5648 = vpack.c.b16 %v5606, %v5603
    %v5649 = vpack.c.b16 %v5610, %v5607
    %v5650 = vpack.c.b16 %v5611, %v5608
    %v5651 = vpack.c.b16 %v5612, %v5609
    %v5652 = vpack.c.b16 %v5616, %v5613
    %v5653 = vpack.c.b16 %v5617, %v5614
    %v5654 = vpack.c.b16 %v5618, %v5615
    %v5655 = vpack.c.b16 %v5622, %v5619
    %v5656 = vpack.c.b16 %v5623, %v5620
    %v5657 = vpack.c.b16 %v5624, %v5621
    %v5658 = vpack.c.b16 %v5628, %v5625
    %v5659 = vpack.c.b16 %v5629, %v5626
    %v5660 = vpack.c.b16 %v5630, %v5627
    %v5661 = vpack.c.b16 %v5634, %v5631
    %v5662 = vpack.c.b16 %v5635, %v5632
    %v5663 = vpack.c.b16 %v5636, %v5633
    %v5664 = vpack.c.b16 %v5640, %v5637
    %v5665 = vpack.c.b16 %v5641, %v5638
    %v5666 = vpack.c.b16 %v5642, %v5639
    %5691 = vmatprep.subr.bf16.mxu0 %v5644
    %5692 = vmatpush1.bf16.msra.mxu0 %v5643
    %5693 = vmatprep.subr.bf16.mxu0 %v5647
    %5694 = vmatpush1.bf16.msra.mxu0 %v5646
    %5695 = vmatprep.subr.bf16.mxu0 %v5650
    %5696 = vmatpush1.bf16.msra.mxu0 %v5649
    %5697 = vmatprep.subr.bf16.mxu0 %v5653
    %5698 = vmatpush1.bf16.msra.mxu0 %v5652
    %5699 = vmatprep.subr.bf16.mxu0 %v5656
    %5700 = vmatpush1.bf16.msra.mxu0 %v5655
    %5701 = vmatprep.subr.bf16.mxu0 %v5659
    %5702 = vmatpush1.bf16.msra.mxu0 %v5658
    %5703 = vmatprep.subr.bf16.mxu0 %v5662
    %5704 = vmatpush1.bf16.msra.mxu0 %v5661
    %5705 = vmatprep.subr.bf16.mxu0 %v5665
    %5706 = vmatpush1.bf16.msra.mxu0 %v5664
    %5707 = vmatprep.subr.bf16.mxu0 0
    %5708 = vmatpush1.bf16.msra.mxu0 0
    %5709 = vmatprep.subr.bf16.mxu0 0
    %5710 = vmatpush1.bf16.msra.mxu0 0
    %5711 = vmatprep.subr.bf16.mxu0 0
    %5712 = vmatpush1.bf16.msra.mxu0 0
    %5713 = vmatprep.subr.bf16.mxu0 0
    %5714 = vmatpush1.bf16.msra.mxu0 0
    %5715 = vmatprep.subr.bf16.mxu0 0
    %5716 = vmatpush1.bf16.msra.mxu0 0
    %5717 = vmatprep.subr.bf16.mxu0 0
    %5718 = vmatpush1.bf16.msra.mxu0 0
    %5719 = vmatprep.subr.bf16.mxu0 0
    %5720 = vmatpush1.bf16.msra.mxu0 0
    %5721 = vmatprep.subr.bf16.mxu0 0
    %5722 = vmatpush1.bf16.msra.mxu0 0
    %5723 = vmatprep.mubr.bf16.mxu0 0
    %5724 = vmatmul.mubr.bf16.gmra.mrb[0].mxu0 %v5546
    %v5725 = vpop.f32.mrb[0].mxu0
    %v5726 = vadd.f32 %v5551, %v5725
    %v5727 = vpop.f32.mrb[0].mxu0
    %v5728 = vadd.f32 %v5555, %v5727
    %v5729 = vpop.f32.mrb[0].mxu0
    %v5730 = vadd.f32 %v5551, %v5729
    %v5731 = vpop.f32.mrb[0].mxu0
    %v5732 = vadd.f32 %v5555, %v5731
    %5733 = vdwg.mxu0
    %5734 = vmatprep.subr.bf16.mxu0 0
    %5735 = vmatpush1.bf16.msra.mxu0 %v5645
    %5736 = vmatprep.subr.bf16.mxu0 0
    %5737 = vmatpush1.bf16.msra.mxu0 %v5648
    %5738 = vmatprep.subr.bf16.mxu0 0
    %5739 = vmatpush1.bf16.msra.mxu0 %v5651
    %5740 = vmatprep.subr.bf16.mxu0 0
    %5741 = vmatpush1.bf16.msra.mxu0 %v5654
    %5742 = vmatprep.subr.bf16.mxu0 0
    %5743 = vmatpush1.bf16.msra.mxu0 %v5657
    %5744 = vmatprep.subr.bf16.mxu0 0
    %5745 = vmatpush1.bf16.msra.mxu0 %v5660
    %5746 = vmatprep.subr.bf16.mxu0 0
    %5747 = vmatpush1.bf16.msra.mxu0 %v5663
    %5748 = vmatprep.subr.bf16.mxu0 0
    %5749 = vmatpush1.bf16.msra.mxu0 %v5666
    %5750 = vmatprep.subr.bf16.mxu0 0
    %5751 = vmatpush1.bf16.msra.mxu0 0
    %5752 = vmatprep.subr.bf16.mxu0 0
    %5753 = vmatpush1.bf16.msra.mxu0 0
    %5754 = vmatprep.subr.bf16.mxu0 0
    %5755 = vmatpush1.bf16.msra.mxu0 0
    %5756 = vmatprep.subr.bf16.mxu0 0
    %5757 = vmatpush1.bf16.msra.mxu0 0
    %5758 = vmatprep.subr.bf16.mxu0 0
    %5759 = vmatpush1.bf16.msra.mxu0 0
    %5760 = vmatprep.subr.bf16.mxu0 0
    %5761 = vmatpush1.bf16.msra.mxu0 0
    %5762 = vmatprep.subr.bf16.mxu0 0
    %5763 = vmatpush1.bf16.msra.mxu0 0
    %5764 = vmatprep.subr.bf16.mxu0 0
    %5765 = vmatpush1.bf16.msra.mxu0 0
    %5766 = vmatprep.mubr.bf16.mxu0 0
    %5767 = vmatmul.mubr.bf16.gmra.mrb[0].mxu0 %v5546
    %v5768 = vpop.f32.mrb[0].mxu0
    %v5769 = vadd.f32 %v5559, %v5768
    %v5770 = vpop.f32.mrb[0].mxu0
    %v5771 = vpop.f32.mrb[0].mxu0
    %v5772 = vadd.f32 %v5559, %v5771
    %v5773 = vpop.f32.mrb[0].mxu0
    %5774 = vdwg.mxu0
    %v5775 = vpack.c.bf16 %v5726, %v5726
    %v5776 = vpack.c.bf16 %v5730, %v5730
    %v5777 = vpack.c.bf16 %v5728, %v5728
    %v5778 = vpack.c.bf16 %v5732, %v5732
    %v5780 = vsel %vm488, %v5775, 0
    %v5783 = vsel %vm488, %v5777, 0
    %5785 = vmatprep.subr.bf16.mxu0 0
    %5786 = vmatpush1.bf16.xpose.msra.mxu0 %v5783
    %5787 = vmatprep.subr.bf16.mxu0 0
    %5788 = vmatpush1.bf16.xpose.msra.mxu0 0
    %5789 = vmatprep.subr.bf16.mxu0 0
    %5790 = vmatpush1.bf16.xpose.msra.mxu0 0
    %5791 = vmatprep.subr.bf16.mxu0 0
    %5792 = vmatpush1.bf16.xpose.msra.mxu0 0
    %5793 = vmatprep.subr.bf16.mxu0 0
    %5794 = vmatpush1.bf16.xpose.msra.mxu0 0
    %5795 = vmatprep.subr.bf16.mxu0 0
    %5796 = vmatpush1.bf16.xpose.msra.mxu0 0
    %5797 = vmatprep.subr.bf16.mxu0 0
    %5798 = vmatpush1.bf16.xpose.msra.mxu0 0
    %5799 = vmatprep.subr.bf16.mxu0 0
    %5800 = vmatpush1.bf16.xpose.msra.mxu0 0
    %5801 = vmatprep.subr.bf16.mxu0 0
    %5802 = vmatpush1.bf16.xpose.msra.mxu0 0
    %5803 = vmatprep.subr.bf16.mxu0 0
    %5804 = vmatpush1.bf16.xpose.msra.mxu0 0
    %5805 = vmatprep.subr.bf16.mxu0 0
    %5806 = vmatpush1.bf16.xpose.msra.mxu0 0
    %5807 = vmatprep.subr.bf16.mxu0 0
    %5808 = vmatpush1.bf16.xpose.msra.mxu0 0
    %5809 = vmatprep.subr.bf16.mxu0 0
    %5810 = vmatpush1.bf16.xpose.msra.mxu0 0
    %5811 = vmatprep.subr.bf16.mxu0 0
    %5812 = vmatpush1.bf16.xpose.msra.mxu0 0
    %5813 = vmatprep.subr.bf16.mxu0 0
    %5814 = vmatpush1.bf16.xpose.msra.mxu0 0
    %5815 = vmatprep.subr.bf16.mxu0 0
    %5816 = vmatpush1.bf16.xpose.msra.mxu0 0
    %5817 = vmatprep.mubr.bf16.mxu0 0
    %5818 = vmatmul.mubr.bf16.gmra.mrb[0].mxu0 %v5780
    %v5819 = vpop.f32.mrb[0].mxu0
    %v5820 = vadd.f32 0.0, %v5819
    %v5821 = vpop.f32.mrb[0].mxu0
    %v5822 = vpop.f32.mrb[0].mxu0
    %v5823 = vpop.f32.mrb[0].mxu0
    %5824 = vdwg.mxu0
    %v5826 = vsel %vm488, %v5776, 0
    %v5829 = vsel %vm488, %v5778, 0
    %5831 = vmatprep.subr.bf16.mxu0 0
    %5832 = vmatpush1.bf16.xpose.msra.mxu0 %v5829
    %5833 = vmatprep.subr.bf16.mxu0 0
    %5834 = vmatpush1.bf16.xpose.msra.mxu0 0
    %5835 = vmatprep.subr.bf16.mxu0 0
    %5836 = vmatpush1.bf16.xpose.msra.mxu0 0
    %5837 = vmatprep.subr.bf16.mxu0 0
    %5838 = vmatpush1.bf16.xpose.msra.mxu0 0
    %5839 = vmatprep.subr.bf16.mxu0 0
    %5840 = vmatpush1.bf16.xpose.msra.mxu0 0
    %5841 = vmatprep.subr.bf16.mxu0 0
    %5842 = vmatpush1.bf16.xpose.msra.mxu0 0
    %5843 = vmatprep.subr.bf16.mxu0 0
    %5844 = vmatpush1.bf16.xpose.msra.mxu0 0
    %5845 = vmatprep.subr.bf16.mxu0 0
    %5846 = vmatpush1.bf16.xpose.msra.mxu0 0
    %5847 = vmatprep.subr.bf16.mxu0 0
    %5848 = vmatpush1.bf16.xpose.msra.mxu0 0
    %5849 = vmatprep.subr.bf16.mxu0 0
    %5850 = vmatpush1.bf16.xpose.msra.mxu0 0
    %5851 = vmatprep.subr.bf16.mxu0 0
    %5852 = vmatpush1.bf16.xpose.msra.mxu0 0
    %5853 = vmatprep.subr.bf16.mxu0 0
    %5854 = vmatpush1.bf16.xpose.msra.mxu0 0
    %5855 = vmatprep.subr.bf16.mxu0 0
    %5856 = vmatpush1.bf16.xpose.msra.mxu0 0
    %5857 = vmatprep.subr.bf16.mxu0 0
    %5858 = vmatpush1.bf16.xpose.msra.mxu0 0
    %5859 = vmatprep.subr.bf16.mxu0 0
    %5860 = vmatpush1.bf16.xpose.msra.mxu0 0
    %5861 = vmatprep.subr.bf16.mxu0 0
    %5862 = vmatpush1.bf16.xpose.msra.mxu0 0
    %5863 = vmatprep.mubr.bf16.mxu0 0
    %5864 = vmatmul.mubr.bf16.gmra.mrb[0].mxu0 %v5826
    %v5865 = vpop.f32.mrb[0].mxu0
    %v5866 = vadd.f32 0.0, %v5865
    %v5867 = vpop.f32.mrb[0].mxu0
    %v5868 = vpop.f32.mrb[0].mxu0
    %v5869 = vpop.f32.mrb[0].mxu0
    %5870 = vdwg.mxu0
    %v5871 = vmul.f32 %v5820, 0.125
    %v5872 = vmul.f32 %v5866, 0.125
    %v5873 = vadd.f32 %v5871, %v164
    %v5874 = vadd.f32 %v5872, %v165
    %v5875 = vsel %vm585, %v5873, -inf
    %5876 = vmax.xlane.f32.xlu0 %v5875
    %v5877 = vpop.xlane.xlu0 %5876
    %v5878 = vsel %vm585, %v5874, -inf
    %5879 = vmax.xlane.f32.xlu0 %v5878
    %v5880 = vpop.xlane.xlu0 %5879
    %v5881 = vsub.f32 %v5873, %v5877
    %v5882 = vsub.f32 %v5874, %v5880
    %v5883 = vmul.f32 %v5881, 1.442695
    %v5884 = vpow.pop %v5883
    %v5885 = vmul.f32 %v5882, 1.442695
    %v5886 = vpow.pop %v5885
    %v5887 = vsel %vm585, %v5884, 0.0
    %5888 = vadd.xlane.f32.xlu0 %v5887
    %v5889 = vpop.xlane.xlu0 %5888
    %v5890 = vsel %vm585, %v5886, 0.0
    %5891 = vadd.xlane.f32.xlu0 %v5890
    %v5892 = vpop.xlane.xlu0 %5891
    %v5893 = vrcp.pop %v5889
    %v5894 = vrcp.pop %v5892
    %v5895 = vmul.f32 %v5884, %v5893
    %v5896 = vmul.f32 %v5886, %v5894
    %v5897 = vpack.c.bf16 %v5895, %v5895
    %v5898 = vpack.c.bf16 %v5896, %v5896
    %v5899 = vpack.c.bf16 %v5769, %v5769
    %v5900 = vpack.c.bf16 %v5772, %v5772
    %v5902 = vsel %vm585, %v5897, 0
    %v5905 = vsel %vm615, %v5899, 0
    %5907 = vmatprep.subr.bf16.mxu0 0
    %5908 = vmatpush1.bf16.msra.mxu0 %v5905
    %5909 = vmatprep.subr.bf16.mxu0 0
    %5910 = vmatpush1.bf16.msra.mxu0 0
    %5911 = vmatprep.subr.bf16.mxu0 0
    %5912 = vmatpush1.bf16.msra.mxu0 0
    %5913 = vmatprep.subr.bf16.mxu0 0
    %5914 = vmatpush1.bf16.msra.mxu0 0
    %5915 = vmatprep.subr.bf16.mxu0 0
    %5916 = vmatpush1.bf16.msra.mxu0 0
    %5917 = vmatprep.subr.bf16.mxu0 0
    %5918 = vmatpush1.bf16.msra.mxu0 0
    %5919 = vmatprep.subr.bf16.mxu0 0
    %5920 = vmatpush1.bf16.msra.mxu0 0
    %5921 = vmatprep.subr.bf16.mxu0 0
    %5922 = vmatpush1.bf16.msra.mxu0 0
    %5923 = vmatprep.subr.bf16.mxu0 0
    %5924 = vmatpush1.bf16.msra.mxu0 0
    %5925 = vmatprep.subr.bf16.mxu0 0
    %5926 = vmatpush1.bf16.msra.mxu0 0
    %5927 = vmatprep.subr.bf16.mxu0 0
    %5928 = vmatpush1.bf16.msra.mxu0 0
    %5929 = vmatprep.subr.bf16.mxu0 0
    %5930 = vmatpush1.bf16.msra.mxu0 0
    %5931 = vmatprep.subr.bf16.mxu0 0
    %5932 = vmatpush1.bf16.msra.mxu0 0
    %5933 = vmatprep.subr.bf16.mxu0 0
    %5934 = vmatpush1.bf16.msra.mxu0 0
    %5935 = vmatprep.subr.bf16.mxu0 0
    %5936 = vmatpush1.bf16.msra.mxu0 0
    %5937 = vmatprep.subr.bf16.mxu0 0
    %5938 = vmatpush1.bf16.msra.mxu0 0
    %5939 = vmatprep.mubr.bf16.mxu0 0
    %5940 = vmatmul.mubr.bf16.gmra.mrb[0].mxu0 %v5902
    %v5941 = vpop.f32.mrb[0].mxu0
    %v5942 = vadd.f32 0.0, %v5941
    %v5943 = vpop.f32.mrb[0].mxu0
    %v5944 = vpop.f32.mrb[0].mxu0
    %v5945 = vpop.f32.mrb[0].mxu0
    %5946 = vdwg.mxu0
    %v5948 = vsel %vm585, %v5898, 0
    %v5951 = vsel %vm615, %v5900, 0
    %5953 = vmatprep.subr.bf16.mxu0 0
    %5954 = vmatpush1.bf16.msra.mxu0 %v5951
    %5955 = vmatprep.subr.bf16.mxu0 0
    %5956 = vmatpush1.bf16.msra.mxu0 0
    %5957 = vmatprep.subr.bf16.mxu0 0
    %5958 = vmatpush1.bf16.msra.mxu0 0
    %5959 = vmatprep.subr.bf16.mxu0 0
    %5960 = vmatpush1.bf16.msra.mxu0 0
    %5961 = vmatprep.subr.bf16.mxu0 0
    %5962 = vmatpush1.bf16.msra.mxu0 0
    %5963 = vmatprep.subr.bf16.mxu0 0
    %5964 = vmatpush1.bf16.msra.mxu0 0
    %5965 = vmatprep.subr.bf16.mxu0 0
    %5966 = vmatpush1.bf16.msra.mxu0 0
    %5967 = vmatprep.subr.bf16.mxu0 0
    %5968 = vmatpush1.bf16.msra.mxu0 0
    %5969 = vmatprep.subr.bf16.mxu0 0
    %5970 = vmatpush1.bf16.msra.mxu0 0
    %5971 = vmatprep.subr.bf16.mxu0 0
    %5972 = vmatpush1.bf16.msra.mxu0 0
    %5973 = vmatprep.subr.bf16.mxu0 0
    %5974 = vmatpush1.bf16.msra.mxu0 0
    %5975 = vmatprep.subr.bf16.mxu0 0
    %5976 = vmatpush1.bf16.msra.mxu0 0
    %5977 = vmatprep.subr.bf16.mxu0 0
    %5978 = vmatpush1.bf16.msra.mxu0 0
    %5979 = vmatprep.subr.bf16.mxu0 0
    %5980 = vmatpush1.bf16.msra.mxu0 0
    %5981 = vmatprep.subr.bf16.mxu0 0
    %5982 = vmatpush1.bf16.msra.mxu0 0
    %5983 = vmatprep.subr.bf16.mxu0 0
    %5984 = vmatpush1.bf16.msra.mxu0 0
    %5985 = vmatprep.mubr.bf16.mxu0 0
    %5986 = vmatmul.mubr.bf16.gmra.mrb[0].mxu0 %v5948
    %v5987 = vpop.f32.mrb[0].mxu0
    %v5988 = vadd.f32 0.0, %v5987
    %v5989 = vpop.f32.mrb[0].mxu0
    %v5990 = vpop.f32.mrb[0].mxu0
    %v5991 = vpop.f32.mrb[0].mxu0
    %5992 = vdwg.mxu0
    %5994 = vrot.lane.b32.xlu0 %v5775, 64
    %v5995 = vpop.permute.xlu0 %5994
    %5997 = vrot.lane.b32.xlu0 %v5777, 64
    %v5998 = vpop.permute.xlu0 %5997
    %v6000 = vsel %vm488, %v5995, 0
    %v6003 = vsel %vm488, %v5998, 0
    %6005 = vmatprep.subr.bf16.mxu0 0
    %6006 = vmatpush1.bf16.xpose.msra.mxu0 %v6003
    %6007 = vmatprep.subr.bf16.mxu0 0
    %6008 = vmatpush1.bf16.xpose.msra.mxu0 0
    %6009 = vmatprep.subr.bf16.mxu0 0
    %6010 = vmatpush1.bf16.xpose.msra.mxu0 0
    %6011 = vmatprep.subr.bf16.mxu0 0
    %6012 = vmatpush1.bf16.xpose.msra.mxu0 0
    %6013 = vmatprep.subr.bf16.mxu0 0
    %6014 = vmatpush1.bf16.xpose.msra.mxu0 0
    %6015 = vmatprep.subr.bf16.mxu0 0
    %6016 = vmatpush1.bf16.xpose.msra.mxu0 0
    %6017 = vmatprep.subr.bf16.mxu0 0
    %6018 = vmatpush1.bf16.xpose.msra.mxu0 0
    %6019 = vmatprep.subr.bf16.mxu0 0
    %6020 = vmatpush1.bf16.xpose.msra.mxu0 0
    %6021 = vmatprep.subr.bf16.mxu0 0
    %6022 = vmatpush1.bf16.xpose.msra.mxu0 0
    %6023 = vmatprep.subr.bf16.mxu0 0
    %6024 = vmatpush1.bf16.xpose.msra.mxu0 0
    %6025 = vmatprep.subr.bf16.mxu0 0
    %6026 = vmatpush1.bf16.xpose.msra.mxu0 0
    %6027 = vmatprep.subr.bf16.mxu0 0
    %6028 = vmatpush1.bf16.xpose.msra.mxu0 0
    %6029 = vmatprep.subr.bf16.mxu0 0
    %6030 = vmatpush1.bf16.xpose.msra.mxu0 0
    %6031 = vmatprep.subr.bf16.mxu0 0
    %6032 = vmatpush1.bf16.xpose.msra.mxu0 0
    %6033 = vmatprep.subr.bf16.mxu0 0
    %6034 = vmatpush1.bf16.xpose.msra.mxu0 0
    %6035 = vmatprep.subr.bf16.mxu0 0
    %6036 = vmatpush1.bf16.xpose.msra.mxu0 0
    %6037 = vmatprep.mubr.bf16.mxu0 0
    %6038 = vmatmul.mubr.bf16.gmra.mrb[0].mxu0 %v6000
    %v6039 = vpop.f32.mrb[0].mxu0
    %v6040 = vadd.f32 0.0, %v6039
    %v6041 = vpop.f32.mrb[0].mxu0
    %v6042 = vpop.f32.mrb[0].mxu0
    %v6043 = vpop.f32.mrb[0].mxu0
    %6044 = vdwg.mxu0
    %6046 = vrot.lane.b32.xlu0 %v5776, 64
    %v6047 = vpop.permute.xlu0 %6046
    %6049 = vrot.lane.b32.xlu0 %v5778, 64
    %v6050 = vpop.permute.xlu0 %6049
    %v6052 = vsel %vm488, %v6047, 0
    %v6055 = vsel %vm488, %v6050, 0
    %6057 = vmatprep.subr.bf16.mxu0 0
    %6058 = vmatpush1.bf16.xpose.msra.mxu0 %v6055
    %6059 = vmatprep.subr.bf16.mxu0 0
    %6060 = vmatpush1.bf16.xpose.msra.mxu0 0
    %6061 = vmatprep.subr.bf16.mxu0 0
    %6062 = vmatpush1.bf16.xpose.msra.mxu0 0
    %6063 = vmatprep.subr.bf16.mxu0 0
    %6064 = vmatpush1.bf16.xpose.msra.mxu0 0
    %6065 = vmatprep.subr.bf16.mxu0 0
    %6066 = vmatpush1.bf16.xpose.msra.mxu0 0
    %6067 = vmatprep.subr.bf16.mxu0 0
    %6068 = vmatpush1.bf16.xpose.msra.mxu0 0
    %6069 = vmatprep.subr.bf16.mxu0 0
    %6070 = vmatpush1.bf16.xpose.msra.mxu0 0
    %6071 = vmatprep.subr.bf16.mxu0 0
    %6072 = vmatpush1.bf16.xpose.msra.mxu0 0
    %6073 = vmatprep.subr.bf16.mxu0 0
    %6074 = vmatpush1.bf16.xpose.msra.mxu0 0
    %6075 = vmatprep.subr.bf16.mxu0 0
    %6076 = vmatpush1.bf16.xpose.msra.mxu0 0
    %6077 = vmatprep.subr.bf16.mxu0 0
    %6078 = vmatpush1.bf16.xpose.msra.mxu0 0
    %6079 = vmatprep.subr.bf16.mxu0 0
    %6080 = vmatpush1.bf16.xpose.msra.mxu0 0
    %6081 = vmatprep.subr.bf16.mxu0 0
    %6082 = vmatpush1.bf16.xpose.msra.mxu0 0
    %6083 = vmatprep.subr.bf16.mxu0 0
    %6084 = vmatpush1.bf16.xpose.msra.mxu0 0
    %6085 = vmatprep.subr.bf16.mxu0 0
    %6086 = vmatpush1.bf16.xpose.msra.mxu0 0
    %6087 = vmatprep.subr.bf16.mxu0 0
    %6088 = vmatpush1.bf16.xpose.msra.mxu0 0
    %6089 = vmatprep.mubr.bf16.mxu0 0
    %6090 = vmatmul.mubr.bf16.gmra.mrb[0].mxu0 %v6052
    %v6091 = vpop.f32.mrb[0].mxu0
    %v6092 = vadd.f32 0.0, %v6091
    %v6093 = vpop.f32.mrb[0].mxu0
    %v6094 = vpop.f32.mrb[0].mxu0
    %v6095 = vpop.f32.mrb[0].mxu0
    %6096 = vdwg.mxu0
    %v6097 = vmul.f32 %v6040, 0.125
    %v6098 = vmul.f32 %v6092, 0.125
    %v6099 = vadd.f32 %v6097, %v164
    %v6100 = vadd.f32 %v6098, %v165
    %v6101 = vsel %vm585, %v6099, -inf
    %6102 = vmax.xlane.f32.xlu0 %v6101
    %v6103 = vpop.xlane.xlu0 %6102
    %v6104 = vsel %vm585, %v6100, -inf
    %6105 = vmax.xlane.f32.xlu0 %v6104
    %v6106 = vpop.xlane.xlu0 %6105
    %v6107 = vsub.f32 %v6099, %v6103
    %v6108 = vsub.f32 %v6100, %v6106
    %v6109 = vmul.f32 %v6107, 1.442695
    %v6110 = vpow.pop %v6109
    %v6111 = vmul.f32 %v6108, 1.442695
    %v6112 = vpow.pop %v6111
    %v6113 = vsel %vm585, %v6110, 0.0
    %6114 = vadd.xlane.f32.xlu0 %v6113
    %v6115 = vpop.xlane.xlu0 %6114
    %v6116 = vsel %vm585, %v6112, 0.0
    %6117 = vadd.xlane.f32.xlu0 %v6116
    %v6118 = vpop.xlane.xlu0 %6117
    %v6119 = vrcp.pop %v6115
    %v6120 = vrcp.pop %v6118
    %v6121 = vmul.f32 %v6110, %v6119
    %v6122 = vmul.f32 %v6112, %v6120
    %v6123 = vpack.c.bf16 %v6121, %v6121
    %v6124 = vpack.c.bf16 %v6122, %v6122
    %6126 = vrot.lane.b32.xlu0 %v5899, 64
    %v6127 = vpop.permute.xlu0 %6126
    %v6129 = vsel %vm585, %v6123, 0
    %v6132 = vsel %vm615, %v6127, 0
    %6134 = vmatprep.subr.bf16.mxu0 0
    %6135 = vmatpush1.bf16.msra.mxu0 %v6132
    %6136 = vmatprep.subr.bf16.mxu0 0
    %6137 = vmatpush1.bf16.msra.mxu0 0
    %6138 = vmatprep.subr.bf16.mxu0 0
    %6139 = vmatpush1.bf16.msra.mxu0 0
    %6140 = vmatprep.subr.bf16.mxu0 0
    %6141 = vmatpush1.bf16.msra.mxu0 0
    %6142 = vmatprep.subr.bf16.mxu0 0
    %6143 = vmatpush1.bf16.msra.mxu0 0
    %6144 = vmatprep.subr.bf16.mxu0 0
    %6145 = vmatpush1.bf16.msra.mxu0 0
    %6146 = vmatprep.subr.bf16.mxu0 0
    %6147 = vmatpush1.bf16.msra.mxu0 0
    %6148 = vmatprep.subr.bf16.mxu0 0
    %6149 = vmatpush1.bf16.msra.mxu0 0
    %6150 = vmatprep.subr.bf16.mxu0 0
    %6151 = vmatpush1.bf16.msra.mxu0 0
    %6152 = vmatprep.subr.bf16.mxu0 0
    %6153 = vmatpush1.bf16.msra.mxu0 0
    %6154 = vmatprep.subr.bf16.mxu0 0
    %6155 = vmatpush1.bf16.msra.mxu0 0
    %6156 = vmatprep.subr.bf16.mxu0 0
    %6157 = vmatpush1.bf16.msra.mxu0 0
    %6158 = vmatprep.subr.bf16.mxu0 0
    %6159 = vmatpush1.bf16.msra.mxu0 0
    %6160 = vmatprep.subr.bf16.mxu0 0
    %6161 = vmatpush1.bf16.msra.mxu0 0
    %6162 = vmatprep.subr.bf16.mxu0 0
    %6163 = vmatpush1.bf16.msra.mxu0 0
    %6164 = vmatprep.subr.bf16.mxu0 0
    %6165 = vmatpush1.bf16.msra.mxu0 0
    %6166 = vmatprep.mubr.bf16.mxu0 0
    %6167 = vmatmul.mubr.bf16.gmra.mrb[0].mxu0 %v6129
    %v6168 = vpop.f32.mrb[0].mxu0
    %v6169 = vadd.f32 0.0, %v6168
    %v6170 = vpop.f32.mrb[0].mxu0
    %v6171 = vpop.f32.mrb[0].mxu0
    %v6172 = vpop.f32.mrb[0].mxu0
    %6173 = vdwg.mxu0
    %6175 = vrot.lane.b32.xlu0 %v5900, 64
    %v6176 = vpop.permute.xlu0 %6175
    %v6178 = vsel %vm585, %v6124, 0
    %v6181 = vsel %vm615, %v6176, 0
    %6183 = vmatprep.subr.bf16.mxu0 0
    %6184 = vmatpush1.bf16.msra.mxu0 %v6181
    %6185 = vmatprep.subr.bf16.mxu0 0
    %6186 = vmatpush1.bf16.msra.mxu0 0
    %6187 = vmatprep.subr.bf16.mxu0 0
    %6188 = vmatpush1.bf16.msra.mxu0 0
    %6189 = vmatprep.subr.bf16.mxu0 0
    %6190 = vmatpush1.bf16.msra.mxu0 0
    %6191 = vmatprep.subr.bf16.mxu0 0
    %6192 = vmatpush1.bf16.msra.mxu0 0
    %6193 = vmatprep.subr.bf16.mxu0 0
    %6194 = vmatpush1.bf16.msra.mxu0 0
    %6195 = vmatprep.subr.bf16.mxu0 0
    %6196 = vmatpush1.bf16.msra.mxu0 0
    %6197 = vmatprep.subr.bf16.mxu0 0
    %6198 = vmatpush1.bf16.msra.mxu0 0
    %6199 = vmatprep.subr.bf16.mxu0 0
    %6200 = vmatpush1.bf16.msra.mxu0 0
    %6201 = vmatprep.subr.bf16.mxu0 0
    %6202 = vmatpush1.bf16.msra.mxu0 0
    %6203 = vmatprep.subr.bf16.mxu0 0
    %6204 = vmatpush1.bf16.msra.mxu0 0
    %6205 = vmatprep.subr.bf16.mxu0 0
    %6206 = vmatpush1.bf16.msra.mxu0 0
    %6207 = vmatprep.subr.bf16.mxu0 0
    %6208 = vmatpush1.bf16.msra.mxu0 0
    %6209 = vmatprep.subr.bf16.mxu0 0
    %6210 = vmatpush1.bf16.msra.mxu0 0
    %6211 = vmatprep.subr.bf16.mxu0 0
    %6212 = vmatpush1.bf16.msra.mxu0 0
    %6213 = vmatprep.subr.bf16.mxu0 0
    %6214 = vmatpush1.bf16.msra.mxu0 0
    %6215 = vmatprep.mubr.bf16.mxu0 0
    %6216 = vmatmul.mubr.bf16.gmra.mrb[0].mxu0 %v6178
    %v6217 = vpop.f32.mrb[0].mxu0
    %v6218 = vadd.f32 0.0, %v6217
    %v6219 = vpop.f32.mrb[0].mxu0
    %v6220 = vpop.f32.mrb[0].mxu0
    %v6221 = vpop.f32.mrb[0].mxu0
    %6222 = vdwg.mxu0
    %6225 = vrot.lane.b32.xlu0 %v6169, 64
    %v6226 = vpop.permute.xlu0 %6225
    %6227 = vrot.lane.b32.xlu0 %v6218, 64
    %v6228 = vpop.permute.xlu0 %6227
    %v6231 = vsel %vm488, %v5942, %v6226
    %v6232 = vsel %vm488, %v5988, %v6228
    %v6233 = vpack.c.bf16 %v6232, %v6231
    %v6234 = vlaneseq
    %v6235 = vshrl.u32 %v6234, 7
    %v6236 = vsub.s32 0, %v6235
    %v6237 = vrot.slane %v5545, %v6236
    %v6254 = vunpack.c.l.b16 %v5529
    %v6255 = vunpack.c.l.b16 %v5530
    %v6256 = vunpack.c.l.b16 %v5531
    %v6257 = vunpack.c.l.b16 %v5532
    %v6258 = vunpack.c.l.b16 %v5533
    %v6259 = vunpack.c.l.b16 %v5534
    %v6260 = vunpack.c.l.b16 %v5535
    %v6261 = vunpack.c.l.b16 %v5536
    %v6262 = vunpack.c.l.b16 %v5537
    %v6263 = vunpack.c.l.b16 %v5538
    %v6264 = vunpack.c.l.b16 %v5539
    %v6265 = vunpack.c.l.b16 %v5540
    %v6266 = vunpack.c.l.b16 %v5541
    %v6267 = vunpack.c.l.b16 %v5542
    %v6268 = vunpack.c.l.b16 %v5543
    %v6269 = vunpack.c.l.b16 %v5544
    %v6270 = vpack.c.b16 %v6255, %v6254
    %v6271 = vpack.c.b16 %v6257, %v6256
    %v6272 = vpack.c.b16 %v6259, %v6258
    %v6273 = vpack.c.b16 %v6261, %v6260
    %v6274 = vpack.c.b16 %v6263, %v6262
    %v6275 = vpack.c.b16 %v6265, %v6264
    %v6276 = vpack.c.b16 %v6267, %v6266
    %v6277 = vpack.c.b16 %v6269, %v6268
    %6286 = vmatprep.subr.bf16.mxu0 0
    %6287 = vmatpush1.bf16.msra.mxu0 %v6270
    %6288 = vmatprep.subr.bf16.mxu0 0
    %6289 = vmatpush1.bf16.msra.mxu0 %v6271
    %6290 = vmatprep.subr.bf16.mxu0 0
    %6291 = vmatpush1.bf16.msra.mxu0 %v6272
    %6292 = vmatprep.subr.bf16.mxu0 0
    %6293 = vmatpush1.bf16.msra.mxu0 %v6273
    %6294 = vmatprep.subr.bf16.mxu0 0
    %6295 = vmatpush1.bf16.msra.mxu0 %v6274
    %6296 = vmatprep.subr.bf16.mxu0 0
    %6297 = vmatpush1.bf16.msra.mxu0 %v6275
    %6298 = vmatprep.subr.bf16.mxu0 0
    %6299 = vmatpush1.bf16.msra.mxu0 %v6276
    %6300 = vmatprep.subr.bf16.mxu0 0
    %6301 = vmatpush1.bf16.msra.mxu0 %v6277
    %6302 = vmatprep.subr.bf16.mxu0 0
    %6303 = vmatpush1.bf16.msra.mxu0 0
    %6304 = vmatprep.subr.bf16.mxu0 0
    %6305 = vmatpush1.bf16.msra.mxu0 0
    %6306 = vmatprep.subr.bf16.mxu0 0
    %6307 = vmatpush1.bf16.msra.mxu0 0
    %6308 = vmatprep.subr.bf16.mxu0 0
    %6309 = vmatpush1.bf16.msra.mxu0 0
    %6310 = vmatprep.subr.bf16.mxu0 0
    %6311 = vmatpush1.bf16.msra.mxu0 0
    %6312 = vmatprep.subr.bf16.mxu0 0
    %6313 = vmatpush1.bf16.msra.mxu0 0
    %6314 = vmatprep.subr.bf16.mxu0 0
    %6315 = vmatpush1.bf16.msra.mxu0 0
    %6316 = vmatprep.subr.bf16.mxu0 0
    %6317 = vmatpush1.bf16.msra.mxu0 0
    %6318 = vmatprep.mubr.bf16.mxu0 0
    %6319 = vmatmul.mubr.bf16.gmra.mrb[0].mxu0 %v6233
    %v6320 = vpop.f32.mrb[0].mxu0
    %v6321 = vadd.f32 %v6237, %v6320
    %v6322 = vpop.f32.mrb[0].mxu0
    %v6323 = vpop.f32.mrb[0].mxu0
    %v6324 = vadd.f32 %v6237, %v6323
    %v6325 = vpop.f32.mrb[0].mxu0
    %6326 = vdwg.mxu0
    %v6327 = vadd.f32 %v5491, %v6321
    %v6328 = vadd.f32 %v5492, %v6324
    %v6329 = vld [vmem:[%s9 + $0x17] sm:$0x1]
    %v6330 = vld [vmem:[%s9 + $0x18] sm:$0x1]
    %6331 = vadd.xlane.f32.xlu0 %v6327
    %v6332 = vpop.xlane.xlu0 %6331
    %6333 = vadd.xlane.f32.xlu0 %v6328
    %v6334 = vpop.xlane.xlu0 %6333
    %v6335 = vmul.f32 %v6332, %v174
    %v6336 = vmul.f32 %v6334, %v174
    %v6337 = vsub.f32 %v6327, %v6335
    %v6338 = vsub.f32 %v6328, %v6336
    %v6339 = vmul.f32 %v6337, %v6337
    %v6340 = vmul.f32 %v6338, %v6338
    %6341 = vadd.xlane.f32.xlu0 %v6339
    %v6342 = vpop.xlane.xlu0 %6341
    %6343 = vadd.xlane.f32.xlu0 %v6340
    %v6344 = vpop.xlane.xlu0 %6343
    %v6345 = vmul.f32 %v6342, %v174
    %v6346 = vmul.f32 %v6344, %v174
    %v6347 = vadd.f32 %v6345, 1e-05
    %v6348 = vadd.f32 %v6346, 1e-05
    %v6349 = vrsqrt.pop %v6347
    %v6350 = vrsqrt.pop %v6348
    %v6351 = vmul.f32 %v6337, %v6349
    %v6352 = vmul.f32 %v6338, %v6350
    %v6353 = vlaneseq
    %v6354 = vshrl.u32 %v6353, 7
    %v6355 = vsub.s32 0, %v6354
    %v6356 = vrot.slane %v6329, %v6355
    %v6357 = vmul.f32 %v6351, %v6356
    %v6358 = vmul.f32 %v6352, %v6356
    %v6359 = vlaneseq
    %v6360 = vshrl.u32 %v6359, 7
    %v6361 = vsub.s32 0, %v6360
    %v6362 = vrot.slane %v6330, %v6361
    %v6363 = vadd.f32 %v6357, %v6362
    %v6364 = vadd.f32 %v6358, %v6362
    %v6365 = vpack.c.bf16 %v6364, %v6363
    %s6366 = scalar_lea.vmem [#allocation2], 1024
    %v6367 = vld [vmem:[%s6366] sm:$0xff]
    %v6368 = vld [vmem:[%s6366 + $0x8] sm:$0xff]
    %v6369 = vld [vmem:[%s6366 + $0x10] sm:$0xff]
    %v6370 = vld [vmem:[%s6366 + $0x18] sm:$0xff]
    %v6371 = vld [vmem:[%s6366 + $0x20] sm:$0xff]
    %v6372 = vld [vmem:[%s6366 + $0x28] sm:$0xff]
    %v6373 = vld [vmem:[%s6366 + $0x30] sm:$0xff]
    %v6374 = vld [vmem:[%s6366 + $0x38] sm:$0xff]
    %v6375 = vld [vmem:[%s6366 + $0x40] sm:$0xff]
    %v6376 = vld [vmem:[%s6366 + $0x48] sm:$0xff]
    %v6377 = vld [vmem:[%s6366 + $0x50] sm:$0xff]
    %v6378 = vld [vmem:[%s6366 + $0x58] sm:$0xff]
    %v6379 = vld [vmem:[%s6366 + $0x60] sm:$0xff]
    %v6380 = vld [vmem:[%s6366 + $0x68] sm:$0xff]
    %v6381 = vld [vmem:[%s6366 + $0x70] sm:$0xff]
    %v6382 = vld [vmem:[%s6366 + $0x78] sm:$0xff]
    %v6383 = vld [vmem:[%s6366 + $0x80] sm:$0xff]
    %v6384 = vld [vmem:[%s6366 + $0x88] sm:$0xff]
    %v6385 = vld [vmem:[%s6366 + $0x90] sm:$0xff]
    %v6386 = vld [vmem:[%s6366 + $0x98] sm:$0xff]
    %v6387 = vld [vmem:[%s6366 + $0xa0] sm:$0xff]
    %v6388 = vld [vmem:[%s6366 + $0xa8] sm:$0xff]
    %v6389 = vld [vmem:[%s6366 + $0xb0] sm:$0xff]
    %v6390 = vld [vmem:[%s6366 + $0xb8] sm:$0xff]
    %v6391 = vld [vmem:[%s6366 + $0xc0] sm:$0xff]
    %v6392 = vld [vmem:[%s6366 + $0xc8] sm:$0xff]
    %v6393 = vld [vmem:[%s6366 + $0xd0] sm:$0xff]
    %v6394 = vld [vmem:[%s6366 + $0xd8] sm:$0xff]
    %v6395 = vld [vmem:[%s6366 + $0xe0] sm:$0xff]
    %v6396 = vld [vmem:[%s6366 + $0xe8] sm:$0xff]
    %v6397 = vld [vmem:[%s6366 + $0xf0] sm:$0xff]
    %v6398 = vld [vmem:[%s6366 + $0xf8] sm:$0xff]
    %v6399 = vld [vmem:[%s6366 + $0x100] sm:$0xff]
    %v6400 = vld [vmem:[%s6366 + $0x108] sm:$0xff]
    %v6401 = vld [vmem:[%s6366 + $0x110] sm:$0xff]
    %v6402 = vld [vmem:[%s6366 + $0x118] sm:$0xff]
    %v6403 = vld [vmem:[%s6366 + $0x120] sm:$0xff]
    %v6404 = vld [vmem:[%s6366 + $0x128] sm:$0xff]
    %v6405 = vld [vmem:[%s6366 + $0x130] sm:$0xff]
    %v6406 = vld [vmem:[%s6366 + $0x138] sm:$0xff]
    %v6407 = vld [vmem:[%s6366 + $0x140] sm:$0xff]
    %v6408 = vld [vmem:[%s6366 + $0x148] sm:$0xff]
    %v6409 = vld [vmem:[%s6366 + $0x150] sm:$0xff]
    %v6410 = vld [vmem:[%s6366 + $0x158] sm:$0xff]
    %v6411 = vld [vmem:[%s6366 + $0x160] sm:$0xff]
    %v6412 = vld [vmem:[%s6366 + $0x168] sm:$0xff]
    %v6413 = vld [vmem:[%s6366 + $0x170] sm:$0xff]
    %v6414 = vld [vmem:[%s6366 + $0x178] sm:$0xff]
    %v6415 = vld [vmem:[%s6366 + $0x180] sm:$0xff]
    %v6416 = vld [vmem:[%s6366 + $0x188] sm:$0xff]
    %v6417 = vld [vmem:[%s6366 + $0x190] sm:$0xff]
    %v6418 = vld [vmem:[%s6366 + $0x198] sm:$0xff]
    %v6419 = vld [vmem:[%s6366 + $0x1a0] sm:$0xff]
    %v6420 = vld [vmem:[%s6366 + $0x1a8] sm:$0xff]
    %v6421 = vld [vmem:[%s6366 + $0x1b0] sm:$0xff]
    %v6422 = vld [vmem:[%s6366 + $0x1b8] sm:$0xff]
    %v6423 = vld [vmem:[%s6366 + $0x1c0] sm:$0xff]
    %v6424 = vld [vmem:[%s6366 + $0x1c8] sm:$0xff]
    %v6425 = vld [vmem:[%s6366 + $0x1d0] sm:$0xff]
    %v6426 = vld [vmem:[%s6366 + $0x1d8] sm:$0xff]
    %v6427 = vld [vmem:[%s6366 + $0x1e0] sm:$0xff]
    %v6428 = vld [vmem:[%s6366 + $0x1e8] sm:$0xff]
    %v6429 = vld [vmem:[%s6366 + $0x1f0] sm:$0xff]
    %v6430 = vld [vmem:[%s6366 + $0x1f8] sm:$0xff]
    %v6431 = vld [vmem:[%s6366 + $0x200] sm:$0xff]
    %v6432 = vld [vmem:[%s6366 + $0x208] sm:$0xff]
    %v6433 = vld [vmem:[%s6366 + $0x210] sm:$0xff]
    %v6434 = vld [vmem:[%s6366 + $0x218] sm:$0xff]
    %v6435 = vld [vmem:[%s6366 + $0x220] sm:$0xff]
    %v6436 = vld [vmem:[%s6366 + $0x228] sm:$0xff]
    %v6437 = vld [vmem:[%s6366 + $0x230] sm:$0xff]
    %v6438 = vld [vmem:[%s6366 + $0x238] sm:$0xff]
    %v6439 = vld [vmem:[%s6366 + $0x240] sm:$0xff]
    %v6440 = vld [vmem:[%s6366 + $0x248] sm:$0xff]
    %v6441 = vld [vmem:[%s6366 + $0x250] sm:$0xff]
    %v6442 = vld [vmem:[%s6366 + $0x258] sm:$0xff]
    %v6443 = vld [vmem:[%s6366 + $0x260] sm:$0xff]
    %v6444 = vld [vmem:[%s6366 + $0x268] sm:$0xff]
    %v6445 = vld [vmem:[%s6366 + $0x270] sm:$0xff]
    %v6446 = vld [vmem:[%s6366 + $0x278] sm:$0xff]
    %v6447 = vld [vmem:[%s6366 + $0x280] sm:$0xff]
    %v6448 = vld [vmem:[%s6366 + $0x288] sm:$0xff]
    %v6449 = vld [vmem:[%s6366 + $0x290] sm:$0xff]
    %v6450 = vld [vmem:[%s6366 + $0x298] sm:$0xff]
    %v6451 = vld [vmem:[%s6366 + $0x2a0] sm:$0xff]
    %v6452 = vld [vmem:[%s6366 + $0x2a8] sm:$0xff]
    %v6453 = vld [vmem:[%s6366 + $0x2b0] sm:$0xff]
    %v6454 = vld [vmem:[%s6366 + $0x2b8] sm:$0xff]
    %v6455 = vld [vmem:[%s6366 + $0x2c0] sm:$0xff]
    %v6456 = vld [vmem:[%s6366 + $0x2c8] sm:$0xff]
    %v6457 = vld [vmem:[%s6366 + $0x2d0] sm:$0xff]
    %v6458 = vld [vmem:[%s6366 + $0x2d8] sm:$0xff]
    %v6459 = vld [vmem:[%s6366 + $0x2e0] sm:$0xff]
    %v6460 = vld [vmem:[%s6366 + $0x2e8] sm:$0xff]
    %v6461 = vld [vmem:[%s6366 + $0x2f0] sm:$0xff]
    %v6462 = vld [vmem:[%s6366 + $0x2f8] sm:$0xff]
    %v6463 = vld [vmem:[%s6366 + $0x300] sm:$0xff]
    %v6464 = vld [vmem:[%s6366 + $0x308] sm:$0xff]
    %v6465 = vld [vmem:[%s6366 + $0x310] sm:$0xff]
    %v6466 = vld [vmem:[%s6366 + $0x318] sm:$0xff]
    %v6467 = vld [vmem:[%s6366 + $0x320] sm:$0xff]
    %v6468 = vld [vmem:[%s6366 + $0x328] sm:$0xff]
    %v6469 = vld [vmem:[%s6366 + $0x330] sm:$0xff]
    %v6470 = vld [vmem:[%s6366 + $0x338] sm:$0xff]
    %v6471 = vld [vmem:[%s6366 + $0x340] sm:$0xff]
    %v6472 = vld [vmem:[%s6366 + $0x348] sm:$0xff]
    %v6473 = vld [vmem:[%s6366 + $0x350] sm:$0xff]
    %v6474 = vld [vmem:[%s6366 + $0x358] sm:$0xff]
    %v6475 = vld [vmem:[%s6366 + $0x360] sm:$0xff]
    %v6476 = vld [vmem:[%s6366 + $0x368] sm:$0xff]
    %v6477 = vld [vmem:[%s6366 + $0x370] sm:$0xff]
    %v6478 = vld [vmem:[%s6366 + $0x378] sm:$0xff]
    %v6479 = vld [vmem:[%s6366 + $0x380] sm:$0xff]
    %v6480 = vld [vmem:[%s6366 + $0x388] sm:$0xff]
    %v6481 = vld [vmem:[%s6366 + $0x390] sm:$0xff]
    %v6482 = vld [vmem:[%s6366 + $0x398] sm:$0xff]
    %v6483 = vld [vmem:[%s6366 + $0x3a0] sm:$0xff]
    %v6484 = vld [vmem:[%s6366 + $0x3a8] sm:$0xff]
    %v6485 = vld [vmem:[%s6366 + $0x3b0] sm:$0xff]
    %v6486 = vld [vmem:[%s6366 + $0x3b8] sm:$0xff]
    %v6487 = vld [vmem:[%s6366 + $0x3c0] sm:$0xff]
    %v6488 = vld [vmem:[%s6366 + $0x3c8] sm:$0xff]
    %v6489 = vld [vmem:[%s6366 + $0x3d0] sm:$0xff]
    %v6490 = vld [vmem:[%s6366 + $0x3d8] sm:$0xff]
    %v6491 = vld [vmem:[%s6366 + $0x3e0] sm:$0xff]
    %v6492 = vld [vmem:[%s6366 + $0x3e8] sm:$0xff]
    %v6493 = vld [vmem:[%s6366 + $0x3f0] sm:$0xff]
    %v6494 = vld [vmem:[%s6366 + $0x3f8] sm:$0xff]
    %s6495 = scalar_lea.vmem [#allocation14], 3
    %v6496 = vld [vmem:[%s6495] ss:$4 sm:$0xff]
    %s6497 = scalar_lea.vmem [#allocation14], 35
    %v6498 = vld [vmem:[%s6497] ss:$4 sm:$0xff]
    %v6501 = vlaneseq
    %v6502 = vshrl.u32 %v6501, 7
    %v6503 = vsub.s32 0, %v6502
    %v6504 = vrot.slane %v6496, %v6503
    %v6505 = vlaneseq
    %v6506 = vshrl.u32 %v6505, 7
    %v6507 = vsub.s32 1, %v6506
    %v6508 = vrot.slane %v6496, %v6507
    %v6509 = vlaneseq
    %v6510 = vshrl.u32 %v6509, 7
    %v6511 = vsub.s32 2, %v6510
    %v6512 = vrot.slane %v6496, %v6511
    %v6513 = vlaneseq
    %v6514 = vshrl.u32 %v6513, 7
    %v6515 = vsub.s32 3, %v6514
    %v6516 = vrot.slane %v6496, %v6515
    %v6517 = vlaneseq
    %v6518 = vshrl.u32 %v6517, 7
    %v6519 = vsub.s32 4, %v6518
    %v6520 = vrot.slane %v6496, %v6519
    %v6521 = vlaneseq
    %v6522 = vshrl.u32 %v6521, 7
    %v6523 = vsub.s32 5, %v6522
    %v6524 = vrot.slane %v6496, %v6523
    %v6525 = vlaneseq
    %v6526 = vshrl.u32 %v6525, 7
    %v6527 = vsub.s32 6, %v6526
    %v6528 = vrot.slane %v6496, %v6527
    %v6529 = vlaneseq
    %v6530 = vshrl.u32 %v6529, 7
    %v6531 = vsub.s32 7, %v6530
    %v6532 = vrot.slane %v6496, %v6531
    %v6533 = vlaneseq
    %v6534 = vshrl.u32 %v6533, 7
    %v6535 = vsub.s32 0, %v6534
    %v6536 = vrot.slane %v6498, %v6535
    %v6537 = vlaneseq
    %v6538 = vshrl.u32 %v6537, 7
    %v6539 = vsub.s32 1, %v6538
    %v6540 = vrot.slane %v6498, %v6539
    %v6541 = vlaneseq
    %v6542 = vshrl.u32 %v6541, 7
    %v6543 = vsub.s32 2, %v6542
    %v6544 = vrot.slane %v6498, %v6543
    %v6545 = vlaneseq
    %v6546 = vshrl.u32 %v6545, 7
    %v6547 = vsub.s32 3, %v6546
    %v6548 = vrot.slane %v6498, %v6547
    %v6549 = vlaneseq
    %v6550 = vshrl.u32 %v6549, 7
    %v6551 = vsub.s32 4, %v6550
    %v6552 = vrot.slane %v6498, %v6551
    %v6553 = vlaneseq
    %v6554 = vshrl.u32 %v6553, 7
    %v6555 = vsub.s32 5, %v6554
    %v6556 = vrot.slane %v6498, %v6555
    %v6557 = vlaneseq
    %v6558 = vshrl.u32 %v6557, 7
    %v6559 = vsub.s32 6, %v6558
    %v6560 = vrot.slane %v6498, %v6559
    %v6561 = vlaneseq
    %v6562 = vshrl.u32 %v6561, 7
    %v6563 = vsub.s32 7, %v6562
    %v6564 = vrot.slane %v6498, %v6563
    %6581 = vmatprep.subr.bf16.mxu0 %v6368
    %6582 = vmatpush1.bf16.msra.mxu0 %v6367
    %6583 = vmatprep.subr.bf16.mxu0 %v6384
    %6584 = vmatpush1.bf16.msra.mxu0 %v6383
    %6585 = vmatprep.subr.bf16.mxu0 %v6400
    %6586 = vmatpush1.bf16.msra.mxu0 %v6399
    %6587 = vmatprep.subr.bf16.mxu0 %v6416
    %6588 = vmatpush1.bf16.msra.mxu0 %v6415
    %6589 = vmatprep.subr.bf16.mxu0 %v6432
    %6590 = vmatpush1.bf16.msra.mxu0 %v6431
    %6591 = vmatprep.subr.bf16.mxu0 %v6448
    %6592 = vmatpush1.bf16.msra.mxu0 %v6447
    %6593 = vmatprep.subr.bf16.mxu0 %v6464
    %6594 = vmatpush1.bf16.msra.mxu0 %v6463
    %6595 = vmatprep.subr.bf16.mxu0 %v6480
    %6596 = vmatpush1.bf16.msra.mxu0 %v6479
    %6597 = vmatprep.subr.bf16.mxu0 0
    %6598 = vmatpush1.bf16.msra.mxu0 0
    %6599 = vmatprep.subr.bf16.mxu0 0
    %6600 = vmatpush1.bf16.msra.mxu0 0
    %6601 = vmatprep.subr.bf16.mxu0 0
    %6602 = vmatpush1.bf16.msra.mxu0 0
    %6603 = vmatprep.subr.bf16.mxu0 0
    %6604 = vmatpush1.bf16.msra.mxu0 0
    %6605 = vmatprep.subr.bf16.mxu0 0
    %6606 = vmatpush1.bf16.msra.mxu0 0
    %6607 = vmatprep.subr.bf16.mxu0 0
    %6608 = vmatpush1.bf16.msra.mxu0 0
    %6609 = vmatprep.subr.bf16.mxu0 0
    %6610 = vmatpush1.bf16.msra.mxu0 0
    %6611 = vmatprep.subr.bf16.mxu0 0
    %6612 = vmatpush1.bf16.msra.mxu0 0
    %6613 = vmatprep.mubr.bf16.mxu0 0
    %6614 = vmatmul.mubr.bf16.gmra.mrb[0].mxu0 %v6365
    %v6615 = vpop.f32.mrb[0].mxu0
    %v6616 = vadd.f32 %v6504, %v6615
    %v6617 = vpop.f32.mrb[0].mxu0
    %v6618 = vadd.f32 %v6508, %v6617
    %v6619 = vpop.f32.mrb[0].mxu0
    %v6620 = vadd.f32 %v6504, %v6619
    %v6621 = vpop.f32.mrb[0].mxu0
    %v6622 = vadd.f32 %v6508, %v6621
    %6623 = vdwg.mxu0
    %6624 = vmatprep.subr.bf16.mxu0 %v6370
    %6625 = vmatpush1.bf16.msra.mxu0 %v6369
    %6626 = vmatprep.subr.bf16.mxu0 %v6386
    %6627 = vmatpush1.bf16.msra.mxu0 %v6385
    %6628 = vmatprep.subr.bf16.mxu0 %v6402
    %6629 = vmatpush1.bf16.msra.mxu0 %v6401
    %6630 = vmatprep.subr.bf16.mxu0 %v6418
    %6631 = vmatpush1.bf16.msra.mxu0 %v6417
    %6632 = vmatprep.subr.bf16.mxu0 %v6434
    %6633 = vmatpush1.bf16.msra.mxu0 %v6433
    %6634 = vmatprep.subr.bf16.mxu0 %v6450
    %6635 = vmatpush1.bf16.msra.mxu0 %v6449
    %6636 = vmatprep.subr.bf16.mxu0 %v6466
    %6637 = vmatpush1.bf16.msra.mxu0 %v6465
    %6638 = vmatprep.subr.bf16.mxu0 %v6482
    %6639 = vmatpush1.bf16.msra.mxu0 %v6481
    %6640 = vmatprep.subr.bf16.mxu0 0
    %6641 = vmatpush1.bf16.msra.mxu0 0
    %6642 = vmatprep.subr.bf16.mxu0 0
    %6643 = vmatpush1.bf16.msra.mxu0 0
    %6644 = vmatprep.subr.bf16.mxu0 0
    %6645 = vmatpush1.bf16.msra.mxu0 0
    %6646 = vmatprep.subr.bf16.mxu0 0
    %6647 = vmatpush1.bf16.msra.mxu0 0
    %6648 = vmatprep.subr.bf16.mxu0 0
    %6649 = vmatpush1.bf16.msra.mxu0 0
    %6650 = vmatprep.subr.bf16.mxu0 0
    %6651 = vmatpush1.bf16.msra.mxu0 0
    %6652 = vmatprep.subr.bf16.mxu0 0
    %6653 = vmatpush1.bf16.msra.mxu0 0
    %6654 = vmatprep.subr.bf16.mxu0 0
    %6655 = vmatpush1.bf16.msra.mxu0 0
    %6656 = vmatprep.mubr.bf16.mxu0 0
    %6657 = vmatmul.mubr.bf16.gmra.mrb[0].mxu0 %v6365
    %v6658 = vpop.f32.mrb[0].mxu0
    %v6659 = vadd.f32 %v6512, %v6658
    %v6660 = vpop.f32.mrb[0].mxu0
    %v6661 = vadd.f32 %v6516, %v6660
    %v6662 = vpop.f32.mrb[0].mxu0
    %v6663 = vadd.f32 %v6512, %v6662
    %v6664 = vpop.f32.mrb[0].mxu0
    %v6665 = vadd.f32 %v6516, %v6664
    %6666 = vdwg.mxu0
    %6667 = vmatprep.subr.bf16.mxu0 %v6372
    %6668 = vmatpush1.bf16.msra.mxu0 %v6371
    %6669 = vmatprep.subr.bf16.mxu0 %v6388
    %6670 = vmatpush1.bf16.msra.mxu0 %v6387
    %6671 = vmatprep.subr.bf16.mxu0 %v6404
    %6672 = vmatpush1.bf16.msra.mxu0 %v6403
    %6673 = vmatprep.subr.bf16.mxu0 %v6420
    %6674 = vmatpush1.bf16.msra.mxu0 %v6419
    %6675 = vmatprep.subr.bf16.mxu0 %v6436
    %6676 = vmatpush1.bf16.msra.mxu0 %v6435
    %6677 = vmatprep.subr.bf16.mxu0 %v6452
    %6678 = vmatpush1.bf16.msra.mxu0 %v6451
    %6679 = vmatprep.subr.bf16.mxu0 %v6468
    %6680 = vmatpush1.bf16.msra.mxu0 %v6467
    %6681 = vmatprep.subr.bf16.mxu0 %v6484
    %6682 = vmatpush1.bf16.msra.mxu0 %v6483
    %6683 = vmatprep.subr.bf16.mxu0 0
    %6684 = vmatpush1.bf16.msra.mxu0 0
    %6685 = vmatprep.subr.bf16.mxu0 0
    %6686 = vmatpush1.bf16.msra.mxu0 0
    %6687 = vmatprep.subr.bf16.mxu0 0
    %6688 = vmatpush1.bf16.msra.mxu0 0
    %6689 = vmatprep.subr.bf16.mxu0 0
    %6690 = vmatpush1.bf16.msra.mxu0 0
    %6691 = vmatprep.subr.bf16.mxu0 0
    %6692 = vmatpush1.bf16.msra.mxu0 0
    %6693 = vmatprep.subr.bf16.mxu0 0
    %6694 = vmatpush1.bf16.msra.mxu0 0
    %6695 = vmatprep.subr.bf16.mxu0 0
    %6696 = vmatpush1.bf16.msra.mxu0 0
    %6697 = vmatprep.subr.bf16.mxu0 0
    %6698 = vmatpush1.bf16.msra.mxu0 0
    %6699 = vmatprep.mubr.bf16.mxu0 0
    %6700 = vmatmul.mubr.bf16.gmra.mrb[0].mxu0 %v6365
    %v6701 = vpop.f32.mrb[0].mxu0
    %v6702 = vadd.f32 %v6520, %v6701
    %v6703 = vpop.f32.mrb[0].mxu0
    %v6704 = vadd.f32 %v6524, %v6703
    %v6705 = vpop.f32.mrb[0].mxu0
    %v6706 = vadd.f32 %v6520, %v6705
    %v6707 = vpop.f32.mrb[0].mxu0
    %v6708 = vadd.f32 %v6524, %v6707
    %6709 = vdwg.mxu0
    %6710 = vmatprep.subr.bf16.mxu0 %v6374
    %6711 = vmatpush1.bf16.msra.mxu0 %v6373
    %6712 = vmatprep.subr.bf16.mxu0 %v6390
    %6713 = vmatpush1.bf16.msra.mxu0 %v6389
    %6714 = vmatprep.subr.bf16.mxu0 %v6406
    %6715 = vmatpush1.bf16.msra.mxu0 %v6405
    %6716 = vmatprep.subr.bf16.mxu0 %v6422
    %6717 = vmatpush1.bf16.msra.mxu0 %v6421
    %6718 = vmatprep.subr.bf16.mxu0 %v6438
    %6719 = vmatpush1.bf16.msra.mxu0 %v6437
    %6720 = vmatprep.subr.bf16.mxu0 %v6454
    %6721 = vmatpush1.bf16.msra.mxu0 %v6453
    %6722 = vmatprep.subr.bf16.mxu0 %v6470
    %6723 = vmatpush1.bf16.msra.mxu0 %v6469
    %6724 = vmatprep.subr.bf16.mxu0 %v6486
    %6725 = vmatpush1.bf16.msra.mxu0 %v6485
    %6726 = vmatprep.subr.bf16.mxu0 0
    %6727 = vmatpush1.bf16.msra.mxu0 0
    %6728 = vmatprep.subr.bf16.mxu0 0
    %6729 = vmatpush1.bf16.msra.mxu0 0
    %6730 = vmatprep.subr.bf16.mxu0 0
    %6731 = vmatpush1.bf16.msra.mxu0 0
    %6732 = vmatprep.subr.bf16.mxu0 0
    %6733 = vmatpush1.bf16.msra.mxu0 0
    %6734 = vmatprep.subr.bf16.mxu0 0
    %6735 = vmatpush1.bf16.msra.mxu0 0
    %6736 = vmatprep.subr.bf16.mxu0 0
    %6737 = vmatpush1.bf16.msra.mxu0 0
    %6738 = vmatprep.subr.bf16.mxu0 0
    %6739 = vmatpush1.bf16.msra.mxu0 0
    %6740 = vmatprep.subr.bf16.mxu0 0
    %6741 = vmatpush1.bf16.msra.mxu0 0
    %6742 = vmatprep.mubr.bf16.mxu0 0
    %6743 = vmatmul.mubr.bf16.gmra.mrb[0].mxu0 %v6365
    %v6744 = vpop.f32.mrb[0].mxu0
    %v6745 = vadd.f32 %v6528, %v6744
    %v6746 = vpop.f32.mrb[0].mxu0
    %v6747 = vadd.f32 %v6532, %v6746
    %v6748 = vpop.f32.mrb[0].mxu0
    %v6749 = vadd.f32 %v6528, %v6748
    %v6750 = vpop.f32.mrb[0].mxu0
    %v6751 = vadd.f32 %v6532, %v6750
    %6752 = vdwg.mxu0
    %6753 = vmatprep.subr.bf16.mxu0 %v6376
    %6754 = vmatpush1.bf16.msra.mxu0 %v6375
    %6755 = vmatprep.subr.bf16.mxu0 %v6392
    %6756 = vmatpush1.bf16.msra.mxu0 %v6391
    %6757 = vmatprep.subr.bf16.mxu0 %v6408
    %6758 = vmatpush1.bf16.msra.mxu0 %v6407
    %6759 = vmatprep.subr.bf16.mxu0 %v6424
    %6760 = vmatpush1.bf16.msra.mxu0 %v6423
    %6761 = vmatprep.subr.bf16.mxu0 %v6440
    %6762 = vmatpush1.bf16.msra.mxu0 %v6439
    %6763 = vmatprep.subr.bf16.mxu0 %v6456
    %6764 = vmatpush1.bf16.msra.mxu0 %v6455
    %6765 = vmatprep.subr.bf16.mxu0 %v6472
    %6766 = vmatpush1.bf16.msra.mxu0 %v6471
    %6767 = vmatprep.subr.bf16.mxu0 %v6488
    %6768 = vmatpush1.bf16.msra.mxu0 %v6487
    %6769 = vmatprep.subr.bf16.mxu0 0
    %6770 = vmatpush1.bf16.msra.mxu0 0
    %6771 = vmatprep.subr.bf16.mxu0 0
    %6772 = vmatpush1.bf16.msra.mxu0 0
    %6773 = vmatprep.subr.bf16.mxu0 0
    %6774 = vmatpush1.bf16.msra.mxu0 0
    %6775 = vmatprep.subr.bf16.mxu0 0
    %6776 = vmatpush1.bf16.msra.mxu0 0
    %6777 = vmatprep.subr.bf16.mxu0 0
    %6778 = vmatpush1.bf16.msra.mxu0 0
    %6779 = vmatprep.subr.bf16.mxu0 0
    %6780 = vmatpush1.bf16.msra.mxu0 0
    %6781 = vmatprep.subr.bf16.mxu0 0
    %6782 = vmatpush1.bf16.msra.mxu0 0
    %6783 = vmatprep.subr.bf16.mxu0 0
    %6784 = vmatpush1.bf16.msra.mxu0 0
    %6785 = vmatprep.mubr.bf16.mxu0 0
    %6786 = vmatmul.mubr.bf16.gmra.mrb[0].mxu0 %v6365
    %v6787 = vpop.f32.mrb[0].mxu0
    %v6788 = vadd.f32 %v6536, %v6787
    %v6789 = vpop.f32.mrb[0].mxu0
    %v6790 = vadd.f32 %v6540, %v6789
    %v6791 = vpop.f32.mrb[0].mxu0
    %v6792 = vadd.f32 %v6536, %v6791
    %v6793 = vpop.f32.mrb[0].mxu0
    %v6794 = vadd.f32 %v6540, %v6793
    %6795 = vdwg.mxu0
    %6796 = vmatprep.subr.bf16.mxu0 %v6378
    %6797 = vmatpush1.bf16.msra.mxu0 %v6377
    %6798 = vmatprep.subr.bf16.mxu0 %v6394
    %6799 = vmatpush1.bf16.msra.mxu0 %v6393
    %6800 = vmatprep.subr.bf16.mxu0 %v6410
    %6801 = vmatpush1.bf16.msra.mxu0 %v6409
    %6802 = vmatprep.subr.bf16.mxu0 %v6426
    %6803 = vmatpush1.bf16.msra.mxu0 %v6425
    %6804 = vmatprep.subr.bf16.mxu0 %v6442
    %6805 = vmatpush1.bf16.msra.mxu0 %v6441
    %6806 = vmatprep.subr.bf16.mxu0 %v6458
    %6807 = vmatpush1.bf16.msra.mxu0 %v6457
    %6808 = vmatprep.subr.bf16.mxu0 %v6474
    %6809 = vmatpush1.bf16.msra.mxu0 %v6473
    %6810 = vmatprep.subr.bf16.mxu0 %v6490
    %6811 = vmatpush1.bf16.msra.mxu0 %v6489
    %6812 = vmatprep.subr.bf16.mxu0 0
    %6813 = vmatpush1.bf16.msra.mxu0 0
    %6814 = vmatprep.subr.bf16.mxu0 0
    %6815 = vmatpush1.bf16.msra.mxu0 0
    %6816 = vmatprep.subr.bf16.mxu0 0
    %6817 = vmatpush1.bf16.msra.mxu0 0
    %6818 = vmatprep.subr.bf16.mxu0 0
    %6819 = vmatpush1.bf16.msra.mxu0 0
    %6820 = vmatprep.subr.bf16.mxu0 0
    %6821 = vmatpush1.bf16.msra.mxu0 0
    %6822 = vmatprep.subr.bf16.mxu0 0
    %6823 = vmatpush1.bf16.msra.mxu0 0
    %6824 = vmatprep.subr.bf16.mxu0 0
    %6825 = vmatpush1.bf16.msra.mxu0 0
    %6826 = vmatprep.subr.bf16.mxu0 0
    %6827 = vmatpush1.bf16.msra.mxu0 0
    %6828 = vmatprep.mubr.bf16.mxu0 0
    %6829 = vmatmul.mubr.bf16.gmra.mrb[0].mxu0 %v6365
    %v6830 = vpop.f32.mrb[0].mxu0
    %v6831 = vadd.f32 %v6544, %v6830
    %v6832 = vpop.f32.mrb[0].mxu0
    %v6833 = vadd.f32 %v6548, %v6832
    %v6834 = vpop.f32.mrb[0].mxu0
    %v6835 = vadd.f32 %v6544, %v6834
    %v6836 = vpop.f32.mrb[0].mxu0
    %v6837 = vadd.f32 %v6548, %v6836
    %6838 = vdwg.mxu0
    %6839 = vmatprep.subr.bf16.mxu0 %v6380
    %6840 = vmatpush1.bf16.msra.mxu0 %v6379
    %6841 = vmatprep.subr.bf16.mxu0 %v6396
    %6842 = vmatpush1.bf16.msra.mxu0 %v6395
    %6843 = vmatprep.subr.bf16.mxu0 %v6412
    %6844 = vmatpush1.bf16.msra.mxu0 %v6411
    %6845 = vmatprep.subr.bf16.mxu0 %v6428
    %6846 = vmatpush1.bf16.msra.mxu0 %v6427
    %6847 = vmatprep.subr.bf16.mxu0 %v6444
    %6848 = vmatpush1.bf16.msra.mxu0 %v6443
    %6849 = vmatprep.subr.bf16.mxu0 %v6460
    %6850 = vmatpush1.bf16.msra.mxu0 %v6459
    %6851 = vmatprep.subr.bf16.mxu0 %v6476
    %6852 = vmatpush1.bf16.msra.mxu0 %v6475
    %6853 = vmatprep.subr.bf16.mxu0 %v6492
    %6854 = vmatpush1.bf16.msra.mxu0 %v6491
    %6855 = vmatprep.subr.bf16.mxu0 0
    %6856 = vmatpush1.bf16.msra.mxu0 0
    %6857 = vmatprep.subr.bf16.mxu0 0
    %6858 = vmatpush1.bf16.msra.mxu0 0
    %6859 = vmatprep.subr.bf16.mxu0 0
    %6860 = vmatpush1.bf16.msra.mxu0 0
    %6861 = vmatprep.subr.bf16.mxu0 0
    %6862 = vmatpush1.bf16.msra.mxu0 0
    %6863 = vmatprep.subr.bf16.mxu0 0
    %6864 = vmatpush1.bf16.msra.mxu0 0
    %6865 = vmatprep.subr.bf16.mxu0 0
    %6866 = vmatpush1.bf16.msra.mxu0 0
    %6867 = vmatprep.subr.bf16.mxu0 0
    %6868 = vmatpush1.bf16.msra.mxu0 0
    %6869 = vmatprep.subr.bf16.mxu0 0
    %6870 = vmatpush1.bf16.msra.mxu0 0
    %6871 = vmatprep.mubr.bf16.mxu0 0
    %6872 = vmatmul.mubr.bf16.gmra.mrb[0].mxu0 %v6365
    %v6873 = vpop.f32.mrb[0].mxu0
    %v6874 = vadd.f32 %v6552, %v6873
    %v6875 = vpop.f32.mrb[0].mxu0
    %v6876 = vadd.f32 %v6556, %v6875
    %v6877 = vpop.f32.mrb[0].mxu0
    %v6878 = vadd.f32 %v6552, %v6877
    %v6879 = vpop.f32.mrb[0].mxu0
    %v6880 = vadd.f32 %v6556, %v6879
    %6881 = vdwg.mxu0
    %6882 = vmatprep.subr.bf16.mxu0 %v6382
    %6883 = vmatpush1.bf16.msra.mxu0 %v6381
    %6884 = vmatprep.subr.bf16.mxu0 %v6398
    %6885 = vmatpush1.bf16.msra.mxu0 %v6397
    %6886 = vmatprep.subr.bf16.mxu0 %v6414
    %6887 = vmatpush1.bf16.msra.mxu0 %v6413
    %6888 = vmatprep.subr.bf16.mxu0 %v6430
    %6889 = vmatpush1.bf16.msra.mxu0 %v6429
    %6890 = vmatprep.subr.bf16.mxu0 %v6446
    %6891 = vmatpush1.bf16.msra.mxu0 %v6445
    %6892 = vmatprep.subr.bf16.mxu0 %v6462
    %6893 = vmatpush1.bf16.msra.mxu0 %v6461
    %6894 = vmatprep.subr.bf16.mxu0 %v6478
    %6895 = vmatpush1.bf16.msra.mxu0 %v6477
    %6896 = vmatprep.subr.bf16.mxu0 %v6494
    %6897 = vmatpush1.bf16.msra.mxu0 %v6493
    %6898 = vmatprep.subr.bf16.mxu0 0
    %6899 = vmatpush1.bf16.msra.mxu0 0
    %6900 = vmatprep.subr.bf16.mxu0 0
    %6901 = vmatpush1.bf16.msra.mxu0 0
    %6902 = vmatprep.subr.bf16.mxu0 0
    %6903 = vmatpush1.bf16.msra.mxu0 0
    %6904 = vmatprep.subr.bf16.mxu0 0
    %6905 = vmatpush1.bf16.msra.mxu0 0
    %6906 = vmatprep.subr.bf16.mxu0 0
    %6907 = vmatpush1.bf16.msra.mxu0 0
    %6908 = vmatprep.subr.bf16.mxu0 0
    %6909 = vmatpush1.bf16.msra.mxu0 0
    %6910 = vmatprep.subr.bf16.mxu0 0
    %6911 = vmatpush1.bf16.msra.mxu0 0
    %6912 = vmatprep.subr.bf16.mxu0 0
    %6913 = vmatpush1.bf16.msra.mxu0 0
    %6914 = vmatprep.mubr.bf16.mxu0 0
    %6915 = vmatmul.mubr.bf16.gmra.mrb[0].mxu0 %v6365
    %v6916 = vpop.f32.mrb[0].mxu0
    %v6917 = vadd.f32 %v6560, %v6916
    %v6918 = vpop.f32.mrb[0].mxu0
    %v6919 = vadd.f32 %v6564, %v6918
    %v6920 = vpop.f32.mrb[0].mxu0
    %v6921 = vadd.f32 %v6560, %v6920
    %v6922 = vpop.f32.mrb[0].mxu0
    %v6923 = vadd.f32 %v6564, %v6922
    %6924 = vdwg.mxu0
    %v6925 = vmax.f32 %v6616, 0.0
    %v6926 = vmax.f32 %v6618, 0.0
    %v6927 = vmax.f32 %v6659, 0.0
    %v6928 = vmax.f32 %v6661, 0.0
    %v6929 = vmax.f32 %v6702, 0.0
    %v6930 = vmax.f32 %v6704, 0.0
    %v6931 = vmax.f32 %v6745, 0.0
    %v6932 = vmax.f32 %v6747, 0.0
    %v6933 = vmax.f32 %v6788, 0.0
    %v6934 = vmax.f32 %v6790, 0.0
    %v6935 = vmax.f32 %v6831, 0.0
    %v6936 = vmax.f32 %v6833, 0.0
    %v6937 = vmax.f32 %v6874, 0.0
    %v6938 = vmax.f32 %v6876, 0.0
    %v6939 = vmax.f32 %v6917, 0.0
    %v6940 = vmax.f32 %v6919, 0.0
    %v6941 = vmax.f32 %v6620, 0.0
    %v6942 = vmax.f32 %v6622, 0.0
    %v6943 = vmax.f32 %v6663, 0.0
    %v6944 = vmax.f32 %v6665, 0.0
    %v6945 = vmax.f32 %v6706, 0.0
    %v6946 = vmax.f32 %v6708, 0.0
    %v6947 = vmax.f32 %v6749, 0.0
    %v6948 = vmax.f32 %v6751, 0.0
    %v6949 = vmax.f32 %v6792, 0.0
    %v6950 = vmax.f32 %v6794, 0.0
    %v6951 = vmax.f32 %v6835, 0.0
    %v6952 = vmax.f32 %v6837, 0.0
    %v6953 = vmax.f32 %v6878, 0.0
    %v6954 = vmax.f32 %v6880, 0.0
    %v6955 = vmax.f32 %v6921, 0.0
    %v6956 = vmax.f32 %v6923, 0.0
    %v6957 = vpack.c.bf16 %v6941, %v6925
    %v6958 = vpack.c.bf16 %v6942, %v6926
    %v6959 = vpack.c.bf16 %v6943, %v6927
    %v6960 = vpack.c.bf16 %v6944, %v6928
    %v6961 = vpack.c.bf16 %v6945, %v6929
    %v6962 = vpack.c.bf16 %v6946, %v6930
    %v6963 = vpack.c.bf16 %v6947, %v6931
    %v6964 = vpack.c.bf16 %v6948, %v6932
    %v6965 = vpack.c.bf16 %v6949, %v6933
    %v6966 = vpack.c.bf16 %v6950, %v6934
    %v6967 = vpack.c.bf16 %v6951, %v6935
    %v6968 = vpack.c.bf16 %v6952, %v6936
    %v6969 = vpack.c.bf16 %v6953, %v6937
    %v6970 = vpack.c.bf16 %v6954, %v6938
    %v6971 = vpack.c.bf16 %v6955, %v6939
    %v6972 = vpack.c.bf16 %v6956, %v6940
    %s6973 = scalar_lea.vmem [#allocation3], 1024
    %v6974 = vld [vmem:[%s6973] sm:$0xff]
    %v6975 = vld [vmem:[%s6973 + $0x8] sm:$0xff]
    %v6976 = vld [vmem:[%s6973 + $0x10] sm:$0xff]
    %v6977 = vld [vmem:[%s6973 + $0x18] sm:$0xff]
    %v6978 = vld [vmem:[%s6973 + $0x20] sm:$0xff]
    %v6979 = vld [vmem:[%s6973 + $0x28] sm:$0xff]
    %v6980 = vld [vmem:[%s6973 + $0x30] sm:$0xff]
    %v6981 = vld [vmem:[%s6973 + $0x38] sm:$0xff]
    %v6982 = vld [vmem:[%s6973 + $0x40] sm:$0xff]
    %v6983 = vld [vmem:[%s6973 + $0x48] sm:$0xff]
    %v6984 = vld [vmem:[%s6973 + $0x50] sm:$0xff]
    %v6985 = vld [vmem:[%s6973 + $0x58] sm:$0xff]
    %v6986 = vld [vmem:[%s6973 + $0x60] sm:$0xff]
    %v6987 = vld [vmem:[%s6973 + $0x68] sm:$0xff]
    %v6988 = vld [vmem:[%s6973 + $0x70] sm:$0xff]
    %v6989 = vld [vmem:[%s6973 + $0x78] sm:$0xff]
    %v6990 = vld [vmem:[%s6973 + $0x80] sm:$0xff]
    %v6991 = vld [vmem:[%s6973 + $0x88] sm:$0xff]
    %v6992 = vld [vmem:[%s6973 + $0x90] sm:$0xff]
    %v6993 = vld [vmem:[%s6973 + $0x98] sm:$0xff]
    %v6994 = vld [vmem:[%s6973 + $0xa0] sm:$0xff]
    %v6995 = vld [vmem:[%s6973 + $0xa8] sm:$0xff]
    %v6996 = vld [vmem:[%s6973 + $0xb0] sm:$0xff]
    %v6997 = vld [vmem:[%s6973 + $0xb8] sm:$0xff]
    %v6998 = vld [vmem:[%s6973 + $0xc0] sm:$0xff]
    %v6999 = vld [vmem:[%s6973 + $0xc8] sm:$0xff]
    %v7000 = vld [vmem:[%s6973 + $0xd0] sm:$0xff]
    %v7001 = vld [vmem:[%s6973 + $0xd8] sm:$0xff]
    %v7002 = vld [vmem:[%s6973 + $0xe0] sm:$0xff]
    %v7003 = vld [vmem:[%s6973 + $0xe8] sm:$0xff]
    %v7004 = vld [vmem:[%s6973 + $0xf0] sm:$0xff]
    %v7005 = vld [vmem:[%s6973 + $0xf8] sm:$0xff]
    %v7006 = vld [vmem:[%s6973 + $0x100] sm:$0xff]
    %v7007 = vld [vmem:[%s6973 + $0x108] sm:$0xff]
    %v7008 = vld [vmem:[%s6973 + $0x110] sm:$0xff]
    %v7009 = vld [vmem:[%s6973 + $0x118] sm:$0xff]
    %v7010 = vld [vmem:[%s6973 + $0x120] sm:$0xff]
    %v7011 = vld [vmem:[%s6973 + $0x128] sm:$0xff]
    %v7012 = vld [vmem:[%s6973 + $0x130] sm:$0xff]
    %v7013 = vld [vmem:[%s6973 + $0x138] sm:$0xff]
    %v7014 = vld [vmem:[%s6973 + $0x140] sm:$0xff]
    %v7015 = vld [vmem:[%s6973 + $0x148] sm:$0xff]
    %v7016 = vld [vmem:[%s6973 + $0x150] sm:$0xff]
    %v7017 = vld [vmem:[%s6973 + $0x158] sm:$0xff]
    %v7018 = vld [vmem:[%s6973 + $0x160] sm:$0xff]
    %v7019 = vld [vmem:[%s6973 + $0x168] sm:$0xff]
    %v7020 = vld [vmem:[%s6973 + $0x170] sm:$0xff]
    %v7021 = vld [vmem:[%s6973 + $0x178] sm:$0xff]
    %v7022 = vld [vmem:[%s6973 + $0x180] sm:$0xff]
    %v7023 = vld [vmem:[%s6973 + $0x188] sm:$0xff]
    %v7024 = vld [vmem:[%s6973 + $0x190] sm:$0xff]
    %v7025 = vld [vmem:[%s6973 + $0x198] sm:$0xff]
    %v7026 = vld [vmem:[%s6973 + $0x1a0] sm:$0xff]
    %v7027 = vld [vmem:[%s6973 + $0x1a8] sm:$0xff]
    %v7028 = vld [vmem:[%s6973 + $0x1b0] sm:$0xff]
    %v7029 = vld [vmem:[%s6973 + $0x1b8] sm:$0xff]
    %v7030 = vld [vmem:[%s6973 + $0x1c0] sm:$0xff]
    %v7031 = vld [vmem:[%s6973 + $0x1c8] sm:$0xff]
    %v7032 = vld [vmem:[%s6973 + $0x1d0] sm:$0xff]
    %v7033 = vld [vmem:[%s6973 + $0x1d8] sm:$0xff]
    %v7034 = vld [vmem:[%s6973 + $0x1e0] sm:$0xff]
    %v7035 = vld [vmem:[%s6973 + $0x1e8] sm:$0xff]
    %v7036 = vld [vmem:[%s6973 + $0x1f0] sm:$0xff]
    %v7037 = vld [vmem:[%s6973 + $0x1f8] sm:$0xff]
    %v7038 = vld [vmem:[%s6973 + $0x200] sm:$0xff]
    %v7039 = vld [vmem:[%s6973 + $0x208] sm:$0xff]
    %v7040 = vld [vmem:[%s6973 + $0x210] sm:$0xff]
    %v7041 = vld [vmem:[%s6973 + $0x218] sm:$0xff]
    %v7042 = vld [vmem:[%s6973 + $0x220] sm:$0xff]
    %v7043 = vld [vmem:[%s6973 + $0x228] sm:$0xff]
    %v7044 = vld [vmem:[%s6973 + $0x230] sm:$0xff]
    %v7045 = vld [vmem:[%s6973 + $0x238] sm:$0xff]
    %v7046 = vld [vmem:[%s6973 + $0x240] sm:$0xff]
    %v7047 = vld [vmem:[%s6973 + $0x248] sm:$0xff]
    %v7048 = vld [vmem:[%s6973 + $0x250] sm:$0xff]
    %v7049 = vld [vmem:[%s6973 + $0x258] sm:$0xff]
    %v7050 = vld [vmem:[%s6973 + $0x260] sm:$0xff]
    %v7051 = vld [vmem:[%s6973 + $0x268] sm:$0xff]
    %v7052 = vld [vmem:[%s6973 + $0x270] sm:$0xff]
    %v7053 = vld [vmem:[%s6973 + $0x278] sm:$0xff]
    %v7054 = vld [vmem:[%s6973 + $0x280] sm:$0xff]
    %v7055 = vld [vmem:[%s6973 + $0x288] sm:$0xff]
    %v7056 = vld [vmem:[%s6973 + $0x290] sm:$0xff]
    %v7057 = vld [vmem:[%s6973 + $0x298] sm:$0xff]
    %v7058 = vld [vmem:[%s6973 + $0x2a0] sm:$0xff]
    %v7059 = vld [vmem:[%s6973 + $0x2a8] sm:$0xff]
    %v7060 = vld [vmem:[%s6973 + $0x2b0] sm:$0xff]
    %v7061 = vld [vmem:[%s6973 + $0x2b8] sm:$0xff]
    %v7062 = vld [vmem:[%s6973 + $0x2c0] sm:$0xff]
    %v7063 = vld [vmem:[%s6973 + $0x2c8] sm:$0xff]
    %v7064 = vld [vmem:[%s6973 + $0x2d0] sm:$0xff]
    %v7065 = vld [vmem:[%s6973 + $0x2d8] sm:$0xff]
    %v7066 = vld [vmem:[%s6973 + $0x2e0] sm:$0xff]
    %v7067 = vld [vmem:[%s6973 + $0x2e8] sm:$0xff]
    %v7068 = vld [vmem:[%s6973 + $0x2f0] sm:$0xff]
    %v7069 = vld [vmem:[%s6973 + $0x2f8] sm:$0xff]
    %v7070 = vld [vmem:[%s6973 + $0x300] sm:$0xff]
    %v7071 = vld [vmem:[%s6973 + $0x308] sm:$0xff]
    %v7072 = vld [vmem:[%s6973 + $0x310] sm:$0xff]
    %v7073 = vld [vmem:[%s6973 + $0x318] sm:$0xff]
    %v7074 = vld [vmem:[%s6973 + $0x320] sm:$0xff]
    %v7075 = vld [vmem:[%s6973 + $0x328] sm:$0xff]
    %v7076 = vld [vmem:[%s6973 + $0x330] sm:$0xff]
    %v7077 = vld [vmem:[%s6973 + $0x338] sm:$0xff]
    %v7078 = vld [vmem:[%s6973 + $0x340] sm:$0xff]
    %v7079 = vld [vmem:[%s6973 + $0x348] sm:$0xff]
    %v7080 = vld [vmem:[%s6973 + $0x350] sm:$0xff]
    %v7081 = vld [vmem:[%s6973 + $0x358] sm:$0xff]
    %v7082 = vld [vmem:[%s6973 + $0x360] sm:$0xff]
    %v7083 = vld [vmem:[%s6973 + $0x368] sm:$0xff]
    %v7084 = vld [vmem:[%s6973 + $0x370] sm:$0xff]
    %v7085 = vld [vmem:[%s6973 + $0x378] sm:$0xff]
    %v7086 = vld [vmem:[%s6973 + $0x380] sm:$0xff]
    %v7087 = vld [vmem:[%s6973 + $0x388] sm:$0xff]
    %v7088 = vld [vmem:[%s6973 + $0x390] sm:$0xff]
    %v7089 = vld [vmem:[%s6973 + $0x398] sm:$0xff]
    %v7090 = vld [vmem:[%s6973 + $0x3a0] sm:$0xff]
    %v7091 = vld [vmem:[%s6973 + $0x3a8] sm:$0xff]
    %v7092 = vld [vmem:[%s6973 + $0x3b0] sm:$0xff]
    %v7093 = vld [vmem:[%s6973 + $0x3b8] sm:$0xff]
    %v7094 = vld [vmem:[%s6973 + $0x3c0] sm:$0xff]
    %v7095 = vld [vmem:[%s6973 + $0x3c8] sm:$0xff]
    %v7096 = vld [vmem:[%s6973 + $0x3d0] sm:$0xff]
    %v7097 = vld [vmem:[%s6973 + $0x3d8] sm:$0xff]
    %v7098 = vld [vmem:[%s6973 + $0x3e0] sm:$0xff]
    %v7099 = vld [vmem:[%s6973 + $0x3e8] sm:$0xff]
    %v7100 = vld [vmem:[%s6973 + $0x3f0] sm:$0xff]
    %v7101 = vld [vmem:[%s6973 + $0x3f8] sm:$0xff]
    %v7102 = vld [vmem:[%s9 + $0x19] sm:$0x1]
    %v7103 = vlaneseq
    %v7104 = vshrl.u32 %v7103, 7
    %v7105 = vsub.s32 0, %v7104
    %v7106 = vrot.slane %v7102, %v7105
    %7107 = vmatprep.subr.bf16.mxu0 0
    %7108 = vmatpush1.bf16.msra.mxu0 %v6974
    %7109 = vmatprep.subr.bf16.mxu0 0
    %7110 = vmatpush1.bf16.msra.mxu0 %v6975
    %7111 = vmatprep.subr.bf16.mxu0 0
    %7112 = vmatpush1.bf16.msra.mxu0 %v6976
    %7113 = vmatprep.subr.bf16.mxu0 0
    %7114 = vmatpush1.bf16.msra.mxu0 %v6977
    %7115 = vmatprep.subr.bf16.mxu0 0
    %7116 = vmatpush1.bf16.msra.mxu0 %v6978
    %7117 = vmatprep.subr.bf16.mxu0 0
    %7118 = vmatpush1.bf16.msra.mxu0 %v6979
    %7119 = vmatprep.subr.bf16.mxu0 0
    %7120 = vmatpush1.bf16.msra.mxu0 %v6980
    %7121 = vmatprep.subr.bf16.mxu0 0
    %7122 = vmatpush1.bf16.msra.mxu0 %v6981
    %7123 = vmatprep.subr.bf16.mxu0 0
    %7124 = vmatpush1.bf16.msra.mxu0 %v6982
    %7125 = vmatprep.subr.bf16.mxu0 0
    %7126 = vmatpush1.bf16.msra.mxu0 %v6983
    %7127 = vmatprep.subr.bf16.mxu0 0
    %7128 = vmatpush1.bf16.msra.mxu0 %v6984
    %7129 = vmatprep.subr.bf16.mxu0 0
    %7130 = vmatpush1.bf16.msra.mxu0 %v6985
    %7131 = vmatprep.subr.bf16.mxu0 0
    %7132 = vmatpush1.bf16.msra.mxu0 %v6986
    %7133 = vmatprep.subr.bf16.mxu0 0
    %7134 = vmatpush1.bf16.msra.mxu0 %v6987
    %7135 = vmatprep.subr.bf16.mxu0 0
    %7136 = vmatpush1.bf16.msra.mxu0 %v6988
    %7137 = vmatprep.subr.bf16.mxu0 0
    %7138 = vmatpush1.bf16.msra.mxu0 %v6989
    %7139 = vmatprep.mubr.bf16.mxu0 %v6958
    %7140 = vmatmul.mubr.bf16.gmra.mrb[0].mxu0 %v6957
    %v7141 = vpop.f32.mrb[0].mxu0
    %v7142 = vadd.f32 %v7106, %v7141
    %v7143 = vpop.f32.mrb[0].mxu0
    %v7144 = vpop.f32.mrb[0].mxu0
    %v7145 = vadd.f32 %v7106, %v7144
    %v7146 = vpop.f32.mrb[0].mxu0
    %7147 = vdwg.mxu0
    %7148 = vmatprep.subr.bf16.mxu0 0
    %7149 = vmatpush1.bf16.msra.mxu0 %v6990
    %7150 = vmatprep.subr.bf16.mxu0 0
    %7151 = vmatpush1.bf16.msra.mxu0 %v6991
    %7152 = vmatprep.subr.bf16.mxu0 0
    %7153 = vmatpush1.bf16.msra.mxu0 %v6992
    %7154 = vmatprep.subr.bf16.mxu0 0
    %7155 = vmatpush1.bf16.msra.mxu0 %v6993
    %7156 = vmatprep.subr.bf16.mxu0 0
    %7157 = vmatpush1.bf16.msra.mxu0 %v6994
    %7158 = vmatprep.subr.bf16.mxu0 0
    %7159 = vmatpush1.bf16.msra.mxu0 %v6995
    %7160 = vmatprep.subr.bf16.mxu0 0
    %7161 = vmatpush1.bf16.msra.mxu0 %v6996
    %7162 = vmatprep.subr.bf16.mxu0 0
    %7163 = vmatpush1.bf16.msra.mxu0 %v6997
    %7164 = vmatprep.subr.bf16.mxu0 0
    %7165 = vmatpush1.bf16.msra.mxu0 %v6998
    %7166 = vmatprep.subr.bf16.mxu0 0
    %7167 = vmatpush1.bf16.msra.mxu0 %v6999
    %7168 = vmatprep.subr.bf16.mxu0 0
    %7169 = vmatpush1.bf16.msra.mxu0 %v7000
    %7170 = vmatprep.subr.bf16.mxu0 0
    %7171 = vmatpush1.bf16.msra.mxu0 %v7001
    %7172 = vmatprep.subr.bf16.mxu0 0
    %7173 = vmatpush1.bf16.msra.mxu0 %v7002
    %7174 = vmatprep.subr.bf16.mxu0 0
    %7175 = vmatpush1.bf16.msra.mxu0 %v7003
    %7176 = vmatprep.subr.bf16.mxu0 0
    %7177 = vmatpush1.bf16.msra.mxu0 %v7004
    %7178 = vmatprep.subr.bf16.mxu0 0
    %7179 = vmatpush1.bf16.msra.mxu0 %v7005
    %7180 = vmatprep.mubr.bf16.mxu0 %v6960
    %7181 = vmatmul.mubr.bf16.gmra.mrb[0].mxu0 %v6959
    %v7182 = vpop.f32.mrb[0].mxu0
    %v7183 = vadd.f32 %v7142, %v7182
    %v7184 = vpop.f32.mrb[0].mxu0
    %v7185 = vpop.f32.mrb[0].mxu0
    %v7186 = vadd.f32 %v7145, %v7185
    %v7187 = vpop.f32.mrb[0].mxu0
    %7188 = vdwg.mxu0
    %7189 = vmatprep.subr.bf16.mxu0 0
    %7190 = vmatpush1.bf16.msra.mxu0 %v7006
    %7191 = vmatprep.subr.bf16.mxu0 0
    %7192 = vmatpush1.bf16.msra.mxu0 %v7007
    %7193 = vmatprep.subr.bf16.mxu0 0
    %7194 = vmatpush1.bf16.msra.mxu0 %v7008
    %7195 = vmatprep.subr.bf16.mxu0 0
    %7196 = vmatpush1.bf16.msra.mxu0 %v7009
    %7197 = vmatprep.subr.bf16.mxu0 0
    %7198 = vmatpush1.bf16.msra.mxu0 %v7010
    %7199 = vmatprep.subr.bf16.mxu0 0
    %7200 = vmatpush1.bf16.msra.mxu0 %v7011
    %7201 = vmatprep.subr.bf16.mxu0 0
    %7202 = vmatpush1.bf16.msra.mxu0 %v7012
    %7203 = vmatprep.subr.bf16.mxu0 0
    %7204 = vmatpush1.bf16.msra.mxu0 %v7013
    %7205 = vmatprep.subr.bf16.mxu0 0
    %7206 = vmatpush1.bf16.msra.mxu0 %v7014
    %7207 = vmatprep.subr.bf16.mxu0 0
    %7208 = vmatpush1.bf16.msra.mxu0 %v7015
    %7209 = vmatprep.subr.bf16.mxu0 0
    %7210 = vmatpush1.bf16.msra.mxu0 %v7016
    %7211 = vmatprep.subr.bf16.mxu0 0
    %7212 = vmatpush1.bf16.msra.mxu0 %v7017
    %7213 = vmatprep.subr.bf16.mxu0 0
    %7214 = vmatpush1.bf16.msra.mxu0 %v7018
    %7215 = vmatprep.subr.bf16.mxu0 0
    %7216 = vmatpush1.bf16.msra.mxu0 %v7019
    %7217 = vmatprep.subr.bf16.mxu0 0
    %7218 = vmatpush1.bf16.msra.mxu0 %v7020
    %7219 = vmatprep.subr.bf16.mxu0 0
    %7220 = vmatpush1.bf16.msra.mxu0 %v7021
    %7221 = vmatprep.mubr.bf16.mxu0 %v6962
    %7222 = vmatmul.mubr.bf16.gmra.mrb[0].mxu0 %v6961
    %v7223 = vpop.f32.mrb[0].mxu0
    %v7224 = vadd.f32 %v7183, %v7223
    %v7225 = vpop.f32.mrb[0].mxu0
    %v7226 = vpop.f32.mrb[0].mxu0
    %v7227 = vadd.f32 %v7186, %v7226
    %v7228 = vpop.f32.mrb[0].mxu0
    %7229 = vdwg.mxu0
    %7230 = vmatprep.subr.bf16.mxu0 0
    %7231 = vmatpush1.bf16.msra.mxu0 %v7022
    %7232 = vmatprep.subr.bf16.mxu0 0
    %7233 = vmatpush1.bf16.msra.mxu0 %v7023
    %7234 = vmatprep.subr.bf16.mxu0 0
    %7235 = vmatpush1.bf16.msra.mxu0 %v7024
    %7236 = vmatprep.subr.bf16.mxu0 0
    %7237 = vmatpush1.bf16.msra.mxu0 %v7025
    %7238 = vmatprep.subr.bf16.mxu0 0
    %7239 = vmatpush1.bf16.msra.mxu0 %v7026
    %7240 = vmatprep.subr.bf16.mxu0 0
    %7241 = vmatpush1.bf16.msra.mxu0 %v7027
    %7242 = vmatprep.subr.bf16.mxu0 0
    %7243 = vmatpush1.bf16.msra.mxu0 %v7028
    %7244 = vmatprep.subr.bf16.mxu0 0
    %7245 = vmatpush1.bf16.msra.mxu0 %v7029
    %7246 = vmatprep.subr.bf16.mxu0 0
    %7247 = vmatpush1.bf16.msra.mxu0 %v7030
    %7248 = vmatprep.subr.bf16.mxu0 0
    %7249 = vmatpush1.bf16.msra.mxu0 %v7031
    %7250 = vmatprep.subr.bf16.mxu0 0
    %7251 = vmatpush1.bf16.msra.mxu0 %v7032
    %7252 = vmatprep.subr.bf16.mxu0 0
    %7253 = vmatpush1.bf16.msra.mxu0 %v7033
    %7254 = vmatprep.subr.bf16.mxu0 0
    %7255 = vmatpush1.bf16.msra.mxu0 %v7034
    %7256 = vmatprep.subr.bf16.mxu0 0
    %7257 = vmatpush1.bf16.msra.mxu0 %v7035
    %7258 = vmatprep.subr.bf16.mxu0 0
    %7259 = vmatpush1.bf16.msra.mxu0 %v7036
    %7260 = vmatprep.subr.bf16.mxu0 0
    %7261 = vmatpush1.bf16.msra.mxu0 %v7037
    %7262 = vmatprep.mubr.bf16.mxu0 %v6964
    %7263 = vmatmul.mubr.bf16.gmra.mrb[0].mxu0 %v6963
    %v7264 = vpop.f32.mrb[0].mxu0
    %v7265 = vadd.f32 %v7224, %v7264
    %v7266 = vpop.f32.mrb[0].mxu0
    %v7267 = vpop.f32.mrb[0].mxu0
    %v7268 = vadd.f32 %v7227, %v7267
    %v7269 = vpop.f32.mrb[0].mxu0
    %7270 = vdwg.mxu0
    %7271 = vmatprep.subr.bf16.mxu0 0
    %7272 = vmatpush1.bf16.msra.mxu0 %v7038
    %7273 = vmatprep.subr.bf16.mxu0 0
    %7274 = vmatpush1.bf16.msra.mxu0 %v7039
    %7275 = vmatprep.subr.bf16.mxu0 0
    %7276 = vmatpush1.bf16.msra.mxu0 %v7040
    %7277 = vmatprep.subr.bf16.mxu0 0
    %7278 = vmatpush1.bf16.msra.mxu0 %v7041
    %7279 = vmatprep.subr.bf16.mxu0 0
    %7280 = vmatpush1.bf16.msra.mxu0 %v7042
    %7281 = vmatprep.subr.bf16.mxu0 0
    %7282 = vmatpush1.bf16.msra.mxu0 %v7043
    %7283 = vmatprep.subr.bf16.mxu0 0
    %7284 = vmatpush1.bf16.msra.mxu0 %v7044
    %7285 = vmatprep.subr.bf16.mxu0 0
    %7286 = vmatpush1.bf16.msra.mxu0 %v7045
    %7287 = vmatprep.subr.bf16.mxu0 0
    %7288 = vmatpush1.bf16.msra.mxu0 %v7046
    %7289 = vmatprep.subr.bf16.mxu0 0
    %7290 = vmatpush1.bf16.msra.mxu0 %v7047
    %7291 = vmatprep.subr.bf16.mxu0 0
    %7292 = vmatpush1.bf16.msra.mxu0 %v7048
    %7293 = vmatprep.subr.bf16.mxu0 0
    %7294 = vmatpush1.bf16.msra.mxu0 %v7049
    %7295 = vmatprep.subr.bf16.mxu0 0
    %7296 = vmatpush1.bf16.msra.mxu0 %v7050
    %7297 = vmatprep.subr.bf16.mxu0 0
    %7298 = vmatpush1.bf16.msra.mxu0 %v7051
    %7299 = vmatprep.subr.bf16.mxu0 0
    %7300 = vmatpush1.bf16.msra.mxu0 %v7052
    %7301 = vmatprep.subr.bf16.mxu0 0
    %7302 = vmatpush1.bf16.msra.mxu0 %v7053
    %7303 = vmatprep.mubr.bf16.mxu0 %v6966
    %7304 = vmatmul.mubr.bf16.gmra.mrb[0].mxu0 %v6965
    %v7305 = vpop.f32.mrb[0].mxu0
    %v7306 = vadd.f32 %v7265, %v7305
    %v7307 = vpop.f32.mrb[0].mxu0
    %v7308 = vpop.f32.mrb[0].mxu0
    %v7309 = vadd.f32 %v7268, %v7308
    %v7310 = vpop.f32.mrb[0].mxu0
    %7311 = vdwg.mxu0
    %7312 = vmatprep.subr.bf16.mxu0 0
    %7313 = vmatpush1.bf16.msra.mxu0 %v7054
    %7314 = vmatprep.subr.bf16.mxu0 0
    %7315 = vmatpush1.bf16.msra.mxu0 %v7055
    %7316 = vmatprep.subr.bf16.mxu0 0
    %7317 = vmatpush1.bf16.msra.mxu0 %v7056
    %7318 = vmatprep.subr.bf16.mxu0 0
    %7319 = vmatpush1.bf16.msra.mxu0 %v7057
    %7320 = vmatprep.subr.bf16.mxu0 0
    %7321 = vmatpush1.bf16.msra.mxu0 %v7058
    %7322 = vmatprep.subr.bf16.mxu0 0
    %7323 = vmatpush1.bf16.msra.mxu0 %v7059
    %7324 = vmatprep.subr.bf16.mxu0 0
    %7325 = vmatpush1.bf16.msra.mxu0 %v7060
    %7326 = vmatprep.subr.bf16.mxu0 0
    %7327 = vmatpush1.bf16.msra.mxu0 %v7061
    %7328 = vmatprep.subr.bf16.mxu0 0
    %7329 = vmatpush1.bf16.msra.mxu0 %v7062
    %7330 = vmatprep.subr.bf16.mxu0 0
    %7331 = vmatpush1.bf16.msra.mxu0 %v7063
    %7332 = vmatprep.subr.bf16.mxu0 0
    %7333 = vmatpush1.bf16.msra.mxu0 %v7064
    %7334 = vmatprep.subr.bf16.mxu0 0
    %7335 = vmatpush1.bf16.msra.mxu0 %v7065
    %7336 = vmatprep.subr.bf16.mxu0 0
    %7337 = vmatpush1.bf16.msra.mxu0 %v7066
    %7338 = vmatprep.subr.bf16.mxu0 0
    %7339 = vmatpush1.bf16.msra.mxu0 %v7067
    %7340 = vmatprep.subr.bf16.mxu0 0
    %7341 = vmatpush1.bf16.msra.mxu0 %v7068
    %7342 = vmatprep.subr.bf16.mxu0 0
    %7343 = vmatpush1.bf16.msra.mxu0 %v7069
    %7344 = vmatprep.mubr.bf16.mxu0 %v6968
    %7345 = vmatmul.mubr.bf16.gmra.mrb[0].mxu0 %v6967
    %v7346 = vpop.f32.mrb[0].mxu0
    %v7347 = vadd.f32 %v7306, %v7346
    %v7348 = vpop.f32.mrb[0].mxu0
    %v7349 = vpop.f32.mrb[0].mxu0
    %v7350 = vadd.f32 %v7309, %v7349
    %v7351 = vpop.f32.mrb[0].mxu0
    %7352 = vdwg.mxu0
    %7353 = vmatprep.subr.bf16.mxu0 0
    %7354 = vmatpush1.bf16.msra.mxu0 %v7070
    %7355 = vmatprep.subr.bf16.mxu0 0
    %7356 = vmatpush1.bf16.msra.mxu0 %v7071
    %7357 = vmatprep.subr.bf16.mxu0 0
    %7358 = vmatpush1.bf16.msra.mxu0 %v7072
    %7359 = vmatprep.subr.bf16.mxu0 0
    %7360 = vmatpush1.bf16.msra.mxu0 %v7073
    %7361 = vmatprep.subr.bf16.mxu0 0
    %7362 = vmatpush1.bf16.msra.mxu0 %v7074
    %7363 = vmatprep.subr.bf16.mxu0 0
    %7364 = vmatpush1.bf16.msra.mxu0 %v7075
    %7365 = vmatprep.subr.bf16.mxu0 0
    %7366 = vmatpush1.bf16.msra.mxu0 %v7076
    %7367 = vmatprep.subr.bf16.mxu0 0
    %7368 = vmatpush1.bf16.msra.mxu0 %v7077
    %7369 = vmatprep.subr.bf16.mxu0 0
    %7370 = vmatpush1.bf16.msra.mxu0 %v7078
    %7371 = vmatprep.subr.bf16.mxu0 0
    %7372 = vmatpush1.bf16.msra.mxu0 %v7079
    %7373 = vmatprep.subr.bf16.mxu0 0
    %7374 = vmatpush1.bf16.msra.mxu0 %v7080
    %7375 = vmatprep.subr.bf16.mxu0 0
    %7376 = vmatpush1.bf16.msra.mxu0 %v7081
    %7377 = vmatprep.subr.bf16.mxu0 0
    %7378 = vmatpush1.bf16.msra.mxu0 %v7082
    %7379 = vmatprep.subr.bf16.mxu0 0
    %7380 = vmatpush1.bf16.msra.mxu0 %v7083
    %7381 = vmatprep.subr.bf16.mxu0 0
    %7382 = vmatpush1.bf16.msra.mxu0 %v7084
    %7383 = vmatprep.subr.bf16.mxu0 0
    %7384 = vmatpush1.bf16.msra.mxu0 %v7085
    %7385 = vmatprep.mubr.bf16.mxu0 %v6970
    %7386 = vmatmul.mubr.bf16.gmra.mrb[0].mxu0 %v6969
    %v7387 = vpop.f32.mrb[0].mxu0
    %v7388 = vadd.f32 %v7347, %v7387
    %v7389 = vpop.f32.mrb[0].mxu0
    %v7390 = vpop.f32.mrb[0].mxu0
    %v7391 = vadd.f32 %v7350, %v7390
    %v7392 = vpop.f32.mrb[0].mxu0
    %7393 = vdwg.mxu0
    %7394 = vmatprep.subr.bf16.mxu0 0
    %7395 = vmatpush1.bf16.msra.mxu0 %v7086
    %7396 = vmatprep.subr.bf16.mxu0 0
    %7397 = vmatpush1.bf16.msra.mxu0 %v7087
    %7398 = vmatprep.subr.bf16.mxu0 0
    %7399 = vmatpush1.bf16.msra.mxu0 %v7088
    %7400 = vmatprep.subr.bf16.mxu0 0
    %7401 = vmatpush1.bf16.msra.mxu0 %v7089
    %7402 = vmatprep.subr.bf16.mxu0 0
    %7403 = vmatpush1.bf16.msra.mxu0 %v7090
    %7404 = vmatprep.subr.bf16.mxu0 0
    %7405 = vmatpush1.bf16.msra.mxu0 %v7091
    %7406 = vmatprep.subr.bf16.mxu0 0
    %7407 = vmatpush1.bf16.msra.mxu0 %v7092
    %7408 = vmatprep.subr.bf16.mxu0 0
    %7409 = vmatpush1.bf16.msra.mxu0 %v7093
    %7410 = vmatprep.subr.bf16.mxu0 0
    %7411 = vmatpush1.bf16.msra.mxu0 %v7094
    %7412 = vmatprep.subr.bf16.mxu0 0
    %7413 = vmatpush1.bf16.msra.mxu0 %v7095
    %7414 = vmatprep.subr.bf16.mxu0 0
    %7415 = vmatpush1.bf16.msra.mxu0 %v7096
    %7416 = vmatprep.subr.bf16.mxu0 0
    %7417 = vmatpush1.bf16.msra.mxu0 %v7097
    %7418 = vmatprep.subr.bf16.mxu0 0
    %7419 = vmatpush1.bf16.msra.mxu0 %v7098
    %7420 = vmatprep.subr.bf16.mxu0 0
    %7421 = vmatpush1.bf16.msra.mxu0 %v7099
    %7422 = vmatprep.subr.bf16.mxu0 0
    %7423 = vmatpush1.bf16.msra.mxu0 %v7100
    %7424 = vmatprep.subr.bf16.mxu0 0
    %7425 = vmatpush1.bf16.msra.mxu0 %v7101
    %7426 = vmatprep.mubr.bf16.mxu0 %v6972
    %7427 = vmatmul.mubr.bf16.gmra.mrb[0].mxu0 %v6971
    %v7428 = vpop.f32.mrb[0].mxu0
    %v7429 = vadd.f32 %v7388, %v7428
    %v7430 = vpop.f32.mrb[0].mxu0
    %v7431 = vpop.f32.mrb[0].mxu0
    %v7432 = vadd.f32 %v7391, %v7431
    %v7433 = vpop.f32.mrb[0].mxu0
    %7434 = vdwg.mxu0
    %v7435 = vadd.f32 %v6363, %v7429
    %v7436 = vadd.f32 %v6364, %v7432
    %v7437 = vld [vmem:[%s9 + $0x1a] sm:$0x1]
    %v7438 = vld [vmem:[%s9 + $0x1b] sm:$0x1]
    %7439 = vadd.xlane.f32.xlu0 %v7435
    %v7440 = vpop.xlane.xlu0 %7439
    %7441 = vadd.xlane.f32.xlu0 %v7436
    %v7442 = vpop.xlane.xlu0 %7441
    %v7443 = vmul.f32 %v7440, %v174
    %v7444 = vmul.f32 %v7442, %v174
    %v7445 = vsub.f32 %v7435, %v7443
    %v7446 = vsub.f32 %v7436, %v7444
    %v7447 = vmul.f32 %v7445, %v7445
    %v7448 = vmul.f32 %v7446, %v7446
    %7449 = vadd.xlane.f32.xlu0 %v7447
    %v7450 = vpop.xlane.xlu0 %7449
    %7451 = vadd.xlane.f32.xlu0 %v7448
    %v7452 = vpop.xlane.xlu0 %7451
    %v7453 = vmul.f32 %v7450, %v174
    %v7454 = vmul.f32 %v7452, %v174
    %v7455 = vadd.f32 %v7453, 1e-05
    %v7456 = vadd.f32 %v7454, 1e-05
    %v7457 = vrsqrt.pop %v7455
    %v7458 = vrsqrt.pop %v7456
    %v7459 = vmul.f32 %v7445, %v7457
    %v7460 = vmul.f32 %v7446, %v7458
    %v7461 = vlaneseq
    %v7462 = vshrl.u32 %v7461, 7
    %v7463 = vsub.s32 0, %v7462
    %v7464 = vrot.slane %v7437, %v7463
    %v7465 = vmul.f32 %v7459, %v7464
    %v7466 = vmul.f32 %v7460, %v7464
    %v7467 = vlaneseq
    %v7468 = vshrl.u32 %v7467, 7
    %v7469 = vsub.s32 0, %v7468
    %v7470 = vrot.slane %v7438, %v7469
    %v7471 = vadd.f32 %v7465, %v7470
    %v7472 = vadd.f32 %v7466, %v7470
    %v7473 = vpack.c.bf16 %v7471, %v7471
    %v7474 = vpack.c.bf16 %v7472, %v7472
    %v7475 = vld [vmem:[#allocation11] sm:$0xf]
    %v7476 = vld [vmem:[#allocation11 + $0x4] sm:$0xf]
    %v7477 = vld [vmem:[#allocation11 + $0x8] sm:$0xf]
    %v7478 = vld [vmem:[#allocation11 + $0xc] sm:$0xf]
    %v7479 = vld [vmem:[#allocation11 + $0x10] sm:$0xf]
    %v7480 = vld [vmem:[#allocation11 + $0x14] sm:$0xf]
    %v7481 = vld [vmem:[#allocation11 + $0x18] sm:$0xf]
    %v7482 = vld [vmem:[#allocation11 + $0x1c] sm:$0xf]
    %v7483 = vld [vmem:[#allocation11 + $0x20] sm:$0xf]
    %v7484 = vld [vmem:[#allocation11 + $0x24] sm:$0xf]
    %v7485 = vld [vmem:[#allocation11 + $0x28] sm:$0xf]
    %v7486 = vld [vmem:[#allocation11 + $0x2c] sm:$0xf]
    %v7487 = vld [vmem:[#allocation11 + $0x30] sm:$0xf]
    %v7488 = vld [vmem:[#allocation11 + $0x34] sm:$0xf]
    %v7489 = vld [vmem:[#allocation11 + $0x38] sm:$0xf]
    %v7490 = vld [vmem:[#allocation11 + $0x3c] sm:$0xf]
    %v7491 = vld [vmem:[%s9 + $0x1c] sm:$0x1]
    %v7492 = vlaneseq
    %v7493 = vshrl.u32 %v7492, 7
    %v7494 = vsub.s32 0, %v7493
    %v7495 = vrot.slane %v7491, %v7494
    %v7498 = vunpack.c.l.b16 %v7473
    %v7499 = vunpack.c.l.b16 %v7474
    %v7500 = vrot.slane %v7499, 7
    %vm7501 = vcmask 1041409
    %v7502 = vsel %vm7501, %v7500, %v7498
    %v7503 = vpack.c.b16 %v7502, %v7502
    %v7521 = vunpack.c.l.b16 %v7475
    %v7522 = vunpack.c.l.b16 %v7476
    %v7523 = vunpack.c.l.b16 %v7477
    %v7524 = vunpack.c.l.b16 %v7478
    %v7525 = vunpack.c.l.b16 %v7479
    %v7526 = vunpack.c.l.b16 %v7480
    %v7527 = vunpack.c.l.b16 %v7481
    %v7528 = vunpack.c.l.b16 %v7482
    %v7529 = vunpack.c.l.b16 %v7483
    %v7530 = vunpack.c.l.b16 %v7484
    %v7531 = vunpack.c.l.b16 %v7485
    %v7532 = vunpack.c.l.b16 %v7486
    %v7533 = vunpack.c.l.b16 %v7487
    %v7534 = vunpack.c.l.b16 %v7488
    %v7535 = vunpack.c.l.b16 %v7489
    %v7536 = vunpack.c.l.b16 %v7490
    %v7537 = vpack.c.b16 %v7522, %v7521
    %v7538 = vpack.c.b16 %v7524, %v7523
    %v7539 = vpack.c.b16 %v7526, %v7525
    %v7540 = vpack.c.b16 %v7528, %v7527
    %v7541 = vpack.c.b16 %v7530, %v7529
    %v7542 = vpack.c.b16 %v7532, %v7531
    %v7543 = vpack.c.b16 %v7534, %v7533
    %v7544 = vpack.c.b16 %v7536, %v7535
    %7553 = vmatprep.subr.bf16.mxu0 0
    %7554 = vmatpush1.bf16.msra.mxu0 %v7537
    %7555 = vmatprep.subr.bf16.mxu0 0
    %7556 = vmatpush1.bf16.msra.mxu0 %v7538
    %7557 = vmatprep.subr.bf16.mxu0 0
    %7558 = vmatpush1.bf16.msra.mxu0 %v7539
    %7559 = vmatprep.subr.bf16.mxu0 0
    %7560 = vmatpush1.bf16.msra.mxu0 %v7540
    %7561 = vmatprep.subr.bf16.mxu0 0
    %7562 = vmatpush1.bf16.msra.mxu0 %v7541
    %7563 = vmatprep.subr.bf16.mxu0 0
    %7564 = vmatpush1.bf16.msra.mxu0 %v7542
    %7565 = vmatprep.subr.bf16.mxu0 0
    %7566 = vmatpush1.bf16.msra.mxu0 %v7543
    %7567 = vmatprep.subr.bf16.mxu0 0
    %7568 = vmatpush1.bf16.msra.mxu0 %v7544
    %7569 = vmatprep.subr.bf16.mxu0 0
    %7570 = vmatpush1.bf16.msra.mxu0 0
    %7571 = vmatprep.subr.bf16.mxu0 0
    %7572 = vmatpush1.bf16.msra.mxu0 0
    %7573 = vmatprep.subr.bf16.mxu0 0
    %7574 = vmatpush1.bf16.msra.mxu0 0
    %7575 = vmatprep.subr.bf16.mxu0 0
    %7576 = vmatpush1.bf16.msra.mxu0 0
    %7577 = vmatprep.subr.bf16.mxu0 0
    %7578 = vmatpush1.bf16.msra.mxu0 0
    %7579 = vmatprep.subr.bf16.mxu0 0
    %7580 = vmatpush1.bf16.msra.mxu0 0
    %7581 = vmatprep.subr.bf16.mxu0 0
    %7582 = vmatpush1.bf16.msra.mxu0 0
    %7583 = vmatprep.subr.bf16.mxu0 0
    %7584 = vmatpush1.bf16.msra.mxu0 0
    %7585 = vmatprep.mubr.bf16.mxu0 0
    %7586 = vmatmul.mubr.bf16.gmra.mrb[0].mxu0 %v7503
    %v7587 = vpop.f32.mrb[0].mxu0
    %v7588 = vadd.f32 %v7495, %v7587
    %v7589 = vpop.f32.mrb[0].mxu0
    %v7590 = vpop.f32.mrb[0].mxu0
    %v7591 = vpop.f32.mrb[0].mxu0
    %7592 = vdwg.mxu0
    %7593 = vst [vmem:[#allocation16] sm:$0x3] %v7588
    // Predicated region
    $region70: #{global_model_forward.1} parent=1 // pred_check
      _
    $region71: #{global_model_forward.1} parent=1 // pred_check_branch
      %7595 = sbr.rel (0) target = $region73
    $region72: #{global_model_forward.1} parent=1 // pred_region
      %s7597 = ssub.s32 32, 32
      %7598 = vsyncadd [#allocation7], %s7597
      %s7600 = sshll.u32 [#allocation16], 4
      %s7601 = int_to_ptr.vmem [resolvable:$true] %s7600
      %7603 = dma.vmem_to_hbm [thread:$0]  %s7601, 32, %s12, [#allocation7]
    $region73: #{global_model_forward.1} parent=1 // pred_fallthru
      _
    // Predicated region
    $region74: #{global_model_forward.1} parent=1 // pred_check
      _
    $region75: #{global_model_forward.1} parent=1 // pred_check_branch
      %7605 = sbr.rel (0) target = $region77
    $region76: #{global_model_forward.1} parent=1 // pred_region
      %7606 = dma.done [#allocation7], 32
    $region77: #{global_model_forward.1} parent=1 // pred_fallthru
      _
    %7607 = vsyncpa [#allocation6], 1
    %7608 = vsyncpa [#allocation9], 1
    %7609 = vsyncpa [#allocation12], 1
    %7610 = vsyncpa [#allocation15], 1
    %7611 = vsyncpa [#allocation7], 1
  %7612 = vsyncmov [#allocation4]
  %s7613 = vpop.sfrf %7612
  %p7614 = scmp.eq.s32.totalorder %s7613, 0
  %p7615 = pneg %p7614
  %7617 = shalt.err (%p7615)
  %s7618 = scalar_lea.sflag [#allocation4], 1
  %7619 = vsyncmov %s7618
  %s7620 = vpop.sfrf %7619
  %p7621 = scmp.eq.s32.totalorder %s7620, 0
  %p7622 = pneg %p7621
  %7624 = shalt.err (%p7622)

</llo_original>
